<compile_context>
chip_gen: v6e
topology: v6e:2x2x1
jax: 0.10.0
libtpu: 0.0.40
codegen_flags: <defaults>
</compile_context>

<pallas_src>
import math
from functools import partial

import jax
import jax.numpy as jnp
from jax.experimental import pallas as pl
from jax.experimental.pallas import tpu as pltpu

N_WIRES = 3606
HIDDEN = 512
LEAK = 0.2
LANE = 128
SUBLANE = 8
N_WIRES_PAD = ((N_WIRES + LANE - 1) // LANE) * LANE   # 3712 = 29 * 128


def _round_up(v, m):
    return ((v + m - 1) // m) * m


# --------------------------------------------------------------------------- #
# Kernel
# --------------------------------------------------------------------------- #
def vae_kernel(x_ref, w1_ref, b1_ref, w2_ref, b2_ref,
               w3_ref, b3_ref, w4_ref, b4_ref, out_ref):
    f32 = jnp.float32
    bf16 = jnp.bfloat16

    # In-kernel cast of the activations (VPU work hidden under the MXU; avoids
    # a separate un-hidden XLA cast pass over the input in HBM).
    x = x_ref[...].astype(bf16)

    # Encoder: Linear(n_wires -> 512) + LeakyReLU(0.2)
    h = jnp.dot(x, w1_ref[...], preferred_element_type=f32) + b1_ref[...]
    h = jnp.where(h >= 0, h, LEAK * h)

    # Encoder: Linear(512 -> enc_pad) + Tanh (EUP).  Padded columns see zero
    # weights and zero bias -> tanh(0) = 0.
    z = jnp.tanh(jnp.dot(h.astype(bf16), w2_ref[...],
                         preferred_element_type=f32) + b2_ref[...])

    # Decoder: Linear(enc_pad -> 512) + ReLU.  Padded z columns hit zero rows
    # of w3, so they contribute nothing.
    h2 = jnp.maximum(jnp.dot(z.astype(bf16), w3_ref[...],
                             preferred_element_type=f32) + b3_ref[...], 0.0)

    # Decoder: Linear(512 -> n_wires_pad) -> lane-dense (3712-wide) store.
    y = jnp.dot(h2.astype(bf16), w4_ref[...],
                preferred_element_type=f32) + b4_ref[...]
    out_ref[...] = y.astype(out_ref.dtype)


# --------------------------------------------------------------------------- #
# Parameters
# --------------------------------------------------------------------------- #
def init_params(key, encoded_dim):
    """Deterministic synthetic weights with the same shapes as the PyTorch module
    (torch nn.Linear layout: weight (out_features, in_features), bias (out,))."""
    def linear(k, out_f, in_f):
        kw, kb = jax.random.split(k)
        scale = 1.0 / math.sqrt(in_f)
        w = scale * jax.random.normal(kw, (out_f, in_f), jnp.float32)
        b = scale * jax.random.normal(kb, (out_f,), jnp.float32)
        return w, b

    k1, k2, k3, k4 = jax.random.split(key, 4)
    enc_w1, enc_b1 = linear(k1, HIDDEN, N_WIRES)
    enc_w2, enc_b2 = linear(k2, encoded_dim, HIDDEN)
    dec_w1, dec_b1 = linear(k3, HIDDEN, encoded_dim)
    dec_w2, dec_b2 = linear(k4, N_WIRES, HIDDEN)
    return {
        "enc_w1": enc_w1, "enc_b1": enc_b1,
        "enc_w2": enc_w2, "enc_b2": enc_b2,
        "dec_w1": dec_w1, "dec_b1": dec_b1,
        "dec_w2": dec_w2, "dec_b2": dec_b2,
    }


def prepare_params(params):
    """One-time transpose / bf16-cast / zero-pad of the weights into the layout
    the kernel consumes (do this at init, NOT on every forward call)."""
    bf16, f32 = jnp.bfloat16, jnp.float32
    enc_dim = params["enc_w2"].shape[0]
    enc_pad = _round_up(enc_dim, LANE)

    w1 = params["enc_w1"].T.astype(bf16)                      # (3606, 512)
    b1 = params["enc_b1"].reshape(1, -1).astype(f32)          # (1, 512)

    w2 = jnp.zeros((HIDDEN, enc_pad), bf16)
    w2 = w2.at[:, :enc_dim].set(params["enc_w2"].T.astype(bf16))
    b2 = jnp.zeros((1, enc_pad), f32).at[:, :enc_dim].set(params["enc_b2"])

    w3 = jnp.zeros((enc_pad, HIDDEN), bf16)
    w3 = w3.at[:enc_dim, :].set(params["dec_w1"].T.astype(bf16))
    b3 = params["dec_b1"].reshape(1, -1).astype(f32)

    w4 = jnp.zeros((HIDDEN, N_WIRES_PAD), bf16)
    w4 = w4.at[:, :N_WIRES].set(params["dec_w2"].T.astype(bf16))
    b4 = jnp.zeros((1, N_WIRES_PAD), f32).at[:, :N_WIRES].set(params["dec_b2"])

    return {"w1": w1, "b1": b1, "w2": w2, "b2": b2,
            "w3": w3, "b3": b3, "w4": w4, "b4": b4}


# --------------------------------------------------------------------------- #
# Generation-aware tiling
# --------------------------------------------------------------------------- #
def _tpu_vmem_bytes():
    try:
        return int(pltpu.get_tpu_info().vmem_capacity_bytes)
    except Exception:
        return 64 * 1024 * 1024   # conservative fallback (v7x per-core VMEM)


def _tiling_config(n_rows, max_tile_rows=None):
    vmem = _tpu_vmem_bytes()
    if vmem >= 100 * 1024 * 1024:                 # v5e / v6e: 128 MiB VMEM
        default_tile, vmem_limit = 512, 96 * 1024 * 1024
    else:                                         # v7x: 64 MiB per TensorCore
        default_tile, vmem_limit = 256, 48 * 1024 * 1024
    if max_tile_rows is None:
        max_tile_rows = default_tile

    rows8 = _round_up(max(n_rows, 1), SUBLANE)
    if rows8 <= max_tile_rows and rows8 % (2 * SUBLANE) == 0:
        # Keep >= 2 grid steps (at zero padding cost) so the "parallel" row
        # axis can shard across both TensorCores and the pipeline has work.
        tile_rows = rows8 // 2
    else:
        tile_rows = min(max_tile_rows, rows8)
    return tile_rows, vmem_limit


# --------------------------------------------------------------------------- #
# Forward wrapper
# --------------------------------------------------------------------------- #
def vae_forward(x, prep, *, max_tile_rows=None, out_dtype=jnp.float32):
    """x: (..., n_wires), like VAE.forward (Linear over the last dim).
    `prep` is the output of prepare_params (computed once at init)."""
    assert x.shape[-1] == N_WIRES
    lead = x.shape[:-1]
    n_rows = int(math.prod(lead)) if lead else 1
    x2 = x.reshape(n_rows, N_WIRES)

    enc_pad = prep["w2"].shape[1]
    tile_rows, vmem_limit = _tiling_config(n_rows, max_tile_rows)
    n_pad = _round_up(max(n_rows, 1), tile_rows)
    if n_pad != n_rows:
        x2 = jnp.pad(x2, ((0, n_pad - n_rows), (0, 0)))

    def resident(shape):
        # Constant index_map -> block stays resident in VMEM across grid steps;
        # Buffered(1) avoids allocating a useless second buffer for ~7.5 MB of
        # bf16 weights (real headroom on v7x's 64 MiB VMEM).
        return pl.BlockSpec(shape, lambda i: (0, 0),
                            pipeline_mode=pl.Buffered(1))

    in_specs = [
        pl.BlockSpec((tile_rows, N_WIRES), lambda i: (i, 0)),        # x rows
        resident((N_WIRES, HIDDEN)), resident((1, HIDDEN)),          # enc lin1
        resident((HIDDEN, enc_pad)), resident((1, enc_pad)),         # enc lin2
        resident((enc_pad, HIDDEN)), resident((1, HIDDEN)),          # dec lin1
        resident((HIDDEN, N_WIRES_PAD)), resident((1, N_WIRES_PAD)),  # dec lin2
    ]
    out_specs = pl.BlockSpec((tile_rows, N_WIRES_PAD), lambda i: (i, 0))

    flops = 2 * n_pad * (N_WIRES * HIDDEN + HIDDEN * enc_pad
                         + enc_pad * HIDDEN + HIDDEN * N_WIRES_PAD)
    bytes_accessed = (
        n_pad * N_WIRES * x2.dtype.itemsize                     # input (cast in-kernel)
        + n_pad * N_WIRES_PAD * jnp.dtype(out_dtype).itemsize   # output
        + 2 * (N_WIRES * HIDDEN + HIDDEN * enc_pad
               + enc_pad * HIDDEN + HIDDEN * N_WIRES_PAD)       # bf16 weights
        + 4 * (2 * HIDDEN + enc_pad + N_WIRES_PAD)              # f32 biases
    )
    cost = pl.CostEstimate(flops=flops,
                           transcendentals=n_pad * enc_pad,     # tanh
                           bytes_accessed=bytes_accessed)

    y = pl.pallas_call(
        vae_kernel,
        out_shape=jax.ShapeDtypeStruct((n_pad, N_WIRES_PAD), out_dtype),
        grid=(n_pad // tile_rows,),
        in_specs=in_specs,
        out_specs=out_specs,
        compiler_params=pltpu.CompilerParams(
            dimension_semantics=("parallel",),
            vmem_limit_bytes=vmem_limit),
        cost_estimate=cost,
    )(x2, prep["w1"], prep["b1"], prep["w2"], prep["b2"],
      prep["w3"], prep["b3"], prep["w4"], prep["b4"])

    # Drop padded rows and the 106 padded output lanes.
    return y[:n_rows, :N_WIRES].reshape(*lead, N_WIRES)


# --------------------------------------------------------------------------- #
# Pure-JAX reference (mirrors the PyTorch forward, f32)
# --------------------------------------------------------------------------- #
def vae_forward_ref(x, params):
    hp = jax.lax.Precision.HIGHEST
    h = jnp.einsum("...i,oi->...o", x, params["enc_w1"], precision=hp) + params["enc_b1"]
    h = jnp.where(h >= 0, h, LEAK * h)
    z = jnp.tanh(jnp.einsum("...i,oi->...o", h, params["enc_w2"], precision=hp)
                 + params["enc_b2"])
    h2 = jnp.maximum(jnp.einsum("...i,oi->...o", z, params["dec_w1"], precision=hp)
                     + params["dec_b1"], 0.0)
    return (jnp.einsum("...i,oi->...o", h2, params["dec_w2"], precision=hp)
            + params["dec_b2"])


if __name__ == "__main__":
    ENCODED_DIM = 16
    B, S = 2, 4   # small leading dims; n_wires=3606 is fixed by the module

    key = jax.random.PRNGKey(0)
    kx, kp = jax.random.split(key)
    x = jax.random.normal(kx, (B, S, N_WIRES), jnp.float32)

    params = init_params(kp, ENCODED_DIM)
    prep = prepare_params(params)          # one-time weight layout prep

    fwd = jax.jit(partial(vae_forward, prep=prep))
    out = jax.block_until_ready(fwd(x))
    ref = vae_forward_ref(x, params)

    assert out.shape == (B, S, N_WIRES)
    # bf16 MXU inputs with f32 accumulation -> small numerical drift vs f32 ref.
    assert jnp.allclose(out, ref, rtol=5e-2, atol=5e-2), float(jnp.max(jnp.abs(out - ref)))
    print("KERNEL_OK")
</pallas_src>

<mosaic_0001>
module attributes {stable_mosaic.version = 11 : i64} {
  func.func @vae_kernel(%arg0: i32, %arg1: memref<8x3606xf32, #tpu.memory_space<vmem>>, %arg2: memref<3606x512xbf16, #tpu.memory_space<vmem>>, %arg3: memref<1x512xf32, #tpu.memory_space<vmem>>, %arg4: memref<512x128xbf16, #tpu.memory_space<vmem>>, %arg5: memref<1x128xf32, #tpu.memory_space<vmem>>, %arg6: memref<128x512xbf16, #tpu.memory_space<vmem>>, %arg7: memref<1x512xf32, #tpu.memory_space<vmem>>, %arg8: memref<512x3712xbf16, #tpu.memory_space<vmem>>, %arg9: memref<1x3712xf32, #tpu.memory_space<vmem>>, %arg10: memref<8x3712xf32, #tpu.memory_space<vmem>>) attributes {dimension_semantics = [#tpu.dimension_semantics<parallel>], iteration_bounds = array<i64: 1>, scalar_prefetch = 0 : i64, scratch_operands = 0 : i64, tpu.core_type = #tpu.core_type<tc>, window_params = [{transform_indices = @transform_0, window_bounds = array<i64: 8, 3606>}, {pipeline_mode = #tpu.pipeline_mode<synchronous>, transform_indices = @transform_1, window_bounds = array<i64: 3606, 512>}, {pipeline_mode = #tpu.pipeline_mode<synchronous>, transform_indices = @transform_2, window_bounds = array<i64: 1, 512>}, {pipeline_mode = #tpu.pipeline_mode<synchronous>, transform_indices = @transform_3, window_bounds = array<i64: 512, 128>}, {pipeline_mode = #tpu.pipeline_mode<synchronous>, transform_indices = @transform_4, window_bounds = array<i64: 1, 128>}, {pipeline_mode = #tpu.pipeline_mode<synchronous>, transform_indices = @transform_5, window_bounds = array<i64: 128, 512>}, {pipeline_mode = #tpu.pipeline_mode<synchronous>, transform_indices = @transform_6, window_bounds = array<i64: 1, 512>}, {pipeline_mode = #tpu.pipeline_mode<synchronous>, transform_indices = @transform_7, window_bounds = array<i64: 512, 3712>}, {pipeline_mode = #tpu.pipeline_mode<synchronous>, transform_indices = @transform_8, window_bounds = array<i64: 1, 3712>}, {transform_indices = @transform_9, window_bounds = array<i64: 8, 3712>}]} {
    %c0 = arith.constant 0 : index
    %c0_0 = arith.constant 0 : index
    %0 = vector.load %arg1[%c0, %c0_0] : memref<8x3606xf32, #tpu.memory_space<vmem>>, vector<8x3606xf32>
    %1 = arith.truncf %0 : vector<8x3606xf32> to vector<8x3606xbf16>
    %c0_1 = arith.constant 0 : index
    %c0_2 = arith.constant 0 : index
    %2 = vector.load %arg2[%c0_1, %c0_2] : memref<3606x512xbf16, #tpu.memory_space<vmem>>, vector<3606x512xbf16>
    %cst = arith.constant dense<0.000000e+00> : vector<8x512xf32>
    %3 = tpu.matmul %1, %2, %cst {dimension_numbers = #tpu.dot_dimension_numbers<[1], [0], [0], [1], [0, 0, 1, 1], [], []>} : vector<8x3606xbf16>, vector<3606x512xbf16>, vector<8x512xf32> -> vector<8x512xf32>
    %c0_3 = arith.constant 0 : index
    %c0_4 = arith.constant 0 : index
    %4 = vector.load %arg3[%c0_3, %c0_4] : memref<1x512xf32, #tpu.memory_space<vmem>>, vector<1x512xf32>
    %5 = vector.broadcast %4 : vector<1x512xf32> to vector<8x512xf32>
    %6 = arith.addf %3, %5 : vector<8x512xf32>
    %cst_5 = arith.constant 0.000000e+00 : f32
    %7 = vector.broadcast %cst_5 : f32 to vector<8x512xf32>
    %8 = arith.cmpf oge, %6, %7 : vector<8x512xf32>
    %cst_6 = arith.constant 2.000000e-01 : f32
    %9 = vector.broadcast %cst_6 : f32 to vector<8x512xf32>
    %10 = arith.mulf %9, %6 : vector<8x512xf32>
    %11 = arith.select %8, %6, %10 : vector<8x512xi1>, vector<8x512xf32>
    %12 = arith.truncf %11 : vector<8x512xf32> to vector<8x512xbf16>
    %c0_7 = arith.constant 0 : index
    %c0_8 = arith.constant 0 : index
    %13 = vector.load %arg4[%c0_7, %c0_8] : memref<512x128xbf16, #tpu.memory_space<vmem>>, vector<512x128xbf16>
    %cst_9 = arith.constant dense<0.000000e+00> : vector<8x128xf32>
    %14 = tpu.matmul %12, %13, %cst_9 {dimension_numbers = #tpu.dot_dimension_numbers<[1], [0], [0], [1], [0, 0, 1, 1], [], []>} : vector<8x512xbf16>, vector<512x128xbf16>, vector<8x128xf32> -> vector<8x128xf32>
    %c0_10 = arith.constant 0 : index
    %c0_11 = arith.constant 0 : index
    %15 = vector.load %arg5[%c0_10, %c0_11] : memref<1x128xf32, #tpu.memory_space<vmem>>, vector<1x128xf32>
    %16 = vector.broadcast %15 : vector<1x128xf32> to vector<8x128xf32>
    %17 = arith.addf %14, %16 : vector<8x128xf32>
    %18 = math.tanh %17 : vector<8x128xf32>
    %19 = arith.truncf %18 : vector<8x128xf32> to vector<8x128xbf16>
    %c0_12 = arith.constant 0 : index
    %c0_13 = arith.constant 0 : index
    %20 = vector.load %arg6[%c0_12, %c0_13] : memref<128x512xbf16, #tpu.memory_space<vmem>>, vector<128x512xbf16>
    %cst_14 = arith.constant dense<0.000000e+00> : vector<8x512xf32>
    %21 = tpu.matmul %19, %20, %cst_14 {dimension_numbers = #tpu.dot_dimension_numbers<[1], [0], [0], [1], [0, 0, 1, 1], [], []>} : vector<8x128xbf16>, vector<128x512xbf16>, vector<8x512xf32> -> vector<8x512xf32>
    %c0_15 = arith.constant 0 : index
    %c0_16 = arith.constant 0 : index
    %22 = vector.load %arg7[%c0_15, %c0_16] : memref<1x512xf32, #tpu.memory_space<vmem>>, vector<1x512xf32>
    %23 = vector.broadcast %22 : vector<1x512xf32> to vector<8x512xf32>
    %24 = arith.addf %21, %23 : vector<8x512xf32>
    %cst_17 = arith.constant 0.000000e+00 : f32
    %25 = vector.broadcast %cst_17 : f32 to vector<8x512xf32>
    %26 = arith.maximumf %24, %25 : vector<8x512xf32>
    %27 = arith.truncf %26 : vector<8x512xf32> to vector<8x512xbf16>
    %c0_18 = arith.constant 0 : index
    %c0_19 = arith.constant 0 : index
    %28 = vector.load %arg8[%c0_18, %c0_19] : memref<512x3712xbf16, #tpu.memory_space<vmem>>, vector<512x3712xbf16>
    %cst_20 = arith.constant dense<0.000000e+00> : vector<8x3712xf32>
    %29 = tpu.matmul %27, %28, %cst_20 {dimension_numbers = #tpu.dot_dimension_numbers<[1], [0], [0], [1], [0, 0, 1, 1], [], []>} : vector<8x512xbf16>, vector<512x3712xbf16>, vector<8x3712xf32> -> vector<8x3712xf32>
    %c0_21 = arith.constant 0 : index
    %c0_22 = arith.constant 0 : index
    %30 = vector.load %arg9[%c0_21, %c0_22] : memref<1x3712xf32, #tpu.memory_space<vmem>>, vector<1x3712xf32>
    %31 = vector.broadcast %30 : vector<1x3712xf32> to vector<8x3712xf32>
    %32 = arith.addf %29, %31 : vector<8x3712xf32>
    %c0_23 = arith.constant 0 : index
    %c0_24 = arith.constant 0 : index
    %33 = vector.load %arg10[%c0_23, %c0_24] : memref<8x3712xf32, #tpu.memory_space<vmem>>, vector<8x3712xf32>
    tpu.vector_store %arg10[%c0_23, %c0_24], %32 {strides = array<i32>} : memref<8x3712xf32, #tpu.memory_space<vmem>>, vector<8x3712xf32>,
    return
  }
  func.func @transform_0(%arg0: i32) -> (i32, i32) {
    %c0_i32 = arith.constant 0 : i32
    %c0_i32_0 = arith.constant 0 : i32
    return %arg0, %c0_i32 : i32, i32
  }
  func.func @transform_1(%arg0: i32) -> (i32, i32) {
    %c0_i32 = arith.constant 0 : i32
    %c0_i32_0 = arith.constant 0 : i32
    %c0_i32_1 = arith.constant 0 : i32
    return %c0_i32, %c0_i32_0 : i32, i32
  }
  func.func @transform_2(%arg0: i32) -> (i32, i32) {
    %c0_i32 = arith.constant 0 : i32
    %c0_i32_0 = arith.constant 0 : i32
    %c0_i32_1 = arith.constant 0 : i32
    return %c0_i32, %c0_i32_0 : i32, i32
  }
  func.func @transform_3(%arg0: i32) -> (i32, i32) {
    %c0_i32 = arith.constant 0 : i32
    %c0_i32_0 = arith.constant 0 : i32
    %c0_i32_1 = arith.constant 0 : i32
    return %c0_i32, %c0_i32_0 : i32, i32
  }
  func.func @transform_4(%arg0: i32) -> (i32, i32) {
    %c0_i32 = arith.constant 0 : i32
    %c0_i32_0 = arith.constant 0 : i32
    %c0_i32_1 = arith.constant 0 : i32
    return %c0_i32, %c0_i32_0 : i32, i32
  }
  func.func @transform_5(%arg0: i32) -> (i32, i32) {
    %c0_i32 = arith.constant 0 : i32
    %c0_i32_0 = arith.constant 0 : i32
    %c0_i32_1 = arith.constant 0 : i32
    return %c0_i32, %c0_i32_0 : i32, i32
  }
  func.func @transform_6(%arg0: i32) -> (i32, i32) {
    %c0_i32 = arith.constant 0 : i32
    %c0_i32_0 = arith.constant 0 : i32
    %c0_i32_1 = arith.constant 0 : i32
    return %c0_i32, %c0_i32_0 : i32, i32
  }
  func.func @transform_7(%arg0: i32) -> (i32, i32) {
    %c0_i32 = arith.constant 0 : i32
    %c0_i32_0 = arith.constant 0 : i32
    %c0_i32_1 = arith.constant 0 : i32
    return %c0_i32, %c0_i32_0 : i32, i32
  }
  func.func @transform_8(%arg0: i32) -> (i32, i32) {
    %c0_i32 = arith.constant 0 : i32
    %c0_i32_0 = arith.constant 0 : i32
    %c0_i32_1 = arith.constant 0 : i32
    return %c0_i32, %c0_i32_0 : i32, i32
  }
  func.func @transform_9(%arg0: i32) -> (i32, i32) {
    %c0_i32 = arith.constant 0 : i32
    %c0_i32_0 = arith.constant 0 : i32
    return %arg0, %c0_i32 : i32, i32
  }
}

</mosaic_0001>

<llo_original>
// kernel: vae_forward.1
$region0: #{vae_forward.1}
  #allocation0 [shape = 'u32[]', space=smem, size = 0x4, offset = 0x4, fixed_abs, tag = 'smem constant byte address 0x4 - core index']
  #allocation1 [shape = 'u32[144,128]{1,0:T(1,128)}', space=vmem, size = 0x12000, scoped, tag = 'internal scratch']
  %s0 = inlined_call_operand.vmem [shape: f32[8,3606], index: 0, kind: input, shape index: {}]
  %s1 = inlined_call_operand.hbm [shape: bf16[3606,512], index: 1, kind: input, shape index: {}]
  %s2 = inlined_call_operand.hbm [shape: f32[1,512], index: 2, kind: input, shape index: {}]
  %s3 = inlined_call_operand.hbm [shape: bf16[512,128], index: 3, kind: input, shape index: {}]
  %s4 = inlined_call_operand.hbm [shape: f32[1,128], index: 4, kind: input, shape index: {}]
  %s5 = inlined_call_operand.hbm [shape: bf16[128,512], index: 5, kind: input, shape index: {}]
  %s6 = inlined_call_operand.hbm [shape: f32[1,512], index: 6, kind: input, shape index: {}]
  %s7 = inlined_call_operand.hbm [shape: bf16[512,3712], index: 7, kind: input, shape index: {}]
  %s8 = inlined_call_operand.hbm [shape: f32[1,3712], index: 8, kind: input, shape index: {}]
  %s9 = inlined_call_operand.vmem [shape: f32[8,3712], index: 9, kind: output, shape index: {}]
  %s10 = sld [smem:[#allocation0]]
  $region78: #{vae_forward.1} parent=0
    _
  %s12 = ssub.s32 1, %s10
  %s13 = scalar_select 0, %s12, %s10
  $region1: #{vae_forward.1} parent=0
    #allocation2 [shape = 'u8[3694592]{0}', space=vmem, size = 0x386000, scoped, tag = 'input window, operand 1, single buffered']
    #allocation3 [shape = 's32[1]{0}', space=sflag, size = 0x4, scoped, tag = 'scoped memory for vae_forward.1']
    #allocation4 [shape = 'u8[2048]{0}', space=vmem, size = 0x800, scoped, tag = 'input window, operand 2, single buffered']
    #allocation5 [shape = 's32[1]{0}', space=sflag, size = 0x4, scoped, tag = 'scoped memory for vae_forward.1']
    #allocation6 [shape = 'u8[131072]{0}', space=vmem, size = 0x20000, scoped, tag = 'input window, operand 3, single buffered']
    #allocation7 [shape = 'u8[512]{0}', space=vmem, size = 0x400, scoped, tag = 'input window, operand 4, single buffered']
    #allocation8 [shape = 's32[1]{0}', space=sflag, size = 0x4, scoped, tag = 'scoped memory for vae_forward.1']
    #allocation9 [shape = 'u8[131072]{0}', space=vmem, size = 0x20000, scoped, tag = 'input window, operand 5, single buffered']
    #allocation10 [shape = 'u8[2048]{0}', space=vmem, size = 0x800, scoped, tag = 'input window, operand 6, single buffered']
    #allocation11 [shape = 's32[1]{0}', space=sflag, size = 0x4, scoped, tag = 'scoped memory for vae_forward.1']
    #allocation12 [shape = 'u8[3801088]{0}', space=vmem, size = 0x3a0000, scoped, tag = 'input window, operand 7, single buffered']
    #allocation13 [shape = 'u8[14848]{0}', space=vmem, size = 0x3c00, scoped, tag = 'input window, operand 8, single buffered']
    #allocation14 [shape = 's32[1]{0}', space=sflag, size = 0x4, scoped, tag = 'scoped memory for vae_forward.1']
    %14 = vsyncpa [#allocation3], 0
    %15 = vsyncpa [#allocation5], 0
    %16 = vsyncpa [#allocation8], 0
    %17 = vsyncpa [#allocation11], 0
    %18 = vsyncpa [#allocation14], 0
    // Predicated region
    $region2: #{vae_forward.1} parent=1 // pred_check
      _
    $region3: #{vae_forward.1} parent=1 // pred_check_branch
      %20 = sbr.rel (0) target = $region5
    $region4: #{vae_forward.1} parent=1 // pred_region
      _
    $region5: #{vae_forward.1} parent=1 // pred_fallthru
      _
    // Predicated region
    $region6: #{vae_forward.1} parent=1 // pred_check
      _
    $region7: #{vae_forward.1} parent=1 // pred_check_branch
      %22 = sbr.rel (0) target = $region9
    $region8: #{vae_forward.1} parent=1 // pred_region
      %s24 = ssub.s32 115456, 115456
      %25 = vsyncadd [#allocation3], %s24
      %s26 = sshll.u32 [#allocation2], 4
      %s27 = int_to_ptr.vmem [resolvable:$true] %s26
      %32 = dma.hbm_to_vmem [thread:$0]  %s1, 115456, %s27, [#allocation3], 256, 256, 16
    $region9: #{vae_forward.1} parent=1 // pred_fallthru
      _
    // Predicated region
    $region10: #{vae_forward.1} parent=1 // pred_check
      _
    $region11: #{vae_forward.1} parent=1 // pred_check_branch
      %34 = sbr.rel (0) target = $region13
    $region12: #{vae_forward.1} parent=1 // pred_region
      %s36 = ssub.s32 64, 64
      %37 = vsyncadd [#allocation5], %s36
      %s39 = sshll.u32 [#allocation4], 4
      %s40 = int_to_ptr.vmem [resolvable:$true] %s39
      %42 = dma.hbm_to_vmem [thread:$0]  %s2, 64, %s40, [#allocation5]
    $region13: #{vae_forward.1} parent=1 // pred_fallthru
      _
    // Predicated region
    $region14: #{vae_forward.1} parent=1 // pred_check
      _
    $region15: #{vae_forward.1} parent=1 // pred_check_branch
      %44 = sbr.rel (0) target = $region17
    $region16: #{vae_forward.1} parent=1 // pred_region
      %s46 = ssub.s32 4096, 4096
      %47 = vsyncadd [#allocation5], %s46
      %s48 = sshll.u32 [#allocation6], 4
      %s49 = int_to_ptr.vmem [resolvable:$true] %s48
      %54 = dma.hbm_to_vmem [thread:$0]  %s3, 4096, %s49, [#allocation5], 64, 64, 4
    $region17: #{vae_forward.1} parent=1 // pred_fallthru
      _
    // Predicated region
    $region18: #{vae_forward.1} parent=1 // pred_check
      _
    $region19: #{vae_forward.1} parent=1 // pred_check_branch
      %56 = sbr.rel (0) target = $region21
    $region20: #{vae_forward.1} parent=1 // pred_region
      %s58 = ssub.s32 16, 16
      %59 = vsyncadd [#allocation8], %s58
      %s61 = sshll.u32 [#allocation7], 4
      %s62 = int_to_ptr.vmem [resolvable:$true] %s61
      %64 = dma.hbm_to_vmem [thread:$0]  %s4, 16, %s62, [#allocation8]
    $region21: #{vae_forward.1} parent=1 // pred_fallthru
      _
    // Predicated region
    $region22: #{vae_forward.1} parent=1 // pred_check
      _
    $region23: #{vae_forward.1} parent=1 // pred_check_branch
      %66 = sbr.rel (0) target = $region25
    $region24: #{vae_forward.1} parent=1 // pred_region
      %s68 = ssub.s32 4096, 4096
      %69 = vsyncadd [#allocation8], %s68
      %s70 = sshll.u32 [#allocation9], 4
      %s71 = int_to_ptr.vmem [resolvable:$true] %s70
      %76 = dma.hbm_to_vmem [thread:$0]  %s5, 4096, %s71, [#allocation8], 256, 256, 16
    $region25: #{vae_forward.1} parent=1 // pred_fallthru
      _
    // Predicated region
    $region26: #{vae_forward.1} parent=1 // pred_check
      _
    $region27: #{vae_forward.1} parent=1 // pred_check_branch
      %78 = sbr.rel (0) target = $region29
    $region28: #{vae_forward.1} parent=1 // pred_region
      %s80 = ssub.s32 64, 64
      %81 = vsyncadd [#allocation11], %s80
      %s83 = sshll.u32 [#allocation10], 4
      %s84 = int_to_ptr.vmem [resolvable:$true] %s83
      %86 = dma.hbm_to_vmem [thread:$0]  %s6, 64, %s84, [#allocation11]
    $region29: #{vae_forward.1} parent=1 // pred_fallthru
      _
    // Predicated region
    $region30: #{vae_forward.1} parent=1 // pred_check
      _
    $region31: #{vae_forward.1} parent=1 // pred_check_branch
      %88 = sbr.rel (0) target = $region33
    $region32: #{vae_forward.1} parent=1 // pred_region
      %s90 = ssub.s32 118784, 118784
      %91 = vsyncadd [#allocation11], %s90
      %s92 = sshll.u32 [#allocation12], 4
      %s93 = int_to_ptr.vmem [resolvable:$true] %s92
      %98 = dma.hbm_to_vmem [thread:$0]  %s7, 118784, %s93, [#allocation11], 1856, 1856, 116
    $region33: #{vae_forward.1} parent=1 // pred_fallthru
      _
    // Predicated region
    $region34: #{vae_forward.1} parent=1 // pred_check
      _
    $region35: #{vae_forward.1} parent=1 // pred_check_branch
      %100 = sbr.rel (0) target = $region37
    $region36: #{vae_forward.1} parent=1 // pred_region
      %s102 = ssub.s32 464, 464
      %103 = vsyncadd [#allocation14], %s102
      %s105 = sshll.u32 [#allocation13], 4
      %s106 = int_to_ptr.vmem [resolvable:$true] %s105
      %108 = dma.hbm_to_vmem [thread:$0]  %s8, 464, %s106, [#allocation14]
    $region37: #{vae_forward.1} parent=1 // pred_fallthru
      _
    // Predicated region
    $region38: #{vae_forward.1} parent=1 // pred_check
      _
    $region39: #{vae_forward.1} parent=1 // pred_check_branch
      %110 = sbr.rel (0) target = $region41
    $region40: #{vae_forward.1} parent=1 // pred_region
      %111 = dma.done [#allocation3], 115456
    $region41: #{vae_forward.1} parent=1 // pred_fallthru
      _
    // Predicated region
    $region42: #{vae_forward.1} parent=1 // pred_check
      _
    $region43: #{vae_forward.1} parent=1 // pred_check_branch
      %113 = sbr.rel (0) target = $region45
    $region44: #{vae_forward.1} parent=1 // pred_region
      %114 = dma.done [#allocation5], 64
    $region45: #{vae_forward.1} parent=1 // pred_fallthru
      _
    // Predicated region
    $region46: #{vae_forward.1} parent=1 // pred_check
      _
    $region47: #{vae_forward.1} parent=1 // pred_check_branch
      %116 = sbr.rel (0) target = $region49
    $region48: #{vae_forward.1} parent=1 // pred_region
      %117 = dma.done [#allocation5], 4096
    $region49: #{vae_forward.1} parent=1 // pred_fallthru
      _
    // Predicated region
    $region50: #{vae_forward.1} parent=1 // pred_check
      _
    $region51: #{vae_forward.1} parent=1 // pred_check_branch
      %119 = sbr.rel (0) target = $region53
    $region52: #{vae_forward.1} parent=1 // pred_region
      %120 = dma.done [#allocation8], 16
    $region53: #{vae_forward.1} parent=1 // pred_fallthru
      _
    // Predicated region
    $region54: #{vae_forward.1} parent=1 // pred_check
      _
    $region55: #{vae_forward.1} parent=1 // pred_check_branch
      %122 = sbr.rel (0) target = $region57
    $region56: #{vae_forward.1} parent=1 // pred_region
      %123 = dma.done [#allocation8], 4096
    $region57: #{vae_forward.1} parent=1 // pred_fallthru
      _
    // Predicated region
    $region58: #{vae_forward.1} parent=1 // pred_check
      _
    $region59: #{vae_forward.1} parent=1 // pred_check_branch
      %125 = sbr.rel (0) target = $region61
    $region60: #{vae_forward.1} parent=1 // pred_region
      %126 = dma.done [#allocation11], 64
    $region61: #{vae_forward.1} parent=1 // pred_fallthru
      _
    // Predicated region
    $region62: #{vae_forward.1} parent=1 // pred_check
      _
    $region63: #{vae_forward.1} parent=1 // pred_check_branch
      %128 = sbr.rel (0) target = $region65
    $region64: #{vae_forward.1} parent=1 // pred_region
      %129 = dma.done [#allocation11], 118784
    $region65: #{vae_forward.1} parent=1 // pred_fallthru
      _
    // Predicated region
    $region66: #{vae_forward.1} parent=1 // pred_check
      _
    $region67: #{vae_forward.1} parent=1 // pred_check_branch
      %131 = sbr.rel (0) target = $region69
    $region68: #{vae_forward.1} parent=1 // pred_region
      %132 = dma.done [#allocation14], 464
    $region69: #{vae_forward.1} parent=1 // pred_fallthru
      _
    %v134 = vld [vmem:[%s0] sm:$0xff]
    %v135 = vld [vmem:[%s0 + $0x8] sm:$0xff]
    %v136 = vld [vmem:[%s0 + $0x10] sm:$0xff]
    %v137 = vld [vmem:[%s0 + $0x18] sm:$0xff]
    %v138 = vld [vmem:[%s0 + $0x20] sm:$0xff]
    %v139 = vld [vmem:[%s0 + $0x28] sm:$0xff]
    %v140 = vld [vmem:[%s0 + $0x30] sm:$0xff]
    %v141 = vld [vmem:[%s0 + $0x38] sm:$0xff]
    %v142 = vld [vmem:[%s0 + $0x40] sm:$0xff]
    %v143 = vld [vmem:[%s0 + $0x48] sm:$0xff]
    %v144 = vld [vmem:[%s0 + $0x50] sm:$0xff]
    %v145 = vld [vmem:[%s0 + $0x58] sm:$0xff]
    %v146 = vld [vmem:[%s0 + $0x60] sm:$0xff]
    %v147 = vld [vmem:[%s0 + $0x68] sm:$0xff]
    %v148 = vld [vmem:[%s0 + $0x70] sm:$0xff]
    %v149 = vld [vmem:[%s0 + $0x78] sm:$0xff]
    %v150 = vld [vmem:[%s0 + $0x80] sm:$0xff]
    %v151 = vld [vmem:[%s0 + $0x88] sm:$0xff]
    %v152 = vld [vmem:[%s0 + $0x90] sm:$0xff]
    %v153 = vld [vmem:[%s0 + $0x98] sm:$0xff]
    %v154 = vld [vmem:[%s0 + $0xa0] sm:$0xff]
    %v155 = vld [vmem:[%s0 + $0xa8] sm:$0xff]
    %v156 = vld [vmem:[%s0 + $0xb0] sm:$0xff]
    %v157 = vld [vmem:[%s0 + $0xb8] sm:$0xff]
    %v158 = vld [vmem:[%s0 + $0xc0] sm:$0xff]
    %v159 = vld [vmem:[%s0 + $0xc8] sm:$0xff]
    %v160 = vld [vmem:[%s0 + $0xd0] sm:$0xff]
    %v161 = vld [vmem:[%s0 + $0xd8] sm:$0xff]
    %v162 = vld [vmem:[%s0 + $0xe0] sm:$0xff]
    %v163 = vpack.c.bf16 %v134, %v134
    %v164 = vpack.c.bf16 %v135, %v135
    %v165 = vpack.c.bf16 %v136, %v136
    %v166 = vpack.c.bf16 %v137, %v137
    %v167 = vpack.c.bf16 %v138, %v138
    %v168 = vpack.c.bf16 %v139, %v139
    %v169 = vpack.c.bf16 %v140, %v140
    %v170 = vpack.c.bf16 %v141, %v141
    %v171 = vpack.c.bf16 %v142, %v142
    %v172 = vpack.c.bf16 %v143, %v143
    %v173 = vpack.c.bf16 %v144, %v144
    %v174 = vpack.c.bf16 %v145, %v145
    %v175 = vpack.c.bf16 %v146, %v146
    %v176 = vpack.c.bf16 %v147, %v147
    %v177 = vpack.c.bf16 %v148, %v148
    %v178 = vpack.c.bf16 %v149, %v149
    %v179 = vpack.c.bf16 %v150, %v150
    %v180 = vpack.c.bf16 %v151, %v151
    %v181 = vpack.c.bf16 %v152, %v152
    %v182 = vpack.c.bf16 %v153, %v153
    %v183 = vpack.c.bf16 %v154, %v154
    %v184 = vpack.c.bf16 %v155, %v155
    %v185 = vpack.c.bf16 %v156, %v156
    %v186 = vpack.c.bf16 %v157, %v157
    %v187 = vpack.c.bf16 %v158, %v158
    %v188 = vpack.c.bf16 %v159, %v159
    %v189 = vpack.c.bf16 %v160, %v160
    %v190 = vpack.c.bf16 %v161, %v161
    %v191 = vpack.c.bf16 %v162, %v162
    %v192 = vld [vmem:[#allocation2] sm:$0xff]
    %v193 = vld [vmem:[#allocation2 + $0x8] sm:$0xff]
    %v194 = vld [vmem:[#allocation2 + $0x10] sm:$0xff]
    %v195 = vld [vmem:[#allocation2 + $0x18] sm:$0xff]
    %v196 = vld [vmem:[#allocation2 + $0x20] sm:$0xff]
    %v197 = vld [vmem:[#allocation2 + $0x28] sm:$0xff]
    %v198 = vld [vmem:[#allocation2 + $0x30] sm:$0xff]
    %v199 = vld [vmem:[#allocation2 + $0x38] sm:$0xff]
    %v200 = vld [vmem:[#allocation2 + $0x40] sm:$0xff]
    %v201 = vld [vmem:[#allocation2 + $0x48] sm:$0xff]
    %v202 = vld [vmem:[#allocation2 + $0x50] sm:$0xff]
    %v203 = vld [vmem:[#allocation2 + $0x58] sm:$0xff]
    %v204 = vld [vmem:[#allocation2 + $0x60] sm:$0xff]
    %v205 = vld [vmem:[#allocation2 + $0x68] sm:$0xff]
    %v206 = vld [vmem:[#allocation2 + $0x70] sm:$0xff]
    %v207 = vld [vmem:[#allocation2 + $0x78] sm:$0xff]
    %v208 = vld [vmem:[#allocation2 + $0x80] sm:$0xff]
    %v209 = vld [vmem:[#allocation2 + $0x88] sm:$0xff]
    %v210 = vld [vmem:[#allocation2 + $0x90] sm:$0xff]
    %v211 = vld [vmem:[#allocation2 + $0x98] sm:$0xff]
    %v212 = vld [vmem:[#allocation2 + $0xa0] sm:$0xff]
    %v213 = vld [vmem:[#allocation2 + $0xa8] sm:$0xff]
    %v214 = vld [vmem:[#allocation2 + $0xb0] sm:$0xff]
    %v215 = vld [vmem:[#allocation2 + $0xb8] sm:$0xff]
    %v216 = vld [vmem:[#allocation2 + $0xc0] sm:$0xff]
    %v217 = vld [vmem:[#allocation2 + $0xc8] sm:$0xff]
    %v218 = vld [vmem:[#allocation2 + $0xd0] sm:$0xff]
    %v219 = vld [vmem:[#allocation2 + $0xd8] sm:$0xff]
    %v220 = vld [vmem:[#allocation2 + $0xe0] sm:$0xff]
    %v221 = vld [vmem:[#allocation2 + $0xe8] sm:$0xff]
    %v222 = vld [vmem:[#allocation2 + $0xf0] sm:$0xff]
    %v223 = vld [vmem:[#allocation2 + $0xf8] sm:$0xff]
    %v224 = vld [vmem:[#allocation2 + $0x100] sm:$0xff]
    %v225 = vld [vmem:[#allocation2 + $0x108] sm:$0xff]
    %v226 = vld [vmem:[#allocation2 + $0x110] sm:$0xff]
    %v227 = vld [vmem:[#allocation2 + $0x118] sm:$0xff]
    %v228 = vld [vmem:[#allocation2 + $0x120] sm:$0xff]
    %v229 = vld [vmem:[#allocation2 + $0x128] sm:$0xff]
    %v230 = vld [vmem:[#allocation2 + $0x130] sm:$0xff]
    %v231 = vld [vmem:[#allocation2 + $0x138] sm:$0xff]
    %v232 = vld [vmem:[#allocation2 + $0x140] sm:$0xff]
    %v233 = vld [vmem:[#allocation2 + $0x148] sm:$0xff]
    %v234 = vld [vmem:[#allocation2 + $0x150] sm:$0xff]
    %v235 = vld [vmem:[#allocation2 + $0x158] sm:$0xff]
    %v236 = vld [vmem:[#allocation2 + $0x160] sm:$0xff]
    %v237 = vld [vmem:[#allocation2 + $0x168] sm:$0xff]
    %v238 = vld [vmem:[#allocation2 + $0x170] sm:$0xff]
    %v239 = vld [vmem:[#allocation2 + $0x178] sm:$0xff]
    %v240 = vld [vmem:[#allocation2 + $0x180] sm:$0xff]
    %v241 = vld [vmem:[#allocation2 + $0x188] sm:$0xff]
    %v242 = vld [vmem:[#allocation2 + $0x190] sm:$0xff]
    %v243 = vld [vmem:[#allocation2 + $0x198] sm:$0xff]
    %v244 = vld [vmem:[#allocation2 + $0x1a0] sm:$0xff]
    %v245 = vld [vmem:[#allocation2 + $0x1a8] sm:$0xff]
    %v246 = vld [vmem:[#allocation2 + $0x1b0] sm:$0xff]
    %v247 = vld [vmem:[#allocation2 + $0x1b8] sm:$0xff]
    %v248 = vld [vmem:[#allocation2 + $0x1c0] sm:$0xff]
    %v249 = vld [vmem:[#allocation2 + $0x1c8] sm:$0xff]
    %v250 = vld [vmem:[#allocation2 + $0x1d0] sm:$0xff]
    %v251 = vld [vmem:[#allocation2 + $0x1d8] sm:$0xff]
    %v252 = vld [vmem:[#allocation2 + $0x1e0] sm:$0xff]
    %v253 = vld [vmem:[#allocation2 + $0x1e8] sm:$0xff]
    %v254 = vld [vmem:[#allocation2 + $0x1f0] sm:$0xff]
    %v255 = vld [vmem:[#allocation2 + $0x1f8] sm:$0xff]
    %v256 = vld [vmem:[#allocation2 + $0x200] sm:$0xff]
    %v257 = vld [vmem:[#allocation2 + $0x208] sm:$0xff]
    %v258 = vld [vmem:[#allocation2 + $0x210] sm:$0xff]
    %v259 = vld [vmem:[#allocation2 + $0x218] sm:$0xff]
    %v260 = vld [vmem:[#allocation2 + $0x220] sm:$0xff]
    %v261 = vld [vmem:[#allocation2 + $0x228] sm:$0xff]
    %v262 = vld [vmem:[#allocation2 + $0x230] sm:$0xff]
    %v263 = vld [vmem:[#allocation2 + $0x238] sm:$0xff]
    %v264 = vld [vmem:[#allocation2 + $0x240] sm:$0xff]
    %v265 = vld [vmem:[#allocation2 + $0x248] sm:$0xff]
    %v266 = vld [vmem:[#allocation2 + $0x250] sm:$0xff]
    %v267 = vld [vmem:[#allocation2 + $0x258] sm:$0xff]
    %v268 = vld [vmem:[#allocation2 + $0x260] sm:$0xff]
    %v269 = vld [vmem:[#allocation2 + $0x268] sm:$0xff]
    %v270 = vld [vmem:[#allocation2 + $0x270] sm:$0xff]
    %v271 = vld [vmem:[#allocation2 + $0x278] sm:$0xff]
    %v272 = vld [vmem:[#allocation2 + $0x280] sm:$0xff]
    %v273 = vld [vmem:[#allocation2 + $0x288] sm:$0xff]
    %v274 = vld [vmem:[#allocation2 + $0x290] sm:$0xff]
    %v275 = vld [vmem:[#allocation2 + $0x298] sm:$0xff]
    %v276 = vld [vmem:[#allocation2 + $0x2a0] sm:$0xff]
    %v277 = vld [vmem:[#allocation2 + $0x2a8] sm:$0xff]
    %v278 = vld [vmem:[#allocation2 + $0x2b0] sm:$0xff]
    %v279 = vld [vmem:[#allocation2 + $0x2b8] sm:$0xff]
    %v280 = vld [vmem:[#allocation2 + $0x2c0] sm:$0xff]
    %v281 = vld [vmem:[#allocation2 + $0x2c8] sm:$0xff]
    %v282 = vld [vmem:[#allocation2 + $0x2d0] sm:$0xff]
    %v283 = vld [vmem:[#allocation2 + $0x2d8] sm:$0xff]
    %v284 = vld [vmem:[#allocation2 + $0x2e0] sm:$0xff]
    %v285 = vld [vmem:[#allocation2 + $0x2e8] sm:$0xff]
    %v286 = vld [vmem:[#allocation2 + $0x2f0] sm:$0xff]
    %v287 = vld [vmem:[#allocation2 + $0x2f8] sm:$0xff]
    %v288 = vld [vmem:[#allocation2 + $0x300] sm:$0xff]
    %v289 = vld [vmem:[#allocation2 + $0x308] sm:$0xff]
    %v290 = vld [vmem:[#allocation2 + $0x310] sm:$0xff]
    %v291 = vld [vmem:[#allocation2 + $0x318] sm:$0xff]
    %v292 = vld [vmem:[#allocation2 + $0x320] sm:$0xff]
    %v293 = vld [vmem:[#allocation2 + $0x328] sm:$0xff]
    %v294 = vld [vmem:[#allocation2 + $0x330] sm:$0xff]
    %v295 = vld [vmem:[#allocation2 + $0x338] sm:$0xff]
    %v296 = vld [vmem:[#allocation2 + $0x340] sm:$0xff]
    %v297 = vld [vmem:[#allocation2 + $0x348] sm:$0xff]
    %v298 = vld [vmem:[#allocation2 + $0x350] sm:$0xff]
    %v299 = vld [vmem:[#allocation2 + $0x358] sm:$0xff]
    %v300 = vld [vmem:[#allocation2 + $0x360] sm:$0xff]
    %v301 = vld [vmem:[#allocation2 + $0x368] sm:$0xff]
    %v302 = vld [vmem:[#allocation2 + $0x370] sm:$0xff]
    %v303 = vld [vmem:[#allocation2 + $0x378] sm:$0xff]
    %v304 = vld [vmem:[#allocation2 + $0x380] sm:$0xff]
    %v305 = vld [vmem:[#allocation2 + $0x388] sm:$0xff]
    %v306 = vld [vmem:[#allocation2 + $0x390] sm:$0xff]
    %v307 = vld [vmem:[#allocation2 + $0x398] sm:$0xff]
    %v308 = vld [vmem:[#allocation2 + $0x3a0] sm:$0xff]
    %v309 = vld [vmem:[#allocation2 + $0x3a8] sm:$0xff]
    %v310 = vld [vmem:[#allocation2 + $0x3b0] sm:$0xff]
    %v311 = vld [vmem:[#allocation2 + $0x3b8] sm:$0xff]
    %v312 = vld [vmem:[#allocation2 + $0x3c0] sm:$0xff]
    %v313 = vld [vmem:[#allocation2 + $0x3c8] sm:$0xff]
    %v314 = vld [vmem:[#allocation2 + $0x3d0] sm:$0xff]
    %v315 = vld [vmem:[#allocation2 + $0x3d8] sm:$0xff]
    %v316 = vld [vmem:[#allocation2 + $0x3e0] sm:$0xff]
    %v317 = vld [vmem:[#allocation2 + $0x3e8] sm:$0xff]
    %v318 = vld [vmem:[#allocation2 + $0x3f0] sm:$0xff]
    %v319 = vld [vmem:[#allocation2 + $0x3f8] sm:$0xff]
    %v320 = vld [vmem:[#allocation2 + $0x400] sm:$0xff]
    %v321 = vld [vmem:[#allocation2 + $0x408] sm:$0xff]
    %v322 = vld [vmem:[#allocation2 + $0x410] sm:$0xff]
    %v323 = vld [vmem:[#allocation2 + $0x418] sm:$0xff]
    %v324 = vld [vmem:[#allocation2 + $0x420] sm:$0xff]
    %v325 = vld [vmem:[#allocation2 + $0x428] sm:$0xff]
    %v326 = vld [vmem:[#allocation2 + $0x430] sm:$0xff]
    %v327 = vld [vmem:[#allocation2 + $0x438] sm:$0xff]
    %v328 = vld [vmem:[#allocation2 + $0x440] sm:$0xff]
    %v329 = vld [vmem:[#allocation2 + $0x448] sm:$0xff]
    %v330 = vld [vmem:[#allocation2 + $0x450] sm:$0xff]
    %v331 = vld [vmem:[#allocation2 + $0x458] sm:$0xff]
    %v332 = vld [vmem:[#allocation2 + $0x460] sm:$0xff]
    %v333 = vld [vmem:[#allocation2 + $0x468] sm:$0xff]
    %v334 = vld [vmem:[#allocation2 + $0x470] sm:$0xff]
    %v335 = vld [vmem:[#allocation2 + $0x478] sm:$0xff]
    %v336 = vld [vmem:[#allocation2 + $0x480] sm:$0xff]
    %v337 = vld [vmem:[#allocation2 + $0x488] sm:$0xff]
    %v338 = vld [vmem:[#allocation2 + $0x490] sm:$0xff]
    %v339 = vld [vmem:[#allocation2 + $0x498] sm:$0xff]
    %v340 = vld [vmem:[#allocation2 + $0x4a0] sm:$0xff]
    %v341 = vld [vmem:[#allocation2 + $0x4a8] sm:$0xff]
    %v342 = vld [vmem:[#allocation2 + $0x4b0] sm:$0xff]
    %v343 = vld [vmem:[#allocation2 + $0x4b8] sm:$0xff]
    %v344 = vld [vmem:[#allocation2 + $0x4c0] sm:$0xff]
    %v345 = vld [vmem:[#allocation2 + $0x4c8] sm:$0xff]
    %v346 = vld [vmem:[#allocation2 + $0x4d0] sm:$0xff]
    %v347 = vld [vmem:[#allocation2 + $0x4d8] sm:$0xff]
    %v348 = vld [vmem:[#allocation2 + $0x4e0] sm:$0xff]
    %v349 = vld [vmem:[#allocation2 + $0x4e8] sm:$0xff]
    %v350 = vld [vmem:[#allocation2 + $0x4f0] sm:$0xff]
    %v351 = vld [vmem:[#allocation2 + $0x4f8] sm:$0xff]
    %v352 = vld [vmem:[#allocation2 + $0x500] sm:$0xff]
    %v353 = vld [vmem:[#allocation2 + $0x508] sm:$0xff]
    %v354 = vld [vmem:[#allocation2 + $0x510] sm:$0xff]
    %v355 = vld [vmem:[#allocation2 + $0x518] sm:$0xff]
    %v356 = vld [vmem:[#allocation2 + $0x520] sm:$0xff]
    %v357 = vld [vmem:[#allocation2 + $0x528] sm:$0xff]
    %v358 = vld [vmem:[#allocation2 + $0x530] sm:$0xff]
    %v359 = vld [vmem:[#allocation2 + $0x538] sm:$0xff]
    %v360 = vld [vmem:[#allocation2 + $0x540] sm:$0xff]
    %v361 = vld [vmem:[#allocation2 + $0x548] sm:$0xff]
    %v362 = vld [vmem:[#allocation2 + $0x550] sm:$0xff]
    %v363 = vld [vmem:[#allocation2 + $0x558] sm:$0xff]
    %v364 = vld [vmem:[#allocation2 + $0x560] sm:$0xff]
    %v365 = vld [vmem:[#allocation2 + $0x568] sm:$0xff]
    %v366 = vld [vmem:[#allocation2 + $0x570] sm:$0xff]
    %v367 = vld [vmem:[#allocation2 + $0x578] sm:$0xff]
    %v368 = vld [vmem:[#allocation2 + $0x580] sm:$0xff]
    %v369 = vld [vmem:[#allocation2 + $0x588] sm:$0xff]
    %v370 = vld [vmem:[#allocation2 + $0x590] sm:$0xff]
    %v371 = vld [vmem:[#allocation2 + $0x598] sm:$0xff]
    %v372 = vld [vmem:[#allocation2 + $0x5a0] sm:$0xff]
    %v373 = vld [vmem:[#allocation2 + $0x5a8] sm:$0xff]
    %v374 = vld [vmem:[#allocation2 + $0x5b0] sm:$0xff]
    %v375 = vld [vmem:[#allocation2 + $0x5b8] sm:$0xff]
    %v376 = vld [vmem:[#allocation2 + $0x5c0] sm:$0xff]
    %v377 = vld [vmem:[#allocation2 + $0x5c8] sm:$0xff]
    %v378 = vld [vmem:[#allocation2 + $0x5d0] sm:$0xff]
    %v379 = vld [vmem:[#allocation2 + $0x5d8] sm:$0xff]
    %v380 = vld [vmem:[#allocation2 + $0x5e0] sm:$0xff]
    %v381 = vld [vmem:[#allocation2 + $0x5e8] sm:$0xff]
    %v382 = vld [vmem:[#allocation2 + $0x5f0] sm:$0xff]
    %v383 = vld [vmem:[#allocation2 + $0x5f8] sm:$0xff]
    %v384 = vld [vmem:[#allocation2 + $0x600] sm:$0xff]
    %v385 = vld [vmem:[#allocation2 + $0x608] sm:$0xff]
    %v386 = vld [vmem:[#allocation2 + $0x610] sm:$0xff]
    %v387 = vld [vmem:[#allocation2 + $0x618] sm:$0xff]
    %v388 = vld [vmem:[#allocation2 + $0x620] sm:$0xff]
    %v389 = vld [vmem:[#allocation2 + $0x628] sm:$0xff]
    %v390 = vld [vmem:[#allocation2 + $0x630] sm:$0xff]
    %v391 = vld [vmem:[#allocation2 + $0x638] sm:$0xff]
    %v392 = vld [vmem:[#allocation2 + $0x640] sm:$0xff]
    %v393 = vld [vmem:[#allocation2 + $0x648] sm:$0xff]
    %v394 = vld [vmem:[#allocation2 + $0x650] sm:$0xff]
    %v395 = vld [vmem:[#allocation2 + $0x658] sm:$0xff]
    %v396 = vld [vmem:[#allocation2 + $0x660] sm:$0xff]
    %v397 = vld [vmem:[#allocation2 + $0x668] sm:$0xff]
    %v398 = vld [vmem:[#allocation2 + $0x670] sm:$0xff]
    %v399 = vld [vmem:[#allocation2 + $0x678] sm:$0xff]
    %v400 = vld [vmem:[#allocation2 + $0x680] sm:$0xff]
    %v401 = vld [vmem:[#allocation2 + $0x688] sm:$0xff]
    %v402 = vld [vmem:[#allocation2 + $0x690] sm:$0xff]
    %v403 = vld [vmem:[#allocation2 + $0x698] sm:$0xff]
    %v404 = vld [vmem:[#allocation2 + $0x6a0] sm:$0xff]
    %v405 = vld [vmem:[#allocation2 + $0x6a8] sm:$0xff]
    %v406 = vld [vmem:[#allocation2 + $0x6b0] sm:$0xff]
    %v407 = vld [vmem:[#allocation2 + $0x6b8] sm:$0xff]
    %v408 = vld [vmem:[#allocation2 + $0x6c0] sm:$0xff]
    %v409 = vld [vmem:[#allocation2 + $0x6c8] sm:$0xff]
    %v410 = vld [vmem:[#allocation2 + $0x6d0] sm:$0xff]
    %v411 = vld [vmem:[#allocation2 + $0x6d8] sm:$0xff]
    %v412 = vld [vmem:[#allocation2 + $0x6e0] sm:$0xff]
    %v413 = vld [vmem:[#allocation2 + $0x6e8] sm:$0xff]
    %v414 = vld [vmem:[#allocation2 + $0x6f0] sm:$0xff]
    %v415 = vld [vmem:[#allocation2 + $0x6f8] sm:$0xff]
    %v416 = vld [vmem:[#allocation2 + $0x700] sm:$0xff]
    %v417 = vld [vmem:[#allocation2 + $0x708] sm:$0xff]
    %v418 = vld [vmem:[#allocation2 + $0x710] sm:$0xff]
    %v419 = vld [vmem:[#allocation2 + $0x718] sm:$0xff]
    %v420 = vld [vmem:[#allocation2 + $0x720] sm:$0xff]
    %v421 = vld [vmem:[#allocation2 + $0x728] sm:$0xff]
    %v422 = vld [vmem:[#allocation2 + $0x730] sm:$0xff]
    %v423 = vld [vmem:[#allocation2 + $0x738] sm:$0xff]
    %v424 = vld [vmem:[#allocation2 + $0x740] sm:$0xff]
    %v425 = vld [vmem:[#allocation2 + $0x748] sm:$0xff]
    %v426 = vld [vmem:[#allocation2 + $0x750] sm:$0xff]
    %v427 = vld [vmem:[#allocation2 + $0x758] sm:$0xff]
    %v428 = vld [vmem:[#allocation2 + $0x760] sm:$0xff]
    %v429 = vld [vmem:[#allocation2 + $0x768] sm:$0xff]
    %v430 = vld [vmem:[#allocation2 + $0x770] sm:$0xff]
    %v431 = vld [vmem:[#allocation2 + $0x778] sm:$0xff]
    %v432 = vld [vmem:[#allocation2 + $0x780] sm:$0xff]
    %v433 = vld [vmem:[#allocation2 + $0x788] sm:$0xff]
    %v434 = vld [vmem:[#allocation2 + $0x790] sm:$0xff]
    %v435 = vld [vmem:[#allocation2 + $0x798] sm:$0xff]
    %v436 = vld [vmem:[#allocation2 + $0x7a0] sm:$0xff]
    %v437 = vld [vmem:[#allocation2 + $0x7a8] sm:$0xff]
    %v438 = vld [vmem:[#allocation2 + $0x7b0] sm:$0xff]
    %v439 = vld [vmem:[#allocation2 + $0x7b8] sm:$0xff]
    %v440 = vld [vmem:[#allocation2 + $0x7c0] sm:$0xff]
    %v441 = vld [vmem:[#allocation2 + $0x7c8] sm:$0xff]
    %v442 = vld [vmem:[#allocation2 + $0x7d0] sm:$0xff]
    %v443 = vld [vmem:[#allocation2 + $0x7d8] sm:$0xff]
    %v444 = vld [vmem:[#allocation2 + $0x7e0] sm:$0xff]
    %v445 = vld [vmem:[#allocation2 + $0x7e8] sm:$0xff]
    %v446 = vld [vmem:[#allocation2 + $0x7f0] sm:$0xff]
    %v447 = vld [vmem:[#allocation2 + $0x7f8] sm:$0xff]
    %v448 = vld [vmem:[#allocation2 + $0x800] sm:$0xff]
    %v449 = vld [vmem:[#allocation2 + $0x808] sm:$0xff]
    %v450 = vld [vmem:[#allocation2 + $0x810] sm:$0xff]
    %v451 = vld [vmem:[#allocation2 + $0x818] sm:$0xff]
    %v452 = vld [vmem:[#allocation2 + $0x820] sm:$0xff]
    %v453 = vld [vmem:[#allocation2 + $0x828] sm:$0xff]
    %v454 = vld [vmem:[#allocation2 + $0x830] sm:$0xff]
    %v455 = vld [vmem:[#allocation2 + $0x838] sm:$0xff]
    %v456 = vld [vmem:[#allocation2 + $0x840] sm:$0xff]
    %v457 = vld [vmem:[#allocation2 + $0x848] sm:$0xff]
    %v458 = vld [vmem:[#allocation2 + $0x850] sm:$0xff]
    %v459 = vld [vmem:[#allocation2 + $0x858] sm:$0xff]
    %v460 = vld [vmem:[#allocation2 + $0x860] sm:$0xff]
    %v461 = vld [vmem:[#allocation2 + $0x868] sm:$0xff]
    %v462 = vld [vmem:[#allocation2 + $0x870] sm:$0xff]
    %v463 = vld [vmem:[#allocation2 + $0x878] sm:$0xff]
    %v464 = vld [vmem:[#allocation2 + $0x880] sm:$0xff]
    %v465 = vld [vmem:[#allocation2 + $0x888] sm:$0xff]
    %v466 = vld [vmem:[#allocation2 + $0x890] sm:$0xff]
    %v467 = vld [vmem:[#allocation2 + $0x898] sm:$0xff]
    %v468 = vld [vmem:[#allocation2 + $0x8a0] sm:$0xff]
    %v469 = vld [vmem:[#allocation2 + $0x8a8] sm:$0xff]
    %v470 = vld [vmem:[#allocation2 + $0x8b0] sm:$0xff]
    %v471 = vld [vmem:[#allocation2 + $0x8b8] sm:$0xff]
    %v472 = vld [vmem:[#allocation2 + $0x8c0] sm:$0xff]
    %v473 = vld [vmem:[#allocation2 + $0x8c8] sm:$0xff]
    %v474 = vld [vmem:[#allocation2 + $0x8d0] sm:$0xff]
    %v475 = vld [vmem:[#allocation2 + $0x8d8] sm:$0xff]
    %v476 = vld [vmem:[#allocation2 + $0x8e0] sm:$0xff]
    %v477 = vld [vmem:[#allocation2 + $0x8e8] sm:$0xff]
    %v478 = vld [vmem:[#allocation2 + $0x8f0] sm:$0xff]
    %v479 = vld [vmem:[#allocation2 + $0x8f8] sm:$0xff]
    %v480 = vld [vmem:[#allocation2 + $0x900] sm:$0xff]
    %v481 = vld [vmem:[#allocation2 + $0x908] sm:$0xff]
    %v482 = vld [vmem:[#allocation2 + $0x910] sm:$0xff]
    %v483 = vld [vmem:[#allocation2 + $0x918] sm:$0xff]
    %v484 = vld [vmem:[#allocation2 + $0x920] sm:$0xff]
    %v485 = vld [vmem:[#allocation2 + $0x928] sm:$0xff]
    %v486 = vld [vmem:[#allocation2 + $0x930] sm:$0xff]
    %v487 = vld [vmem:[#allocation2 + $0x938] sm:$0xff]
    %v488 = vld [vmem:[#allocation2 + $0x940] sm:$0xff]
    %v489 = vld [vmem:[#allocation2 + $0x948] sm:$0xff]
    %v490 = vld [vmem:[#allocation2 + $0x950] sm:$0xff]
    %v491 = vld [vmem:[#allocation2 + $0x958] sm:$0xff]
    %v492 = vld [vmem:[#allocation2 + $0x960] sm:$0xff]
    %v493 = vld [vmem:[#allocation2 + $0x968] sm:$0xff]
    %v494 = vld [vmem:[#allocation2 + $0x970] sm:$0xff]
    %v495 = vld [vmem:[#allocation2 + $0x978] sm:$0xff]
    %v496 = vld [vmem:[#allocation2 + $0x980] sm:$0xff]
    %v497 = vld [vmem:[#allocation2 + $0x988] sm:$0xff]
    %v498 = vld [vmem:[#allocation2 + $0x990] sm:$0xff]
    %v499 = vld [vmem:[#allocation2 + $0x998] sm:$0xff]
    %v500 = vld [vmem:[#allocation2 + $0x9a0] sm:$0xff]
    %v501 = vld [vmem:[#allocation2 + $0x9a8] sm:$0xff]
    %v502 = vld [vmem:[#allocation2 + $0x9b0] sm:$0xff]
    %v503 = vld [vmem:[#allocation2 + $0x9b8] sm:$0xff]
    %v504 = vld [vmem:[#allocation2 + $0x9c0] sm:$0xff]
    %v505 = vld [vmem:[#allocation2 + $0x9c8] sm:$0xff]
    %v506 = vld [vmem:[#allocation2 + $0x9d0] sm:$0xff]
    %v507 = vld [vmem:[#allocation2 + $0x9d8] sm:$0xff]
    %v508 = vld [vmem:[#allocation2 + $0x9e0] sm:$0xff]
    %v509 = vld [vmem:[#allocation2 + $0x9e8] sm:$0xff]
    %v510 = vld [vmem:[#allocation2 + $0x9f0] sm:$0xff]
    %v511 = vld [vmem:[#allocation2 + $0x9f8] sm:$0xff]
    %v512 = vld [vmem:[#allocation2 + $0xa00] sm:$0xff]
    %v513 = vld [vmem:[#allocation2 + $0xa08] sm:$0xff]
    %v514 = vld [vmem:[#allocation2 + $0xa10] sm:$0xff]
    %v515 = vld [vmem:[#allocation2 + $0xa18] sm:$0xff]
    %v516 = vld [vmem:[#allocation2 + $0xa20] sm:$0xff]
    %v517 = vld [vmem:[#allocation2 + $0xa28] sm:$0xff]
    %v518 = vld [vmem:[#allocation2 + $0xa30] sm:$0xff]
    %v519 = vld [vmem:[#allocation2 + $0xa38] sm:$0xff]
    %v520 = vld [vmem:[#allocation2 + $0xa40] sm:$0xff]
    %v521 = vld [vmem:[#allocation2 + $0xa48] sm:$0xff]
    %v522 = vld [vmem:[#allocation2 + $0xa50] sm:$0xff]
    %v523 = vld [vmem:[#allocation2 + $0xa58] sm:$0xff]
    %v524 = vld [vmem:[#allocation2 + $0xa60] sm:$0xff]
    %v525 = vld [vmem:[#allocation2 + $0xa68] sm:$0xff]
    %v526 = vld [vmem:[#allocation2 + $0xa70] sm:$0xff]
    %v527 = vld [vmem:[#allocation2 + $0xa78] sm:$0xff]
    %v528 = vld [vmem:[#allocation2 + $0xa80] sm:$0xff]
    %v529 = vld [vmem:[#allocation2 + $0xa88] sm:$0xff]
    %v530 = vld [vmem:[#allocation2 + $0xa90] sm:$0xff]
    %v531 = vld [vmem:[#allocation2 + $0xa98] sm:$0xff]
    %v532 = vld [vmem:[#allocation2 + $0xaa0] sm:$0xff]
    %v533 = vld [vmem:[#allocation2 + $0xaa8] sm:$0xff]
    %v534 = vld [vmem:[#allocation2 + $0xab0] sm:$0xff]
    %v535 = vld [vmem:[#allocation2 + $0xab8] sm:$0xff]
    %v536 = vld [vmem:[#allocation2 + $0xac0] sm:$0xff]
    %v537 = vld [vmem:[#allocation2 + $0xac8] sm:$0xff]
    %v538 = vld [vmem:[#allocation2 + $0xad0] sm:$0xff]
    %v539 = vld [vmem:[#allocation2 + $0xad8] sm:$0xff]
    %v540 = vld [vmem:[#allocation2 + $0xae0] sm:$0xff]
    %v541 = vld [vmem:[#allocation2 + $0xae8] sm:$0xff]
    %v542 = vld [vmem:[#allocation2 + $0xaf0] sm:$0xff]
    %v543 = vld [vmem:[#allocation2 + $0xaf8] sm:$0xff]
    %v544 = vld [vmem:[#allocation2 + $0xb00] sm:$0xff]
    %v545 = vld [vmem:[#allocation2 + $0xb08] sm:$0xff]
    %v546 = vld [vmem:[#allocation2 + $0xb10] sm:$0xff]
    %v547 = vld [vmem:[#allocation2 + $0xb18] sm:$0xff]
    %v548 = vld [vmem:[#allocation2 + $0xb20] sm:$0xff]
    %v549 = vld [vmem:[#allocation2 + $0xb28] sm:$0xff]
    %v550 = vld [vmem:[#allocation2 + $0xb30] sm:$0xff]
    %v551 = vld [vmem:[#allocation2 + $0xb38] sm:$0xff]
    %v552 = vld [vmem:[#allocation2 + $0xb40] sm:$0xff]
    %v553 = vld [vmem:[#allocation2 + $0xb48] sm:$0xff]
    %v554 = vld [vmem:[#allocation2 + $0xb50] sm:$0xff]
    %v555 = vld [vmem:[#allocation2 + $0xb58] sm:$0xff]
    %v556 = vld [vmem:[#allocation2 + $0xb60] sm:$0xff]
    %v557 = vld [vmem:[#allocation2 + $0xb68] sm:$0xff]
    %v558 = vld [vmem:[#allocation2 + $0xb70] sm:$0xff]
    %v559 = vld [vmem:[#allocation2 + $0xb78] sm:$0xff]
    %v560 = vld [vmem:[#allocation2 + $0xb80] sm:$0xff]
    %v561 = vld [vmem:[#allocation2 + $0xb88] sm:$0xff]
    %v562 = vld [vmem:[#allocation2 + $0xb90] sm:$0xff]
    %v563 = vld [vmem:[#allocation2 + $0xb98] sm:$0xff]
    %v564 = vld [vmem:[#allocation2 + $0xba0] sm:$0xff]
    %v565 = vld [vmem:[#allocation2 + $0xba8] sm:$0xff]
    %v566 = vld [vmem:[#allocation2 + $0xbb0] sm:$0xff]
    %v567 = vld [vmem:[#allocation2 + $0xbb8] sm:$0xff]
    %v568 = vld [vmem:[#allocation2 + $0xbc0] sm:$0xff]
    %v569 = vld [vmem:[#allocation2 + $0xbc8] sm:$0xff]
    %v570 = vld [vmem:[#allocation2 + $0xbd0] sm:$0xff]
    %v571 = vld [vmem:[#allocation2 + $0xbd8] sm:$0xff]
    %v572 = vld [vmem:[#allocation2 + $0xbe0] sm:$0xff]
    %v573 = vld [vmem:[#allocation2 + $0xbe8] sm:$0xff]
    %v574 = vld [vmem:[#allocation2 + $0xbf0] sm:$0xff]
    %v575 = vld [vmem:[#allocation2 + $0xbf8] sm:$0xff]
    %v576 = vld [vmem:[#allocation2 + $0xc00] sm:$0xff]
    %v577 = vld [vmem:[#allocation2 + $0xc08] sm:$0xff]
    %v578 = vld [vmem:[#allocation2 + $0xc10] sm:$0xff]
    %v579 = vld [vmem:[#allocation2 + $0xc18] sm:$0xff]
    %v580 = vld [vmem:[#allocation2 + $0xc20] sm:$0xff]
    %v581 = vld [vmem:[#allocation2 + $0xc28] sm:$0xff]
    %v582 = vld [vmem:[#allocation2 + $0xc30] sm:$0xff]
    %v583 = vld [vmem:[#allocation2 + $0xc38] sm:$0xff]
    %v584 = vld [vmem:[#allocation2 + $0xc40] sm:$0xff]
    %v585 = vld [vmem:[#allocation2 + $0xc48] sm:$0xff]
    %v586 = vld [vmem:[#allocation2 + $0xc50] sm:$0xff]
    %v587 = vld [vmem:[#allocation2 + $0xc58] sm:$0xff]
    %v588 = vld [vmem:[#allocation2 + $0xc60] sm:$0xff]
    %v589 = vld [vmem:[#allocation2 + $0xc68] sm:$0xff]
    %v590 = vld [vmem:[#allocation2 + $0xc70] sm:$0xff]
    %v591 = vld [vmem:[#allocation2 + $0xc78] sm:$0xff]
    %v592 = vld [vmem:[#allocation2 + $0xc80] sm:$0xff]
    %v593 = vld [vmem:[#allocation2 + $0xc88] sm:$0xff]
    %v594 = vld [vmem:[#allocation2 + $0xc90] sm:$0xff]
    %v595 = vld [vmem:[#allocation2 + $0xc98] sm:$0xff]
    %v596 = vld [vmem:[#allocation2 + $0xca0] sm:$0xff]
    %v597 = vld [vmem:[#allocation2 + $0xca8] sm:$0xff]
    %v598 = vld [vmem:[#allocation2 + $0xcb0] sm:$0xff]
    %v599 = vld [vmem:[#allocation2 + $0xcb8] sm:$0xff]
    %v600 = vld [vmem:[#allocation2 + $0xcc0] sm:$0xff]
    %v601 = vld [vmem:[#allocation2 + $0xcc8] sm:$0xff]
    %v602 = vld [vmem:[#allocation2 + $0xcd0] sm:$0xff]
    %v603 = vld [vmem:[#allocation2 + $0xcd8] sm:$0xff]
    %v604 = vld [vmem:[#allocation2 + $0xce0] sm:$0xff]
    %v605 = vld [vmem:[#allocation2 + $0xce8] sm:$0xff]
    %v606 = vld [vmem:[#allocation2 + $0xcf0] sm:$0xff]
    %v607 = vld [vmem:[#allocation2 + $0xcf8] sm:$0xff]
    %v608 = vld [vmem:[#allocation2 + $0xd00] sm:$0xff]
    %v609 = vld [vmem:[#allocation2 + $0xd08] sm:$0xff]
    %v610 = vld [vmem:[#allocation2 + $0xd10] sm:$0xff]
    %v611 = vld [vmem:[#allocation2 + $0xd18] sm:$0xff]
    %v612 = vld [vmem:[#allocation2 + $0xd20] sm:$0xff]
    %v613 = vld [vmem:[#allocation2 + $0xd28] sm:$0xff]
    %v614 = vld [vmem:[#allocation2 + $0xd30] sm:$0xff]
    %v615 = vld [vmem:[#allocation2 + $0xd38] sm:$0xff]
    %v616 = vld [vmem:[#allocation2 + $0xd40] sm:$0xff]
    %v617 = vld [vmem:[#allocation2 + $0xd48] sm:$0xff]
    %v618 = vld [vmem:[#allocation2 + $0xd50] sm:$0xff]
    %v619 = vld [vmem:[#allocation2 + $0xd58] sm:$0xff]
    %v620 = vld [vmem:[#allocation2 + $0xd60] sm:$0xff]
    %v621 = vld [vmem:[#allocation2 + $0xd68] sm:$0xff]
    %v622 = vld [vmem:[#allocation2 + $0xd70] sm:$0xff]
    %v623 = vld [vmem:[#allocation2 + $0xd78] sm:$0xff]
    %v624 = vld [vmem:[#allocation2 + $0xd80] sm:$0xff]
    %v625 = vld [vmem:[#allocation2 + $0xd88] sm:$0xff]
    %v626 = vld [vmem:[#allocation2 + $0xd90] sm:$0xff]
    %v627 = vld [vmem:[#allocation2 + $0xd98] sm:$0xff]
    %v628 = vld [vmem:[#allocation2 + $0xda0] sm:$0xff]
    %v629 = vld [vmem:[#allocation2 + $0xda8] sm:$0xff]
    %v630 = vld [vmem:[#allocation2 + $0xdb0] sm:$0xff]
    %v631 = vld [vmem:[#allocation2 + $0xdb8] sm:$0xff]
    %v632 = vld [vmem:[#allocation2 + $0xdc0] sm:$0xff]
    %v633 = vld [vmem:[#allocation2 + $0xdc8] sm:$0xff]
    %v634 = vld [vmem:[#allocation2 + $0xdd0] sm:$0xff]
    %v635 = vld [vmem:[#allocation2 + $0xdd8] sm:$0xff]
    %v636 = vld [vmem:[#allocation2 + $0xde0] sm:$0xff]
    %v637 = vld [vmem:[#allocation2 + $0xde8] sm:$0xff]
    %v638 = vld [vmem:[#allocation2 + $0xdf0] sm:$0xff]
    %v639 = vld [vmem:[#allocation2 + $0xdf8] sm:$0xff]
    %v640 = vld [vmem:[#allocation2 + $0xe00] sm:$0xff]
    %v641 = vld [vmem:[#allocation2 + $0xe08] sm:$0xff]
    %v642 = vld [vmem:[#allocation2 + $0xe10] sm:$0xff]
    %v643 = vld [vmem:[#allocation2 + $0xe18] sm:$0xff]
    %v644 = vld [vmem:[#allocation2 + $0xe20] sm:$0xff]
    %v645 = vld [vmem:[#allocation2 + $0xe28] sm:$0xff]
    %v646 = vld [vmem:[#allocation2 + $0xe30] sm:$0xff]
    %v647 = vld [vmem:[#allocation2 + $0xe38] sm:$0xff]
    %v648 = vld [vmem:[#allocation2 + $0xe40] sm:$0xff]
    %v649 = vld [vmem:[#allocation2 + $0xe48] sm:$0xff]
    %v650 = vld [vmem:[#allocation2 + $0xe50] sm:$0xff]
    %v651 = vld [vmem:[#allocation2 + $0xe58] sm:$0xff]
    %v652 = vld [vmem:[#allocation2 + $0xe60] sm:$0xff]
    %v653 = vld [vmem:[#allocation2 + $0xe68] sm:$0xff]
    %v654 = vld [vmem:[#allocation2 + $0xe70] sm:$0xff]
    %v655 = vld [vmem:[#allocation2 + $0xe78] sm:$0xff]
    %v656 = vld [vmem:[#allocation2 + $0xe80] sm:$0xff]
    %v657 = vld [vmem:[#allocation2 + $0xe88] sm:$0xff]
    %v658 = vld [vmem:[#allocation2 + $0xe90] sm:$0xff]
    %v659 = vld [vmem:[#allocation2 + $0xe98] sm:$0xff]
    %v660 = vld [vmem:[#allocation2 + $0xea0] sm:$0xff]
    %v661 = vld [vmem:[#allocation2 + $0xea8] sm:$0xff]
    %v662 = vld [vmem:[#allocation2 + $0xeb0] sm:$0xff]
    %v663 = vld [vmem:[#allocation2 + $0xeb8] sm:$0xff]
    %v664 = vld [vmem:[#allocation2 + $0xec0] sm:$0xff]
    %v665 = vld [vmem:[#allocation2 + $0xec8] sm:$0xff]
    %v666 = vld [vmem:[#allocation2 + $0xed0] sm:$0xff]
    %v667 = vld [vmem:[#allocation2 + $0xed8] sm:$0xff]
    %v668 = vld [vmem:[#allocation2 + $0xee0] sm:$0xff]
    %v669 = vld [vmem:[#allocation2 + $0xee8] sm:$0xff]
    %v670 = vld [vmem:[#allocation2 + $0xef0] sm:$0xff]
    %v671 = vld [vmem:[#allocation2 + $0xef8] sm:$0xff]
    %v672 = vld [vmem:[#allocation2 + $0xf00] sm:$0xff]
    %v673 = vld [vmem:[#allocation2 + $0xf08] sm:$0xff]
    %v674 = vld [vmem:[#allocation2 + $0xf10] sm:$0xff]
    %v675 = vld [vmem:[#allocation2 + $0xf18] sm:$0xff]
    %v676 = vld [vmem:[#allocation2 + $0xf20] sm:$0xff]
    %v677 = vld [vmem:[#allocation2 + $0xf28] sm:$0xff]
    %v678 = vld [vmem:[#allocation2 + $0xf30] sm:$0xff]
    %v679 = vld [vmem:[#allocation2 + $0xf38] sm:$0xff]
    %v680 = vld [vmem:[#allocation2 + $0xf40] sm:$0xff]
    %v681 = vld [vmem:[#allocation2 + $0xf48] sm:$0xff]
    %v682 = vld [vmem:[#allocation2 + $0xf50] sm:$0xff]
    %v683 = vld [vmem:[#allocation2 + $0xf58] sm:$0xff]
    %v684 = vld [vmem:[#allocation2 + $0xf60] sm:$0xff]
    %v685 = vld [vmem:[#allocation2 + $0xf68] sm:$0xff]
    %v686 = vld [vmem:[#allocation2 + $0xf70] sm:$0xff]
    %v687 = vld [vmem:[#allocation2 + $0xf78] sm:$0xff]
    %v688 = vld [vmem:[#allocation2 + $0xf80] sm:$0xff]
    %v689 = vld [vmem:[#allocation2 + $0xf88] sm:$0xff]
    %v690 = vld [vmem:[#allocation2 + $0xf90] sm:$0xff]
    %v691 = vld [vmem:[#allocation2 + $0xf98] sm:$0xff]
    %v692 = vld [vmem:[#allocation2 + $0xfa0] sm:$0xff]
    %v693 = vld [vmem:[#allocation2 + $0xfa8] sm:$0xff]
    %v694 = vld [vmem:[#allocation2 + $0xfb0] sm:$0xff]
    %v695 = vld [vmem:[#allocation2 + $0xfb8] sm:$0xff]
    %v696 = vld [vmem:[#allocation2 + $0xfc0] sm:$0xff]
    %v697 = vld [vmem:[#allocation2 + $0xfc8] sm:$0xff]
    %v698 = vld [vmem:[#allocation2 + $0xfd0] sm:$0xff]
    %v699 = vld [vmem:[#allocation2 + $0xfd8] sm:$0xff]
    %v700 = vld [vmem:[#allocation2 + $0xfe0] sm:$0xff]
    %v701 = vld [vmem:[#allocation2 + $0xfe8] sm:$0xff]
    %v702 = vld [vmem:[#allocation2 + $0xff0] sm:$0xff]
    %v703 = vld [vmem:[#allocation2 + $0xff8] sm:$0xff]
    %v704 = vld [vmem:[#allocation2 + $0x1000] sm:$0xff]
    %v705 = vld [vmem:[#allocation2 + $0x1008] sm:$0xff]
    %v706 = vld [vmem:[#allocation2 + $0x1010] sm:$0xff]
    %v707 = vld [vmem:[#allocation2 + $0x1018] sm:$0xff]
    %v708 = vld [vmem:[#allocation2 + $0x1020] sm:$0xff]
    %v709 = vld [vmem:[#allocation2 + $0x1028] sm:$0xff]
    %v710 = vld [vmem:[#allocation2 + $0x1030] sm:$0xff]
    %v711 = vld [vmem:[#allocation2 + $0x1038] sm:$0xff]
    %v712 = vld [vmem:[#allocation2 + $0x1040] sm:$0xff]
    %v713 = vld [vmem:[#allocation2 + $0x1048] sm:$0xff]
    %v714 = vld [vmem:[#allocation2 + $0x1050] sm:$0xff]
    %v715 = vld [vmem:[#allocation2 + $0x1058] sm:$0xff]
    %v716 = vld [vmem:[#allocation2 + $0x1060] sm:$0xff]
    %v717 = vld [vmem:[#allocation2 + $0x1068] sm:$0xff]
    %v718 = vld [vmem:[#allocation2 + $0x1070] sm:$0xff]
    %v719 = vld [vmem:[#allocation2 + $0x1078] sm:$0xff]
    %v720 = vld [vmem:[#allocation2 + $0x1080] sm:$0xff]
    %v721 = vld [vmem:[#allocation2 + $0x1088] sm:$0xff]
    %v722 = vld [vmem:[#allocation2 + $0x1090] sm:$0xff]
    %v723 = vld [vmem:[#allocation2 + $0x1098] sm:$0xff]
    %v724 = vld [vmem:[#allocation2 + $0x10a0] sm:$0xff]
    %v725 = vld [vmem:[#allocation2 + $0x10a8] sm:$0xff]
    %v726 = vld [vmem:[#allocation2 + $0x10b0] sm:$0xff]
    %v727 = vld [vmem:[#allocation2 + $0x10b8] sm:$0xff]
    %v728 = vld [vmem:[#allocation2 + $0x10c0] sm:$0xff]
    %v729 = vld [vmem:[#allocation2 + $0x10c8] sm:$0xff]
    %v730 = vld [vmem:[#allocation2 + $0x10d0] sm:$0xff]
    %v731 = vld [vmem:[#allocation2 + $0x10d8] sm:$0xff]
    %v732 = vld [vmem:[#allocation2 + $0x10e0] sm:$0xff]
    %v733 = vld [vmem:[#allocation2 + $0x10e8] sm:$0xff]
    %v734 = vld [vmem:[#allocation2 + $0x10f0] sm:$0xff]
    %v735 = vld [vmem:[#allocation2 + $0x10f8] sm:$0xff]
    %v736 = vld [vmem:[#allocation2 + $0x1100] sm:$0xff]
    %v737 = vld [vmem:[#allocation2 + $0x1108] sm:$0xff]
    %v738 = vld [vmem:[#allocation2 + $0x1110] sm:$0xff]
    %v739 = vld [vmem:[#allocation2 + $0x1118] sm:$0xff]
    %v740 = vld [vmem:[#allocation2 + $0x1120] sm:$0xff]
    %v741 = vld [vmem:[#allocation2 + $0x1128] sm:$0xff]
    %v742 = vld [vmem:[#allocation2 + $0x1130] sm:$0xff]
    %v743 = vld [vmem:[#allocation2 + $0x1138] sm:$0xff]
    %v744 = vld [vmem:[#allocation2 + $0x1140] sm:$0xff]
    %v745 = vld [vmem:[#allocation2 + $0x1148] sm:$0xff]
    %v746 = vld [vmem:[#allocation2 + $0x1150] sm:$0xff]
    %v747 = vld [vmem:[#allocation2 + $0x1158] sm:$0xff]
    %v748 = vld [vmem:[#allocation2 + $0x1160] sm:$0xff]
    %v749 = vld [vmem:[#allocation2 + $0x1168] sm:$0xff]
    %v750 = vld [vmem:[#allocation2 + $0x1170] sm:$0xff]
    %v751 = vld [vmem:[#allocation2 + $0x1178] sm:$0xff]
    %v752 = vld [vmem:[#allocation2 + $0x1180] sm:$0xff]
    %v753 = vld [vmem:[#allocation2 + $0x1188] sm:$0xff]
    %v754 = vld [vmem:[#allocation2 + $0x1190] sm:$0xff]
    %v755 = vld [vmem:[#allocation2 + $0x1198] sm:$0xff]
    %v756 = vld [vmem:[#allocation2 + $0x11a0] sm:$0xff]
    %v757 = vld [vmem:[#allocation2 + $0x11a8] sm:$0xff]
    %v758 = vld [vmem:[#allocation2 + $0x11b0] sm:$0xff]
    %v759 = vld [vmem:[#allocation2 + $0x11b8] sm:$0xff]
    %v760 = vld [vmem:[#allocation2 + $0x11c0] sm:$0xff]
    %v761 = vld [vmem:[#allocation2 + $0x11c8] sm:$0xff]
    %v762 = vld [vmem:[#allocation2 + $0x11d0] sm:$0xff]
    %v763 = vld [vmem:[#allocation2 + $0x11d8] sm:$0xff]
    %v764 = vld [vmem:[#allocation2 + $0x11e0] sm:$0xff]
    %v765 = vld [vmem:[#allocation2 + $0x11e8] sm:$0xff]
    %v766 = vld [vmem:[#allocation2 + $0x11f0] sm:$0xff]
    %v767 = vld [vmem:[#allocation2 + $0x11f8] sm:$0xff]
    %v768 = vld [vmem:[#allocation2 + $0x1200] sm:$0xff]
    %v769 = vld [vmem:[#allocation2 + $0x1208] sm:$0xff]
    %v770 = vld [vmem:[#allocation2 + $0x1210] sm:$0xff]
    %v771 = vld [vmem:[#allocation2 + $0x1218] sm:$0xff]
    %v772 = vld [vmem:[#allocation2 + $0x1220] sm:$0xff]
    %v773 = vld [vmem:[#allocation2 + $0x1228] sm:$0xff]
    %v774 = vld [vmem:[#allocation2 + $0x1230] sm:$0xff]
    %v775 = vld [vmem:[#allocation2 + $0x1238] sm:$0xff]
    %v776 = vld [vmem:[#allocation2 + $0x1240] sm:$0xff]
    %v777 = vld [vmem:[#allocation2 + $0x1248] sm:$0xff]
    %v778 = vld [vmem:[#allocation2 + $0x1250] sm:$0xff]
    %v779 = vld [vmem:[#allocation2 + $0x1258] sm:$0xff]
    %v780 = vld [vmem:[#allocation2 + $0x1260] sm:$0xff]
    %v781 = vld [vmem:[#allocation2 + $0x1268] sm:$0xff]
    %v782 = vld [vmem:[#allocation2 + $0x1270] sm:$0xff]
    %v783 = vld [vmem:[#allocation2 + $0x1278] sm:$0xff]
    %v784 = vld [vmem:[#allocation2 + $0x1280] sm:$0xff]
    %v785 = vld [vmem:[#allocation2 + $0x1288] sm:$0xff]
    %v786 = vld [vmem:[#allocation2 + $0x1290] sm:$0xff]
    %v787 = vld [vmem:[#allocation2 + $0x1298] sm:$0xff]
    %v788 = vld [vmem:[#allocation2 + $0x12a0] sm:$0xff]
    %v789 = vld [vmem:[#allocation2 + $0x12a8] sm:$0xff]
    %v790 = vld [vmem:[#allocation2 + $0x12b0] sm:$0xff]
    %v791 = vld [vmem:[#allocation2 + $0x12b8] sm:$0xff]
    %v792 = vld [vmem:[#allocation2 + $0x12c0] sm:$0xff]
    %v793 = vld [vmem:[#allocation2 + $0x12c8] sm:$0xff]
    %v794 = vld [vmem:[#allocation2 + $0x12d0] sm:$0xff]
    %v795 = vld [vmem:[#allocation2 + $0x12d8] sm:$0xff]
    %v796 = vld [vmem:[#allocation2 + $0x12e0] sm:$0xff]
    %v797 = vld [vmem:[#allocation2 + $0x12e8] sm:$0xff]
    %v798 = vld [vmem:[#allocation2 + $0x12f0] sm:$0xff]
    %v799 = vld [vmem:[#allocation2 + $0x12f8] sm:$0xff]
    %v800 = vld [vmem:[#allocation2 + $0x1300] sm:$0xff]
    %v801 = vld [vmem:[#allocation2 + $0x1308] sm:$0xff]
    %v802 = vld [vmem:[#allocation2 + $0x1310] sm:$0xff]
    %v803 = vld [vmem:[#allocation2 + $0x1318] sm:$0xff]
    %v804 = vld [vmem:[#allocation2 + $0x1320] sm:$0xff]
    %v805 = vld [vmem:[#allocation2 + $0x1328] sm:$0xff]
    %v806 = vld [vmem:[#allocation2 + $0x1330] sm:$0xff]
    %v807 = vld [vmem:[#allocation2 + $0x1338] sm:$0xff]
    %v808 = vld [vmem:[#allocation2 + $0x1340] sm:$0xff]
    %v809 = vld [vmem:[#allocation2 + $0x1348] sm:$0xff]
    %v810 = vld [vmem:[#allocation2 + $0x1350] sm:$0xff]
    %v811 = vld [vmem:[#allocation2 + $0x1358] sm:$0xff]
    %v812 = vld [vmem:[#allocation2 + $0x1360] sm:$0xff]
    %v813 = vld [vmem:[#allocation2 + $0x1368] sm:$0xff]
    %v814 = vld [vmem:[#allocation2 + $0x1370] sm:$0xff]
    %v815 = vld [vmem:[#allocation2 + $0x1378] sm:$0xff]
    %v816 = vld [vmem:[#allocation2 + $0x1380] sm:$0xff]
    %v817 = vld [vmem:[#allocation2 + $0x1388] sm:$0xff]
    %v818 = vld [vmem:[#allocation2 + $0x1390] sm:$0xff]
    %v819 = vld [vmem:[#allocation2 + $0x1398] sm:$0xff]
    %v820 = vld [vmem:[#allocation2 + $0x13a0] sm:$0xff]
    %v821 = vld [vmem:[#allocation2 + $0x13a8] sm:$0xff]
    %v822 = vld [vmem:[#allocation2 + $0x13b0] sm:$0xff]
    %v823 = vld [vmem:[#allocation2 + $0x13b8] sm:$0xff]
    %v824 = vld [vmem:[#allocation2 + $0x13c0] sm:$0xff]
    %v825 = vld [vmem:[#allocation2 + $0x13c8] sm:$0xff]
    %v826 = vld [vmem:[#allocation2 + $0x13d0] sm:$0xff]
    %v827 = vld [vmem:[#allocation2 + $0x13d8] sm:$0xff]
    %v828 = vld [vmem:[#allocation2 + $0x13e0] sm:$0xff]
    %v829 = vld [vmem:[#allocation2 + $0x13e8] sm:$0xff]
    %v830 = vld [vmem:[#allocation2 + $0x13f0] sm:$0xff]
    %v831 = vld [vmem:[#allocation2 + $0x13f8] sm:$0xff]
    %v832 = vld [vmem:[#allocation2 + $0x1400] sm:$0xff]
    %v833 = vld [vmem:[#allocation2 + $0x1408] sm:$0xff]
    %v834 = vld [vmem:[#allocation2 + $0x1410] sm:$0xff]
    %v835 = vld [vmem:[#allocation2 + $0x1418] sm:$0xff]
    %v836 = vld [vmem:[#allocation2 + $0x1420] sm:$0xff]
    %v837 = vld [vmem:[#allocation2 + $0x1428] sm:$0xff]
    %v838 = vld [vmem:[#allocation2 + $0x1430] sm:$0xff]
    %v839 = vld [vmem:[#allocation2 + $0x1438] sm:$0xff]
    %v840 = vld [vmem:[#allocation2 + $0x1440] sm:$0xff]
    %v841 = vld [vmem:[#allocation2 + $0x1448] sm:$0xff]
    %v842 = vld [vmem:[#allocation2 + $0x1450] sm:$0xff]
    %v843 = vld [vmem:[#allocation2 + $0x1458] sm:$0xff]
    %v844 = vld [vmem:[#allocation2 + $0x1460] sm:$0xff]
    %v845 = vld [vmem:[#allocation2 + $0x1468] sm:$0xff]
    %v846 = vld [vmem:[#allocation2 + $0x1470] sm:$0xff]
    %v847 = vld [vmem:[#allocation2 + $0x1478] sm:$0xff]
    %v848 = vld [vmem:[#allocation2 + $0x1480] sm:$0xff]
    %v849 = vld [vmem:[#allocation2 + $0x1488] sm:$0xff]
    %v850 = vld [vmem:[#allocation2 + $0x1490] sm:$0xff]
    %v851 = vld [vmem:[#allocation2 + $0x1498] sm:$0xff]
    %v852 = vld [vmem:[#allocation2 + $0x14a0] sm:$0xff]
    %v853 = vld [vmem:[#allocation2 + $0x14a8] sm:$0xff]
    %v854 = vld [vmem:[#allocation2 + $0x14b0] sm:$0xff]
    %v855 = vld [vmem:[#allocation2 + $0x14b8] sm:$0xff]
    %v856 = vld [vmem:[#allocation2 + $0x14c0] sm:$0xff]
    %v857 = vld [vmem:[#allocation2 + $0x14c8] sm:$0xff]
    %v858 = vld [vmem:[#allocation2 + $0x14d0] sm:$0xff]
    %v859 = vld [vmem:[#allocation2 + $0x14d8] sm:$0xff]
    %v860 = vld [vmem:[#allocation2 + $0x14e0] sm:$0xff]
    %v861 = vld [vmem:[#allocation2 + $0x14e8] sm:$0xff]
    %v862 = vld [vmem:[#allocation2 + $0x14f0] sm:$0xff]
    %v863 = vld [vmem:[#allocation2 + $0x14f8] sm:$0xff]
    %v864 = vld [vmem:[#allocation2 + $0x1500] sm:$0xff]
    %v865 = vld [vmem:[#allocation2 + $0x1508] sm:$0xff]
    %v866 = vld [vmem:[#allocation2 + $0x1510] sm:$0xff]
    %v867 = vld [vmem:[#allocation2 + $0x1518] sm:$0xff]
    %v868 = vld [vmem:[#allocation2 + $0x1520] sm:$0xff]
    %v869 = vld [vmem:[#allocation2 + $0x1528] sm:$0xff]
    %v870 = vld [vmem:[#allocation2 + $0x1530] sm:$0xff]
    %v871 = vld [vmem:[#allocation2 + $0x1538] sm:$0xff]
    %v872 = vld [vmem:[#allocation2 + $0x1540] sm:$0xff]
    %v873 = vld [vmem:[#allocation2 + $0x1548] sm:$0xff]
    %v874 = vld [vmem:[#allocation2 + $0x1550] sm:$0xff]
    %v875 = vld [vmem:[#allocation2 + $0x1558] sm:$0xff]
    %v876 = vld [vmem:[#allocation2 + $0x1560] sm:$0xff]
    %v877 = vld [vmem:[#allocation2 + $0x1568] sm:$0xff]
    %v878 = vld [vmem:[#allocation2 + $0x1570] sm:$0xff]
    %v879 = vld [vmem:[#allocation2 + $0x1578] sm:$0xff]
    %v880 = vld [vmem:[#allocation2 + $0x1580] sm:$0xff]
    %v881 = vld [vmem:[#allocation2 + $0x1588] sm:$0xff]
    %v882 = vld [vmem:[#allocation2 + $0x1590] sm:$0xff]
    %v883 = vld [vmem:[#allocation2 + $0x1598] sm:$0xff]
    %v884 = vld [vmem:[#allocation2 + $0x15a0] sm:$0xff]
    %v885 = vld [vmem:[#allocation2 + $0x15a8] sm:$0xff]
    %v886 = vld [vmem:[#allocation2 + $0x15b0] sm:$0xff]
    %v887 = vld [vmem:[#allocation2 + $0x15b8] sm:$0xff]
    %v888 = vld [vmem:[#allocation2 + $0x15c0] sm:$0xff]
    %v889 = vld [vmem:[#allocation2 + $0x15c8] sm:$0xff]
    %v890 = vld [vmem:[#allocation2 + $0x15d0] sm:$0xff]
    %v891 = vld [vmem:[#allocation2 + $0x15d8] sm:$0xff]
    %v892 = vld [vmem:[#allocation2 + $0x15e0] sm:$0xff]
    %v893 = vld [vmem:[#allocation2 + $0x15e8] sm:$0xff]
    %v894 = vld [vmem:[#allocation2 + $0x15f0] sm:$0xff]
    %v895 = vld [vmem:[#allocation2 + $0x15f8] sm:$0xff]
    %v896 = vld [vmem:[#allocation2 + $0x1600] sm:$0xff]
    %v897 = vld [vmem:[#allocation2 + $0x1608] sm:$0xff]
    %v898 = vld [vmem:[#allocation2 + $0x1610] sm:$0xff]
    %v899 = vld [vmem:[#allocation2 + $0x1618] sm:$0xff]
    %v900 = vld [vmem:[#allocation2 + $0x1620] sm:$0xff]
    %v901 = vld [vmem:[#allocation2 + $0x1628] sm:$0xff]
    %v902 = vld [vmem:[#allocation2 + $0x1630] sm:$0xff]
    %v903 = vld [vmem:[#allocation2 + $0x1638] sm:$0xff]
    %v904 = vld [vmem:[#allocation2 + $0x1640] sm:$0xff]
    %v905 = vld [vmem:[#allocation2 + $0x1648] sm:$0xff]
    %v906 = vld [vmem:[#allocation2 + $0x1650] sm:$0xff]
    %v907 = vld [vmem:[#allocation2 + $0x1658] sm:$0xff]
    %v908 = vld [vmem:[#allocation2 + $0x1660] sm:$0xff]
    %v909 = vld [vmem:[#allocation2 + $0x1668] sm:$0xff]
    %v910 = vld [vmem:[#allocation2 + $0x1670] sm:$0xff]
    %v911 = vld [vmem:[#allocation2 + $0x1678] sm:$0xff]
    %v912 = vld [vmem:[#allocation2 + $0x1680] sm:$0xff]
    %v913 = vld [vmem:[#allocation2 + $0x1688] sm:$0xff]
    %v914 = vld [vmem:[#allocation2 + $0x1690] sm:$0xff]
    %v915 = vld [vmem:[#allocation2 + $0x1698] sm:$0xff]
    %v916 = vld [vmem:[#allocation2 + $0x16a0] sm:$0xff]
    %v917 = vld [vmem:[#allocation2 + $0x16a8] sm:$0xff]
    %v918 = vld [vmem:[#allocation2 + $0x16b0] sm:$0xff]
    %v919 = vld [vmem:[#allocation2 + $0x16b8] sm:$0xff]
    %v920 = vld [vmem:[#allocation2 + $0x16c0] sm:$0xff]
    %v921 = vld [vmem:[#allocation2 + $0x16c8] sm:$0xff]
    %v922 = vld [vmem:[#allocation2 + $0x16d0] sm:$0xff]
    %v923 = vld [vmem:[#allocation2 + $0x16d8] sm:$0xff]
    %v924 = vld [vmem:[#allocation2 + $0x16e0] sm:$0xff]
    %v925 = vld [vmem:[#allocation2 + $0x16e8] sm:$0xff]
    %v926 = vld [vmem:[#allocation2 + $0x16f0] sm:$0xff]
    %v927 = vld [vmem:[#allocation2 + $0x16f8] sm:$0xff]
    %v928 = vld [vmem:[#allocation2 + $0x1700] sm:$0xff]
    %v929 = vld [vmem:[#allocation2 + $0x1708] sm:$0xff]
    %v930 = vld [vmem:[#allocation2 + $0x1710] sm:$0xff]
    %v931 = vld [vmem:[#allocation2 + $0x1718] sm:$0xff]
    %v932 = vld [vmem:[#allocation2 + $0x1720] sm:$0xff]
    %v933 = vld [vmem:[#allocation2 + $0x1728] sm:$0xff]
    %v934 = vld [vmem:[#allocation2 + $0x1730] sm:$0xff]
    %v935 = vld [vmem:[#allocation2 + $0x1738] sm:$0xff]
    %v936 = vld [vmem:[#allocation2 + $0x1740] sm:$0xff]
    %v937 = vld [vmem:[#allocation2 + $0x1748] sm:$0xff]
    %v938 = vld [vmem:[#allocation2 + $0x1750] sm:$0xff]
    %v939 = vld [vmem:[#allocation2 + $0x1758] sm:$0xff]
    %v940 = vld [vmem:[#allocation2 + $0x1760] sm:$0xff]
    %v941 = vld [vmem:[#allocation2 + $0x1768] sm:$0xff]
    %v942 = vld [vmem:[#allocation2 + $0x1770] sm:$0xff]
    %v943 = vld [vmem:[#allocation2 + $0x1778] sm:$0xff]
    %v944 = vld [vmem:[#allocation2 + $0x1780] sm:$0xff]
    %v945 = vld [vmem:[#allocation2 + $0x1788] sm:$0xff]
    %v946 = vld [vmem:[#allocation2 + $0x1790] sm:$0xff]
    %v947 = vld [vmem:[#allocation2 + $0x1798] sm:$0xff]
    %v948 = vld [vmem:[#allocation2 + $0x17a0] sm:$0xff]
    %v949 = vld [vmem:[#allocation2 + $0x17a8] sm:$0xff]
    %v950 = vld [vmem:[#allocation2 + $0x17b0] sm:$0xff]
    %v951 = vld [vmem:[#allocation2 + $0x17b8] sm:$0xff]
    %v952 = vld [vmem:[#allocation2 + $0x17c0] sm:$0xff]
    %v953 = vld [vmem:[#allocation2 + $0x17c8] sm:$0xff]
    %v954 = vld [vmem:[#allocation2 + $0x17d0] sm:$0xff]
    %v955 = vld [vmem:[#allocation2 + $0x17d8] sm:$0xff]
    %v956 = vld [vmem:[#allocation2 + $0x17e0] sm:$0xff]
    %v957 = vld [vmem:[#allocation2 + $0x17e8] sm:$0xff]
    %v958 = vld [vmem:[#allocation2 + $0x17f0] sm:$0xff]
    %v959 = vld [vmem:[#allocation2 + $0x17f8] sm:$0xff]
    %v960 = vld [vmem:[#allocation2 + $0x1800] sm:$0xff]
    %v961 = vld [vmem:[#allocation2 + $0x1808] sm:$0xff]
    %v962 = vld [vmem:[#allocation2 + $0x1810] sm:$0xff]
    %v963 = vld [vmem:[#allocation2 + $0x1818] sm:$0xff]
    %v964 = vld [vmem:[#allocation2 + $0x1820] sm:$0xff]
    %v965 = vld [vmem:[#allocation2 + $0x1828] sm:$0xff]
    %v966 = vld [vmem:[#allocation2 + $0x1830] sm:$0xff]
    %v967 = vld [vmem:[#allocation2 + $0x1838] sm:$0xff]
    %v968 = vld [vmem:[#allocation2 + $0x1840] sm:$0xff]
    %v969 = vld [vmem:[#allocation2 + $0x1848] sm:$0xff]
    %v970 = vld [vmem:[#allocation2 + $0x1850] sm:$0xff]
    %v971 = vld [vmem:[#allocation2 + $0x1858] sm:$0xff]
    %v972 = vld [vmem:[#allocation2 + $0x1860] sm:$0xff]
    %v973 = vld [vmem:[#allocation2 + $0x1868] sm:$0xff]
    %v974 = vld [vmem:[#allocation2 + $0x1870] sm:$0xff]
    %v975 = vld [vmem:[#allocation2 + $0x1878] sm:$0xff]
    %v976 = vld [vmem:[#allocation2 + $0x1880] sm:$0xff]
    %v977 = vld [vmem:[#allocation2 + $0x1888] sm:$0xff]
    %v978 = vld [vmem:[#allocation2 + $0x1890] sm:$0xff]
    %v979 = vld [vmem:[#allocation2 + $0x1898] sm:$0xff]
    %v980 = vld [vmem:[#allocation2 + $0x18a0] sm:$0xff]
    %v981 = vld [vmem:[#allocation2 + $0x18a8] sm:$0xff]
    %v982 = vld [vmem:[#allocation2 + $0x18b0] sm:$0xff]
    %v983 = vld [vmem:[#allocation2 + $0x18b8] sm:$0xff]
    %v984 = vld [vmem:[#allocation2 + $0x18c0] sm:$0xff]
    %v985 = vld [vmem:[#allocation2 + $0x18c8] sm:$0xff]
    %v986 = vld [vmem:[#allocation2 + $0x18d0] sm:$0xff]
    %v987 = vld [vmem:[#allocation2 + $0x18d8] sm:$0xff]
    %v988 = vld [vmem:[#allocation2 + $0x18e0] sm:$0xff]
    %v989 = vld [vmem:[#allocation2 + $0x18e8] sm:$0xff]
    %v990 = vld [vmem:[#allocation2 + $0x18f0] sm:$0xff]
    %v991 = vld [vmem:[#allocation2 + $0x18f8] sm:$0xff]
    %v992 = vld [vmem:[#allocation2 + $0x1900] sm:$0xff]
    %v993 = vld [vmem:[#allocation2 + $0x1908] sm:$0xff]
    %v994 = vld [vmem:[#allocation2 + $0x1910] sm:$0xff]
    %v995 = vld [vmem:[#allocation2 + $0x1918] sm:$0xff]
    %v996 = vld [vmem:[#allocation2 + $0x1920] sm:$0xff]
    %v997 = vld [vmem:[#allocation2 + $0x1928] sm:$0xff]
    %v998 = vld [vmem:[#allocation2 + $0x1930] sm:$0xff]
    %v999 = vld [vmem:[#allocation2 + $0x1938] sm:$0xff]
    %v1000 = vld [vmem:[#allocation2 + $0x1940] sm:$0xff]
    %v1001 = vld [vmem:[#allocation2 + $0x1948] sm:$0xff]
    %v1002 = vld [vmem:[#allocation2 + $0x1950] sm:$0xff]
    %v1003 = vld [vmem:[#allocation2 + $0x1958] sm:$0xff]
    %v1004 = vld [vmem:[#allocation2 + $0x1960] sm:$0xff]
    %v1005 = vld [vmem:[#allocation2 + $0x1968] sm:$0xff]
    %v1006 = vld [vmem:[#allocation2 + $0x1970] sm:$0xff]
    %v1007 = vld [vmem:[#allocation2 + $0x1978] sm:$0xff]
    %v1008 = vld [vmem:[#allocation2 + $0x1980] sm:$0xff]
    %v1009 = vld [vmem:[#allocation2 + $0x1988] sm:$0xff]
    %v1010 = vld [vmem:[#allocation2 + $0x1990] sm:$0xff]
    %v1011 = vld [vmem:[#allocation2 + $0x1998] sm:$0xff]
    %v1012 = vld [vmem:[#allocation2 + $0x19a0] sm:$0xff]
    %v1013 = vld [vmem:[#allocation2 + $0x19a8] sm:$0xff]
    %v1014 = vld [vmem:[#allocation2 + $0x19b0] sm:$0xff]
    %v1015 = vld [vmem:[#allocation2 + $0x19b8] sm:$0xff]
    %v1016 = vld [vmem:[#allocation2 + $0x19c0] sm:$0xff]
    %v1017 = vld [vmem:[#allocation2 + $0x19c8] sm:$0xff]
    %v1018 = vld [vmem:[#allocation2 + $0x19d0] sm:$0xff]
    %v1019 = vld [vmem:[#allocation2 + $0x19d8] sm:$0xff]
    %v1020 = vld [vmem:[#allocation2 + $0x19e0] sm:$0xff]
    %v1021 = vld [vmem:[#allocation2 + $0x19e8] sm:$0xff]
    %v1022 = vld [vmem:[#allocation2 + $0x19f0] sm:$0xff]
    %v1023 = vld [vmem:[#allocation2 + $0x19f8] sm:$0xff]
    %v1024 = vld [vmem:[#allocation2 + $0x1a00] sm:$0xff]
    %v1025 = vld [vmem:[#allocation2 + $0x1a08] sm:$0xff]
    %v1026 = vld [vmem:[#allocation2 + $0x1a10] sm:$0xff]
    %v1027 = vld [vmem:[#allocation2 + $0x1a18] sm:$0xff]
    %v1028 = vld [vmem:[#allocation2 + $0x1a20] sm:$0xff]
    %v1029 = vld [vmem:[#allocation2 + $0x1a28] sm:$0xff]
    %v1030 = vld [vmem:[#allocation2 + $0x1a30] sm:$0xff]
    %v1031 = vld [vmem:[#allocation2 + $0x1a38] sm:$0xff]
    %v1032 = vld [vmem:[#allocation2 + $0x1a40] sm:$0xff]
    %v1033 = vld [vmem:[#allocation2 + $0x1a48] sm:$0xff]
    %v1034 = vld [vmem:[#allocation2 + $0x1a50] sm:$0xff]
    %v1035 = vld [vmem:[#allocation2 + $0x1a58] sm:$0xff]
    %v1036 = vld [vmem:[#allocation2 + $0x1a60] sm:$0xff]
    %v1037 = vld [vmem:[#allocation2 + $0x1a68] sm:$0xff]
    %v1038 = vld [vmem:[#allocation2 + $0x1a70] sm:$0xff]
    %v1039 = vld [vmem:[#allocation2 + $0x1a78] sm:$0xff]
    %v1040 = vld [vmem:[#allocation2 + $0x1a80] sm:$0xff]
    %v1041 = vld [vmem:[#allocation2 + $0x1a88] sm:$0xff]
    %v1042 = vld [vmem:[#allocation2 + $0x1a90] sm:$0xff]
    %v1043 = vld [vmem:[#allocation2 + $0x1a98] sm:$0xff]
    %v1044 = vld [vmem:[#allocation2 + $0x1aa0] sm:$0xff]
    %v1045 = vld [vmem:[#allocation2 + $0x1aa8] sm:$0xff]
    %v1046 = vld [vmem:[#allocation2 + $0x1ab0] sm:$0xff]
    %v1047 = vld [vmem:[#allocation2 + $0x1ab8] sm:$0xff]
    %v1048 = vld [vmem:[#allocation2 + $0x1ac0] sm:$0xff]
    %v1049 = vld [vmem:[#allocation2 + $0x1ac8] sm:$0xff]
    %v1050 = vld [vmem:[#allocation2 + $0x1ad0] sm:$0xff]
    %v1051 = vld [vmem:[#allocation2 + $0x1ad8] sm:$0xff]
    %v1052 = vld [vmem:[#allocation2 + $0x1ae0] sm:$0xff]
    %v1053 = vld [vmem:[#allocation2 + $0x1ae8] sm:$0xff]
    %v1054 = vld [vmem:[#allocation2 + $0x1af0] sm:$0xff]
    %v1055 = vld [vmem:[#allocation2 + $0x1af8] sm:$0xff]
    %v1056 = vld [vmem:[#allocation2 + $0x1b00] sm:$0xff]
    %v1057 = vld [vmem:[#allocation2 + $0x1b08] sm:$0xff]
    %v1058 = vld [vmem:[#allocation2 + $0x1b10] sm:$0xff]
    %v1059 = vld [vmem:[#allocation2 + $0x1b18] sm:$0xff]
    %v1060 = vld [vmem:[#allocation2 + $0x1b20] sm:$0xff]
    %v1061 = vld [vmem:[#allocation2 + $0x1b28] sm:$0xff]
    %v1062 = vld [vmem:[#allocation2 + $0x1b30] sm:$0xff]
    %v1063 = vld [vmem:[#allocation2 + $0x1b38] sm:$0xff]
    %v1064 = vld [vmem:[#allocation2 + $0x1b40] sm:$0xff]
    %v1065 = vld [vmem:[#allocation2 + $0x1b48] sm:$0xff]
    %v1066 = vld [vmem:[#allocation2 + $0x1b50] sm:$0xff]
    %v1067 = vld [vmem:[#allocation2 + $0x1b58] sm:$0xff]
    %v1068 = vld [vmem:[#allocation2 + $0x1b60] sm:$0xff]
    %v1069 = vld [vmem:[#allocation2 + $0x1b68] sm:$0xff]
    %v1070 = vld [vmem:[#allocation2 + $0x1b70] sm:$0xff]
    %v1071 = vld [vmem:[#allocation2 + $0x1b78] sm:$0xff]
    %v1072 = vld [vmem:[#allocation2 + $0x1b80] sm:$0xff]
    %v1073 = vld [vmem:[#allocation2 + $0x1b88] sm:$0xff]
    %v1074 = vld [vmem:[#allocation2 + $0x1b90] sm:$0xff]
    %v1075 = vld [vmem:[#allocation2 + $0x1b98] sm:$0xff]
    %v1076 = vld [vmem:[#allocation2 + $0x1ba0] sm:$0xff]
    %v1077 = vld [vmem:[#allocation2 + $0x1ba8] sm:$0xff]
    %v1078 = vld [vmem:[#allocation2 + $0x1bb0] sm:$0xff]
    %v1079 = vld [vmem:[#allocation2 + $0x1bb8] sm:$0xff]
    %v1080 = vld [vmem:[#allocation2 + $0x1bc0] sm:$0xff]
    %v1081 = vld [vmem:[#allocation2 + $0x1bc8] sm:$0xff]
    %v1082 = vld [vmem:[#allocation2 + $0x1bd0] sm:$0xff]
    %v1083 = vld [vmem:[#allocation2 + $0x1bd8] sm:$0xff]
    %v1084 = vld [vmem:[#allocation2 + $0x1be0] sm:$0xff]
    %v1085 = vld [vmem:[#allocation2 + $0x1be8] sm:$0xff]
    %v1086 = vld [vmem:[#allocation2 + $0x1bf0] sm:$0xff]
    %v1087 = vld [vmem:[#allocation2 + $0x1bf8] sm:$0xff]
    %v1088 = vld [vmem:[#allocation2 + $0x1c00] sm:$0xff]
    %v1089 = vld [vmem:[#allocation2 + $0x1c08] sm:$0xff]
    %v1090 = vld [vmem:[#allocation2 + $0x1c10] sm:$0xff]
    %v1091 = vld [vmem:[#allocation2 + $0x1c18] sm:$0xff]
    %v1092 = vld [vmem:[#allocation2 + $0x1c20] sm:$0x77]
    %v1093 = vld [vmem:[#allocation2 + $0x1c28] sm:$0x77]
    %v1094 = vld [vmem:[#allocation4] sm:$0xf]
    %v1096 = vlaneseq
    %v1097 = vshrl.u32 %v1096, 7
    %v1098 = vsub.s32 0, %v1097
    %v1099 = vrot.slane %v1094, %v1098
    %v1100 = vlaneseq
    %v1101 = vshrl.u32 %v1100, 7
    %v1102 = vsub.s32 1, %v1101
    %v1103 = vrot.slane %v1094, %v1102
    %v1104 = vlaneseq
    %v1105 = vshrl.u32 %v1104, 7
    %v1106 = vsub.s32 2, %v1105
    %v1107 = vrot.slane %v1094, %v1106
    %v1108 = vlaneseq
    %v1109 = vshrl.u32 %v1108, 7
    %v1110 = vsub.s32 3, %v1109
    %v1111 = vrot.slane %v1094, %v1110
    %v2018 = vunpack.c.l.b16 %v192
    %v2019 = vunpack.c.h.b16 %v192
    %v2020 = vunpack.c.l.b16 %v193
    %v2021 = vunpack.c.h.b16 %v193
    %v2022 = vunpack.c.l.b16 %v194
    %v2023 = vunpack.c.h.b16 %v194
    %v2024 = vunpack.c.l.b16 %v195
    %v2025 = vunpack.c.h.b16 %v195
    %v2026 = vunpack.c.l.b16 %v196
    %v2027 = vunpack.c.h.b16 %v196
    %v2028 = vunpack.c.l.b16 %v197
    %v2029 = vunpack.c.h.b16 %v197
    %v2030 = vunpack.c.l.b16 %v198
    %v2031 = vunpack.c.h.b16 %v198
    %v2032 = vunpack.c.l.b16 %v199
    %v2033 = vunpack.c.h.b16 %v199
    %v2034 = vunpack.c.l.b16 %v200
    %v2035 = vunpack.c.h.b16 %v200
    %v2036 = vunpack.c.l.b16 %v201
    %v2037 = vunpack.c.h.b16 %v201
    %v2038 = vunpack.c.l.b16 %v202
    %v2039 = vunpack.c.h.b16 %v202
    %v2040 = vunpack.c.l.b16 %v203
    %v2041 = vunpack.c.h.b16 %v203
    %v2042 = vunpack.c.l.b16 %v204
    %v2043 = vunpack.c.h.b16 %v204
    %v2044 = vunpack.c.l.b16 %v205
    %v2045 = vunpack.c.h.b16 %v205
    %v2046 = vunpack.c.l.b16 %v206
    %v2047 = vunpack.c.h.b16 %v206
    %v2048 = vunpack.c.l.b16 %v207
    %v2049 = vunpack.c.h.b16 %v207
    %v2050 = vunpack.c.l.b16 %v208
    %v2051 = vunpack.c.h.b16 %v208
    %v2052 = vunpack.c.l.b16 %v209
    %v2053 = vunpack.c.h.b16 %v209
    %v2054 = vunpack.c.l.b16 %v210
    %v2055 = vunpack.c.h.b16 %v210
    %v2056 = vunpack.c.l.b16 %v211
    %v2057 = vunpack.c.h.b16 %v211
    %v2058 = vunpack.c.l.b16 %v212
    %v2059 = vunpack.c.h.b16 %v212
    %v2060 = vunpack.c.l.b16 %v213
    %v2061 = vunpack.c.h.b16 %v213
    %v2062 = vunpack.c.l.b16 %v214
    %v2063 = vunpack.c.h.b16 %v214
    %v2064 = vunpack.c.l.b16 %v215
    %v2065 = vunpack.c.h.b16 %v215
    %v2066 = vunpack.c.l.b16 %v216
    %v2067 = vunpack.c.h.b16 %v216
    %v2068 = vunpack.c.l.b16 %v217
    %v2069 = vunpack.c.h.b16 %v217
    %v2070 = vunpack.c.l.b16 %v218
    %v2071 = vunpack.c.h.b16 %v218
    %v2072 = vunpack.c.l.b16 %v219
    %v2073 = vunpack.c.h.b16 %v219
    %v2074 = vunpack.c.l.b16 %v220
    %v2075 = vunpack.c.h.b16 %v220
    %v2076 = vunpack.c.l.b16 %v221
    %v2077 = vunpack.c.h.b16 %v221
    %v2078 = vunpack.c.l.b16 %v222
    %v2079 = vunpack.c.h.b16 %v222
    %v2080 = vunpack.c.l.b16 %v223
    %v2081 = vunpack.c.h.b16 %v223
    %v2082 = vunpack.c.l.b16 %v224
    %v2083 = vunpack.c.h.b16 %v224
    %v2084 = vunpack.c.l.b16 %v225
    %v2085 = vunpack.c.h.b16 %v225
    %v2086 = vunpack.c.l.b16 %v226
    %v2087 = vunpack.c.h.b16 %v226
    %v2088 = vunpack.c.l.b16 %v227
    %v2089 = vunpack.c.h.b16 %v227
    %v2090 = vunpack.c.l.b16 %v228
    %v2091 = vunpack.c.h.b16 %v228
    %v2092 = vunpack.c.l.b16 %v229
    %v2093 = vunpack.c.h.b16 %v229
    %v2094 = vunpack.c.l.b16 %v230
    %v2095 = vunpack.c.h.b16 %v230
    %v2096 = vunpack.c.l.b16 %v231
    %v2097 = vunpack.c.h.b16 %v231
    %v2098 = vunpack.c.l.b16 %v232
    %v2099 = vunpack.c.h.b16 %v232
    %v2100 = vunpack.c.l.b16 %v233
    %v2101 = vunpack.c.h.b16 %v233
    %v2102 = vunpack.c.l.b16 %v234
    %v2103 = vunpack.c.h.b16 %v234
    %v2104 = vunpack.c.l.b16 %v235
    %v2105 = vunpack.c.h.b16 %v235
    %v2106 = vunpack.c.l.b16 %v236
    %v2107 = vunpack.c.h.b16 %v236
    %v2108 = vunpack.c.l.b16 %v237
    %v2109 = vunpack.c.h.b16 %v237
    %v2110 = vunpack.c.l.b16 %v238
    %v2111 = vunpack.c.h.b16 %v238
    %v2112 = vunpack.c.l.b16 %v239
    %v2113 = vunpack.c.h.b16 %v239
    %v2114 = vunpack.c.l.b16 %v240
    %v2115 = vunpack.c.h.b16 %v240
    %v2116 = vunpack.c.l.b16 %v241
    %v2117 = vunpack.c.h.b16 %v241
    %v2118 = vunpack.c.l.b16 %v242
    %v2119 = vunpack.c.h.b16 %v242
    %v2120 = vunpack.c.l.b16 %v243
    %v2121 = vunpack.c.h.b16 %v243
    %v2122 = vunpack.c.l.b16 %v244
    %v2123 = vunpack.c.h.b16 %v244
    %v2124 = vunpack.c.l.b16 %v245
    %v2125 = vunpack.c.h.b16 %v245
    %v2126 = vunpack.c.l.b16 %v246
    %v2127 = vunpack.c.h.b16 %v246
    %v2128 = vunpack.c.l.b16 %v247
    %v2129 = vunpack.c.h.b16 %v247
    %v2130 = vunpack.c.l.b16 %v248
    %v2131 = vunpack.c.h.b16 %v248
    %v2132 = vunpack.c.l.b16 %v249
    %v2133 = vunpack.c.h.b16 %v249
    %v2134 = vunpack.c.l.b16 %v250
    %v2135 = vunpack.c.h.b16 %v250
    %v2136 = vunpack.c.l.b16 %v251
    %v2137 = vunpack.c.h.b16 %v251
    %v2138 = vunpack.c.l.b16 %v252
    %v2139 = vunpack.c.h.b16 %v252
    %v2140 = vunpack.c.l.b16 %v253
    %v2141 = vunpack.c.h.b16 %v253
    %v2142 = vunpack.c.l.b16 %v254
    %v2143 = vunpack.c.h.b16 %v254
    %v2144 = vunpack.c.l.b16 %v255
    %v2145 = vunpack.c.h.b16 %v255
    %v2146 = vunpack.c.l.b16 %v256
    %v2147 = vunpack.c.h.b16 %v256
    %v2148 = vunpack.c.l.b16 %v257
    %v2149 = vunpack.c.h.b16 %v257
    %v2150 = vunpack.c.l.b16 %v258
    %v2151 = vunpack.c.h.b16 %v258
    %v2152 = vunpack.c.l.b16 %v259
    %v2153 = vunpack.c.h.b16 %v259
    %v2154 = vunpack.c.l.b16 %v260
    %v2155 = vunpack.c.h.b16 %v260
    %v2156 = vunpack.c.l.b16 %v261
    %v2157 = vunpack.c.h.b16 %v261
    %v2158 = vunpack.c.l.b16 %v262
    %v2159 = vunpack.c.h.b16 %v262
    %v2160 = vunpack.c.l.b16 %v263
    %v2161 = vunpack.c.h.b16 %v263
    %v2162 = vunpack.c.l.b16 %v264
    %v2163 = vunpack.c.h.b16 %v264
    %v2164 = vunpack.c.l.b16 %v265
    %v2165 = vunpack.c.h.b16 %v265
    %v2166 = vunpack.c.l.b16 %v266
    %v2167 = vunpack.c.h.b16 %v266
    %v2168 = vunpack.c.l.b16 %v267
    %v2169 = vunpack.c.h.b16 %v267
    %v2170 = vunpack.c.l.b16 %v268
    %v2171 = vunpack.c.h.b16 %v268
    %v2172 = vunpack.c.l.b16 %v269
    %v2173 = vunpack.c.h.b16 %v269
    %v2174 = vunpack.c.l.b16 %v270
    %v2175 = vunpack.c.h.b16 %v270
    %v2176 = vunpack.c.l.b16 %v271
    %v2177 = vunpack.c.h.b16 %v271
    %v2178 = vunpack.c.l.b16 %v272
    %v2179 = vunpack.c.h.b16 %v272
    %v2180 = vunpack.c.l.b16 %v273
    %v2181 = vunpack.c.h.b16 %v273
    %v2182 = vunpack.c.l.b16 %v274
    %v2183 = vunpack.c.h.b16 %v274
    %v2184 = vunpack.c.l.b16 %v275
    %v2185 = vunpack.c.h.b16 %v275
    %v2186 = vunpack.c.l.b16 %v276
    %v2187 = vunpack.c.h.b16 %v276
    %v2188 = vunpack.c.l.b16 %v277
    %v2189 = vunpack.c.h.b16 %v277
    %v2190 = vunpack.c.l.b16 %v278
    %v2191 = vunpack.c.h.b16 %v278
    %v2192 = vunpack.c.l.b16 %v279
    %v2193 = vunpack.c.h.b16 %v279
    %v2194 = vunpack.c.l.b16 %v280
    %v2195 = vunpack.c.h.b16 %v280
    %v2196 = vunpack.c.l.b16 %v281
    %v2197 = vunpack.c.h.b16 %v281
    %v2198 = vunpack.c.l.b16 %v282
    %v2199 = vunpack.c.h.b16 %v282
    %v2200 = vunpack.c.l.b16 %v283
    %v2201 = vunpack.c.h.b16 %v283
    %v2202 = vunpack.c.l.b16 %v284
    %v2203 = vunpack.c.h.b16 %v284
    %v2204 = vunpack.c.l.b16 %v285
    %v2205 = vunpack.c.h.b16 %v285
    %v2206 = vunpack.c.l.b16 %v286
    %v2207 = vunpack.c.h.b16 %v286
    %v2208 = vunpack.c.l.b16 %v287
    %v2209 = vunpack.c.h.b16 %v287
    %v2210 = vunpack.c.l.b16 %v288
    %v2211 = vunpack.c.h.b16 %v288
    %v2212 = vunpack.c.l.b16 %v289
    %v2213 = vunpack.c.h.b16 %v289
    %v2214 = vunpack.c.l.b16 %v290
    %v2215 = vunpack.c.h.b16 %v290
    %v2216 = vunpack.c.l.b16 %v291
    %v2217 = vunpack.c.h.b16 %v291
    %v2218 = vunpack.c.l.b16 %v292
    %v2219 = vunpack.c.h.b16 %v292
    %v2220 = vunpack.c.l.b16 %v293
    %v2221 = vunpack.c.h.b16 %v293
    %v2222 = vunpack.c.l.b16 %v294
    %v2223 = vunpack.c.h.b16 %v294
    %v2224 = vunpack.c.l.b16 %v295
    %v2225 = vunpack.c.h.b16 %v295
    %v2226 = vunpack.c.l.b16 %v296
    %v2227 = vunpack.c.h.b16 %v296
    %v2228 = vunpack.c.l.b16 %v297
    %v2229 = vunpack.c.h.b16 %v297
    %v2230 = vunpack.c.l.b16 %v298
    %v2231 = vunpack.c.h.b16 %v298
    %v2232 = vunpack.c.l.b16 %v299
    %v2233 = vunpack.c.h.b16 %v299
    %v2234 = vunpack.c.l.b16 %v300
    %v2235 = vunpack.c.h.b16 %v300
    %v2236 = vunpack.c.l.b16 %v301
    %v2237 = vunpack.c.h.b16 %v301
    %v2238 = vunpack.c.l.b16 %v302
    %v2239 = vunpack.c.h.b16 %v302
    %v2240 = vunpack.c.l.b16 %v303
    %v2241 = vunpack.c.h.b16 %v303
    %v2242 = vunpack.c.l.b16 %v304
    %v2243 = vunpack.c.h.b16 %v304
    %v2244 = vunpack.c.l.b16 %v305
    %v2245 = vunpack.c.h.b16 %v305
    %v2246 = vunpack.c.l.b16 %v306
    %v2247 = vunpack.c.h.b16 %v306
    %v2248 = vunpack.c.l.b16 %v307
    %v2249 = vunpack.c.h.b16 %v307
    %v2250 = vunpack.c.l.b16 %v308
    %v2251 = vunpack.c.h.b16 %v308
    %v2252 = vunpack.c.l.b16 %v309
    %v2253 = vunpack.c.h.b16 %v309
    %v2254 = vunpack.c.l.b16 %v310
    %v2255 = vunpack.c.h.b16 %v310
    %v2256 = vunpack.c.l.b16 %v311
    %v2257 = vunpack.c.h.b16 %v311
    %v2258 = vunpack.c.l.b16 %v312
    %v2259 = vunpack.c.h.b16 %v312
    %v2260 = vunpack.c.l.b16 %v313
    %v2261 = vunpack.c.h.b16 %v313
    %v2262 = vunpack.c.l.b16 %v314
    %v2263 = vunpack.c.h.b16 %v314
    %v2264 = vunpack.c.l.b16 %v315
    %v2265 = vunpack.c.h.b16 %v315
    %v2266 = vunpack.c.l.b16 %v316
    %v2267 = vunpack.c.h.b16 %v316
    %v2268 = vunpack.c.l.b16 %v317
    %v2269 = vunpack.c.h.b16 %v317
    %v2270 = vunpack.c.l.b16 %v318
    %v2271 = vunpack.c.h.b16 %v318
    %v2272 = vunpack.c.l.b16 %v319
    %v2273 = vunpack.c.h.b16 %v319
    %v2274 = vunpack.c.l.b16 %v320
    %v2275 = vunpack.c.h.b16 %v320
    %v2276 = vunpack.c.l.b16 %v321
    %v2277 = vunpack.c.h.b16 %v321
    %v2278 = vunpack.c.l.b16 %v322
    %v2279 = vunpack.c.h.b16 %v322
    %v2280 = vunpack.c.l.b16 %v323
    %v2281 = vunpack.c.h.b16 %v323
    %v2282 = vunpack.c.l.b16 %v324
    %v2283 = vunpack.c.h.b16 %v324
    %v2284 = vunpack.c.l.b16 %v325
    %v2285 = vunpack.c.h.b16 %v325
    %v2286 = vunpack.c.l.b16 %v326
    %v2287 = vunpack.c.h.b16 %v326
    %v2288 = vunpack.c.l.b16 %v327
    %v2289 = vunpack.c.h.b16 %v327
    %v2290 = vunpack.c.l.b16 %v328
    %v2291 = vunpack.c.h.b16 %v328
    %v2292 = vunpack.c.l.b16 %v329
    %v2293 = vunpack.c.h.b16 %v329
    %v2294 = vunpack.c.l.b16 %v330
    %v2295 = vunpack.c.h.b16 %v330
    %v2296 = vunpack.c.l.b16 %v331
    %v2297 = vunpack.c.h.b16 %v331
    %v2298 = vunpack.c.l.b16 %v332
    %v2299 = vunpack.c.h.b16 %v332
    %v2300 = vunpack.c.l.b16 %v333
    %v2301 = vunpack.c.h.b16 %v333
    %v2302 = vunpack.c.l.b16 %v334
    %v2303 = vunpack.c.h.b16 %v334
    %v2304 = vunpack.c.l.b16 %v335
    %v2305 = vunpack.c.h.b16 %v335
    %v2306 = vunpack.c.l.b16 %v336
    %v2307 = vunpack.c.h.b16 %v336
    %v2308 = vunpack.c.l.b16 %v337
    %v2309 = vunpack.c.h.b16 %v337
    %v2310 = vunpack.c.l.b16 %v338
    %v2311 = vunpack.c.h.b16 %v338
    %v2312 = vunpack.c.l.b16 %v339
    %v2313 = vunpack.c.h.b16 %v339
    %v2314 = vunpack.c.l.b16 %v340
    %v2315 = vunpack.c.h.b16 %v340
    %v2316 = vunpack.c.l.b16 %v341
    %v2317 = vunpack.c.h.b16 %v341
    %v2318 = vunpack.c.l.b16 %v342
    %v2319 = vunpack.c.h.b16 %v342
    %v2320 = vunpack.c.l.b16 %v343
    %v2321 = vunpack.c.h.b16 %v343
    %v2322 = vunpack.c.l.b16 %v344
    %v2323 = vunpack.c.h.b16 %v344
    %v2324 = vunpack.c.l.b16 %v345
    %v2325 = vunpack.c.h.b16 %v345
    %v2326 = vunpack.c.l.b16 %v346
    %v2327 = vunpack.c.h.b16 %v346
    %v2328 = vunpack.c.l.b16 %v347
    %v2329 = vunpack.c.h.b16 %v347
    %v2330 = vunpack.c.l.b16 %v348
    %v2331 = vunpack.c.h.b16 %v348
    %v2332 = vunpack.c.l.b16 %v349
    %v2333 = vunpack.c.h.b16 %v349
    %v2334 = vunpack.c.l.b16 %v350
    %v2335 = vunpack.c.h.b16 %v350
    %v2336 = vunpack.c.l.b16 %v351
    %v2337 = vunpack.c.h.b16 %v351
    %v2338 = vunpack.c.l.b16 %v352
    %v2339 = vunpack.c.h.b16 %v352
    %v2340 = vunpack.c.l.b16 %v353
    %v2341 = vunpack.c.h.b16 %v353
    %v2342 = vunpack.c.l.b16 %v354
    %v2343 = vunpack.c.h.b16 %v354
    %v2344 = vunpack.c.l.b16 %v355
    %v2345 = vunpack.c.h.b16 %v355
    %v2346 = vunpack.c.l.b16 %v356
    %v2347 = vunpack.c.h.b16 %v356
    %v2348 = vunpack.c.l.b16 %v357
    %v2349 = vunpack.c.h.b16 %v357
    %v2350 = vunpack.c.l.b16 %v358
    %v2351 = vunpack.c.h.b16 %v358
    %v2352 = vunpack.c.l.b16 %v359
    %v2353 = vunpack.c.h.b16 %v359
    %v2354 = vunpack.c.l.b16 %v360
    %v2355 = vunpack.c.h.b16 %v360
    %v2356 = vunpack.c.l.b16 %v361
    %v2357 = vunpack.c.h.b16 %v361
    %v2358 = vunpack.c.l.b16 %v362
    %v2359 = vunpack.c.h.b16 %v362
    %v2360 = vunpack.c.l.b16 %v363
    %v2361 = vunpack.c.h.b16 %v363
    %v2362 = vunpack.c.l.b16 %v364
    %v2363 = vunpack.c.h.b16 %v364
    %v2364 = vunpack.c.l.b16 %v365
    %v2365 = vunpack.c.h.b16 %v365
    %v2366 = vunpack.c.l.b16 %v366
    %v2367 = vunpack.c.h.b16 %v366
    %v2368 = vunpack.c.l.b16 %v367
    %v2369 = vunpack.c.h.b16 %v367
    %v2370 = vunpack.c.l.b16 %v368
    %v2371 = vunpack.c.h.b16 %v368
    %v2372 = vunpack.c.l.b16 %v369
    %v2373 = vunpack.c.h.b16 %v369
    %v2374 = vunpack.c.l.b16 %v370
    %v2375 = vunpack.c.h.b16 %v370
    %v2376 = vunpack.c.l.b16 %v371
    %v2377 = vunpack.c.h.b16 %v371
    %v2378 = vunpack.c.l.b16 %v372
    %v2379 = vunpack.c.h.b16 %v372
    %v2380 = vunpack.c.l.b16 %v373
    %v2381 = vunpack.c.h.b16 %v373
    %v2382 = vunpack.c.l.b16 %v374
    %v2383 = vunpack.c.h.b16 %v374
    %v2384 = vunpack.c.l.b16 %v375
    %v2385 = vunpack.c.h.b16 %v375
    %v2386 = vunpack.c.l.b16 %v376
    %v2387 = vunpack.c.h.b16 %v376
    %v2388 = vunpack.c.l.b16 %v377
    %v2389 = vunpack.c.h.b16 %v377
    %v2390 = vunpack.c.l.b16 %v378
    %v2391 = vunpack.c.h.b16 %v378
    %v2392 = vunpack.c.l.b16 %v379
    %v2393 = vunpack.c.h.b16 %v379
    %v2394 = vunpack.c.l.b16 %v380
    %v2395 = vunpack.c.h.b16 %v380
    %v2396 = vunpack.c.l.b16 %v381
    %v2397 = vunpack.c.h.b16 %v381
    %v2398 = vunpack.c.l.b16 %v382
    %v2399 = vunpack.c.h.b16 %v382
    %v2400 = vunpack.c.l.b16 %v383
    %v2401 = vunpack.c.h.b16 %v383
    %v2402 = vunpack.c.l.b16 %v384
    %v2403 = vunpack.c.h.b16 %v384
    %v2404 = vunpack.c.l.b16 %v385
    %v2405 = vunpack.c.h.b16 %v385
    %v2406 = vunpack.c.l.b16 %v386
    %v2407 = vunpack.c.h.b16 %v386
    %v2408 = vunpack.c.l.b16 %v387
    %v2409 = vunpack.c.h.b16 %v387
    %v2410 = vunpack.c.l.b16 %v388
    %v2411 = vunpack.c.h.b16 %v388
    %v2412 = vunpack.c.l.b16 %v389
    %v2413 = vunpack.c.h.b16 %v389
    %v2414 = vunpack.c.l.b16 %v390
    %v2415 = vunpack.c.h.b16 %v390
    %v2416 = vunpack.c.l.b16 %v391
    %v2417 = vunpack.c.h.b16 %v391
    %v2418 = vunpack.c.l.b16 %v392
    %v2419 = vunpack.c.h.b16 %v392
    %v2420 = vunpack.c.l.b16 %v393
    %v2421 = vunpack.c.h.b16 %v393
    %v2422 = vunpack.c.l.b16 %v394
    %v2423 = vunpack.c.h.b16 %v394
    %v2424 = vunpack.c.l.b16 %v395
    %v2425 = vunpack.c.h.b16 %v395
    %v2426 = vunpack.c.l.b16 %v396
    %v2427 = vunpack.c.h.b16 %v396
    %v2428 = vunpack.c.l.b16 %v397
    %v2429 = vunpack.c.h.b16 %v397
    %v2430 = vunpack.c.l.b16 %v398
    %v2431 = vunpack.c.h.b16 %v398
    %v2432 = vunpack.c.l.b16 %v399
    %v2433 = vunpack.c.h.b16 %v399
    %v2434 = vunpack.c.l.b16 %v400
    %v2435 = vunpack.c.h.b16 %v400
    %v2436 = vunpack.c.l.b16 %v401
    %v2437 = vunpack.c.h.b16 %v401
    %v2438 = vunpack.c.l.b16 %v402
    %v2439 = vunpack.c.h.b16 %v402
    %v2440 = vunpack.c.l.b16 %v403
    %v2441 = vunpack.c.h.b16 %v403
    %v2442 = vunpack.c.l.b16 %v404
    %v2443 = vunpack.c.h.b16 %v404
    %v2444 = vunpack.c.l.b16 %v405
    %v2445 = vunpack.c.h.b16 %v405
    %v2446 = vunpack.c.l.b16 %v406
    %v2447 = vunpack.c.h.b16 %v406
    %v2448 = vunpack.c.l.b16 %v407
    %v2449 = vunpack.c.h.b16 %v407
    %v2450 = vunpack.c.l.b16 %v408
    %v2451 = vunpack.c.h.b16 %v408
    %v2452 = vunpack.c.l.b16 %v409
    %v2453 = vunpack.c.h.b16 %v409
    %v2454 = vunpack.c.l.b16 %v410
    %v2455 = vunpack.c.h.b16 %v410
    %v2456 = vunpack.c.l.b16 %v411
    %v2457 = vunpack.c.h.b16 %v411
    %v2458 = vunpack.c.l.b16 %v412
    %v2459 = vunpack.c.h.b16 %v412
    %v2460 = vunpack.c.l.b16 %v413
    %v2461 = vunpack.c.h.b16 %v413
    %v2462 = vunpack.c.l.b16 %v414
    %v2463 = vunpack.c.h.b16 %v414
    %v2464 = vunpack.c.l.b16 %v415
    %v2465 = vunpack.c.h.b16 %v415
    %v2466 = vunpack.c.l.b16 %v416
    %v2467 = vunpack.c.h.b16 %v416
    %v2468 = vunpack.c.l.b16 %v417
    %v2469 = vunpack.c.h.b16 %v417
    %v2470 = vunpack.c.l.b16 %v418
    %v2471 = vunpack.c.h.b16 %v418
    %v2472 = vunpack.c.l.b16 %v419
    %v2473 = vunpack.c.h.b16 %v419
    %v2474 = vunpack.c.l.b16 %v420
    %v2475 = vunpack.c.h.b16 %v420
    %v2476 = vunpack.c.l.b16 %v421
    %v2477 = vunpack.c.h.b16 %v421
    %v2478 = vunpack.c.l.b16 %v422
    %v2479 = vunpack.c.h.b16 %v422
    %v2480 = vunpack.c.l.b16 %v423
    %v2481 = vunpack.c.h.b16 %v423
    %v2482 = vunpack.c.l.b16 %v424
    %v2483 = vunpack.c.h.b16 %v424
    %v2484 = vunpack.c.l.b16 %v425
    %v2485 = vunpack.c.h.b16 %v425
    %v2486 = vunpack.c.l.b16 %v426
    %v2487 = vunpack.c.h.b16 %v426
    %v2488 = vunpack.c.l.b16 %v427
    %v2489 = vunpack.c.h.b16 %v427
    %v2490 = vunpack.c.l.b16 %v428
    %v2491 = vunpack.c.h.b16 %v428
    %v2492 = vunpack.c.l.b16 %v429
    %v2493 = vunpack.c.h.b16 %v429
    %v2494 = vunpack.c.l.b16 %v430
    %v2495 = vunpack.c.h.b16 %v430
    %v2496 = vunpack.c.l.b16 %v431
    %v2497 = vunpack.c.h.b16 %v431
    %v2498 = vunpack.c.l.b16 %v432
    %v2499 = vunpack.c.h.b16 %v432
    %v2500 = vunpack.c.l.b16 %v433
    %v2501 = vunpack.c.h.b16 %v433
    %v2502 = vunpack.c.l.b16 %v434
    %v2503 = vunpack.c.h.b16 %v434
    %v2504 = vunpack.c.l.b16 %v435
    %v2505 = vunpack.c.h.b16 %v435
    %v2506 = vunpack.c.l.b16 %v436
    %v2507 = vunpack.c.h.b16 %v436
    %v2508 = vunpack.c.l.b16 %v437
    %v2509 = vunpack.c.h.b16 %v437
    %v2510 = vunpack.c.l.b16 %v438
    %v2511 = vunpack.c.h.b16 %v438
    %v2512 = vunpack.c.l.b16 %v439
    %v2513 = vunpack.c.h.b16 %v439
    %v2514 = vunpack.c.l.b16 %v440
    %v2515 = vunpack.c.h.b16 %v440
    %v2516 = vunpack.c.l.b16 %v441
    %v2517 = vunpack.c.h.b16 %v441
    %v2518 = vunpack.c.l.b16 %v442
    %v2519 = vunpack.c.h.b16 %v442
    %v2520 = vunpack.c.l.b16 %v443
    %v2521 = vunpack.c.h.b16 %v443
    %v2522 = vunpack.c.l.b16 %v444
    %v2523 = vunpack.c.h.b16 %v444
    %v2524 = vunpack.c.l.b16 %v445
    %v2525 = vunpack.c.h.b16 %v445
    %v2526 = vunpack.c.l.b16 %v446
    %v2527 = vunpack.c.h.b16 %v446
    %v2528 = vunpack.c.l.b16 %v447
    %v2529 = vunpack.c.h.b16 %v447
    %v2530 = vunpack.c.l.b16 %v448
    %v2531 = vunpack.c.h.b16 %v448
    %v2532 = vunpack.c.l.b16 %v449
    %v2533 = vunpack.c.h.b16 %v449
    %v2534 = vunpack.c.l.b16 %v450
    %v2535 = vunpack.c.h.b16 %v450
    %v2536 = vunpack.c.l.b16 %v451
    %v2537 = vunpack.c.h.b16 %v451
    %v2538 = vunpack.c.l.b16 %v452
    %v2539 = vunpack.c.h.b16 %v452
    %v2540 = vunpack.c.l.b16 %v453
    %v2541 = vunpack.c.h.b16 %v453
    %v2542 = vunpack.c.l.b16 %v454
    %v2543 = vunpack.c.h.b16 %v454
    %v2544 = vunpack.c.l.b16 %v455
    %v2545 = vunpack.c.h.b16 %v455
    %v2546 = vunpack.c.l.b16 %v456
    %v2547 = vunpack.c.h.b16 %v456
    %v2548 = vunpack.c.l.b16 %v457
    %v2549 = vunpack.c.h.b16 %v457
    %v2550 = vunpack.c.l.b16 %v458
    %v2551 = vunpack.c.h.b16 %v458
    %v2552 = vunpack.c.l.b16 %v459
    %v2553 = vunpack.c.h.b16 %v459
    %v2554 = vunpack.c.l.b16 %v460
    %v2555 = vunpack.c.h.b16 %v460
    %v2556 = vunpack.c.l.b16 %v461
    %v2557 = vunpack.c.h.b16 %v461
    %v2558 = vunpack.c.l.b16 %v462
    %v2559 = vunpack.c.h.b16 %v462
    %v2560 = vunpack.c.l.b16 %v463
    %v2561 = vunpack.c.h.b16 %v463
    %v2562 = vunpack.c.l.b16 %v464
    %v2563 = vunpack.c.h.b16 %v464
    %v2564 = vunpack.c.l.b16 %v465
    %v2565 = vunpack.c.h.b16 %v465
    %v2566 = vunpack.c.l.b16 %v466
    %v2567 = vunpack.c.h.b16 %v466
    %v2568 = vunpack.c.l.b16 %v467
    %v2569 = vunpack.c.h.b16 %v467
    %v2570 = vunpack.c.l.b16 %v468
    %v2571 = vunpack.c.h.b16 %v468
    %v2572 = vunpack.c.l.b16 %v469
    %v2573 = vunpack.c.h.b16 %v469
    %v2574 = vunpack.c.l.b16 %v470
    %v2575 = vunpack.c.h.b16 %v470
    %v2576 = vunpack.c.l.b16 %v471
    %v2577 = vunpack.c.h.b16 %v471
    %v2578 = vunpack.c.l.b16 %v472
    %v2579 = vunpack.c.h.b16 %v472
    %v2580 = vunpack.c.l.b16 %v473
    %v2581 = vunpack.c.h.b16 %v473
    %v2582 = vunpack.c.l.b16 %v474
    %v2583 = vunpack.c.h.b16 %v474
    %v2584 = vunpack.c.l.b16 %v475
    %v2585 = vunpack.c.h.b16 %v475
    %v2586 = vunpack.c.l.b16 %v476
    %v2587 = vunpack.c.h.b16 %v476
    %v2588 = vunpack.c.l.b16 %v477
    %v2589 = vunpack.c.h.b16 %v477
    %v2590 = vunpack.c.l.b16 %v478
    %v2591 = vunpack.c.h.b16 %v478
    %v2592 = vunpack.c.l.b16 %v479
    %v2593 = vunpack.c.h.b16 %v479
    %v2594 = vunpack.c.l.b16 %v480
    %v2595 = vunpack.c.h.b16 %v480
    %v2596 = vunpack.c.l.b16 %v481
    %v2597 = vunpack.c.h.b16 %v481
    %v2598 = vunpack.c.l.b16 %v482
    %v2599 = vunpack.c.h.b16 %v482
    %v2600 = vunpack.c.l.b16 %v483
    %v2601 = vunpack.c.h.b16 %v483
    %v2602 = vunpack.c.l.b16 %v484
    %v2603 = vunpack.c.h.b16 %v484
    %v2604 = vunpack.c.l.b16 %v485
    %v2605 = vunpack.c.h.b16 %v485
    %v2606 = vunpack.c.l.b16 %v486
    %v2607 = vunpack.c.h.b16 %v486
    %v2608 = vunpack.c.l.b16 %v487
    %v2609 = vunpack.c.h.b16 %v487
    %v2610 = vunpack.c.l.b16 %v488
    %v2611 = vunpack.c.h.b16 %v488
    %v2612 = vunpack.c.l.b16 %v489
    %v2613 = vunpack.c.h.b16 %v489
    %v2614 = vunpack.c.l.b16 %v490
    %v2615 = vunpack.c.h.b16 %v490
    %v2616 = vunpack.c.l.b16 %v491
    %v2617 = vunpack.c.h.b16 %v491
    %v2618 = vunpack.c.l.b16 %v492
    %v2619 = vunpack.c.h.b16 %v492
    %v2620 = vunpack.c.l.b16 %v493
    %v2621 = vunpack.c.h.b16 %v493
    %v2622 = vunpack.c.l.b16 %v494
    %v2623 = vunpack.c.h.b16 %v494
    %v2624 = vunpack.c.l.b16 %v495
    %v2625 = vunpack.c.h.b16 %v495
    %v2626 = vunpack.c.l.b16 %v496
    %v2627 = vunpack.c.h.b16 %v496
    %v2628 = vunpack.c.l.b16 %v497
    %v2629 = vunpack.c.h.b16 %v497
    %v2630 = vunpack.c.l.b16 %v498
    %v2631 = vunpack.c.h.b16 %v498
    %v2632 = vunpack.c.l.b16 %v499
    %v2633 = vunpack.c.h.b16 %v499
    %v2634 = vunpack.c.l.b16 %v500
    %v2635 = vunpack.c.h.b16 %v500
    %v2636 = vunpack.c.l.b16 %v501
    %v2637 = vunpack.c.h.b16 %v501
    %v2638 = vunpack.c.l.b16 %v502
    %v2639 = vunpack.c.h.b16 %v502
    %v2640 = vunpack.c.l.b16 %v503
    %v2641 = vunpack.c.h.b16 %v503
    %v2642 = vunpack.c.l.b16 %v504
    %v2643 = vunpack.c.h.b16 %v504
    %v2644 = vunpack.c.l.b16 %v505
    %v2645 = vunpack.c.h.b16 %v505
    %v2646 = vunpack.c.l.b16 %v506
    %v2647 = vunpack.c.h.b16 %v506
    %v2648 = vunpack.c.l.b16 %v507
    %v2649 = vunpack.c.h.b16 %v507
    %v2650 = vunpack.c.l.b16 %v508
    %v2651 = vunpack.c.h.b16 %v508
    %v2652 = vunpack.c.l.b16 %v509
    %v2653 = vunpack.c.h.b16 %v509
    %v2654 = vunpack.c.l.b16 %v510
    %v2655 = vunpack.c.h.b16 %v510
    %v2656 = vunpack.c.l.b16 %v511
    %v2657 = vunpack.c.h.b16 %v511
    %v2658 = vunpack.c.l.b16 %v512
    %v2659 = vunpack.c.h.b16 %v512
    %v2660 = vunpack.c.l.b16 %v513
    %v2661 = vunpack.c.h.b16 %v513
    %v2662 = vunpack.c.l.b16 %v514
    %v2663 = vunpack.c.h.b16 %v514
    %v2664 = vunpack.c.l.b16 %v515
    %v2665 = vunpack.c.h.b16 %v515
    %v2666 = vunpack.c.l.b16 %v516
    %v2667 = vunpack.c.h.b16 %v516
    %v2668 = vunpack.c.l.b16 %v517
    %v2669 = vunpack.c.h.b16 %v517
    %v2670 = vunpack.c.l.b16 %v518
    %v2671 = vunpack.c.h.b16 %v518
    %v2672 = vunpack.c.l.b16 %v519
    %v2673 = vunpack.c.h.b16 %v519
    %v2674 = vunpack.c.l.b16 %v520
    %v2675 = vunpack.c.h.b16 %v520
    %v2676 = vunpack.c.l.b16 %v521
    %v2677 = vunpack.c.h.b16 %v521
    %v2678 = vunpack.c.l.b16 %v522
    %v2679 = vunpack.c.h.b16 %v522
    %v2680 = vunpack.c.l.b16 %v523
    %v2681 = vunpack.c.h.b16 %v523
    %v2682 = vunpack.c.l.b16 %v524
    %v2683 = vunpack.c.h.b16 %v524
    %v2684 = vunpack.c.l.b16 %v525
    %v2685 = vunpack.c.h.b16 %v525
    %v2686 = vunpack.c.l.b16 %v526
    %v2687 = vunpack.c.h.b16 %v526
    %v2688 = vunpack.c.l.b16 %v527
    %v2689 = vunpack.c.h.b16 %v527
    %v2690 = vunpack.c.l.b16 %v528
    %v2691 = vunpack.c.h.b16 %v528
    %v2692 = vunpack.c.l.b16 %v529
    %v2693 = vunpack.c.h.b16 %v529
    %v2694 = vunpack.c.l.b16 %v530
    %v2695 = vunpack.c.h.b16 %v530
    %v2696 = vunpack.c.l.b16 %v531
    %v2697 = vunpack.c.h.b16 %v531
    %v2698 = vunpack.c.l.b16 %v532
    %v2699 = vunpack.c.h.b16 %v532
    %v2700 = vunpack.c.l.b16 %v533
    %v2701 = vunpack.c.h.b16 %v533
    %v2702 = vunpack.c.l.b16 %v534
    %v2703 = vunpack.c.h.b16 %v534
    %v2704 = vunpack.c.l.b16 %v535
    %v2705 = vunpack.c.h.b16 %v535
    %v2706 = vunpack.c.l.b16 %v536
    %v2707 = vunpack.c.h.b16 %v536
    %v2708 = vunpack.c.l.b16 %v537
    %v2709 = vunpack.c.h.b16 %v537
    %v2710 = vunpack.c.l.b16 %v538
    %v2711 = vunpack.c.h.b16 %v538
    %v2712 = vunpack.c.l.b16 %v539
    %v2713 = vunpack.c.h.b16 %v539
    %v2714 = vunpack.c.l.b16 %v540
    %v2715 = vunpack.c.h.b16 %v540
    %v2716 = vunpack.c.l.b16 %v541
    %v2717 = vunpack.c.h.b16 %v541
    %v2718 = vunpack.c.l.b16 %v542
    %v2719 = vunpack.c.h.b16 %v542
    %v2720 = vunpack.c.l.b16 %v543
    %v2721 = vunpack.c.h.b16 %v543
    %v2722 = vunpack.c.l.b16 %v544
    %v2723 = vunpack.c.h.b16 %v544
    %v2724 = vunpack.c.l.b16 %v545
    %v2725 = vunpack.c.h.b16 %v545
    %v2726 = vunpack.c.l.b16 %v546
    %v2727 = vunpack.c.h.b16 %v546
    %v2728 = vunpack.c.l.b16 %v547
    %v2729 = vunpack.c.h.b16 %v547
    %v2730 = vunpack.c.l.b16 %v548
    %v2731 = vunpack.c.h.b16 %v548
    %v2732 = vunpack.c.l.b16 %v549
    %v2733 = vunpack.c.h.b16 %v549
    %v2734 = vunpack.c.l.b16 %v550
    %v2735 = vunpack.c.h.b16 %v550
    %v2736 = vunpack.c.l.b16 %v551
    %v2737 = vunpack.c.h.b16 %v551
    %v2738 = vunpack.c.l.b16 %v552
    %v2739 = vunpack.c.h.b16 %v552
    %v2740 = vunpack.c.l.b16 %v553
    %v2741 = vunpack.c.h.b16 %v553
    %v2742 = vunpack.c.l.b16 %v554
    %v2743 = vunpack.c.h.b16 %v554
    %v2744 = vunpack.c.l.b16 %v555
    %v2745 = vunpack.c.h.b16 %v555
    %v2746 = vunpack.c.l.b16 %v556
    %v2747 = vunpack.c.h.b16 %v556
    %v2748 = vunpack.c.l.b16 %v557
    %v2749 = vunpack.c.h.b16 %v557
    %v2750 = vunpack.c.l.b16 %v558
    %v2751 = vunpack.c.h.b16 %v558
    %v2752 = vunpack.c.l.b16 %v559
    %v2753 = vunpack.c.h.b16 %v559
    %v2754 = vunpack.c.l.b16 %v560
    %v2755 = vunpack.c.h.b16 %v560
    %v2756 = vunpack.c.l.b16 %v561
    %v2757 = vunpack.c.h.b16 %v561
    %v2758 = vunpack.c.l.b16 %v562
    %v2759 = vunpack.c.h.b16 %v562
    %v2760 = vunpack.c.l.b16 %v563
    %v2761 = vunpack.c.h.b16 %v563
    %v2762 = vunpack.c.l.b16 %v564
    %v2763 = vunpack.c.h.b16 %v564
    %v2764 = vunpack.c.l.b16 %v565
    %v2765 = vunpack.c.h.b16 %v565
    %v2766 = vunpack.c.l.b16 %v566
    %v2767 = vunpack.c.h.b16 %v566
    %v2768 = vunpack.c.l.b16 %v567
    %v2769 = vunpack.c.h.b16 %v567
    %v2770 = vunpack.c.l.b16 %v568
    %v2771 = vunpack.c.h.b16 %v568
    %v2772 = vunpack.c.l.b16 %v569
    %v2773 = vunpack.c.h.b16 %v569
    %v2774 = vunpack.c.l.b16 %v570
    %v2775 = vunpack.c.h.b16 %v570
    %v2776 = vunpack.c.l.b16 %v571
    %v2777 = vunpack.c.h.b16 %v571
    %v2778 = vunpack.c.l.b16 %v572
    %v2779 = vunpack.c.h.b16 %v572
    %v2780 = vunpack.c.l.b16 %v573
    %v2781 = vunpack.c.h.b16 %v573
    %v2782 = vunpack.c.l.b16 %v574
    %v2783 = vunpack.c.h.b16 %v574
    %v2784 = vunpack.c.l.b16 %v575
    %v2785 = vunpack.c.h.b16 %v575
    %v2786 = vunpack.c.l.b16 %v576
    %v2787 = vunpack.c.h.b16 %v576
    %v2788 = vunpack.c.l.b16 %v577
    %v2789 = vunpack.c.h.b16 %v577
    %v2790 = vunpack.c.l.b16 %v578
    %v2791 = vunpack.c.h.b16 %v578
    %v2792 = vunpack.c.l.b16 %v579
    %v2793 = vunpack.c.h.b16 %v579
    %v2794 = vunpack.c.l.b16 %v580
    %v2795 = vunpack.c.h.b16 %v580
    %v2796 = vunpack.c.l.b16 %v581
    %v2797 = vunpack.c.h.b16 %v581
    %v2798 = vunpack.c.l.b16 %v582
    %v2799 = vunpack.c.h.b16 %v582
    %v2800 = vunpack.c.l.b16 %v583
    %v2801 = vunpack.c.h.b16 %v583
    %v2802 = vunpack.c.l.b16 %v584
    %v2803 = vunpack.c.h.b16 %v584
    %v2804 = vunpack.c.l.b16 %v585
    %v2805 = vunpack.c.h.b16 %v585
    %v2806 = vunpack.c.l.b16 %v586
    %v2807 = vunpack.c.h.b16 %v586
    %v2808 = vunpack.c.l.b16 %v587
    %v2809 = vunpack.c.h.b16 %v587
    %v2810 = vunpack.c.l.b16 %v588
    %v2811 = vunpack.c.h.b16 %v588
    %v2812 = vunpack.c.l.b16 %v589
    %v2813 = vunpack.c.h.b16 %v589
    %v2814 = vunpack.c.l.b16 %v590
    %v2815 = vunpack.c.h.b16 %v590
    %v2816 = vunpack.c.l.b16 %v591
    %v2817 = vunpack.c.h.b16 %v591
    %v2818 = vunpack.c.l.b16 %v592
    %v2819 = vunpack.c.h.b16 %v592
    %v2820 = vunpack.c.l.b16 %v593
    %v2821 = vunpack.c.h.b16 %v593
    %v2822 = vunpack.c.l.b16 %v594
    %v2823 = vunpack.c.h.b16 %v594
    %v2824 = vunpack.c.l.b16 %v595
    %v2825 = vunpack.c.h.b16 %v595
    %v2826 = vunpack.c.l.b16 %v596
    %v2827 = vunpack.c.h.b16 %v596
    %v2828 = vunpack.c.l.b16 %v597
    %v2829 = vunpack.c.h.b16 %v597
    %v2830 = vunpack.c.l.b16 %v598
    %v2831 = vunpack.c.h.b16 %v598
    %v2832 = vunpack.c.l.b16 %v599
    %v2833 = vunpack.c.h.b16 %v599
    %v2834 = vunpack.c.l.b16 %v600
    %v2835 = vunpack.c.h.b16 %v600
    %v2836 = vunpack.c.l.b16 %v601
    %v2837 = vunpack.c.h.b16 %v601
    %v2838 = vunpack.c.l.b16 %v602
    %v2839 = vunpack.c.h.b16 %v602
    %v2840 = vunpack.c.l.b16 %v603
    %v2841 = vunpack.c.h.b16 %v603
    %v2842 = vunpack.c.l.b16 %v604
    %v2843 = vunpack.c.h.b16 %v604
    %v2844 = vunpack.c.l.b16 %v605
    %v2845 = vunpack.c.h.b16 %v605
    %v2846 = vunpack.c.l.b16 %v606
    %v2847 = vunpack.c.h.b16 %v606
    %v2848 = vunpack.c.l.b16 %v607
    %v2849 = vunpack.c.h.b16 %v607
    %v2850 = vunpack.c.l.b16 %v608
    %v2851 = vunpack.c.h.b16 %v608
    %v2852 = vunpack.c.l.b16 %v609
    %v2853 = vunpack.c.h.b16 %v609
    %v2854 = vunpack.c.l.b16 %v610
    %v2855 = vunpack.c.h.b16 %v610
    %v2856 = vunpack.c.l.b16 %v611
    %v2857 = vunpack.c.h.b16 %v611
    %v2858 = vunpack.c.l.b16 %v612
    %v2859 = vunpack.c.h.b16 %v612
    %v2860 = vunpack.c.l.b16 %v613
    %v2861 = vunpack.c.h.b16 %v613
    %v2862 = vunpack.c.l.b16 %v614
    %v2863 = vunpack.c.h.b16 %v614
    %v2864 = vunpack.c.l.b16 %v615
    %v2865 = vunpack.c.h.b16 %v615
    %v2866 = vunpack.c.l.b16 %v616
    %v2867 = vunpack.c.h.b16 %v616
    %v2868 = vunpack.c.l.b16 %v617
    %v2869 = vunpack.c.h.b16 %v617
    %v2870 = vunpack.c.l.b16 %v618
    %v2871 = vunpack.c.h.b16 %v618
    %v2872 = vunpack.c.l.b16 %v619
    %v2873 = vunpack.c.h.b16 %v619
    %v2874 = vunpack.c.l.b16 %v620
    %v2875 = vunpack.c.h.b16 %v620
    %v2876 = vunpack.c.l.b16 %v621
    %v2877 = vunpack.c.h.b16 %v621
    %v2878 = vunpack.c.l.b16 %v622
    %v2879 = vunpack.c.h.b16 %v622
    %v2880 = vunpack.c.l.b16 %v623
    %v2881 = vunpack.c.h.b16 %v623
    %v2882 = vunpack.c.l.b16 %v624
    %v2883 = vunpack.c.h.b16 %v624
    %v2884 = vunpack.c.l.b16 %v625
    %v2885 = vunpack.c.h.b16 %v625
    %v2886 = vunpack.c.l.b16 %v626
    %v2887 = vunpack.c.h.b16 %v626
    %v2888 = vunpack.c.l.b16 %v627
    %v2889 = vunpack.c.h.b16 %v627
    %v2890 = vunpack.c.l.b16 %v628
    %v2891 = vunpack.c.h.b16 %v628
    %v2892 = vunpack.c.l.b16 %v629
    %v2893 = vunpack.c.h.b16 %v629
    %v2894 = vunpack.c.l.b16 %v630
    %v2895 = vunpack.c.h.b16 %v630
    %v2896 = vunpack.c.l.b16 %v631
    %v2897 = vunpack.c.h.b16 %v631
    %v2898 = vunpack.c.l.b16 %v632
    %v2899 = vunpack.c.h.b16 %v632
    %v2900 = vunpack.c.l.b16 %v633
    %v2901 = vunpack.c.h.b16 %v633
    %v2902 = vunpack.c.l.b16 %v634
    %v2903 = vunpack.c.h.b16 %v634
    %v2904 = vunpack.c.l.b16 %v635
    %v2905 = vunpack.c.h.b16 %v635
    %v2906 = vunpack.c.l.b16 %v636
    %v2907 = vunpack.c.h.b16 %v636
    %v2908 = vunpack.c.l.b16 %v637
    %v2909 = vunpack.c.h.b16 %v637
    %v2910 = vunpack.c.l.b16 %v638
    %v2911 = vunpack.c.h.b16 %v638
    %v2912 = vunpack.c.l.b16 %v639
    %v2913 = vunpack.c.h.b16 %v639
    %v2914 = vunpack.c.l.b16 %v640
    %v2915 = vunpack.c.h.b16 %v640
    %v2916 = vunpack.c.l.b16 %v641
    %v2917 = vunpack.c.h.b16 %v641
    %v2918 = vunpack.c.l.b16 %v642
    %v2919 = vunpack.c.h.b16 %v642
    %v2920 = vunpack.c.l.b16 %v643
    %v2921 = vunpack.c.h.b16 %v643
    %v2922 = vunpack.c.l.b16 %v644
    %v2923 = vunpack.c.h.b16 %v644
    %v2924 = vunpack.c.l.b16 %v645
    %v2925 = vunpack.c.h.b16 %v645
    %v2926 = vunpack.c.l.b16 %v646
    %v2927 = vunpack.c.h.b16 %v646
    %v2928 = vunpack.c.l.b16 %v647
    %v2929 = vunpack.c.h.b16 %v647
    %v2930 = vunpack.c.l.b16 %v648
    %v2931 = vunpack.c.h.b16 %v648
    %v2932 = vunpack.c.l.b16 %v649
    %v2933 = vunpack.c.h.b16 %v649
    %v2934 = vunpack.c.l.b16 %v650
    %v2935 = vunpack.c.h.b16 %v650
    %v2936 = vunpack.c.l.b16 %v651
    %v2937 = vunpack.c.h.b16 %v651
    %v2938 = vunpack.c.l.b16 %v652
    %v2939 = vunpack.c.h.b16 %v652
    %v2940 = vunpack.c.l.b16 %v653
    %v2941 = vunpack.c.h.b16 %v653
    %v2942 = vunpack.c.l.b16 %v654
    %v2943 = vunpack.c.h.b16 %v654
    %v2944 = vunpack.c.l.b16 %v655
    %v2945 = vunpack.c.h.b16 %v655
    %v2946 = vunpack.c.l.b16 %v656
    %v2947 = vunpack.c.h.b16 %v656
    %v2948 = vunpack.c.l.b16 %v657
    %v2949 = vunpack.c.h.b16 %v657
    %v2950 = vunpack.c.l.b16 %v658
    %v2951 = vunpack.c.h.b16 %v658
    %v2952 = vunpack.c.l.b16 %v659
    %v2953 = vunpack.c.h.b16 %v659
    %v2954 = vunpack.c.l.b16 %v660
    %v2955 = vunpack.c.h.b16 %v660
    %v2956 = vunpack.c.l.b16 %v661
    %v2957 = vunpack.c.h.b16 %v661
    %v2958 = vunpack.c.l.b16 %v662
    %v2959 = vunpack.c.h.b16 %v662
    %v2960 = vunpack.c.l.b16 %v663
    %v2961 = vunpack.c.h.b16 %v663
    %v2962 = vunpack.c.l.b16 %v664
    %v2963 = vunpack.c.h.b16 %v664
    %v2964 = vunpack.c.l.b16 %v665
    %v2965 = vunpack.c.h.b16 %v665
    %v2966 = vunpack.c.l.b16 %v666
    %v2967 = vunpack.c.h.b16 %v666
    %v2968 = vunpack.c.l.b16 %v667
    %v2969 = vunpack.c.h.b16 %v667
    %v2970 = vunpack.c.l.b16 %v668
    %v2971 = vunpack.c.h.b16 %v668
    %v2972 = vunpack.c.l.b16 %v669
    %v2973 = vunpack.c.h.b16 %v669
    %v2974 = vunpack.c.l.b16 %v670
    %v2975 = vunpack.c.h.b16 %v670
    %v2976 = vunpack.c.l.b16 %v671
    %v2977 = vunpack.c.h.b16 %v671
    %v2978 = vunpack.c.l.b16 %v672
    %v2979 = vunpack.c.h.b16 %v672
    %v2980 = vunpack.c.l.b16 %v673
    %v2981 = vunpack.c.h.b16 %v673
    %v2982 = vunpack.c.l.b16 %v674
    %v2983 = vunpack.c.h.b16 %v674
    %v2984 = vunpack.c.l.b16 %v675
    %v2985 = vunpack.c.h.b16 %v675
    %v2986 = vunpack.c.l.b16 %v676
    %v2987 = vunpack.c.h.b16 %v676
    %v2988 = vunpack.c.l.b16 %v677
    %v2989 = vunpack.c.h.b16 %v677
    %v2990 = vunpack.c.l.b16 %v678
    %v2991 = vunpack.c.h.b16 %v678
    %v2992 = vunpack.c.l.b16 %v679
    %v2993 = vunpack.c.h.b16 %v679
    %v2994 = vunpack.c.l.b16 %v680
    %v2995 = vunpack.c.h.b16 %v680
    %v2996 = vunpack.c.l.b16 %v681
    %v2997 = vunpack.c.h.b16 %v681
    %v2998 = vunpack.c.l.b16 %v682
    %v2999 = vunpack.c.h.b16 %v682
    %v3000 = vunpack.c.l.b16 %v683
    %v3001 = vunpack.c.h.b16 %v683
    %v3002 = vunpack.c.l.b16 %v684
    %v3003 = vunpack.c.h.b16 %v684
    %v3004 = vunpack.c.l.b16 %v685
    %v3005 = vunpack.c.h.b16 %v685
    %v3006 = vunpack.c.l.b16 %v686
    %v3007 = vunpack.c.h.b16 %v686
    %v3008 = vunpack.c.l.b16 %v687
    %v3009 = vunpack.c.h.b16 %v687
    %v3010 = vunpack.c.l.b16 %v688
    %v3011 = vunpack.c.h.b16 %v688
    %v3012 = vunpack.c.l.b16 %v689
    %v3013 = vunpack.c.h.b16 %v689
    %v3014 = vunpack.c.l.b16 %v690
    %v3015 = vunpack.c.h.b16 %v690
    %v3016 = vunpack.c.l.b16 %v691
    %v3017 = vunpack.c.h.b16 %v691
    %v3018 = vunpack.c.l.b16 %v692
    %v3019 = vunpack.c.h.b16 %v692
    %v3020 = vunpack.c.l.b16 %v693
    %v3021 = vunpack.c.h.b16 %v693
    %v3022 = vunpack.c.l.b16 %v694
    %v3023 = vunpack.c.h.b16 %v694
    %v3024 = vunpack.c.l.b16 %v695
    %v3025 = vunpack.c.h.b16 %v695
    %v3026 = vunpack.c.l.b16 %v696
    %v3027 = vunpack.c.h.b16 %v696
    %v3028 = vunpack.c.l.b16 %v697
    %v3029 = vunpack.c.h.b16 %v697
    %v3030 = vunpack.c.l.b16 %v698
    %v3031 = vunpack.c.h.b16 %v698
    %v3032 = vunpack.c.l.b16 %v699
    %v3033 = vunpack.c.h.b16 %v699
    %v3034 = vunpack.c.l.b16 %v700
    %v3035 = vunpack.c.h.b16 %v700
    %v3036 = vunpack.c.l.b16 %v701
    %v3037 = vunpack.c.h.b16 %v701
    %v3038 = vunpack.c.l.b16 %v702
    %v3039 = vunpack.c.h.b16 %v702
    %v3040 = vunpack.c.l.b16 %v703
    %v3041 = vunpack.c.h.b16 %v703
    %v3042 = vunpack.c.l.b16 %v704
    %v3043 = vunpack.c.h.b16 %v704
    %v3044 = vunpack.c.l.b16 %v705
    %v3045 = vunpack.c.h.b16 %v705
    %v3046 = vunpack.c.l.b16 %v706
    %v3047 = vunpack.c.h.b16 %v706
    %v3048 = vunpack.c.l.b16 %v707
    %v3049 = vunpack.c.h.b16 %v707
    %v3050 = vunpack.c.l.b16 %v708
    %v3051 = vunpack.c.h.b16 %v708
    %v3052 = vunpack.c.l.b16 %v709
    %v3053 = vunpack.c.h.b16 %v709
    %v3054 = vunpack.c.l.b16 %v710
    %v3055 = vunpack.c.h.b16 %v710
    %v3056 = vunpack.c.l.b16 %v711
    %v3057 = vunpack.c.h.b16 %v711
    %v3058 = vunpack.c.l.b16 %v712
    %v3059 = vunpack.c.h.b16 %v712
    %v3060 = vunpack.c.l.b16 %v713
    %v3061 = vunpack.c.h.b16 %v713
    %v3062 = vunpack.c.l.b16 %v714
    %v3063 = vunpack.c.h.b16 %v714
    %v3064 = vunpack.c.l.b16 %v715
    %v3065 = vunpack.c.h.b16 %v715
    %v3066 = vunpack.c.l.b16 %v716
    %v3067 = vunpack.c.h.b16 %v716
    %v3068 = vunpack.c.l.b16 %v717
    %v3069 = vunpack.c.h.b16 %v717
    %v3070 = vunpack.c.l.b16 %v718
    %v3071 = vunpack.c.h.b16 %v718
    %v3072 = vunpack.c.l.b16 %v719
    %v3073 = vunpack.c.h.b16 %v719
    %v3074 = vunpack.c.l.b16 %v720
    %v3075 = vunpack.c.h.b16 %v720
    %v3076 = vunpack.c.l.b16 %v721
    %v3077 = vunpack.c.h.b16 %v721
    %v3078 = vunpack.c.l.b16 %v722
    %v3079 = vunpack.c.h.b16 %v722
    %v3080 = vunpack.c.l.b16 %v723
    %v3081 = vunpack.c.h.b16 %v723
    %v3082 = vunpack.c.l.b16 %v724
    %v3083 = vunpack.c.h.b16 %v724
    %v3084 = vunpack.c.l.b16 %v725
    %v3085 = vunpack.c.h.b16 %v725
    %v3086 = vunpack.c.l.b16 %v726
    %v3087 = vunpack.c.h.b16 %v726
    %v3088 = vunpack.c.l.b16 %v727
    %v3089 = vunpack.c.h.b16 %v727
    %v3090 = vunpack.c.l.b16 %v728
    %v3091 = vunpack.c.h.b16 %v728
    %v3092 = vunpack.c.l.b16 %v729
    %v3093 = vunpack.c.h.b16 %v729
    %v3094 = vunpack.c.l.b16 %v730
    %v3095 = vunpack.c.h.b16 %v730
    %v3096 = vunpack.c.l.b16 %v731
    %v3097 = vunpack.c.h.b16 %v731
    %v3098 = vunpack.c.l.b16 %v732
    %v3099 = vunpack.c.h.b16 %v732
    %v3100 = vunpack.c.l.b16 %v733
    %v3101 = vunpack.c.h.b16 %v733
    %v3102 = vunpack.c.l.b16 %v734
    %v3103 = vunpack.c.h.b16 %v734
    %v3104 = vunpack.c.l.b16 %v735
    %v3105 = vunpack.c.h.b16 %v735
    %v3106 = vunpack.c.l.b16 %v736
    %v3107 = vunpack.c.h.b16 %v736
    %v3108 = vunpack.c.l.b16 %v737
    %v3109 = vunpack.c.h.b16 %v737
    %v3110 = vunpack.c.l.b16 %v738
    %v3111 = vunpack.c.h.b16 %v738
    %v3112 = vunpack.c.l.b16 %v739
    %v3113 = vunpack.c.h.b16 %v739
    %v3114 = vunpack.c.l.b16 %v740
    %v3115 = vunpack.c.h.b16 %v740
    %v3116 = vunpack.c.l.b16 %v741
    %v3117 = vunpack.c.h.b16 %v741
    %v3118 = vunpack.c.l.b16 %v742
    %v3119 = vunpack.c.h.b16 %v742
    %v3120 = vunpack.c.l.b16 %v743
    %v3121 = vunpack.c.h.b16 %v743
    %v3122 = vunpack.c.l.b16 %v744
    %v3123 = vunpack.c.h.b16 %v744
    %v3124 = vunpack.c.l.b16 %v745
    %v3125 = vunpack.c.h.b16 %v745
    %v3126 = vunpack.c.l.b16 %v746
    %v3127 = vunpack.c.h.b16 %v746
    %v3128 = vunpack.c.l.b16 %v747
    %v3129 = vunpack.c.h.b16 %v747
    %v3130 = vunpack.c.l.b16 %v748
    %v3131 = vunpack.c.h.b16 %v748
    %v3132 = vunpack.c.l.b16 %v749
    %v3133 = vunpack.c.h.b16 %v749
    %v3134 = vunpack.c.l.b16 %v750
    %v3135 = vunpack.c.h.b16 %v750
    %v3136 = vunpack.c.l.b16 %v751
    %v3137 = vunpack.c.h.b16 %v751
    %v3138 = vunpack.c.l.b16 %v752
    %v3139 = vunpack.c.h.b16 %v752
    %v3140 = vunpack.c.l.b16 %v753
    %v3141 = vunpack.c.h.b16 %v753
    %v3142 = vunpack.c.l.b16 %v754
    %v3143 = vunpack.c.h.b16 %v754
    %v3144 = vunpack.c.l.b16 %v755
    %v3145 = vunpack.c.h.b16 %v755
    %v3146 = vunpack.c.l.b16 %v756
    %v3147 = vunpack.c.h.b16 %v756
    %v3148 = vunpack.c.l.b16 %v757
    %v3149 = vunpack.c.h.b16 %v757
    %v3150 = vunpack.c.l.b16 %v758
    %v3151 = vunpack.c.h.b16 %v758
    %v3152 = vunpack.c.l.b16 %v759
    %v3153 = vunpack.c.h.b16 %v759
    %v3154 = vunpack.c.l.b16 %v760
    %v3155 = vunpack.c.h.b16 %v760
    %v3156 = vunpack.c.l.b16 %v761
    %v3157 = vunpack.c.h.b16 %v761
    %v3158 = vunpack.c.l.b16 %v762
    %v3159 = vunpack.c.h.b16 %v762
    %v3160 = vunpack.c.l.b16 %v763
    %v3161 = vunpack.c.h.b16 %v763
    %v3162 = vunpack.c.l.b16 %v764
    %v3163 = vunpack.c.h.b16 %v764
    %v3164 = vunpack.c.l.b16 %v765
    %v3165 = vunpack.c.h.b16 %v765
    %v3166 = vunpack.c.l.b16 %v766
    %v3167 = vunpack.c.h.b16 %v766
    %v3168 = vunpack.c.l.b16 %v767
    %v3169 = vunpack.c.h.b16 %v767
    %v3170 = vunpack.c.l.b16 %v768
    %v3171 = vunpack.c.h.b16 %v768
    %v3172 = vunpack.c.l.b16 %v769
    %v3173 = vunpack.c.h.b16 %v769
    %v3174 = vunpack.c.l.b16 %v770
    %v3175 = vunpack.c.h.b16 %v770
    %v3176 = vunpack.c.l.b16 %v771
    %v3177 = vunpack.c.h.b16 %v771
    %v3178 = vunpack.c.l.b16 %v772
    %v3179 = vunpack.c.h.b16 %v772
    %v3180 = vunpack.c.l.b16 %v773
    %v3181 = vunpack.c.h.b16 %v773
    %v3182 = vunpack.c.l.b16 %v774
    %v3183 = vunpack.c.h.b16 %v774
    %v3184 = vunpack.c.l.b16 %v775
    %v3185 = vunpack.c.h.b16 %v775
    %v3186 = vunpack.c.l.b16 %v776
    %v3187 = vunpack.c.h.b16 %v776
    %v3188 = vunpack.c.l.b16 %v777
    %v3189 = vunpack.c.h.b16 %v777
    %v3190 = vunpack.c.l.b16 %v778
    %v3191 = vunpack.c.h.b16 %v778
    %v3192 = vunpack.c.l.b16 %v779
    %v3193 = vunpack.c.h.b16 %v779
    %v3194 = vunpack.c.l.b16 %v780
    %v3195 = vunpack.c.h.b16 %v780
    %v3196 = vunpack.c.l.b16 %v781
    %v3197 = vunpack.c.h.b16 %v781
    %v3198 = vunpack.c.l.b16 %v782
    %v3199 = vunpack.c.h.b16 %v782
    %v3200 = vunpack.c.l.b16 %v783
    %v3201 = vunpack.c.h.b16 %v783
    %v3202 = vunpack.c.l.b16 %v784
    %v3203 = vunpack.c.h.b16 %v784
    %v3204 = vunpack.c.l.b16 %v785
    %v3205 = vunpack.c.h.b16 %v785
    %v3206 = vunpack.c.l.b16 %v786
    %v3207 = vunpack.c.h.b16 %v786
    %v3208 = vunpack.c.l.b16 %v787
    %v3209 = vunpack.c.h.b16 %v787
    %v3210 = vunpack.c.l.b16 %v788
    %v3211 = vunpack.c.h.b16 %v788
    %v3212 = vunpack.c.l.b16 %v789
    %v3213 = vunpack.c.h.b16 %v789
    %v3214 = vunpack.c.l.b16 %v790
    %v3215 = vunpack.c.h.b16 %v790
    %v3216 = vunpack.c.l.b16 %v791
    %v3217 = vunpack.c.h.b16 %v791
    %v3218 = vunpack.c.l.b16 %v792
    %v3219 = vunpack.c.h.b16 %v792
    %v3220 = vunpack.c.l.b16 %v793
    %v3221 = vunpack.c.h.b16 %v793
    %v3222 = vunpack.c.l.b16 %v794
    %v3223 = vunpack.c.h.b16 %v794
    %v3224 = vunpack.c.l.b16 %v795
    %v3225 = vunpack.c.h.b16 %v795
    %v3226 = vunpack.c.l.b16 %v796
    %v3227 = vunpack.c.h.b16 %v796
    %v3228 = vunpack.c.l.b16 %v797
    %v3229 = vunpack.c.h.b16 %v797
    %v3230 = vunpack.c.l.b16 %v798
    %v3231 = vunpack.c.h.b16 %v798
    %v3232 = vunpack.c.l.b16 %v799
    %v3233 = vunpack.c.h.b16 %v799
    %v3234 = vunpack.c.l.b16 %v800
    %v3235 = vunpack.c.h.b16 %v800
    %v3236 = vunpack.c.l.b16 %v801
    %v3237 = vunpack.c.h.b16 %v801
    %v3238 = vunpack.c.l.b16 %v802
    %v3239 = vunpack.c.h.b16 %v802
    %v3240 = vunpack.c.l.b16 %v803
    %v3241 = vunpack.c.h.b16 %v803
    %v3242 = vunpack.c.l.b16 %v804
    %v3243 = vunpack.c.h.b16 %v804
    %v3244 = vunpack.c.l.b16 %v805
    %v3245 = vunpack.c.h.b16 %v805
    %v3246 = vunpack.c.l.b16 %v806
    %v3247 = vunpack.c.h.b16 %v806
    %v3248 = vunpack.c.l.b16 %v807
    %v3249 = vunpack.c.h.b16 %v807
    %v3250 = vunpack.c.l.b16 %v808
    %v3251 = vunpack.c.h.b16 %v808
    %v3252 = vunpack.c.l.b16 %v809
    %v3253 = vunpack.c.h.b16 %v809
    %v3254 = vunpack.c.l.b16 %v810
    %v3255 = vunpack.c.h.b16 %v810
    %v3256 = vunpack.c.l.b16 %v811
    %v3257 = vunpack.c.h.b16 %v811
    %v3258 = vunpack.c.l.b16 %v812
    %v3259 = vunpack.c.h.b16 %v812
    %v3260 = vunpack.c.l.b16 %v813
    %v3261 = vunpack.c.h.b16 %v813
    %v3262 = vunpack.c.l.b16 %v814
    %v3263 = vunpack.c.h.b16 %v814
    %v3264 = vunpack.c.l.b16 %v815
    %v3265 = vunpack.c.h.b16 %v815
    %v3266 = vunpack.c.l.b16 %v816
    %v3267 = vunpack.c.h.b16 %v816
    %v3268 = vunpack.c.l.b16 %v817
    %v3269 = vunpack.c.h.b16 %v817
    %v3270 = vunpack.c.l.b16 %v818
    %v3271 = vunpack.c.h.b16 %v818
    %v3272 = vunpack.c.l.b16 %v819
    %v3273 = vunpack.c.h.b16 %v819
    %v3274 = vunpack.c.l.b16 %v820
    %v3275 = vunpack.c.h.b16 %v820
    %v3276 = vunpack.c.l.b16 %v821
    %v3277 = vunpack.c.h.b16 %v821
    %v3278 = vunpack.c.l.b16 %v822
    %v3279 = vunpack.c.h.b16 %v822
    %v3280 = vunpack.c.l.b16 %v823
    %v3281 = vunpack.c.h.b16 %v823
    %v3282 = vunpack.c.l.b16 %v824
    %v3283 = vunpack.c.h.b16 %v824
    %v3284 = vunpack.c.l.b16 %v825
    %v3285 = vunpack.c.h.b16 %v825
    %v3286 = vunpack.c.l.b16 %v826
    %v3287 = vunpack.c.h.b16 %v826
    %v3288 = vunpack.c.l.b16 %v827
    %v3289 = vunpack.c.h.b16 %v827
    %v3290 = vunpack.c.l.b16 %v828
    %v3291 = vunpack.c.h.b16 %v828
    %v3292 = vunpack.c.l.b16 %v829
    %v3293 = vunpack.c.h.b16 %v829
    %v3294 = vunpack.c.l.b16 %v830
    %v3295 = vunpack.c.h.b16 %v830
    %v3296 = vunpack.c.l.b16 %v831
    %v3297 = vunpack.c.h.b16 %v831
    %v3298 = vunpack.c.l.b16 %v832
    %v3299 = vunpack.c.h.b16 %v832
    %v3300 = vunpack.c.l.b16 %v833
    %v3301 = vunpack.c.h.b16 %v833
    %v3302 = vunpack.c.l.b16 %v834
    %v3303 = vunpack.c.h.b16 %v834
    %v3304 = vunpack.c.l.b16 %v835
    %v3305 = vunpack.c.h.b16 %v835
    %v3306 = vunpack.c.l.b16 %v836
    %v3307 = vunpack.c.h.b16 %v836
    %v3308 = vunpack.c.l.b16 %v837
    %v3309 = vunpack.c.h.b16 %v837
    %v3310 = vunpack.c.l.b16 %v838
    %v3311 = vunpack.c.h.b16 %v838
    %v3312 = vunpack.c.l.b16 %v839
    %v3313 = vunpack.c.h.b16 %v839
    %v3314 = vunpack.c.l.b16 %v840
    %v3315 = vunpack.c.h.b16 %v840
    %v3316 = vunpack.c.l.b16 %v841
    %v3317 = vunpack.c.h.b16 %v841
    %v3318 = vunpack.c.l.b16 %v842
    %v3319 = vunpack.c.h.b16 %v842
    %v3320 = vunpack.c.l.b16 %v843
    %v3321 = vunpack.c.h.b16 %v843
    %v3322 = vunpack.c.l.b16 %v844
    %v3323 = vunpack.c.h.b16 %v844
    %v3324 = vunpack.c.l.b16 %v845
    %v3325 = vunpack.c.h.b16 %v845
    %v3326 = vunpack.c.l.b16 %v846
    %v3327 = vunpack.c.h.b16 %v846
    %v3328 = vunpack.c.l.b16 %v847
    %v3329 = vunpack.c.h.b16 %v847
    %v3330 = vunpack.c.l.b16 %v848
    %v3331 = vunpack.c.h.b16 %v848
    %v3332 = vunpack.c.l.b16 %v849
    %v3333 = vunpack.c.h.b16 %v849
    %v3334 = vunpack.c.l.b16 %v850
    %v3335 = vunpack.c.h.b16 %v850
    %v3336 = vunpack.c.l.b16 %v851
    %v3337 = vunpack.c.h.b16 %v851
    %v3338 = vunpack.c.l.b16 %v852
    %v3339 = vunpack.c.h.b16 %v852
    %v3340 = vunpack.c.l.b16 %v853
    %v3341 = vunpack.c.h.b16 %v853
    %v3342 = vunpack.c.l.b16 %v854
    %v3343 = vunpack.c.h.b16 %v854
    %v3344 = vunpack.c.l.b16 %v855
    %v3345 = vunpack.c.h.b16 %v855
    %v3346 = vunpack.c.l.b16 %v856
    %v3347 = vunpack.c.h.b16 %v856
    %v3348 = vunpack.c.l.b16 %v857
    %v3349 = vunpack.c.h.b16 %v857
    %v3350 = vunpack.c.l.b16 %v858
    %v3351 = vunpack.c.h.b16 %v858
    %v3352 = vunpack.c.l.b16 %v859
    %v3353 = vunpack.c.h.b16 %v859
    %v3354 = vunpack.c.l.b16 %v860
    %v3355 = vunpack.c.h.b16 %v860
    %v3356 = vunpack.c.l.b16 %v861
    %v3357 = vunpack.c.h.b16 %v861
    %v3358 = vunpack.c.l.b16 %v862
    %v3359 = vunpack.c.h.b16 %v862
    %v3360 = vunpack.c.l.b16 %v863
    %v3361 = vunpack.c.h.b16 %v863
    %v3362 = vunpack.c.l.b16 %v864
    %v3363 = vunpack.c.h.b16 %v864
    %v3364 = vunpack.c.l.b16 %v865
    %v3365 = vunpack.c.h.b16 %v865
    %v3366 = vunpack.c.l.b16 %v866
    %v3367 = vunpack.c.h.b16 %v866
    %v3368 = vunpack.c.l.b16 %v867
    %v3369 = vunpack.c.h.b16 %v867
    %v3370 = vunpack.c.l.b16 %v868
    %v3371 = vunpack.c.h.b16 %v868
    %v3372 = vunpack.c.l.b16 %v869
    %v3373 = vunpack.c.h.b16 %v869
    %v3374 = vunpack.c.l.b16 %v870
    %v3375 = vunpack.c.h.b16 %v870
    %v3376 = vunpack.c.l.b16 %v871
    %v3377 = vunpack.c.h.b16 %v871
    %v3378 = vunpack.c.l.b16 %v872
    %v3379 = vunpack.c.h.b16 %v872
    %v3380 = vunpack.c.l.b16 %v873
    %v3381 = vunpack.c.h.b16 %v873
    %v3382 = vunpack.c.l.b16 %v874
    %v3383 = vunpack.c.h.b16 %v874
    %v3384 = vunpack.c.l.b16 %v875
    %v3385 = vunpack.c.h.b16 %v875
    %v3386 = vunpack.c.l.b16 %v876
    %v3387 = vunpack.c.h.b16 %v876
    %v3388 = vunpack.c.l.b16 %v877
    %v3389 = vunpack.c.h.b16 %v877
    %v3390 = vunpack.c.l.b16 %v878
    %v3391 = vunpack.c.h.b16 %v878
    %v3392 = vunpack.c.l.b16 %v879
    %v3393 = vunpack.c.h.b16 %v879
    %v3394 = vunpack.c.l.b16 %v880
    %v3395 = vunpack.c.h.b16 %v880
    %v3396 = vunpack.c.l.b16 %v881
    %v3397 = vunpack.c.h.b16 %v881
    %v3398 = vunpack.c.l.b16 %v882
    %v3399 = vunpack.c.h.b16 %v882
    %v3400 = vunpack.c.l.b16 %v883
    %v3401 = vunpack.c.h.b16 %v883
    %v3402 = vunpack.c.l.b16 %v884
    %v3403 = vunpack.c.h.b16 %v884
    %v3404 = vunpack.c.l.b16 %v885
    %v3405 = vunpack.c.h.b16 %v885
    %v3406 = vunpack.c.l.b16 %v886
    %v3407 = vunpack.c.h.b16 %v886
    %v3408 = vunpack.c.l.b16 %v887
    %v3409 = vunpack.c.h.b16 %v887
    %v3410 = vunpack.c.l.b16 %v888
    %v3411 = vunpack.c.h.b16 %v888
    %v3412 = vunpack.c.l.b16 %v889
    %v3413 = vunpack.c.h.b16 %v889
    %v3414 = vunpack.c.l.b16 %v890
    %v3415 = vunpack.c.h.b16 %v890
    %v3416 = vunpack.c.l.b16 %v891
    %v3417 = vunpack.c.h.b16 %v891
    %v3418 = vunpack.c.l.b16 %v892
    %v3419 = vunpack.c.h.b16 %v892
    %v3420 = vunpack.c.l.b16 %v893
    %v3421 = vunpack.c.h.b16 %v893
    %v3422 = vunpack.c.l.b16 %v894
    %v3423 = vunpack.c.h.b16 %v894
    %v3424 = vunpack.c.l.b16 %v895
    %v3425 = vunpack.c.h.b16 %v895
    %v3426 = vunpack.c.l.b16 %v896
    %v3427 = vunpack.c.h.b16 %v896
    %v3428 = vunpack.c.l.b16 %v897
    %v3429 = vunpack.c.h.b16 %v897
    %v3430 = vunpack.c.l.b16 %v898
    %v3431 = vunpack.c.h.b16 %v898
    %v3432 = vunpack.c.l.b16 %v899
    %v3433 = vunpack.c.h.b16 %v899
    %v3434 = vunpack.c.l.b16 %v900
    %v3435 = vunpack.c.h.b16 %v900
    %v3436 = vunpack.c.l.b16 %v901
    %v3437 = vunpack.c.h.b16 %v901
    %v3438 = vunpack.c.l.b16 %v902
    %v3439 = vunpack.c.h.b16 %v902
    %v3440 = vunpack.c.l.b16 %v903
    %v3441 = vunpack.c.h.b16 %v903
    %v3442 = vunpack.c.l.b16 %v904
    %v3443 = vunpack.c.h.b16 %v904
    %v3444 = vunpack.c.l.b16 %v905
    %v3445 = vunpack.c.h.b16 %v905
    %v3446 = vunpack.c.l.b16 %v906
    %v3447 = vunpack.c.h.b16 %v906
    %v3448 = vunpack.c.l.b16 %v907
    %v3449 = vunpack.c.h.b16 %v907
    %v3450 = vunpack.c.l.b16 %v908
    %v3451 = vunpack.c.h.b16 %v908
    %v3452 = vunpack.c.l.b16 %v909
    %v3453 = vunpack.c.h.b16 %v909
    %v3454 = vunpack.c.l.b16 %v910
    %v3455 = vunpack.c.h.b16 %v910
    %v3456 = vunpack.c.l.b16 %v911
    %v3457 = vunpack.c.h.b16 %v911
    %v3458 = vunpack.c.l.b16 %v912
    %v3459 = vunpack.c.h.b16 %v912
    %v3460 = vunpack.c.l.b16 %v913
    %v3461 = vunpack.c.h.b16 %v913
    %v3462 = vunpack.c.l.b16 %v914
    %v3463 = vunpack.c.h.b16 %v914
    %v3464 = vunpack.c.l.b16 %v915
    %v3465 = vunpack.c.h.b16 %v915
    %v3466 = vunpack.c.l.b16 %v916
    %v3467 = vunpack.c.h.b16 %v916
    %v3468 = vunpack.c.l.b16 %v917
    %v3469 = vunpack.c.h.b16 %v917
    %v3470 = vunpack.c.l.b16 %v918
    %v3471 = vunpack.c.h.b16 %v918
    %v3472 = vunpack.c.l.b16 %v919
    %v3473 = vunpack.c.h.b16 %v919
    %v3474 = vunpack.c.l.b16 %v920
    %v3475 = vunpack.c.h.b16 %v920
    %v3476 = vunpack.c.l.b16 %v921
    %v3477 = vunpack.c.h.b16 %v921
    %v3478 = vunpack.c.l.b16 %v922
    %v3479 = vunpack.c.h.b16 %v922
    %v3480 = vunpack.c.l.b16 %v923
    %v3481 = vunpack.c.h.b16 %v923
    %v3482 = vunpack.c.l.b16 %v924
    %v3483 = vunpack.c.h.b16 %v924
    %v3484 = vunpack.c.l.b16 %v925
    %v3485 = vunpack.c.h.b16 %v925
    %v3486 = vunpack.c.l.b16 %v926
    %v3487 = vunpack.c.h.b16 %v926
    %v3488 = vunpack.c.l.b16 %v927
    %v3489 = vunpack.c.h.b16 %v927
    %v3490 = vunpack.c.l.b16 %v928
    %v3491 = vunpack.c.h.b16 %v928
    %v3492 = vunpack.c.l.b16 %v929
    %v3493 = vunpack.c.h.b16 %v929
    %v3494 = vunpack.c.l.b16 %v930
    %v3495 = vunpack.c.h.b16 %v930
    %v3496 = vunpack.c.l.b16 %v931
    %v3497 = vunpack.c.h.b16 %v931
    %v3498 = vunpack.c.l.b16 %v932
    %v3499 = vunpack.c.h.b16 %v932
    %v3500 = vunpack.c.l.b16 %v933
    %v3501 = vunpack.c.h.b16 %v933
    %v3502 = vunpack.c.l.b16 %v934
    %v3503 = vunpack.c.h.b16 %v934
    %v3504 = vunpack.c.l.b16 %v935
    %v3505 = vunpack.c.h.b16 %v935
    %v3506 = vunpack.c.l.b16 %v936
    %v3507 = vunpack.c.h.b16 %v936
    %v3508 = vunpack.c.l.b16 %v937
    %v3509 = vunpack.c.h.b16 %v937
    %v3510 = vunpack.c.l.b16 %v938
    %v3511 = vunpack.c.h.b16 %v938
    %v3512 = vunpack.c.l.b16 %v939
    %v3513 = vunpack.c.h.b16 %v939
    %v3514 = vunpack.c.l.b16 %v940
    %v3515 = vunpack.c.h.b16 %v940
    %v3516 = vunpack.c.l.b16 %v941
    %v3517 = vunpack.c.h.b16 %v941
    %v3518 = vunpack.c.l.b16 %v942
    %v3519 = vunpack.c.h.b16 %v942
    %v3520 = vunpack.c.l.b16 %v943
    %v3521 = vunpack.c.h.b16 %v943
    %v3522 = vunpack.c.l.b16 %v944
    %v3523 = vunpack.c.h.b16 %v944
    %v3524 = vunpack.c.l.b16 %v945
    %v3525 = vunpack.c.h.b16 %v945
    %v3526 = vunpack.c.l.b16 %v946
    %v3527 = vunpack.c.h.b16 %v946
    %v3528 = vunpack.c.l.b16 %v947
    %v3529 = vunpack.c.h.b16 %v947
    %v3530 = vunpack.c.l.b16 %v948
    %v3531 = vunpack.c.h.b16 %v948
    %v3532 = vunpack.c.l.b16 %v949
    %v3533 = vunpack.c.h.b16 %v949
    %v3534 = vunpack.c.l.b16 %v950
    %v3535 = vunpack.c.h.b16 %v950
    %v3536 = vunpack.c.l.b16 %v951
    %v3537 = vunpack.c.h.b16 %v951
    %v3538 = vunpack.c.l.b16 %v952
    %v3539 = vunpack.c.h.b16 %v952
    %v3540 = vunpack.c.l.b16 %v953
    %v3541 = vunpack.c.h.b16 %v953
    %v3542 = vunpack.c.l.b16 %v954
    %v3543 = vunpack.c.h.b16 %v954
    %v3544 = vunpack.c.l.b16 %v955
    %v3545 = vunpack.c.h.b16 %v955
    %v3546 = vunpack.c.l.b16 %v956
    %v3547 = vunpack.c.h.b16 %v956
    %v3548 = vunpack.c.l.b16 %v957
    %v3549 = vunpack.c.h.b16 %v957
    %v3550 = vunpack.c.l.b16 %v958
    %v3551 = vunpack.c.h.b16 %v958
    %v3552 = vunpack.c.l.b16 %v959
    %v3553 = vunpack.c.h.b16 %v959
    %v3554 = vunpack.c.l.b16 %v960
    %v3555 = vunpack.c.h.b16 %v960
    %v3556 = vunpack.c.l.b16 %v961
    %v3557 = vunpack.c.h.b16 %v961
    %v3558 = vunpack.c.l.b16 %v962
    %v3559 = vunpack.c.h.b16 %v962
    %v3560 = vunpack.c.l.b16 %v963
    %v3561 = vunpack.c.h.b16 %v963
    %v3562 = vunpack.c.l.b16 %v964
    %v3563 = vunpack.c.h.b16 %v964
    %v3564 = vunpack.c.l.b16 %v965
    %v3565 = vunpack.c.h.b16 %v965
    %v3566 = vunpack.c.l.b16 %v966
    %v3567 = vunpack.c.h.b16 %v966
    %v3568 = vunpack.c.l.b16 %v967
    %v3569 = vunpack.c.h.b16 %v967
    %v3570 = vunpack.c.l.b16 %v968
    %v3571 = vunpack.c.h.b16 %v968
    %v3572 = vunpack.c.l.b16 %v969
    %v3573 = vunpack.c.h.b16 %v969
    %v3574 = vunpack.c.l.b16 %v970
    %v3575 = vunpack.c.h.b16 %v970
    %v3576 = vunpack.c.l.b16 %v971
    %v3577 = vunpack.c.h.b16 %v971
    %v3578 = vunpack.c.l.b16 %v972
    %v3579 = vunpack.c.h.b16 %v972
    %v3580 = vunpack.c.l.b16 %v973
    %v3581 = vunpack.c.h.b16 %v973
    %v3582 = vunpack.c.l.b16 %v974
    %v3583 = vunpack.c.h.b16 %v974
    %v3584 = vunpack.c.l.b16 %v975
    %v3585 = vunpack.c.h.b16 %v975
    %v3586 = vunpack.c.l.b16 %v976
    %v3587 = vunpack.c.h.b16 %v976
    %v3588 = vunpack.c.l.b16 %v977
    %v3589 = vunpack.c.h.b16 %v977
    %v3590 = vunpack.c.l.b16 %v978
    %v3591 = vunpack.c.h.b16 %v978
    %v3592 = vunpack.c.l.b16 %v979
    %v3593 = vunpack.c.h.b16 %v979
    %v3594 = vunpack.c.l.b16 %v980
    %v3595 = vunpack.c.h.b16 %v980
    %v3596 = vunpack.c.l.b16 %v981
    %v3597 = vunpack.c.h.b16 %v981
    %v3598 = vunpack.c.l.b16 %v982
    %v3599 = vunpack.c.h.b16 %v982
    %v3600 = vunpack.c.l.b16 %v983
    %v3601 = vunpack.c.h.b16 %v983
    %v3602 = vunpack.c.l.b16 %v984
    %v3603 = vunpack.c.h.b16 %v984
    %v3604 = vunpack.c.l.b16 %v985
    %v3605 = vunpack.c.h.b16 %v985
    %v3606 = vunpack.c.l.b16 %v986
    %v3607 = vunpack.c.h.b16 %v986
    %v3608 = vunpack.c.l.b16 %v987
    %v3609 = vunpack.c.h.b16 %v987
    %v3610 = vunpack.c.l.b16 %v988
    %v3611 = vunpack.c.h.b16 %v988
    %v3612 = vunpack.c.l.b16 %v989
    %v3613 = vunpack.c.h.b16 %v989
    %v3614 = vunpack.c.l.b16 %v990
    %v3615 = vunpack.c.h.b16 %v990
    %v3616 = vunpack.c.l.b16 %v991
    %v3617 = vunpack.c.h.b16 %v991
    %v3618 = vunpack.c.l.b16 %v992
    %v3619 = vunpack.c.h.b16 %v992
    %v3620 = vunpack.c.l.b16 %v993
    %v3621 = vunpack.c.h.b16 %v993
    %v3622 = vunpack.c.l.b16 %v994
    %v3623 = vunpack.c.h.b16 %v994
    %v3624 = vunpack.c.l.b16 %v995
    %v3625 = vunpack.c.h.b16 %v995
    %v3626 = vunpack.c.l.b16 %v996
    %v3627 = vunpack.c.h.b16 %v996
    %v3628 = vunpack.c.l.b16 %v997
    %v3629 = vunpack.c.h.b16 %v997
    %v3630 = vunpack.c.l.b16 %v998
    %v3631 = vunpack.c.h.b16 %v998
    %v3632 = vunpack.c.l.b16 %v999
    %v3633 = vunpack.c.h.b16 %v999
    %v3634 = vunpack.c.l.b16 %v1000
    %v3635 = vunpack.c.h.b16 %v1000
    %v3636 = vunpack.c.l.b16 %v1001
    %v3637 = vunpack.c.h.b16 %v1001
    %v3638 = vunpack.c.l.b16 %v1002
    %v3639 = vunpack.c.h.b16 %v1002
    %v3640 = vunpack.c.l.b16 %v1003
    %v3641 = vunpack.c.h.b16 %v1003
    %v3642 = vunpack.c.l.b16 %v1004
    %v3643 = vunpack.c.h.b16 %v1004
    %v3644 = vunpack.c.l.b16 %v1005
    %v3645 = vunpack.c.h.b16 %v1005
    %v3646 = vunpack.c.l.b16 %v1006
    %v3647 = vunpack.c.h.b16 %v1006
    %v3648 = vunpack.c.l.b16 %v1007
    %v3649 = vunpack.c.h.b16 %v1007
    %v3650 = vunpack.c.l.b16 %v1008
    %v3651 = vunpack.c.h.b16 %v1008
    %v3652 = vunpack.c.l.b16 %v1009
    %v3653 = vunpack.c.h.b16 %v1009
    %v3654 = vunpack.c.l.b16 %v1010
    %v3655 = vunpack.c.h.b16 %v1010
    %v3656 = vunpack.c.l.b16 %v1011
    %v3657 = vunpack.c.h.b16 %v1011
    %v3658 = vunpack.c.l.b16 %v1012
    %v3659 = vunpack.c.h.b16 %v1012
    %v3660 = vunpack.c.l.b16 %v1013
    %v3661 = vunpack.c.h.b16 %v1013
    %v3662 = vunpack.c.l.b16 %v1014
    %v3663 = vunpack.c.h.b16 %v1014
    %v3664 = vunpack.c.l.b16 %v1015
    %v3665 = vunpack.c.h.b16 %v1015
    %v3666 = vunpack.c.l.b16 %v1016
    %v3667 = vunpack.c.h.b16 %v1016
    %v3668 = vunpack.c.l.b16 %v1017
    %v3669 = vunpack.c.h.b16 %v1017
    %v3670 = vunpack.c.l.b16 %v1018
    %v3671 = vunpack.c.h.b16 %v1018
    %v3672 = vunpack.c.l.b16 %v1019
    %v3673 = vunpack.c.h.b16 %v1019
    %v3674 = vunpack.c.l.b16 %v1020
    %v3675 = vunpack.c.h.b16 %v1020
    %v3676 = vunpack.c.l.b16 %v1021
    %v3677 = vunpack.c.h.b16 %v1021
    %v3678 = vunpack.c.l.b16 %v1022
    %v3679 = vunpack.c.h.b16 %v1022
    %v3680 = vunpack.c.l.b16 %v1023
    %v3681 = vunpack.c.h.b16 %v1023
    %v3682 = vunpack.c.l.b16 %v1024
    %v3683 = vunpack.c.h.b16 %v1024
    %v3684 = vunpack.c.l.b16 %v1025
    %v3685 = vunpack.c.h.b16 %v1025
    %v3686 = vunpack.c.l.b16 %v1026
    %v3687 = vunpack.c.h.b16 %v1026
    %v3688 = vunpack.c.l.b16 %v1027
    %v3689 = vunpack.c.h.b16 %v1027
    %v3690 = vunpack.c.l.b16 %v1028
    %v3691 = vunpack.c.h.b16 %v1028
    %v3692 = vunpack.c.l.b16 %v1029
    %v3693 = vunpack.c.h.b16 %v1029
    %v3694 = vunpack.c.l.b16 %v1030
    %v3695 = vunpack.c.h.b16 %v1030
    %v3696 = vunpack.c.l.b16 %v1031
    %v3697 = vunpack.c.h.b16 %v1031
    %v3698 = vunpack.c.l.b16 %v1032
    %v3699 = vunpack.c.h.b16 %v1032
    %v3700 = vunpack.c.l.b16 %v1033
    %v3701 = vunpack.c.h.b16 %v1033
    %v3702 = vunpack.c.l.b16 %v1034
    %v3703 = vunpack.c.h.b16 %v1034
    %v3704 = vunpack.c.l.b16 %v1035
    %v3705 = vunpack.c.h.b16 %v1035
    %v3706 = vunpack.c.l.b16 %v1036
    %v3707 = vunpack.c.h.b16 %v1036
    %v3708 = vunpack.c.l.b16 %v1037
    %v3709 = vunpack.c.h.b16 %v1037
    %v3710 = vunpack.c.l.b16 %v1038
    %v3711 = vunpack.c.h.b16 %v1038
    %v3712 = vunpack.c.l.b16 %v1039
    %v3713 = vunpack.c.h.b16 %v1039
    %v3714 = vunpack.c.l.b16 %v1040
    %v3715 = vunpack.c.h.b16 %v1040
    %v3716 = vunpack.c.l.b16 %v1041
    %v3717 = vunpack.c.h.b16 %v1041
    %v3718 = vunpack.c.l.b16 %v1042
    %v3719 = vunpack.c.h.b16 %v1042
    %v3720 = vunpack.c.l.b16 %v1043
    %v3721 = vunpack.c.h.b16 %v1043
    %v3722 = vunpack.c.l.b16 %v1044
    %v3723 = vunpack.c.h.b16 %v1044
    %v3724 = vunpack.c.l.b16 %v1045
    %v3725 = vunpack.c.h.b16 %v1045
    %v3726 = vunpack.c.l.b16 %v1046
    %v3727 = vunpack.c.h.b16 %v1046
    %v3728 = vunpack.c.l.b16 %v1047
    %v3729 = vunpack.c.h.b16 %v1047
    %v3730 = vunpack.c.l.b16 %v1048
    %v3731 = vunpack.c.h.b16 %v1048
    %v3732 = vunpack.c.l.b16 %v1049
    %v3733 = vunpack.c.h.b16 %v1049
    %v3734 = vunpack.c.l.b16 %v1050
    %v3735 = vunpack.c.h.b16 %v1050
    %v3736 = vunpack.c.l.b16 %v1051
    %v3737 = vunpack.c.h.b16 %v1051
    %v3738 = vunpack.c.l.b16 %v1052
    %v3739 = vunpack.c.h.b16 %v1052
    %v3740 = vunpack.c.l.b16 %v1053
    %v3741 = vunpack.c.h.b16 %v1053
    %v3742 = vunpack.c.l.b16 %v1054
    %v3743 = vunpack.c.h.b16 %v1054
    %v3744 = vunpack.c.l.b16 %v1055
    %v3745 = vunpack.c.h.b16 %v1055
    %v3746 = vunpack.c.l.b16 %v1056
    %v3747 = vunpack.c.h.b16 %v1056
    %v3748 = vunpack.c.l.b16 %v1057
    %v3749 = vunpack.c.h.b16 %v1057
    %v3750 = vunpack.c.l.b16 %v1058
    %v3751 = vunpack.c.h.b16 %v1058
    %v3752 = vunpack.c.l.b16 %v1059
    %v3753 = vunpack.c.h.b16 %v1059
    %v3754 = vunpack.c.l.b16 %v1060
    %v3755 = vunpack.c.h.b16 %v1060
    %v3756 = vunpack.c.l.b16 %v1061
    %v3757 = vunpack.c.h.b16 %v1061
    %v3758 = vunpack.c.l.b16 %v1062
    %v3759 = vunpack.c.h.b16 %v1062
    %v3760 = vunpack.c.l.b16 %v1063
    %v3761 = vunpack.c.h.b16 %v1063
    %v3762 = vunpack.c.l.b16 %v1064
    %v3763 = vunpack.c.h.b16 %v1064
    %v3764 = vunpack.c.l.b16 %v1065
    %v3765 = vunpack.c.h.b16 %v1065
    %v3766 = vunpack.c.l.b16 %v1066
    %v3767 = vunpack.c.h.b16 %v1066
    %v3768 = vunpack.c.l.b16 %v1067
    %v3769 = vunpack.c.h.b16 %v1067
    %v3770 = vunpack.c.l.b16 %v1068
    %v3771 = vunpack.c.h.b16 %v1068
    %v3772 = vunpack.c.l.b16 %v1069
    %v3773 = vunpack.c.h.b16 %v1069
    %v3774 = vunpack.c.l.b16 %v1070
    %v3775 = vunpack.c.h.b16 %v1070
    %v3776 = vunpack.c.l.b16 %v1071
    %v3777 = vunpack.c.h.b16 %v1071
    %v3778 = vunpack.c.l.b16 %v1072
    %v3779 = vunpack.c.h.b16 %v1072
    %v3780 = vunpack.c.l.b16 %v1073
    %v3781 = vunpack.c.h.b16 %v1073
    %v3782 = vunpack.c.l.b16 %v1074
    %v3783 = vunpack.c.h.b16 %v1074
    %v3784 = vunpack.c.l.b16 %v1075
    %v3785 = vunpack.c.h.b16 %v1075
    %v3786 = vunpack.c.l.b16 %v1076
    %v3787 = vunpack.c.h.b16 %v1076
    %v3788 = vunpack.c.l.b16 %v1077
    %v3789 = vunpack.c.h.b16 %v1077
    %v3790 = vunpack.c.l.b16 %v1078
    %v3791 = vunpack.c.h.b16 %v1078
    %v3792 = vunpack.c.l.b16 %v1079
    %v3793 = vunpack.c.h.b16 %v1079
    %v3794 = vunpack.c.l.b16 %v1080
    %v3795 = vunpack.c.h.b16 %v1080
    %v3796 = vunpack.c.l.b16 %v1081
    %v3797 = vunpack.c.h.b16 %v1081
    %v3798 = vunpack.c.l.b16 %v1082
    %v3799 = vunpack.c.h.b16 %v1082
    %v3800 = vunpack.c.l.b16 %v1083
    %v3801 = vunpack.c.h.b16 %v1083
    %v3802 = vunpack.c.l.b16 %v1084
    %v3803 = vunpack.c.h.b16 %v1084
    %v3804 = vunpack.c.l.b16 %v1085
    %v3805 = vunpack.c.h.b16 %v1085
    %v3806 = vunpack.c.l.b16 %v1086
    %v3807 = vunpack.c.h.b16 %v1086
    %v3808 = vunpack.c.l.b16 %v1087
    %v3809 = vunpack.c.h.b16 %v1087
    %v3810 = vunpack.c.l.b16 %v1088
    %v3811 = vunpack.c.h.b16 %v1088
    %v3812 = vunpack.c.l.b16 %v1089
    %v3813 = vunpack.c.h.b16 %v1089
    %v3814 = vunpack.c.l.b16 %v1090
    %v3815 = vunpack.c.h.b16 %v1090
    %v3816 = vunpack.c.l.b16 %v1091
    %v3817 = vunpack.c.h.b16 %v1091
    %v3818 = vunpack.c.l.b16 %v1092
    %v3819 = vunpack.c.h.b16 %v1092
    %v3820 = vunpack.c.l.b16 %v1093
    %v3821 = vunpack.c.h.b16 %v1093
    %v3822 = vpack.c.b16 %v2022, %v2018
    %v3823 = vpack.c.b16 %v2023, %v2019
    %v3824 = vpack.c.b16 %v2024, %v2020
    %v3825 = vpack.c.b16 %v2025, %v2021
    %v3826 = vpack.c.b16 %v2030, %v2026
    %v3827 = vpack.c.b16 %v2031, %v2027
    %v3828 = vpack.c.b16 %v2032, %v2028
    %v3829 = vpack.c.b16 %v2033, %v2029
    %v3830 = vpack.c.b16 %v2038, %v2034
    %v3831 = vpack.c.b16 %v2039, %v2035
    %v3832 = vpack.c.b16 %v2040, %v2036
    %v3833 = vpack.c.b16 %v2041, %v2037
    %v3834 = vpack.c.b16 %v2046, %v2042
    %v3835 = vpack.c.b16 %v2047, %v2043
    %v3836 = vpack.c.b16 %v2048, %v2044
    %v3837 = vpack.c.b16 %v2049, %v2045
    %v3838 = vpack.c.b16 %v2054, %v2050
    %v3839 = vpack.c.b16 %v2055, %v2051
    %v3840 = vpack.c.b16 %v2056, %v2052
    %v3841 = vpack.c.b16 %v2057, %v2053
    %v3842 = vpack.c.b16 %v2062, %v2058
    %v3843 = vpack.c.b16 %v2063, %v2059
    %v3844 = vpack.c.b16 %v2064, %v2060
    %v3845 = vpack.c.b16 %v2065, %v2061
    %v3846 = vpack.c.b16 %v2070, %v2066
    %v3847 = vpack.c.b16 %v2071, %v2067
    %v3848 = vpack.c.b16 %v2072, %v2068
    %v3849 = vpack.c.b16 %v2073, %v2069
    %v3850 = vpack.c.b16 %v2078, %v2074
    %v3851 = vpack.c.b16 %v2079, %v2075
    %v3852 = vpack.c.b16 %v2080, %v2076
    %v3853 = vpack.c.b16 %v2081, %v2077
    %v3854 = vpack.c.b16 %v2086, %v2082
    %v3855 = vpack.c.b16 %v2087, %v2083
    %v3856 = vpack.c.b16 %v2088, %v2084
    %v3857 = vpack.c.b16 %v2089, %v2085
    %v3858 = vpack.c.b16 %v2094, %v2090
    %v3859 = vpack.c.b16 %v2095, %v2091
    %v3860 = vpack.c.b16 %v2096, %v2092
    %v3861 = vpack.c.b16 %v2097, %v2093
    %v3862 = vpack.c.b16 %v2102, %v2098
    %v3863 = vpack.c.b16 %v2103, %v2099
    %v3864 = vpack.c.b16 %v2104, %v2100
    %v3865 = vpack.c.b16 %v2105, %v2101
    %v3866 = vpack.c.b16 %v2110, %v2106
    %v3867 = vpack.c.b16 %v2111, %v2107
    %v3868 = vpack.c.b16 %v2112, %v2108
    %v3869 = vpack.c.b16 %v2113, %v2109
    %v3870 = vpack.c.b16 %v2118, %v2114
    %v3871 = vpack.c.b16 %v2119, %v2115
    %v3872 = vpack.c.b16 %v2120, %v2116
    %v3873 = vpack.c.b16 %v2121, %v2117
    %v3874 = vpack.c.b16 %v2126, %v2122
    %v3875 = vpack.c.b16 %v2127, %v2123
    %v3876 = vpack.c.b16 %v2128, %v2124
    %v3877 = vpack.c.b16 %v2129, %v2125
    %v3878 = vpack.c.b16 %v2134, %v2130
    %v3879 = vpack.c.b16 %v2135, %v2131
    %v3880 = vpack.c.b16 %v2136, %v2132
    %v3881 = vpack.c.b16 %v2137, %v2133
    %v3882 = vpack.c.b16 %v2142, %v2138
    %v3883 = vpack.c.b16 %v2143, %v2139
    %v3884 = vpack.c.b16 %v2144, %v2140
    %v3885 = vpack.c.b16 %v2145, %v2141
    %v3886 = vpack.c.b16 %v2150, %v2146
    %v3887 = vpack.c.b16 %v2151, %v2147
    %v3888 = vpack.c.b16 %v2152, %v2148
    %v3889 = vpack.c.b16 %v2153, %v2149
    %v3890 = vpack.c.b16 %v2158, %v2154
    %v3891 = vpack.c.b16 %v2159, %v2155
    %v3892 = vpack.c.b16 %v2160, %v2156
    %v3893 = vpack.c.b16 %v2161, %v2157
    %v3894 = vpack.c.b16 %v2166, %v2162
    %v3895 = vpack.c.b16 %v2167, %v2163
    %v3896 = vpack.c.b16 %v2168, %v2164
    %v3897 = vpack.c.b16 %v2169, %v2165
    %v3898 = vpack.c.b16 %v2174, %v2170
    %v3899 = vpack.c.b16 %v2175, %v2171
    %v3900 = vpack.c.b16 %v2176, %v2172
    %v3901 = vpack.c.b16 %v2177, %v2173
    %v3902 = vpack.c.b16 %v2182, %v2178
    %v3903 = vpack.c.b16 %v2183, %v2179
    %v3904 = vpack.c.b16 %v2184, %v2180
    %v3905 = vpack.c.b16 %v2185, %v2181
    %v3906 = vpack.c.b16 %v2190, %v2186
    %v3907 = vpack.c.b16 %v2191, %v2187
    %v3908 = vpack.c.b16 %v2192, %v2188
    %v3909 = vpack.c.b16 %v2193, %v2189
    %v3910 = vpack.c.b16 %v2198, %v2194
    %v3911 = vpack.c.b16 %v2199, %v2195
    %v3912 = vpack.c.b16 %v2200, %v2196
    %v3913 = vpack.c.b16 %v2201, %v2197
    %v3914 = vpack.c.b16 %v2206, %v2202
    %v3915 = vpack.c.b16 %v2207, %v2203
    %v3916 = vpack.c.b16 %v2208, %v2204
    %v3917 = vpack.c.b16 %v2209, %v2205
    %v3918 = vpack.c.b16 %v2214, %v2210
    %v3919 = vpack.c.b16 %v2215, %v2211
    %v3920 = vpack.c.b16 %v2216, %v2212
    %v3921 = vpack.c.b16 %v2217, %v2213
    %v3922 = vpack.c.b16 %v2222, %v2218
    %v3923 = vpack.c.b16 %v2223, %v2219
    %v3924 = vpack.c.b16 %v2224, %v2220
    %v3925 = vpack.c.b16 %v2225, %v2221
    %v3926 = vpack.c.b16 %v2230, %v2226
    %v3927 = vpack.c.b16 %v2231, %v2227
    %v3928 = vpack.c.b16 %v2232, %v2228
    %v3929 = vpack.c.b16 %v2233, %v2229
    %v3930 = vpack.c.b16 %v2238, %v2234
    %v3931 = vpack.c.b16 %v2239, %v2235
    %v3932 = vpack.c.b16 %v2240, %v2236
    %v3933 = vpack.c.b16 %v2241, %v2237
    %v3934 = vpack.c.b16 %v2246, %v2242
    %v3935 = vpack.c.b16 %v2247, %v2243
    %v3936 = vpack.c.b16 %v2248, %v2244
    %v3937 = vpack.c.b16 %v2249, %v2245
    %v3938 = vpack.c.b16 %v2254, %v2250
    %v3939 = vpack.c.b16 %v2255, %v2251
    %v3940 = vpack.c.b16 %v2256, %v2252
    %v3941 = vpack.c.b16 %v2257, %v2253
    %v3942 = vpack.c.b16 %v2262, %v2258
    %v3943 = vpack.c.b16 %v2263, %v2259
    %v3944 = vpack.c.b16 %v2264, %v2260
    %v3945 = vpack.c.b16 %v2265, %v2261
    %v3946 = vpack.c.b16 %v2270, %v2266
    %v3947 = vpack.c.b16 %v2271, %v2267
    %v3948 = vpack.c.b16 %v2272, %v2268
    %v3949 = vpack.c.b16 %v2273, %v2269
    %v3950 = vpack.c.b16 %v2278, %v2274
    %v3951 = vpack.c.b16 %v2279, %v2275
    %v3952 = vpack.c.b16 %v2280, %v2276
    %v3953 = vpack.c.b16 %v2281, %v2277
    %v3954 = vpack.c.b16 %v2286, %v2282
    %v3955 = vpack.c.b16 %v2287, %v2283
    %v3956 = vpack.c.b16 %v2288, %v2284
    %v3957 = vpack.c.b16 %v2289, %v2285
    %v3958 = vpack.c.b16 %v2294, %v2290
    %v3959 = vpack.c.b16 %v2295, %v2291
    %v3960 = vpack.c.b16 %v2296, %v2292
    %v3961 = vpack.c.b16 %v2297, %v2293
    %v3962 = vpack.c.b16 %v2302, %v2298
    %v3963 = vpack.c.b16 %v2303, %v2299
    %v3964 = vpack.c.b16 %v2304, %v2300
    %v3965 = vpack.c.b16 %v2305, %v2301
    %v3966 = vpack.c.b16 %v2310, %v2306
    %v3967 = vpack.c.b16 %v2311, %v2307
    %v3968 = vpack.c.b16 %v2312, %v2308
    %v3969 = vpack.c.b16 %v2313, %v2309
    %v3970 = vpack.c.b16 %v2318, %v2314
    %v3971 = vpack.c.b16 %v2319, %v2315
    %v3972 = vpack.c.b16 %v2320, %v2316
    %v3973 = vpack.c.b16 %v2321, %v2317
    %v3974 = vpack.c.b16 %v2326, %v2322
    %v3975 = vpack.c.b16 %v2327, %v2323
    %v3976 = vpack.c.b16 %v2328, %v2324
    %v3977 = vpack.c.b16 %v2329, %v2325
    %v3978 = vpack.c.b16 %v2334, %v2330
    %v3979 = vpack.c.b16 %v2335, %v2331
    %v3980 = vpack.c.b16 %v2336, %v2332
    %v3981 = vpack.c.b16 %v2337, %v2333
    %v3982 = vpack.c.b16 %v2342, %v2338
    %v3983 = vpack.c.b16 %v2343, %v2339
    %v3984 = vpack.c.b16 %v2344, %v2340
    %v3985 = vpack.c.b16 %v2345, %v2341
    %v3986 = vpack.c.b16 %v2350, %v2346
    %v3987 = vpack.c.b16 %v2351, %v2347
    %v3988 = vpack.c.b16 %v2352, %v2348
    %v3989 = vpack.c.b16 %v2353, %v2349
    %v3990 = vpack.c.b16 %v2358, %v2354
    %v3991 = vpack.c.b16 %v2359, %v2355
    %v3992 = vpack.c.b16 %v2360, %v2356
    %v3993 = vpack.c.b16 %v2361, %v2357
    %v3994 = vpack.c.b16 %v2366, %v2362
    %v3995 = vpack.c.b16 %v2367, %v2363
    %v3996 = vpack.c.b16 %v2368, %v2364
    %v3997 = vpack.c.b16 %v2369, %v2365
    %v3998 = vpack.c.b16 %v2374, %v2370
    %v3999 = vpack.c.b16 %v2375, %v2371
    %v4000 = vpack.c.b16 %v2376, %v2372
    %v4001 = vpack.c.b16 %v2377, %v2373
    %v4002 = vpack.c.b16 %v2382, %v2378
    %v4003 = vpack.c.b16 %v2383, %v2379
    %v4004 = vpack.c.b16 %v2384, %v2380
    %v4005 = vpack.c.b16 %v2385, %v2381
    %v4006 = vpack.c.b16 %v2390, %v2386
    %v4007 = vpack.c.b16 %v2391, %v2387
    %v4008 = vpack.c.b16 %v2392, %v2388
    %v4009 = vpack.c.b16 %v2393, %v2389
    %v4010 = vpack.c.b16 %v2398, %v2394
    %v4011 = vpack.c.b16 %v2399, %v2395
    %v4012 = vpack.c.b16 %v2400, %v2396
    %v4013 = vpack.c.b16 %v2401, %v2397
    %v4014 = vpack.c.b16 %v2406, %v2402
    %v4015 = vpack.c.b16 %v2407, %v2403
    %v4016 = vpack.c.b16 %v2408, %v2404
    %v4017 = vpack.c.b16 %v2409, %v2405
    %v4018 = vpack.c.b16 %v2414, %v2410
    %v4019 = vpack.c.b16 %v2415, %v2411
    %v4020 = vpack.c.b16 %v2416, %v2412
    %v4021 = vpack.c.b16 %v2417, %v2413
    %v4022 = vpack.c.b16 %v2422, %v2418
    %v4023 = vpack.c.b16 %v2423, %v2419
    %v4024 = vpack.c.b16 %v2424, %v2420
    %v4025 = vpack.c.b16 %v2425, %v2421
    %v4026 = vpack.c.b16 %v2430, %v2426
    %v4027 = vpack.c.b16 %v2431, %v2427
    %v4028 = vpack.c.b16 %v2432, %v2428
    %v4029 = vpack.c.b16 %v2433, %v2429
    %v4030 = vpack.c.b16 %v2438, %v2434
    %v4031 = vpack.c.b16 %v2439, %v2435
    %v4032 = vpack.c.b16 %v2440, %v2436
    %v4033 = vpack.c.b16 %v2441, %v2437
    %v4034 = vpack.c.b16 %v2446, %v2442
    %v4035 = vpack.c.b16 %v2447, %v2443
    %v4036 = vpack.c.b16 %v2448, %v2444
    %v4037 = vpack.c.b16 %v2449, %v2445
    %v4038 = vpack.c.b16 %v2454, %v2450
    %v4039 = vpack.c.b16 %v2455, %v2451
    %v4040 = vpack.c.b16 %v2456, %v2452
    %v4041 = vpack.c.b16 %v2457, %v2453
    %v4042 = vpack.c.b16 %v2462, %v2458
    %v4043 = vpack.c.b16 %v2463, %v2459
    %v4044 = vpack.c.b16 %v2464, %v2460
    %v4045 = vpack.c.b16 %v2465, %v2461
    %v4046 = vpack.c.b16 %v2470, %v2466
    %v4047 = vpack.c.b16 %v2471, %v2467
    %v4048 = vpack.c.b16 %v2472, %v2468
    %v4049 = vpack.c.b16 %v2473, %v2469
    %v4050 = vpack.c.b16 %v2478, %v2474
    %v4051 = vpack.c.b16 %v2479, %v2475
    %v4052 = vpack.c.b16 %v2480, %v2476
    %v4053 = vpack.c.b16 %v2481, %v2477
    %v4054 = vpack.c.b16 %v2486, %v2482
    %v4055 = vpack.c.b16 %v2487, %v2483
    %v4056 = vpack.c.b16 %v2488, %v2484
    %v4057 = vpack.c.b16 %v2489, %v2485
    %v4058 = vpack.c.b16 %v2494, %v2490
    %v4059 = vpack.c.b16 %v2495, %v2491
    %v4060 = vpack.c.b16 %v2496, %v2492
    %v4061 = vpack.c.b16 %v2497, %v2493
    %v4062 = vpack.c.b16 %v2502, %v2498
    %v4063 = vpack.c.b16 %v2503, %v2499
    %v4064 = vpack.c.b16 %v2504, %v2500
    %v4065 = vpack.c.b16 %v2505, %v2501
    %v4066 = vpack.c.b16 %v2510, %v2506
    %v4067 = vpack.c.b16 %v2511, %v2507
    %v4068 = vpack.c.b16 %v2512, %v2508
    %v4069 = vpack.c.b16 %v2513, %v2509
    %v4070 = vpack.c.b16 %v2518, %v2514
    %v4071 = vpack.c.b16 %v2519, %v2515
    %v4072 = vpack.c.b16 %v2520, %v2516
    %v4073 = vpack.c.b16 %v2521, %v2517
    %v4074 = vpack.c.b16 %v2526, %v2522
    %v4075 = vpack.c.b16 %v2527, %v2523
    %v4076 = vpack.c.b16 %v2528, %v2524
    %v4077 = vpack.c.b16 %v2529, %v2525
    %v4078 = vpack.c.b16 %v2534, %v2530
    %v4079 = vpack.c.b16 %v2535, %v2531
    %v4080 = vpack.c.b16 %v2536, %v2532
    %v4081 = vpack.c.b16 %v2537, %v2533
    %v4082 = vpack.c.b16 %v2542, %v2538
    %v4083 = vpack.c.b16 %v2543, %v2539
    %v4084 = vpack.c.b16 %v2544, %v2540
    %v4085 = vpack.c.b16 %v2545, %v2541
    %v4086 = vpack.c.b16 %v2550, %v2546
    %v4087 = vpack.c.b16 %v2551, %v2547
    %v4088 = vpack.c.b16 %v2552, %v2548
    %v4089 = vpack.c.b16 %v2553, %v2549
    %v4090 = vpack.c.b16 %v2558, %v2554
    %v4091 = vpack.c.b16 %v2559, %v2555
    %v4092 = vpack.c.b16 %v2560, %v2556
    %v4093 = vpack.c.b16 %v2561, %v2557
    %v4094 = vpack.c.b16 %v2566, %v2562
    %v4095 = vpack.c.b16 %v2567, %v2563
    %v4096 = vpack.c.b16 %v2568, %v2564
    %v4097 = vpack.c.b16 %v2569, %v2565
    %v4098 = vpack.c.b16 %v2574, %v2570
    %v4099 = vpack.c.b16 %v2575, %v2571
    %v4100 = vpack.c.b16 %v2576, %v2572
    %v4101 = vpack.c.b16 %v2577, %v2573
    %v4102 = vpack.c.b16 %v2582, %v2578
    %v4103 = vpack.c.b16 %v2583, %v2579
    %v4104 = vpack.c.b16 %v2584, %v2580
    %v4105 = vpack.c.b16 %v2585, %v2581
    %v4106 = vpack.c.b16 %v2590, %v2586
    %v4107 = vpack.c.b16 %v2591, %v2587
    %v4108 = vpack.c.b16 %v2592, %v2588
    %v4109 = vpack.c.b16 %v2593, %v2589
    %v4110 = vpack.c.b16 %v2598, %v2594
    %v4111 = vpack.c.b16 %v2599, %v2595
    %v4112 = vpack.c.b16 %v2600, %v2596
    %v4113 = vpack.c.b16 %v2601, %v2597
    %v4114 = vpack.c.b16 %v2606, %v2602
    %v4115 = vpack.c.b16 %v2607, %v2603
    %v4116 = vpack.c.b16 %v2608, %v2604
    %v4117 = vpack.c.b16 %v2609, %v2605
    %v4118 = vpack.c.b16 %v2614, %v2610
    %v4119 = vpack.c.b16 %v2615, %v2611
    %v4120 = vpack.c.b16 %v2616, %v2612
    %v4121 = vpack.c.b16 %v2617, %v2613
    %v4122 = vpack.c.b16 %v2622, %v2618
    %v4123 = vpack.c.b16 %v2623, %v2619
    %v4124 = vpack.c.b16 %v2624, %v2620
    %v4125 = vpack.c.b16 %v2625, %v2621
    %v4126 = vpack.c.b16 %v2630, %v2626
    %v4127 = vpack.c.b16 %v2631, %v2627
    %v4128 = vpack.c.b16 %v2632, %v2628
    %v4129 = vpack.c.b16 %v2633, %v2629
    %v4130 = vpack.c.b16 %v2638, %v2634
    %v4131 = vpack.c.b16 %v2639, %v2635
    %v4132 = vpack.c.b16 %v2640, %v2636
    %v4133 = vpack.c.b16 %v2641, %v2637
    %v4134 = vpack.c.b16 %v2646, %v2642
    %v4135 = vpack.c.b16 %v2647, %v2643
    %v4136 = vpack.c.b16 %v2648, %v2644
    %v4137 = vpack.c.b16 %v2649, %v2645
    %v4138 = vpack.c.b16 %v2654, %v2650
    %v4139 = vpack.c.b16 %v2655, %v2651
    %v4140 = vpack.c.b16 %v2656, %v2652
    %v4141 = vpack.c.b16 %v2657, %v2653
    %v4142 = vpack.c.b16 %v2662, %v2658
    %v4143 = vpack.c.b16 %v2663, %v2659
    %v4144 = vpack.c.b16 %v2664, %v2660
    %v4145 = vpack.c.b16 %v2665, %v2661
    %v4146 = vpack.c.b16 %v2670, %v2666
    %v4147 = vpack.c.b16 %v2671, %v2667
    %v4148 = vpack.c.b16 %v2672, %v2668
    %v4149 = vpack.c.b16 %v2673, %v2669
    %v4150 = vpack.c.b16 %v2678, %v2674
    %v4151 = vpack.c.b16 %v2679, %v2675
    %v4152 = vpack.c.b16 %v2680, %v2676
    %v4153 = vpack.c.b16 %v2681, %v2677
    %v4154 = vpack.c.b16 %v2686, %v2682
    %v4155 = vpack.c.b16 %v2687, %v2683
    %v4156 = vpack.c.b16 %v2688, %v2684
    %v4157 = vpack.c.b16 %v2689, %v2685
    %v4158 = vpack.c.b16 %v2694, %v2690
    %v4159 = vpack.c.b16 %v2695, %v2691
    %v4160 = vpack.c.b16 %v2696, %v2692
    %v4161 = vpack.c.b16 %v2697, %v2693
    %v4162 = vpack.c.b16 %v2702, %v2698
    %v4163 = vpack.c.b16 %v2703, %v2699
    %v4164 = vpack.c.b16 %v2704, %v2700
    %v4165 = vpack.c.b16 %v2705, %v2701
    %v4166 = vpack.c.b16 %v2710, %v2706
    %v4167 = vpack.c.b16 %v2711, %v2707
    %v4168 = vpack.c.b16 %v2712, %v2708
    %v4169 = vpack.c.b16 %v2713, %v2709
    %v4170 = vpack.c.b16 %v2718, %v2714
    %v4171 = vpack.c.b16 %v2719, %v2715
    %v4172 = vpack.c.b16 %v2720, %v2716
    %v4173 = vpack.c.b16 %v2721, %v2717
    %v4174 = vpack.c.b16 %v2726, %v2722
    %v4175 = vpack.c.b16 %v2727, %v2723
    %v4176 = vpack.c.b16 %v2728, %v2724
    %v4177 = vpack.c.b16 %v2729, %v2725
    %v4178 = vpack.c.b16 %v2734, %v2730
    %v4179 = vpack.c.b16 %v2735, %v2731
    %v4180 = vpack.c.b16 %v2736, %v2732
    %v4181 = vpack.c.b16 %v2737, %v2733
    %v4182 = vpack.c.b16 %v2742, %v2738
    %v4183 = vpack.c.b16 %v2743, %v2739
    %v4184 = vpack.c.b16 %v2744, %v2740
    %v4185 = vpack.c.b16 %v2745, %v2741
    %v4186 = vpack.c.b16 %v2750, %v2746
    %v4187 = vpack.c.b16 %v2751, %v2747
    %v4188 = vpack.c.b16 %v2752, %v2748
    %v4189 = vpack.c.b16 %v2753, %v2749
    %v4190 = vpack.c.b16 %v2758, %v2754
    %v4191 = vpack.c.b16 %v2759, %v2755
    %v4192 = vpack.c.b16 %v2760, %v2756
    %v4193 = vpack.c.b16 %v2761, %v2757
    %v4194 = vpack.c.b16 %v2766, %v2762
    %v4195 = vpack.c.b16 %v2767, %v2763
    %v4196 = vpack.c.b16 %v2768, %v2764
    %v4197 = vpack.c.b16 %v2769, %v2765
    %v4198 = vpack.c.b16 %v2774, %v2770
    %v4199 = vpack.c.b16 %v2775, %v2771
    %v4200 = vpack.c.b16 %v2776, %v2772
    %v4201 = vpack.c.b16 %v2777, %v2773
    %v4202 = vpack.c.b16 %v2782, %v2778
    %v4203 = vpack.c.b16 %v2783, %v2779
    %v4204 = vpack.c.b16 %v2784, %v2780
    %v4205 = vpack.c.b16 %v2785, %v2781
    %v4206 = vpack.c.b16 %v2790, %v2786
    %v4207 = vpack.c.b16 %v2791, %v2787
    %v4208 = vpack.c.b16 %v2792, %v2788
    %v4209 = vpack.c.b16 %v2793, %v2789
    %v4210 = vpack.c.b16 %v2798, %v2794
    %v4211 = vpack.c.b16 %v2799, %v2795
    %v4212 = vpack.c.b16 %v2800, %v2796
    %v4213 = vpack.c.b16 %v2801, %v2797
    %v4214 = vpack.c.b16 %v2806, %v2802
    %v4215 = vpack.c.b16 %v2807, %v2803
    %v4216 = vpack.c.b16 %v2808, %v2804
    %v4217 = vpack.c.b16 %v2809, %v2805
    %v4218 = vpack.c.b16 %v2814, %v2810
    %v4219 = vpack.c.b16 %v2815, %v2811
    %v4220 = vpack.c.b16 %v2816, %v2812
    %v4221 = vpack.c.b16 %v2817, %v2813
    %v4222 = vpack.c.b16 %v2822, %v2818
    %v4223 = vpack.c.b16 %v2823, %v2819
    %v4224 = vpack.c.b16 %v2824, %v2820
    %v4225 = vpack.c.b16 %v2825, %v2821
    %v4226 = vpack.c.b16 %v2830, %v2826
    %v4227 = vpack.c.b16 %v2831, %v2827
    %v4228 = vpack.c.b16 %v2832, %v2828
    %v4229 = vpack.c.b16 %v2833, %v2829
    %v4230 = vpack.c.b16 %v2838, %v2834
    %v4231 = vpack.c.b16 %v2839, %v2835
    %v4232 = vpack.c.b16 %v2840, %v2836
    %v4233 = vpack.c.b16 %v2841, %v2837
    %v4234 = vpack.c.b16 %v2846, %v2842
    %v4235 = vpack.c.b16 %v2847, %v2843
    %v4236 = vpack.c.b16 %v2848, %v2844
    %v4237 = vpack.c.b16 %v2849, %v2845
    %v4238 = vpack.c.b16 %v2854, %v2850
    %v4239 = vpack.c.b16 %v2855, %v2851
    %v4240 = vpack.c.b16 %v2856, %v2852
    %v4241 = vpack.c.b16 %v2857, %v2853
    %v4242 = vpack.c.b16 %v2862, %v2858
    %v4243 = vpack.c.b16 %v2863, %v2859
    %v4244 = vpack.c.b16 %v2864, %v2860
    %v4245 = vpack.c.b16 %v2865, %v2861
    %v4246 = vpack.c.b16 %v2870, %v2866
    %v4247 = vpack.c.b16 %v2871, %v2867
    %v4248 = vpack.c.b16 %v2872, %v2868
    %v4249 = vpack.c.b16 %v2873, %v2869
    %v4250 = vpack.c.b16 %v2878, %v2874
    %v4251 = vpack.c.b16 %v2879, %v2875
    %v4252 = vpack.c.b16 %v2880, %v2876
    %v4253 = vpack.c.b16 %v2881, %v2877
    %v4254 = vpack.c.b16 %v2886, %v2882
    %v4255 = vpack.c.b16 %v2887, %v2883
    %v4256 = vpack.c.b16 %v2888, %v2884
    %v4257 = vpack.c.b16 %v2889, %v2885
    %v4258 = vpack.c.b16 %v2894, %v2890
    %v4259 = vpack.c.b16 %v2895, %v2891
    %v4260 = vpack.c.b16 %v2896, %v2892
    %v4261 = vpack.c.b16 %v2897, %v2893
    %v4262 = vpack.c.b16 %v2902, %v2898
    %v4263 = vpack.c.b16 %v2903, %v2899
    %v4264 = vpack.c.b16 %v2904, %v2900
    %v4265 = vpack.c.b16 %v2905, %v2901
    %v4266 = vpack.c.b16 %v2910, %v2906
    %v4267 = vpack.c.b16 %v2911, %v2907
    %v4268 = vpack.c.b16 %v2912, %v2908
    %v4269 = vpack.c.b16 %v2913, %v2909
    %v4270 = vpack.c.b16 %v2918, %v2914
    %v4271 = vpack.c.b16 %v2919, %v2915
    %v4272 = vpack.c.b16 %v2920, %v2916
    %v4273 = vpack.c.b16 %v2921, %v2917
    %v4274 = vpack.c.b16 %v2926, %v2922
    %v4275 = vpack.c.b16 %v2927, %v2923
    %v4276 = vpack.c.b16 %v2928, %v2924
    %v4277 = vpack.c.b16 %v2929, %v2925
    %v4278 = vpack.c.b16 %v2934, %v2930
    %v4279 = vpack.c.b16 %v2935, %v2931
    %v4280 = vpack.c.b16 %v2936, %v2932
    %v4281 = vpack.c.b16 %v2937, %v2933
    %v4282 = vpack.c.b16 %v2942, %v2938
    %v4283 = vpack.c.b16 %v2943, %v2939
    %v4284 = vpack.c.b16 %v2944, %v2940
    %v4285 = vpack.c.b16 %v2945, %v2941
    %v4286 = vpack.c.b16 %v2950, %v2946
    %v4287 = vpack.c.b16 %v2951, %v2947
    %v4288 = vpack.c.b16 %v2952, %v2948
    %v4289 = vpack.c.b16 %v2953, %v2949
    %v4290 = vpack.c.b16 %v2958, %v2954
    %v4291 = vpack.c.b16 %v2959, %v2955
    %v4292 = vpack.c.b16 %v2960, %v2956
    %v4293 = vpack.c.b16 %v2961, %v2957
    %v4294 = vpack.c.b16 %v2966, %v2962
    %v4295 = vpack.c.b16 %v2967, %v2963
    %v4296 = vpack.c.b16 %v2968, %v2964
    %v4297 = vpack.c.b16 %v2969, %v2965
    %v4298 = vpack.c.b16 %v2974, %v2970
    %v4299 = vpack.c.b16 %v2975, %v2971
    %v4300 = vpack.c.b16 %v2976, %v2972
    %v4301 = vpack.c.b16 %v2977, %v2973
    %v4302 = vpack.c.b16 %v2982, %v2978
    %v4303 = vpack.c.b16 %v2983, %v2979
    %v4304 = vpack.c.b16 %v2984, %v2980
    %v4305 = vpack.c.b16 %v2985, %v2981
    %v4306 = vpack.c.b16 %v2990, %v2986
    %v4307 = vpack.c.b16 %v2991, %v2987
    %v4308 = vpack.c.b16 %v2992, %v2988
    %v4309 = vpack.c.b16 %v2993, %v2989
    %v4310 = vpack.c.b16 %v2998, %v2994
    %v4311 = vpack.c.b16 %v2999, %v2995
    %v4312 = vpack.c.b16 %v3000, %v2996
    %v4313 = vpack.c.b16 %v3001, %v2997
    %v4314 = vpack.c.b16 %v3006, %v3002
    %v4315 = vpack.c.b16 %v3007, %v3003
    %v4316 = vpack.c.b16 %v3008, %v3004
    %v4317 = vpack.c.b16 %v3009, %v3005
    %v4318 = vpack.c.b16 %v3014, %v3010
    %v4319 = vpack.c.b16 %v3015, %v3011
    %v4320 = vpack.c.b16 %v3016, %v3012
    %v4321 = vpack.c.b16 %v3017, %v3013
    %v4322 = vpack.c.b16 %v3022, %v3018
    %v4323 = vpack.c.b16 %v3023, %v3019
    %v4324 = vpack.c.b16 %v3024, %v3020
    %v4325 = vpack.c.b16 %v3025, %v3021
    %v4326 = vpack.c.b16 %v3030, %v3026
    %v4327 = vpack.c.b16 %v3031, %v3027
    %v4328 = vpack.c.b16 %v3032, %v3028
    %v4329 = vpack.c.b16 %v3033, %v3029
    %v4330 = vpack.c.b16 %v3038, %v3034
    %v4331 = vpack.c.b16 %v3039, %v3035
    %v4332 = vpack.c.b16 %v3040, %v3036
    %v4333 = vpack.c.b16 %v3041, %v3037
    %v4334 = vpack.c.b16 %v3046, %v3042
    %v4335 = vpack.c.b16 %v3047, %v3043
    %v4336 = vpack.c.b16 %v3048, %v3044
    %v4337 = vpack.c.b16 %v3049, %v3045
    %v4338 = vpack.c.b16 %v3054, %v3050
    %v4339 = vpack.c.b16 %v3055, %v3051
    %v4340 = vpack.c.b16 %v3056, %v3052
    %v4341 = vpack.c.b16 %v3057, %v3053
    %v4342 = vpack.c.b16 %v3062, %v3058
    %v4343 = vpack.c.b16 %v3063, %v3059
    %v4344 = vpack.c.b16 %v3064, %v3060
    %v4345 = vpack.c.b16 %v3065, %v3061
    %v4346 = vpack.c.b16 %v3070, %v3066
    %v4347 = vpack.c.b16 %v3071, %v3067
    %v4348 = vpack.c.b16 %v3072, %v3068
    %v4349 = vpack.c.b16 %v3073, %v3069
    %v4350 = vpack.c.b16 %v3078, %v3074
    %v4351 = vpack.c.b16 %v3079, %v3075
    %v4352 = vpack.c.b16 %v3080, %v3076
    %v4353 = vpack.c.b16 %v3081, %v3077
    %v4354 = vpack.c.b16 %v3086, %v3082
    %v4355 = vpack.c.b16 %v3087, %v3083
    %v4356 = vpack.c.b16 %v3088, %v3084
    %v4357 = vpack.c.b16 %v3089, %v3085
    %v4358 = vpack.c.b16 %v3094, %v3090
    %v4359 = vpack.c.b16 %v3095, %v3091
    %v4360 = vpack.c.b16 %v3096, %v3092
    %v4361 = vpack.c.b16 %v3097, %v3093
    %v4362 = vpack.c.b16 %v3102, %v3098
    %v4363 = vpack.c.b16 %v3103, %v3099
    %v4364 = vpack.c.b16 %v3104, %v3100
    %v4365 = vpack.c.b16 %v3105, %v3101
    %v4366 = vpack.c.b16 %v3110, %v3106
    %v4367 = vpack.c.b16 %v3111, %v3107
    %v4368 = vpack.c.b16 %v3112, %v3108
    %v4369 = vpack.c.b16 %v3113, %v3109
    %v4370 = vpack.c.b16 %v3118, %v3114
    %v4371 = vpack.c.b16 %v3119, %v3115
    %v4372 = vpack.c.b16 %v3120, %v3116
    %v4373 = vpack.c.b16 %v3121, %v3117
    %v4374 = vpack.c.b16 %v3126, %v3122
    %v4375 = vpack.c.b16 %v3127, %v3123
    %v4376 = vpack.c.b16 %v3128, %v3124
    %v4377 = vpack.c.b16 %v3129, %v3125
    %v4378 = vpack.c.b16 %v3134, %v3130
    %v4379 = vpack.c.b16 %v3135, %v3131
    %v4380 = vpack.c.b16 %v3136, %v3132
    %v4381 = vpack.c.b16 %v3137, %v3133
    %v4382 = vpack.c.b16 %v3142, %v3138
    %v4383 = vpack.c.b16 %v3143, %v3139
    %v4384 = vpack.c.b16 %v3144, %v3140
    %v4385 = vpack.c.b16 %v3145, %v3141
    %v4386 = vpack.c.b16 %v3150, %v3146
    %v4387 = vpack.c.b16 %v3151, %v3147
    %v4388 = vpack.c.b16 %v3152, %v3148
    %v4389 = vpack.c.b16 %v3153, %v3149
    %v4390 = vpack.c.b16 %v3158, %v3154
    %v4391 = vpack.c.b16 %v3159, %v3155
    %v4392 = vpack.c.b16 %v3160, %v3156
    %v4393 = vpack.c.b16 %v3161, %v3157
    %v4394 = vpack.c.b16 %v3166, %v3162
    %v4395 = vpack.c.b16 %v3167, %v3163
    %v4396 = vpack.c.b16 %v3168, %v3164
    %v4397 = vpack.c.b16 %v3169, %v3165
    %v4398 = vpack.c.b16 %v3174, %v3170
    %v4399 = vpack.c.b16 %v3175, %v3171
    %v4400 = vpack.c.b16 %v3176, %v3172
    %v4401 = vpack.c.b16 %v3177, %v3173
    %v4402 = vpack.c.b16 %v3182, %v3178
    %v4403 = vpack.c.b16 %v3183, %v3179
    %v4404 = vpack.c.b16 %v3184, %v3180
    %v4405 = vpack.c.b16 %v3185, %v3181
    %v4406 = vpack.c.b16 %v3190, %v3186
    %v4407 = vpack.c.b16 %v3191, %v3187
    %v4408 = vpack.c.b16 %v3192, %v3188
    %v4409 = vpack.c.b16 %v3193, %v3189
    %v4410 = vpack.c.b16 %v3198, %v3194
    %v4411 = vpack.c.b16 %v3199, %v3195
    %v4412 = vpack.c.b16 %v3200, %v3196
    %v4413 = vpack.c.b16 %v3201, %v3197
    %v4414 = vpack.c.b16 %v3206, %v3202
    %v4415 = vpack.c.b16 %v3207, %v3203
    %v4416 = vpack.c.b16 %v3208, %v3204
    %v4417 = vpack.c.b16 %v3209, %v3205
    %v4418 = vpack.c.b16 %v3214, %v3210
    %v4419 = vpack.c.b16 %v3215, %v3211
    %v4420 = vpack.c.b16 %v3216, %v3212
    %v4421 = vpack.c.b16 %v3217, %v3213
    %v4422 = vpack.c.b16 %v3222, %v3218
    %v4423 = vpack.c.b16 %v3223, %v3219
    %v4424 = vpack.c.b16 %v3224, %v3220
    %v4425 = vpack.c.b16 %v3225, %v3221
    %v4426 = vpack.c.b16 %v3230, %v3226
    %v4427 = vpack.c.b16 %v3231, %v3227
    %v4428 = vpack.c.b16 %v3232, %v3228
    %v4429 = vpack.c.b16 %v3233, %v3229
    %v4430 = vpack.c.b16 %v3238, %v3234
    %v4431 = vpack.c.b16 %v3239, %v3235
    %v4432 = vpack.c.b16 %v3240, %v3236
    %v4433 = vpack.c.b16 %v3241, %v3237
    %v4434 = vpack.c.b16 %v3246, %v3242
    %v4435 = vpack.c.b16 %v3247, %v3243
    %v4436 = vpack.c.b16 %v3248, %v3244
    %v4437 = vpack.c.b16 %v3249, %v3245
    %v4438 = vpack.c.b16 %v3254, %v3250
    %v4439 = vpack.c.b16 %v3255, %v3251
    %v4440 = vpack.c.b16 %v3256, %v3252
    %v4441 = vpack.c.b16 %v3257, %v3253
    %v4442 = vpack.c.b16 %v3262, %v3258
    %v4443 = vpack.c.b16 %v3263, %v3259
    %v4444 = vpack.c.b16 %v3264, %v3260
    %v4445 = vpack.c.b16 %v3265, %v3261
    %v4446 = vpack.c.b16 %v3270, %v3266
    %v4447 = vpack.c.b16 %v3271, %v3267
    %v4448 = vpack.c.b16 %v3272, %v3268
    %v4449 = vpack.c.b16 %v3273, %v3269
    %v4450 = vpack.c.b16 %v3278, %v3274
    %v4451 = vpack.c.b16 %v3279, %v3275
    %v4452 = vpack.c.b16 %v3280, %v3276
    %v4453 = vpack.c.b16 %v3281, %v3277
    %v4454 = vpack.c.b16 %v3286, %v3282
    %v4455 = vpack.c.b16 %v3287, %v3283
    %v4456 = vpack.c.b16 %v3288, %v3284
    %v4457 = vpack.c.b16 %v3289, %v3285
    %v4458 = vpack.c.b16 %v3294, %v3290
    %v4459 = vpack.c.b16 %v3295, %v3291
    %v4460 = vpack.c.b16 %v3296, %v3292
    %v4461 = vpack.c.b16 %v3297, %v3293
    %v4462 = vpack.c.b16 %v3302, %v3298
    %v4463 = vpack.c.b16 %v3303, %v3299
    %v4464 = vpack.c.b16 %v3304, %v3300
    %v4465 = vpack.c.b16 %v3305, %v3301
    %v4466 = vpack.c.b16 %v3310, %v3306
    %v4467 = vpack.c.b16 %v3311, %v3307
    %v4468 = vpack.c.b16 %v3312, %v3308
    %v4469 = vpack.c.b16 %v3313, %v3309
    %v4470 = vpack.c.b16 %v3318, %v3314
    %v4471 = vpack.c.b16 %v3319, %v3315
    %v4472 = vpack.c.b16 %v3320, %v3316
    %v4473 = vpack.c.b16 %v3321, %v3317
    %v4474 = vpack.c.b16 %v3326, %v3322
    %v4475 = vpack.c.b16 %v3327, %v3323
    %v4476 = vpack.c.b16 %v3328, %v3324
    %v4477 = vpack.c.b16 %v3329, %v3325
    %v4478 = vpack.c.b16 %v3334, %v3330
    %v4479 = vpack.c.b16 %v3335, %v3331
    %v4480 = vpack.c.b16 %v3336, %v3332
    %v4481 = vpack.c.b16 %v3337, %v3333
    %v4482 = vpack.c.b16 %v3342, %v3338
    %v4483 = vpack.c.b16 %v3343, %v3339
    %v4484 = vpack.c.b16 %v3344, %v3340
    %v4485 = vpack.c.b16 %v3345, %v3341
    %v4486 = vpack.c.b16 %v3350, %v3346
    %v4487 = vpack.c.b16 %v3351, %v3347
    %v4488 = vpack.c.b16 %v3352, %v3348
    %v4489 = vpack.c.b16 %v3353, %v3349
    %v4490 = vpack.c.b16 %v3358, %v3354
    %v4491 = vpack.c.b16 %v3359, %v3355
    %v4492 = vpack.c.b16 %v3360, %v3356
    %v4493 = vpack.c.b16 %v3361, %v3357
    %v4494 = vpack.c.b16 %v3366, %v3362
    %v4495 = vpack.c.b16 %v3367, %v3363
    %v4496 = vpack.c.b16 %v3368, %v3364
    %v4497 = vpack.c.b16 %v3369, %v3365
    %v4498 = vpack.c.b16 %v3374, %v3370
    %v4499 = vpack.c.b16 %v3375, %v3371
    %v4500 = vpack.c.b16 %v3376, %v3372
    %v4501 = vpack.c.b16 %v3377, %v3373
    %v4502 = vpack.c.b16 %v3382, %v3378
    %v4503 = vpack.c.b16 %v3383, %v3379
    %v4504 = vpack.c.b16 %v3384, %v3380
    %v4505 = vpack.c.b16 %v3385, %v3381
    %v4506 = vpack.c.b16 %v3390, %v3386
    %v4507 = vpack.c.b16 %v3391, %v3387
    %v4508 = vpack.c.b16 %v3392, %v3388
    %v4509 = vpack.c.b16 %v3393, %v3389
    %v4510 = vpack.c.b16 %v3398, %v3394
    %v4511 = vpack.c.b16 %v3399, %v3395
    %v4512 = vpack.c.b16 %v3400, %v3396
    %v4513 = vpack.c.b16 %v3401, %v3397
    %v4514 = vpack.c.b16 %v3406, %v3402
    %v4515 = vpack.c.b16 %v3407, %v3403
    %v4516 = vpack.c.b16 %v3408, %v3404
    %v4517 = vpack.c.b16 %v3409, %v3405
    %v4518 = vpack.c.b16 %v3414, %v3410
    %v4519 = vpack.c.b16 %v3415, %v3411
    %v4520 = vpack.c.b16 %v3416, %v3412
    %v4521 = vpack.c.b16 %v3417, %v3413
    %v4522 = vpack.c.b16 %v3422, %v3418
    %v4523 = vpack.c.b16 %v3423, %v3419
    %v4524 = vpack.c.b16 %v3424, %v3420
    %v4525 = vpack.c.b16 %v3425, %v3421
    %v4526 = vpack.c.b16 %v3430, %v3426
    %v4527 = vpack.c.b16 %v3431, %v3427
    %v4528 = vpack.c.b16 %v3432, %v3428
    %v4529 = vpack.c.b16 %v3433, %v3429
    %v4530 = vpack.c.b16 %v3438, %v3434
    %v4531 = vpack.c.b16 %v3439, %v3435
    %v4532 = vpack.c.b16 %v3440, %v3436
    %v4533 = vpack.c.b16 %v3441, %v3437
    %v4534 = vpack.c.b16 %v3446, %v3442
    %v4535 = vpack.c.b16 %v3447, %v3443
    %v4536 = vpack.c.b16 %v3448, %v3444
    %v4537 = vpack.c.b16 %v3449, %v3445
    %v4538 = vpack.c.b16 %v3454, %v3450
    %v4539 = vpack.c.b16 %v3455, %v3451
    %v4540 = vpack.c.b16 %v3456, %v3452
    %v4541 = vpack.c.b16 %v3457, %v3453
    %v4542 = vpack.c.b16 %v3462, %v3458
    %v4543 = vpack.c.b16 %v3463, %v3459
    %v4544 = vpack.c.b16 %v3464, %v3460
    %v4545 = vpack.c.b16 %v3465, %v3461
    %v4546 = vpack.c.b16 %v3470, %v3466
    %v4547 = vpack.c.b16 %v3471, %v3467
    %v4548 = vpack.c.b16 %v3472, %v3468
    %v4549 = vpack.c.b16 %v3473, %v3469
    %v4550 = vpack.c.b16 %v3478, %v3474
    %v4551 = vpack.c.b16 %v3479, %v3475
    %v4552 = vpack.c.b16 %v3480, %v3476
    %v4553 = vpack.c.b16 %v3481, %v3477
    %v4554 = vpack.c.b16 %v3486, %v3482
    %v4555 = vpack.c.b16 %v3487, %v3483
    %v4556 = vpack.c.b16 %v3488, %v3484
    %v4557 = vpack.c.b16 %v3489, %v3485
    %v4558 = vpack.c.b16 %v3494, %v3490
    %v4559 = vpack.c.b16 %v3495, %v3491
    %v4560 = vpack.c.b16 %v3496, %v3492
    %v4561 = vpack.c.b16 %v3497, %v3493
    %v4562 = vpack.c.b16 %v3502, %v3498
    %v4563 = vpack.c.b16 %v3503, %v3499
    %v4564 = vpack.c.b16 %v3504, %v3500
    %v4565 = vpack.c.b16 %v3505, %v3501
    %v4566 = vpack.c.b16 %v3510, %v3506
    %v4567 = vpack.c.b16 %v3511, %v3507
    %v4568 = vpack.c.b16 %v3512, %v3508
    %v4569 = vpack.c.b16 %v3513, %v3509
    %v4570 = vpack.c.b16 %v3518, %v3514
    %v4571 = vpack.c.b16 %v3519, %v3515
    %v4572 = vpack.c.b16 %v3520, %v3516
    %v4573 = vpack.c.b16 %v3521, %v3517
    %v4574 = vpack.c.b16 %v3526, %v3522
    %v4575 = vpack.c.b16 %v3527, %v3523
    %v4576 = vpack.c.b16 %v3528, %v3524
    %v4577 = vpack.c.b16 %v3529, %v3525
    %v4578 = vpack.c.b16 %v3534, %v3530
    %v4579 = vpack.c.b16 %v3535, %v3531
    %v4580 = vpack.c.b16 %v3536, %v3532
    %v4581 = vpack.c.b16 %v3537, %v3533
    %v4582 = vpack.c.b16 %v3542, %v3538
    %v4583 = vpack.c.b16 %v3543, %v3539
    %v4584 = vpack.c.b16 %v3544, %v3540
    %v4585 = vpack.c.b16 %v3545, %v3541
    %v4586 = vpack.c.b16 %v3550, %v3546
    %v4587 = vpack.c.b16 %v3551, %v3547
    %v4588 = vpack.c.b16 %v3552, %v3548
    %v4589 = vpack.c.b16 %v3553, %v3549
    %v4590 = vpack.c.b16 %v3558, %v3554
    %v4591 = vpack.c.b16 %v3559, %v3555
    %v4592 = vpack.c.b16 %v3560, %v3556
    %v4593 = vpack.c.b16 %v3561, %v3557
    %v4594 = vpack.c.b16 %v3566, %v3562
    %v4595 = vpack.c.b16 %v3567, %v3563
    %v4596 = vpack.c.b16 %v3568, %v3564
    %v4597 = vpack.c.b16 %v3569, %v3565
    %v4598 = vpack.c.b16 %v3574, %v3570
    %v4599 = vpack.c.b16 %v3575, %v3571
    %v4600 = vpack.c.b16 %v3576, %v3572
    %v4601 = vpack.c.b16 %v3577, %v3573
    %v4602 = vpack.c.b16 %v3582, %v3578
    %v4603 = vpack.c.b16 %v3583, %v3579
    %v4604 = vpack.c.b16 %v3584, %v3580
    %v4605 = vpack.c.b16 %v3585, %v3581
    %v4606 = vpack.c.b16 %v3590, %v3586
    %v4607 = vpack.c.b16 %v3591, %v3587
    %v4608 = vpack.c.b16 %v3592, %v3588
    %v4609 = vpack.c.b16 %v3593, %v3589
    %v4610 = vpack.c.b16 %v3598, %v3594
    %v4611 = vpack.c.b16 %v3599, %v3595
    %v4612 = vpack.c.b16 %v3600, %v3596
    %v4613 = vpack.c.b16 %v3601, %v3597
    %v4614 = vpack.c.b16 %v3606, %v3602
    %v4615 = vpack.c.b16 %v3607, %v3603
    %v4616 = vpack.c.b16 %v3608, %v3604
    %v4617 = vpack.c.b16 %v3609, %v3605
    %v4618 = vpack.c.b16 %v3614, %v3610
    %v4619 = vpack.c.b16 %v3615, %v3611
    %v4620 = vpack.c.b16 %v3616, %v3612
    %v4621 = vpack.c.b16 %v3617, %v3613
    %v4622 = vpack.c.b16 %v3622, %v3618
    %v4623 = vpack.c.b16 %v3623, %v3619
    %v4624 = vpack.c.b16 %v3624, %v3620
    %v4625 = vpack.c.b16 %v3625, %v3621
    %v4626 = vpack.c.b16 %v3630, %v3626
    %v4627 = vpack.c.b16 %v3631, %v3627
    %v4628 = vpack.c.b16 %v3632, %v3628
    %v4629 = vpack.c.b16 %v3633, %v3629
    %v4630 = vpack.c.b16 %v3638, %v3634
    %v4631 = vpack.c.b16 %v3639, %v3635
    %v4632 = vpack.c.b16 %v3640, %v3636
    %v4633 = vpack.c.b16 %v3641, %v3637
    %v4634 = vpack.c.b16 %v3646, %v3642
    %v4635 = vpack.c.b16 %v3647, %v3643
    %v4636 = vpack.c.b16 %v3648, %v3644
    %v4637 = vpack.c.b16 %v3649, %v3645
    %v4638 = vpack.c.b16 %v3654, %v3650
    %v4639 = vpack.c.b16 %v3655, %v3651
    %v4640 = vpack.c.b16 %v3656, %v3652
    %v4641 = vpack.c.b16 %v3657, %v3653
    %v4642 = vpack.c.b16 %v3662, %v3658
    %v4643 = vpack.c.b16 %v3663, %v3659
    %v4644 = vpack.c.b16 %v3664, %v3660
    %v4645 = vpack.c.b16 %v3665, %v3661
    %v4646 = vpack.c.b16 %v3670, %v3666
    %v4647 = vpack.c.b16 %v3671, %v3667
    %v4648 = vpack.c.b16 %v3672, %v3668
    %v4649 = vpack.c.b16 %v3673, %v3669
    %v4650 = vpack.c.b16 %v3678, %v3674
    %v4651 = vpack.c.b16 %v3679, %v3675
    %v4652 = vpack.c.b16 %v3680, %v3676
    %v4653 = vpack.c.b16 %v3681, %v3677
    %v4654 = vpack.c.b16 %v3686, %v3682
    %v4655 = vpack.c.b16 %v3687, %v3683
    %v4656 = vpack.c.b16 %v3688, %v3684
    %v4657 = vpack.c.b16 %v3689, %v3685
    %v4658 = vpack.c.b16 %v3694, %v3690
    %v4659 = vpack.c.b16 %v3695, %v3691
    %v4660 = vpack.c.b16 %v3696, %v3692
    %v4661 = vpack.c.b16 %v3697, %v3693
    %v4662 = vpack.c.b16 %v3702, %v3698
    %v4663 = vpack.c.b16 %v3703, %v3699
    %v4664 = vpack.c.b16 %v3704, %v3700
    %v4665 = vpack.c.b16 %v3705, %v3701
    %v4666 = vpack.c.b16 %v3710, %v3706
    %v4667 = vpack.c.b16 %v3711, %v3707
    %v4668 = vpack.c.b16 %v3712, %v3708
    %v4669 = vpack.c.b16 %v3713, %v3709
    %v4670 = vpack.c.b16 %v3718, %v3714
    %v4671 = vpack.c.b16 %v3719, %v3715
    %v4672 = vpack.c.b16 %v3720, %v3716
    %v4673 = vpack.c.b16 %v3721, %v3717
    %v4674 = vpack.c.b16 %v3726, %v3722
    %v4675 = vpack.c.b16 %v3727, %v3723
    %v4676 = vpack.c.b16 %v3728, %v3724
    %v4677 = vpack.c.b16 %v3729, %v3725
    %v4678 = vpack.c.b16 %v3734, %v3730
    %v4679 = vpack.c.b16 %v3735, %v3731
    %v4680 = vpack.c.b16 %v3736, %v3732
    %v4681 = vpack.c.b16 %v3737, %v3733
    %v4682 = vpack.c.b16 %v3742, %v3738
    %v4683 = vpack.c.b16 %v3743, %v3739
    %v4684 = vpack.c.b16 %v3744, %v3740
    %v4685 = vpack.c.b16 %v3745, %v3741
    %v4686 = vpack.c.b16 %v3750, %v3746
    %v4687 = vpack.c.b16 %v3751, %v3747
    %v4688 = vpack.c.b16 %v3752, %v3748
    %v4689 = vpack.c.b16 %v3753, %v3749
    %v4690 = vpack.c.b16 %v3758, %v3754
    %v4691 = vpack.c.b16 %v3759, %v3755
    %v4692 = vpack.c.b16 %v3760, %v3756
    %v4693 = vpack.c.b16 %v3761, %v3757
    %v4694 = vpack.c.b16 %v3766, %v3762
    %v4695 = vpack.c.b16 %v3767, %v3763
    %v4696 = vpack.c.b16 %v3768, %v3764
    %v4697 = vpack.c.b16 %v3769, %v3765
    %v4698 = vpack.c.b16 %v3774, %v3770
    %v4699 = vpack.c.b16 %v3775, %v3771
    %v4700 = vpack.c.b16 %v3776, %v3772
    %v4701 = vpack.c.b16 %v3777, %v3773
    %v4702 = vpack.c.b16 %v3782, %v3778
    %v4703 = vpack.c.b16 %v3783, %v3779
    %v4704 = vpack.c.b16 %v3784, %v3780
    %v4705 = vpack.c.b16 %v3785, %v3781
    %v4706 = vpack.c.b16 %v3790, %v3786
    %v4707 = vpack.c.b16 %v3791, %v3787
    %v4708 = vpack.c.b16 %v3792, %v3788
    %v4709 = vpack.c.b16 %v3793, %v3789
    %v4710 = vpack.c.b16 %v3798, %v3794
    %v4711 = vpack.c.b16 %v3799, %v3795
    %v4712 = vpack.c.b16 %v3800, %v3796
    %v4713 = vpack.c.b16 %v3801, %v3797
    %v4714 = vpack.c.b16 %v3806, %v3802
    %v4715 = vpack.c.b16 %v3807, %v3803
    %v4716 = vpack.c.b16 %v3808, %v3804
    %v4717 = vpack.c.b16 %v3809, %v3805
    %v4718 = vpack.c.b16 %v3814, %v3810
    %v4719 = vpack.c.b16 %v3815, %v3811
    %v4720 = vpack.c.b16 %v3816, %v3812
    %v4721 = vpack.c.b16 %v3817, %v3813
    %v4722 = vpack.c.b16 %v3818, %v3818
    %v4723 = vpack.c.b16 %v3819, %v3819
    %v4724 = vpack.c.b16 %v3820, %v3820
    %v4725 = vpack.c.b16 %v3821, %v3821
    %vm5626 = vcmask 179200
    %v5628 = vsel %vm5626, %v191, 0
    %vm5630 = vcmask 1042432
    %v5632 = vsel %vm5630, %v4722, 0
    %v5635 = vsel %vm5630, %v4723, 0
    %v5638 = vsel %vm5630, %v4724, 0
    %v5641 = vsel %vm5630, %v4725, 0
    %5643 = vmatprep.subr.bf16.mxu0 %v3851
    %5644 = vmatpush1.bf16.msra.mxu0 %v3850
    %5645 = vmatprep.subr.bf16.mxu0 %v3847
    %5646 = vmatpush1.bf16.msra.mxu0 %v3846
    %5647 = vmatprep.subr.bf16.mxu0 %v3843
    %5648 = vmatpush1.bf16.msra.mxu0 %v3842
    %5649 = vmatprep.subr.bf16.mxu0 %v3839
    %5650 = vmatpush1.bf16.msra.mxu0 %v3838
    %5651 = vmatprep.subr.bf16.mxu0 %v3835
    %5652 = vmatpush1.bf16.msra.mxu0 %v3834
    %5653 = vmatprep.subr.bf16.mxu0 %v3831
    %5654 = vmatpush1.bf16.msra.mxu0 %v3830
    %5655 = vmatprep.subr.bf16.mxu0 %v3827
    %5656 = vmatpush1.bf16.msra.mxu0 %v3826
    %5657 = vmatprep.subr.bf16.mxu0 %v3823
    %5658 = vmatpush1.bf16.msra.mxu0 %v3822
    %5659 = vmatprep.subr.bf16.mxu0 %v3883
    %5660 = vmatpush2.bf16.msra.mxu0 %v3882
    %5661 = vmatprep.subr.bf16.mxu0 %v3879
    %5662 = vmatpush2.bf16.msra.mxu0 %v3878
    %5663 = vmatprep.subr.bf16.mxu0 %v3875
    %5664 = vmatpush2.bf16.msra.mxu0 %v3874
    %5665 = vmatprep.subr.bf16.mxu0 %v3871
    %5666 = vmatpush2.bf16.msra.mxu0 %v3870
    %5667 = vmatprep.subr.bf16.mxu0 %v3867
    %5668 = vmatpush2.bf16.msra.mxu0 %v3866
    %5669 = vmatprep.subr.bf16.mxu0 %v3863
    %5670 = vmatpush2.bf16.msra.mxu0 %v3862
    %5671 = vmatprep.subr.bf16.mxu0 %v3859
    %5672 = vmatpush2.bf16.msra.mxu0 %v3858
    %5673 = vmatprep.subr.bf16.mxu0 %v3855
    %5674 = vmatpush2.bf16.msra.mxu0 %v3854
    %5675 = vmatprep.mubr.bf16.mxu0 %v164
    %5676 = vmatmul.mubr.bf16.gmra.mxu0 %v163
    %v5677 = vpop.f32.mrf.mxu0
    %v5678 = vadd.f32 %v1099, %v5677
    %v5679 = vpop.f32.mrf.mxu0
    %v5680 = vadd.f32 %v1103, %v5679
    %v5681 = vpop.f32.mrf.mxu0
    %v5682 = vpop.f32.mrf.mxu0
    %5683 = vdwg.mxu0
    %5684 = vmatprep.subr.bf16.mxu0 %v3915
    %5685 = vmatpush1.bf16.msra.mxu0 %v3914
    %5686 = vmatprep.subr.bf16.mxu0 %v3911
    %5687 = vmatpush1.bf16.msra.mxu0 %v3910
    %5688 = vmatprep.subr.bf16.mxu0 %v3907
    %5689 = vmatpush1.bf16.msra.mxu0 %v3906
    %5690 = vmatprep.subr.bf16.mxu0 %v3903
    %5691 = vmatpush1.bf16.msra.mxu0 %v3902
    %5692 = vmatprep.subr.bf16.mxu0 %v3899
    %5693 = vmatpush1.bf16.msra.mxu0 %v3898
    %5694 = vmatprep.subr.bf16.mxu0 %v3895
    %5695 = vmatpush1.bf16.msra.mxu0 %v3894
    %5696 = vmatprep.subr.bf16.mxu0 %v3891
    %5697 = vmatpush1.bf16.msra.mxu0 %v3890
    %5698 = vmatprep.subr.bf16.mxu0 %v3887
    %5699 = vmatpush1.bf16.msra.mxu0 %v3886
    %5700 = vmatprep.subr.bf16.mxu0 %v3947
    %5701 = vmatpush2.bf16.msra.mxu0 %v3946
    %5702 = vmatprep.subr.bf16.mxu0 %v3943
    %5703 = vmatpush2.bf16.msra.mxu0 %v3942
    %5704 = vmatprep.subr.bf16.mxu0 %v3939
    %5705 = vmatpush2.bf16.msra.mxu0 %v3938
    %5706 = vmatprep.subr.bf16.mxu0 %v3935
    %5707 = vmatpush2.bf16.msra.mxu0 %v3934
    %5708 = vmatprep.subr.bf16.mxu0 %v3931
    %5709 = vmatpush2.bf16.msra.mxu0 %v3930
    %5710 = vmatprep.subr.bf16.mxu0 %v3927
    %5711 = vmatpush2.bf16.msra.mxu0 %v3926
    %5712 = vmatprep.subr.bf16.mxu0 %v3923
    %5713 = vmatpush2.bf16.msra.mxu0 %v3922
    %5714 = vmatprep.subr.bf16.mxu0 %v3919
    %5715 = vmatpush2.bf16.msra.mxu0 %v3918
    %5716 = vmatprep.mubr.bf16.mxu0 %v166
    %5717 = vmatmul.mubr.bf16.gmra.mxu0 %v165
    %v5718 = vpop.f32.mrf.mxu0
    %v5719 = vadd.f32 %v5678, %v5718
    %v5720 = vpop.f32.mrf.mxu0
    %v5721 = vadd.f32 %v5680, %v5720
    %v5722 = vpop.f32.mrf.mxu0
    %v5723 = vpop.f32.mrf.mxu0
    %5724 = vdwg.mxu0
    %5725 = vmatprep.subr.bf16.mxu0 %v3979
    %5726 = vmatpush1.bf16.msra.mxu0 %v3978
    %5727 = vmatprep.subr.bf16.mxu0 %v3975
    %5728 = vmatpush1.bf16.msra.mxu0 %v3974
    %5729 = vmatprep.subr.bf16.mxu0 %v3971
    %5730 = vmatpush1.bf16.msra.mxu0 %v3970
    %5731 = vmatprep.subr.bf16.mxu0 %v3967
    %5732 = vmatpush1.bf16.msra.mxu0 %v3966
    %5733 = vmatprep.subr.bf16.mxu0 %v3963
    %5734 = vmatpush1.bf16.msra.mxu0 %v3962
    %5735 = vmatprep.subr.bf16.mxu0 %v3959
    %5736 = vmatpush1.bf16.msra.mxu0 %v3958
    %5737 = vmatprep.subr.bf16.mxu0 %v3955
    %5738 = vmatpush1.bf16.msra.mxu0 %v3954
    %5739 = vmatprep.subr.bf16.mxu0 %v3951
    %5740 = vmatpush1.bf16.msra.mxu0 %v3950
    %5741 = vmatprep.subr.bf16.mxu0 %v4011
    %5742 = vmatpush2.bf16.msra.mxu0 %v4010
    %5743 = vmatprep.subr.bf16.mxu0 %v4007
    %5744 = vmatpush2.bf16.msra.mxu0 %v4006
    %5745 = vmatprep.subr.bf16.mxu0 %v4003
    %5746 = vmatpush2.bf16.msra.mxu0 %v4002
    %5747 = vmatprep.subr.bf16.mxu0 %v3999
    %5748 = vmatpush2.bf16.msra.mxu0 %v3998
    %5749 = vmatprep.subr.bf16.mxu0 %v3995
    %5750 = vmatpush2.bf16.msra.mxu0 %v3994
    %5751 = vmatprep.subr.bf16.mxu0 %v3991
    %5752 = vmatpush2.bf16.msra.mxu0 %v3990
    %5753 = vmatprep.subr.bf16.mxu0 %v3987
    %5754 = vmatpush2.bf16.msra.mxu0 %v3986
    %5755 = vmatprep.subr.bf16.mxu0 %v3983
    %5756 = vmatpush2.bf16.msra.mxu0 %v3982
    %5757 = vmatprep.mubr.bf16.mxu0 %v168
    %5758 = vmatmul.mubr.bf16.gmra.mxu0 %v167
    %v5759 = vpop.f32.mrf.mxu0
    %v5760 = vadd.f32 %v5719, %v5759
    %v5761 = vpop.f32.mrf.mxu0
    %v5762 = vadd.f32 %v5721, %v5761
    %v5763 = vpop.f32.mrf.mxu0
    %v5764 = vpop.f32.mrf.mxu0
    %5765 = vdwg.mxu0
    %5766 = vmatprep.subr.bf16.mxu0 %v4043
    %5767 = vmatpush1.bf16.msra.mxu0 %v4042
    %5768 = vmatprep.subr.bf16.mxu0 %v4039
    %5769 = vmatpush1.bf16.msra.mxu0 %v4038
    %5770 = vmatprep.subr.bf16.mxu0 %v4035
    %5771 = vmatpush1.bf16.msra.mxu0 %v4034
    %5772 = vmatprep.subr.bf16.mxu0 %v4031
    %5773 = vmatpush1.bf16.msra.mxu0 %v4030
    %5774 = vmatprep.subr.bf16.mxu0 %v4027
    %5775 = vmatpush1.bf16.msra.mxu0 %v4026
    %5776 = vmatprep.subr.bf16.mxu0 %v4023
    %5777 = vmatpush1.bf16.msra.mxu0 %v4022
    %5778 = vmatprep.subr.bf16.mxu0 %v4019
    %5779 = vmatpush1.bf16.msra.mxu0 %v4018
    %5780 = vmatprep.subr.bf16.mxu0 %v4015
    %5781 = vmatpush1.bf16.msra.mxu0 %v4014
    %5782 = vmatprep.subr.bf16.mxu0 %v4075
    %5783 = vmatpush2.bf16.msra.mxu0 %v4074
    %5784 = vmatprep.subr.bf16.mxu0 %v4071
    %5785 = vmatpush2.bf16.msra.mxu0 %v4070
    %5786 = vmatprep.subr.bf16.mxu0 %v4067
    %5787 = vmatpush2.bf16.msra.mxu0 %v4066
    %5788 = vmatprep.subr.bf16.mxu0 %v4063
    %5789 = vmatpush2.bf16.msra.mxu0 %v4062
    %5790 = vmatprep.subr.bf16.mxu0 %v4059
    %5791 = vmatpush2.bf16.msra.mxu0 %v4058
    %5792 = vmatprep.subr.bf16.mxu0 %v4055
    %5793 = vmatpush2.bf16.msra.mxu0 %v4054
    %5794 = vmatprep.subr.bf16.mxu0 %v4051
    %5795 = vmatpush2.bf16.msra.mxu0 %v4050
    %5796 = vmatprep.subr.bf16.mxu0 %v4047
    %5797 = vmatpush2.bf16.msra.mxu0 %v4046
    %5798 = vmatprep.mubr.bf16.mxu0 %v170
    %5799 = vmatmul.mubr.bf16.gmra.mxu0 %v169
    %v5800 = vpop.f32.mrf.mxu0
    %v5801 = vadd.f32 %v5760, %v5800
    %v5802 = vpop.f32.mrf.mxu0
    %v5803 = vadd.f32 %v5762, %v5802
    %v5804 = vpop.f32.mrf.mxu0
    %v5805 = vpop.f32.mrf.mxu0
    %5806 = vdwg.mxu0
    %5807 = vmatprep.subr.bf16.mxu0 %v4107
    %5808 = vmatpush1.bf16.msra.mxu0 %v4106
    %5809 = vmatprep.subr.bf16.mxu0 %v4103
    %5810 = vmatpush1.bf16.msra.mxu0 %v4102
    %5811 = vmatprep.subr.bf16.mxu0 %v4099
    %5812 = vmatpush1.bf16.msra.mxu0 %v4098
    %5813 = vmatprep.subr.bf16.mxu0 %v4095
    %5814 = vmatpush1.bf16.msra.mxu0 %v4094
    %5815 = vmatprep.subr.bf16.mxu0 %v4091
    %5816 = vmatpush1.bf16.msra.mxu0 %v4090
    %5817 = vmatprep.subr.bf16.mxu0 %v4087
    %5818 = vmatpush1.bf16.msra.mxu0 %v4086
    %5819 = vmatprep.subr.bf16.mxu0 %v4083
    %5820 = vmatpush1.bf16.msra.mxu0 %v4082
    %5821 = vmatprep.subr.bf16.mxu0 %v4079
    %5822 = vmatpush1.bf16.msra.mxu0 %v4078
    %5823 = vmatprep.subr.bf16.mxu0 %v4139
    %5824 = vmatpush2.bf16.msra.mxu0 %v4138
    %5825 = vmatprep.subr.bf16.mxu0 %v4135
    %5826 = vmatpush2.bf16.msra.mxu0 %v4134
    %5827 = vmatprep.subr.bf16.mxu0 %v4131
    %5828 = vmatpush2.bf16.msra.mxu0 %v4130
    %5829 = vmatprep.subr.bf16.mxu0 %v4127
    %5830 = vmatpush2.bf16.msra.mxu0 %v4126
    %5831 = vmatprep.subr.bf16.mxu0 %v4123
    %5832 = vmatpush2.bf16.msra.mxu0 %v4122
    %5833 = vmatprep.subr.bf16.mxu0 %v4119
    %5834 = vmatpush2.bf16.msra.mxu0 %v4118
    %5835 = vmatprep.subr.bf16.mxu0 %v4115
    %5836 = vmatpush2.bf16.msra.mxu0 %v4114
    %5837 = vmatprep.subr.bf16.mxu0 %v4111
    %5838 = vmatpush2.bf16.msra.mxu0 %v4110
    %5839 = vmatprep.mubr.bf16.mxu0 %v172
    %5840 = vmatmul.mubr.bf16.gmra.mxu0 %v171
    %v5841 = vpop.f32.mrf.mxu0
    %v5842 = vadd.f32 %v5801, %v5841
    %v5843 = vpop.f32.mrf.mxu0
    %v5844 = vadd.f32 %v5803, %v5843
    %v5845 = vpop.f32.mrf.mxu0
    %v5846 = vpop.f32.mrf.mxu0
    %5847 = vdwg.mxu0
    %5848 = vmatprep.subr.bf16.mxu0 %v4171
    %5849 = vmatpush1.bf16.msra.mxu0 %v4170
    %5850 = vmatprep.subr.bf16.mxu0 %v4167
    %5851 = vmatpush1.bf16.msra.mxu0 %v4166
    %5852 = vmatprep.subr.bf16.mxu0 %v4163
    %5853 = vmatpush1.bf16.msra.mxu0 %v4162
    %5854 = vmatprep.subr.bf16.mxu0 %v4159
    %5855 = vmatpush1.bf16.msra.mxu0 %v4158
    %5856 = vmatprep.subr.bf16.mxu0 %v4155
    %5857 = vmatpush1.bf16.msra.mxu0 %v4154
    %5858 = vmatprep.subr.bf16.mxu0 %v4151
    %5859 = vmatpush1.bf16.msra.mxu0 %v4150
    %5860 = vmatprep.subr.bf16.mxu0 %v4147
    %5861 = vmatpush1.bf16.msra.mxu0 %v4146
    %5862 = vmatprep.subr.bf16.mxu0 %v4143
    %5863 = vmatpush1.bf16.msra.mxu0 %v4142
    %5864 = vmatprep.subr.bf16.mxu0 %v4203
    %5865 = vmatpush2.bf16.msra.mxu0 %v4202
    %5866 = vmatprep.subr.bf16.mxu0 %v4199
    %5867 = vmatpush2.bf16.msra.mxu0 %v4198
    %5868 = vmatprep.subr.bf16.mxu0 %v4195
    %5869 = vmatpush2.bf16.msra.mxu0 %v4194
    %5870 = vmatprep.subr.bf16.mxu0 %v4191
    %5871 = vmatpush2.bf16.msra.mxu0 %v4190
    %5872 = vmatprep.subr.bf16.mxu0 %v4187
    %5873 = vmatpush2.bf16.msra.mxu0 %v4186
    %5874 = vmatprep.subr.bf16.mxu0 %v4183
    %5875 = vmatpush2.bf16.msra.mxu0 %v4182
    %5876 = vmatprep.subr.bf16.mxu0 %v4179
    %5877 = vmatpush2.bf16.msra.mxu0 %v4178
    %5878 = vmatprep.subr.bf16.mxu0 %v4175
    %5879 = vmatpush2.bf16.msra.mxu0 %v4174
    %5880 = vmatprep.mubr.bf16.mxu0 %v174
    %5881 = vmatmul.mubr.bf16.gmra.mxu0 %v173
    %v5882 = vpop.f32.mrf.mxu0
    %v5883 = vadd.f32 %v5842, %v5882
    %v5884 = vpop.f32.mrf.mxu0
    %v5885 = vadd.f32 %v5844, %v5884
    %v5886 = vpop.f32.mrf.mxu0
    %v5887 = vpop.f32.mrf.mxu0
    %5888 = vdwg.mxu0
    %5889 = vmatprep.subr.bf16.mxu0 %v4235
    %5890 = vmatpush1.bf16.msra.mxu0 %v4234
    %5891 = vmatprep.subr.bf16.mxu0 %v4231
    %5892 = vmatpush1.bf16.msra.mxu0 %v4230
    %5893 = vmatprep.subr.bf16.mxu0 %v4227
    %5894 = vmatpush1.bf16.msra.mxu0 %v4226
    %5895 = vmatprep.subr.bf16.mxu0 %v4223
    %5896 = vmatpush1.bf16.msra.mxu0 %v4222
    %5897 = vmatprep.subr.bf16.mxu0 %v4219
    %5898 = vmatpush1.bf16.msra.mxu0 %v4218
    %5899 = vmatprep.subr.bf16.mxu0 %v4215
    %5900 = vmatpush1.bf16.msra.mxu0 %v4214
    %5901 = vmatprep.subr.bf16.mxu0 %v4211
    %5902 = vmatpush1.bf16.msra.mxu0 %v4210
    %5903 = vmatprep.subr.bf16.mxu0 %v4207
    %5904 = vmatpush1.bf16.msra.mxu0 %v4206
    %5905 = vmatprep.subr.bf16.mxu0 %v4267
    %5906 = vmatpush2.bf16.msra.mxu0 %v4266
    %5907 = vmatprep.subr.bf16.mxu0 %v4263
    %5908 = vmatpush2.bf16.msra.mxu0 %v4262
    %5909 = vmatprep.subr.bf16.mxu0 %v4259
    %5910 = vmatpush2.bf16.msra.mxu0 %v4258
    %5911 = vmatprep.subr.bf16.mxu0 %v4255
    %5912 = vmatpush2.bf16.msra.mxu0 %v4254
    %5913 = vmatprep.subr.bf16.mxu0 %v4251
    %5914 = vmatpush2.bf16.msra.mxu0 %v4250
    %5915 = vmatprep.subr.bf16.mxu0 %v4247
    %5916 = vmatpush2.bf16.msra.mxu0 %v4246
    %5917 = vmatprep.subr.bf16.mxu0 %v4243
    %5918 = vmatpush2.bf16.msra.mxu0 %v4242
    %5919 = vmatprep.subr.bf16.mxu0 %v4239
    %5920 = vmatpush2.bf16.msra.mxu0 %v4238
    %5921 = vmatprep.mubr.bf16.mxu0 %v176
    %5922 = vmatmul.mubr.bf16.gmra.mxu0 %v175
    %v5923 = vpop.f32.mrf.mxu0
    %v5924 = vadd.f32 %v5883, %v5923
    %v5925 = vpop.f32.mrf.mxu0
    %v5926 = vadd.f32 %v5885, %v5925
    %v5927 = vpop.f32.mrf.mxu0
    %v5928 = vpop.f32.mrf.mxu0
    %5929 = vdwg.mxu0
    %5930 = vmatprep.subr.bf16.mxu0 %v4299
    %5931 = vmatpush1.bf16.msra.mxu0 %v4298
    %5932 = vmatprep.subr.bf16.mxu0 %v4295
    %5933 = vmatpush1.bf16.msra.mxu0 %v4294
    %5934 = vmatprep.subr.bf16.mxu0 %v4291
    %5935 = vmatpush1.bf16.msra.mxu0 %v4290
    %5936 = vmatprep.subr.bf16.mxu0 %v4287
    %5937 = vmatpush1.bf16.msra.mxu0 %v4286
    %5938 = vmatprep.subr.bf16.mxu0 %v4283
    %5939 = vmatpush1.bf16.msra.mxu0 %v4282
    %5940 = vmatprep.subr.bf16.mxu0 %v4279
    %5941 = vmatpush1.bf16.msra.mxu0 %v4278
    %5942 = vmatprep.subr.bf16.mxu0 %v4275
    %5943 = vmatpush1.bf16.msra.mxu0 %v4274
    %5944 = vmatprep.subr.bf16.mxu0 %v4271
    %5945 = vmatpush1.bf16.msra.mxu0 %v4270
    %5946 = vmatprep.subr.bf16.mxu0 %v4331
    %5947 = vmatpush2.bf16.msra.mxu0 %v4330
    %5948 = vmatprep.subr.bf16.mxu0 %v4327
    %5949 = vmatpush2.bf16.msra.mxu0 %v4326
    %5950 = vmatprep.subr.bf16.mxu0 %v4323
    %5951 = vmatpush2.bf16.msra.mxu0 %v4322
    %5952 = vmatprep.subr.bf16.mxu0 %v4319
    %5953 = vmatpush2.bf16.msra.mxu0 %v4318
    %5954 = vmatprep.subr.bf16.mxu0 %v4315
    %5955 = vmatpush2.bf16.msra.mxu0 %v4314
    %5956 = vmatprep.subr.bf16.mxu0 %v4311
    %5957 = vmatpush2.bf16.msra.mxu0 %v4310
    %5958 = vmatprep.subr.bf16.mxu0 %v4307
    %5959 = vmatpush2.bf16.msra.mxu0 %v4306
    %5960 = vmatprep.subr.bf16.mxu0 %v4303
    %5961 = vmatpush2.bf16.msra.mxu0 %v4302
    %5962 = vmatprep.mubr.bf16.mxu0 %v178
    %5963 = vmatmul.mubr.bf16.gmra.mxu0 %v177
    %v5964 = vpop.f32.mrf.mxu0
    %v5965 = vadd.f32 %v5924, %v5964
    %v5966 = vpop.f32.mrf.mxu0
    %v5967 = vadd.f32 %v5926, %v5966
    %v5968 = vpop.f32.mrf.mxu0
    %v5969 = vpop.f32.mrf.mxu0
    %5970 = vdwg.mxu0
    %5971 = vmatprep.subr.bf16.mxu0 %v4363
    %5972 = vmatpush1.bf16.msra.mxu0 %v4362
    %5973 = vmatprep.subr.bf16.mxu0 %v4359
    %5974 = vmatpush1.bf16.msra.mxu0 %v4358
    %5975 = vmatprep.subr.bf16.mxu0 %v4355
    %5976 = vmatpush1.bf16.msra.mxu0 %v4354
    %5977 = vmatprep.subr.bf16.mxu0 %v4351
    %5978 = vmatpush1.bf16.msra.mxu0 %v4350
    %5979 = vmatprep.subr.bf16.mxu0 %v4347
    %5980 = vmatpush1.bf16.msra.mxu0 %v4346
    %5981 = vmatprep.subr.bf16.mxu0 %v4343
    %5982 = vmatpush1.bf16.msra.mxu0 %v4342
    %5983 = vmatprep.subr.bf16.mxu0 %v4339
    %5984 = vmatpush1.bf16.msra.mxu0 %v4338
    %5985 = vmatprep.subr.bf16.mxu0 %v4335
    %5986 = vmatpush1.bf16.msra.mxu0 %v4334
    %5987 = vmatprep.subr.bf16.mxu0 %v4395
    %5988 = vmatpush2.bf16.msra.mxu0 %v4394
    %5989 = vmatprep.subr.bf16.mxu0 %v4391
    %5990 = vmatpush2.bf16.msra.mxu0 %v4390
    %5991 = vmatprep.subr.bf16.mxu0 %v4387
    %5992 = vmatpush2.bf16.msra.mxu0 %v4386
    %5993 = vmatprep.subr.bf16.mxu0 %v4383
    %5994 = vmatpush2.bf16.msra.mxu0 %v4382
    %5995 = vmatprep.subr.bf16.mxu0 %v4379
    %5996 = vmatpush2.bf16.msra.mxu0 %v4378
    %5997 = vmatprep.subr.bf16.mxu0 %v4375
    %5998 = vmatpush2.bf16.msra.mxu0 %v4374
    %5999 = vmatprep.subr.bf16.mxu0 %v4371
    %6000 = vmatpush2.bf16.msra.mxu0 %v4370
    %6001 = vmatprep.subr.bf16.mxu0 %v4367
    %6002 = vmatpush2.bf16.msra.mxu0 %v4366
    %6003 = vmatprep.mubr.bf16.mxu0 %v180
    %6004 = vmatmul.mubr.bf16.gmra.mxu0 %v179
    %v6005 = vpop.f32.mrf.mxu0
    %v6006 = vadd.f32 %v5965, %v6005
    %v6007 = vpop.f32.mrf.mxu0
    %v6008 = vadd.f32 %v5967, %v6007
    %v6009 = vpop.f32.mrf.mxu0
    %v6010 = vpop.f32.mrf.mxu0
    %6011 = vdwg.mxu0
    %6012 = vmatprep.subr.bf16.mxu0 %v4427
    %6013 = vmatpush1.bf16.msra.mxu0 %v4426
    %6014 = vmatprep.subr.bf16.mxu0 %v4423
    %6015 = vmatpush1.bf16.msra.mxu0 %v4422
    %6016 = vmatprep.subr.bf16.mxu0 %v4419
    %6017 = vmatpush1.bf16.msra.mxu0 %v4418
    %6018 = vmatprep.subr.bf16.mxu0 %v4415
    %6019 = vmatpush1.bf16.msra.mxu0 %v4414
    %6020 = vmatprep.subr.bf16.mxu0 %v4411
    %6021 = vmatpush1.bf16.msra.mxu0 %v4410
    %6022 = vmatprep.subr.bf16.mxu0 %v4407
    %6023 = vmatpush1.bf16.msra.mxu0 %v4406
    %6024 = vmatprep.subr.bf16.mxu0 %v4403
    %6025 = vmatpush1.bf16.msra.mxu0 %v4402
    %6026 = vmatprep.subr.bf16.mxu0 %v4399
    %6027 = vmatpush1.bf16.msra.mxu0 %v4398
    %6028 = vmatprep.subr.bf16.mxu0 %v4459
    %6029 = vmatpush2.bf16.msra.mxu0 %v4458
    %6030 = vmatprep.subr.bf16.mxu0 %v4455
    %6031 = vmatpush2.bf16.msra.mxu0 %v4454
    %6032 = vmatprep.subr.bf16.mxu0 %v4451
    %6033 = vmatpush2.bf16.msra.mxu0 %v4450
    %6034 = vmatprep.subr.bf16.mxu0 %v4447
    %6035 = vmatpush2.bf16.msra.mxu0 %v4446
    %6036 = vmatprep.subr.bf16.mxu0 %v4443
    %6037 = vmatpush2.bf16.msra.mxu0 %v4442
    %6038 = vmatprep.subr.bf16.mxu0 %v4439
    %6039 = vmatpush2.bf16.msra.mxu0 %v4438
    %6040 = vmatprep.subr.bf16.mxu0 %v4435
    %6041 = vmatpush2.bf16.msra.mxu0 %v4434
    %6042 = vmatprep.subr.bf16.mxu0 %v4431
    %6043 = vmatpush2.bf16.msra.mxu0 %v4430
    %6044 = vmatprep.mubr.bf16.mxu0 %v182
    %6045 = vmatmul.mubr.bf16.gmra.mxu0 %v181
    %v6046 = vpop.f32.mrf.mxu0
    %v6047 = vadd.f32 %v6006, %v6046
    %v6048 = vpop.f32.mrf.mxu0
    %v6049 = vadd.f32 %v6008, %v6048
    %v6050 = vpop.f32.mrf.mxu0
    %v6051 = vpop.f32.mrf.mxu0
    %6052 = vdwg.mxu0
    %6053 = vmatprep.subr.bf16.mxu0 %v4491
    %6054 = vmatpush1.bf16.msra.mxu0 %v4490
    %6055 = vmatprep.subr.bf16.mxu0 %v4487
    %6056 = vmatpush1.bf16.msra.mxu0 %v4486
    %6057 = vmatprep.subr.bf16.mxu0 %v4483
    %6058 = vmatpush1.bf16.msra.mxu0 %v4482
    %6059 = vmatprep.subr.bf16.mxu0 %v4479
    %6060 = vmatpush1.bf16.msra.mxu0 %v4478
    %6061 = vmatprep.subr.bf16.mxu0 %v4475
    %6062 = vmatpush1.bf16.msra.mxu0 %v4474
    %6063 = vmatprep.subr.bf16.mxu0 %v4471
    %6064 = vmatpush1.bf16.msra.mxu0 %v4470
    %6065 = vmatprep.subr.bf16.mxu0 %v4467
    %6066 = vmatpush1.bf16.msra.mxu0 %v4466
    %6067 = vmatprep.subr.bf16.mxu0 %v4463
    %6068 = vmatpush1.bf16.msra.mxu0 %v4462
    %6069 = vmatprep.subr.bf16.mxu0 %v4523
    %6070 = vmatpush2.bf16.msra.mxu0 %v4522
    %6071 = vmatprep.subr.bf16.mxu0 %v4519
    %6072 = vmatpush2.bf16.msra.mxu0 %v4518
    %6073 = vmatprep.subr.bf16.mxu0 %v4515
    %6074 = vmatpush2.bf16.msra.mxu0 %v4514
    %6075 = vmatprep.subr.bf16.mxu0 %v4511
    %6076 = vmatpush2.bf16.msra.mxu0 %v4510
    %6077 = vmatprep.subr.bf16.mxu0 %v4507
    %6078 = vmatpush2.bf16.msra.mxu0 %v4506
    %6079 = vmatprep.subr.bf16.mxu0 %v4503
    %6080 = vmatpush2.bf16.msra.mxu0 %v4502
    %6081 = vmatprep.subr.bf16.mxu0 %v4499
    %6082 = vmatpush2.bf16.msra.mxu0 %v4498
    %6083 = vmatprep.subr.bf16.mxu0 %v4495
    %6084 = vmatpush2.bf16.msra.mxu0 %v4494
    %6085 = vmatprep.mubr.bf16.mxu0 %v184
    %6086 = vmatmul.mubr.bf16.gmra.mxu0 %v183
    %v6087 = vpop.f32.mrf.mxu0
    %v6088 = vadd.f32 %v6047, %v6087
    %v6089 = vpop.f32.mrf.mxu0
    %v6090 = vadd.f32 %v6049, %v6089
    %v6091 = vpop.f32.mrf.mxu0
    %v6092 = vpop.f32.mrf.mxu0
    %6093 = vdwg.mxu0
    %6094 = vmatprep.subr.bf16.mxu0 %v4555
    %6095 = vmatpush1.bf16.msra.mxu0 %v4554
    %6096 = vmatprep.subr.bf16.mxu0 %v4551
    %6097 = vmatpush1.bf16.msra.mxu0 %v4550
    %6098 = vmatprep.subr.bf16.mxu0 %v4547
    %6099 = vmatpush1.bf16.msra.mxu0 %v4546
    %6100 = vmatprep.subr.bf16.mxu0 %v4543
    %6101 = vmatpush1.bf16.msra.mxu0 %v4542
    %6102 = vmatprep.subr.bf16.mxu0 %v4539
    %6103 = vmatpush1.bf16.msra.mxu0 %v4538
    %6104 = vmatprep.subr.bf16.mxu0 %v4535
    %6105 = vmatpush1.bf16.msra.mxu0 %v4534
    %6106 = vmatprep.subr.bf16.mxu0 %v4531
    %6107 = vmatpush1.bf16.msra.mxu0 %v4530
    %6108 = vmatprep.subr.bf16.mxu0 %v4527
    %6109 = vmatpush1.bf16.msra.mxu0 %v4526
    %6110 = vmatprep.subr.bf16.mxu0 %v4587
    %6111 = vmatpush2.bf16.msra.mxu0 %v4586
    %6112 = vmatprep.subr.bf16.mxu0 %v4583
    %6113 = vmatpush2.bf16.msra.mxu0 %v4582
    %6114 = vmatprep.subr.bf16.mxu0 %v4579
    %6115 = vmatpush2.bf16.msra.mxu0 %v4578
    %6116 = vmatprep.subr.bf16.mxu0 %v4575
    %6117 = vmatpush2.bf16.msra.mxu0 %v4574
    %6118 = vmatprep.subr.bf16.mxu0 %v4571
    %6119 = vmatpush2.bf16.msra.mxu0 %v4570
    %6120 = vmatprep.subr.bf16.mxu0 %v4567
    %6121 = vmatpush2.bf16.msra.mxu0 %v4566
    %6122 = vmatprep.subr.bf16.mxu0 %v4563
    %6123 = vmatpush2.bf16.msra.mxu0 %v4562
    %6124 = vmatprep.subr.bf16.mxu0 %v4559
    %6125 = vmatpush2.bf16.msra.mxu0 %v4558
    %6126 = vmatprep.mubr.bf16.mxu0 %v186
    %6127 = vmatmul.mubr.bf16.gmra.mxu0 %v185
    %v6128 = vpop.f32.mrf.mxu0
    %v6129 = vadd.f32 %v6088, %v6128
    %v6130 = vpop.f32.mrf.mxu0
    %v6131 = vadd.f32 %v6090, %v6130
    %v6132 = vpop.f32.mrf.mxu0
    %v6133 = vpop.f32.mrf.mxu0
    %6134 = vdwg.mxu0
    %6135 = vmatprep.subr.bf16.mxu0 %v4619
    %6136 = vmatpush1.bf16.msra.mxu0 %v4618
    %6137 = vmatprep.subr.bf16.mxu0 %v4615
    %6138 = vmatpush1.bf16.msra.mxu0 %v4614
    %6139 = vmatprep.subr.bf16.mxu0 %v4611
    %6140 = vmatpush1.bf16.msra.mxu0 %v4610
    %6141 = vmatprep.subr.bf16.mxu0 %v4607
    %6142 = vmatpush1.bf16.msra.mxu0 %v4606
    %6143 = vmatprep.subr.bf16.mxu0 %v4603
    %6144 = vmatpush1.bf16.msra.mxu0 %v4602
    %6145 = vmatprep.subr.bf16.mxu0 %v4599
    %6146 = vmatpush1.bf16.msra.mxu0 %v4598
    %6147 = vmatprep.subr.bf16.mxu0 %v4595
    %6148 = vmatpush1.bf16.msra.mxu0 %v4594
    %6149 = vmatprep.subr.bf16.mxu0 %v4591
    %6150 = vmatpush1.bf16.msra.mxu0 %v4590
    %6151 = vmatprep.subr.bf16.mxu0 %v4651
    %6152 = vmatpush2.bf16.msra.mxu0 %v4650
    %6153 = vmatprep.subr.bf16.mxu0 %v4647
    %6154 = vmatpush2.bf16.msra.mxu0 %v4646
    %6155 = vmatprep.subr.bf16.mxu0 %v4643
    %6156 = vmatpush2.bf16.msra.mxu0 %v4642
    %6157 = vmatprep.subr.bf16.mxu0 %v4639
    %6158 = vmatpush2.bf16.msra.mxu0 %v4638
    %6159 = vmatprep.subr.bf16.mxu0 %v4635
    %6160 = vmatpush2.bf16.msra.mxu0 %v4634
    %6161 = vmatprep.subr.bf16.mxu0 %v4631
    %6162 = vmatpush2.bf16.msra.mxu0 %v4630
    %6163 = vmatprep.subr.bf16.mxu0 %v4627
    %6164 = vmatpush2.bf16.msra.mxu0 %v4626
    %6165 = vmatprep.subr.bf16.mxu0 %v4623
    %6166 = vmatpush2.bf16.msra.mxu0 %v4622
    %6167 = vmatprep.mubr.bf16.mxu0 %v188
    %6168 = vmatmul.mubr.bf16.gmra.mxu0 %v187
    %v6169 = vpop.f32.mrf.mxu0
    %v6170 = vadd.f32 %v6129, %v6169
    %v6171 = vpop.f32.mrf.mxu0
    %v6172 = vadd.f32 %v6131, %v6171
    %v6173 = vpop.f32.mrf.mxu0
    %v6174 = vpop.f32.mrf.mxu0
    %6175 = vdwg.mxu0
    %6176 = vmatprep.subr.bf16.mxu0 %v4683
    %6177 = vmatpush1.bf16.msra.mxu0 %v4682
    %6178 = vmatprep.subr.bf16.mxu0 %v4679
    %6179 = vmatpush1.bf16.msra.mxu0 %v4678
    %6180 = vmatprep.subr.bf16.mxu0 %v4675
    %6181 = vmatpush1.bf16.msra.mxu0 %v4674
    %6182 = vmatprep.subr.bf16.mxu0 %v4671
    %6183 = vmatpush1.bf16.msra.mxu0 %v4670
    %6184 = vmatprep.subr.bf16.mxu0 %v4667
    %6185 = vmatpush1.bf16.msra.mxu0 %v4666
    %6186 = vmatprep.subr.bf16.mxu0 %v4663
    %6187 = vmatpush1.bf16.msra.mxu0 %v4662
    %6188 = vmatprep.subr.bf16.mxu0 %v4659
    %6189 = vmatpush1.bf16.msra.mxu0 %v4658
    %6190 = vmatprep.subr.bf16.mxu0 %v4655
    %6191 = vmatpush1.bf16.msra.mxu0 %v4654
    %6192 = vmatprep.subr.bf16.mxu0 %v4715
    %6193 = vmatpush2.bf16.msra.mxu0 %v4714
    %6194 = vmatprep.subr.bf16.mxu0 %v4711
    %6195 = vmatpush2.bf16.msra.mxu0 %v4710
    %6196 = vmatprep.subr.bf16.mxu0 %v4707
    %6197 = vmatpush2.bf16.msra.mxu0 %v4706
    %6198 = vmatprep.subr.bf16.mxu0 %v4703
    %6199 = vmatpush2.bf16.msra.mxu0 %v4702
    %6200 = vmatprep.subr.bf16.mxu0 %v4699
    %6201 = vmatpush2.bf16.msra.mxu0 %v4698
    %6202 = vmatprep.subr.bf16.mxu0 %v4695
    %6203 = vmatpush2.bf16.msra.mxu0 %v4694
    %6204 = vmatprep.subr.bf16.mxu0 %v4691
    %6205 = vmatpush2.bf16.msra.mxu0 %v4690
    %6206 = vmatprep.subr.bf16.mxu0 %v4687
    %6207 = vmatpush2.bf16.msra.mxu0 %v4686
    %6208 = vmatprep.mubr.bf16.mxu0 %v190
    %6209 = vmatmul.mubr.bf16.gmra.mxu0 %v189
    %v6210 = vpop.f32.mrf.mxu0
    %v6211 = vadd.f32 %v6170, %v6210
    %v6212 = vpop.f32.mrf.mxu0
    %v6213 = vadd.f32 %v6172, %v6212
    %v6214 = vpop.f32.mrf.mxu0
    %v6215 = vpop.f32.mrf.mxu0
    %6216 = vdwg.mxu0
    %6217 = vmatprep.subr.bf16.mxu0 0
    %6218 = vmatpush1.bf16.msra.mxu0 0
    %6219 = vmatprep.subr.bf16.mxu0 0
    %6220 = vmatpush1.bf16.msra.mxu0 0
    %6221 = vmatprep.subr.bf16.mxu0 0
    %6222 = vmatpush1.bf16.msra.mxu0 0
    %6223 = vmatprep.subr.bf16.mxu0 0
    %6224 = vmatpush1.bf16.msra.mxu0 0
    %6225 = vmatprep.subr.bf16.mxu0 0
    %6226 = vmatpush1.bf16.msra.mxu0 0
    %6227 = vmatprep.subr.bf16.mxu0 0
    %6228 = vmatpush1.bf16.msra.mxu0 0
    %6229 = vmatprep.subr.bf16.mxu0 %v5635
    %6230 = vmatpush1.bf16.msra.mxu0 %v5632
    %6231 = vmatprep.subr.bf16.mxu0 %v4719
    %6232 = vmatpush1.bf16.msra.mxu0 %v4718
    %6233 = vmatprep.subr.bf16.mxu0 0
    %6234 = vmatpush2.bf16.msra.mxu0 0
    %6235 = vmatprep.subr.bf16.mxu0 0
    %6236 = vmatpush2.bf16.msra.mxu0 0
    %6237 = vmatprep.subr.bf16.mxu0 0
    %6238 = vmatpush2.bf16.msra.mxu0 0
    %6239 = vmatprep.subr.bf16.mxu0 0
    %6240 = vmatpush2.bf16.msra.mxu0 0
    %6241 = vmatprep.subr.bf16.mxu0 0
    %6242 = vmatpush2.bf16.msra.mxu0 0
    %6243 = vmatprep.subr.bf16.mxu0 0
    %6244 = vmatpush2.bf16.msra.mxu0 0
    %6245 = vmatprep.subr.bf16.mxu0 0
    %6246 = vmatpush2.bf16.msra.mxu0 0
    %6247 = vmatprep.subr.bf16.mxu0 0
    %6248 = vmatpush2.bf16.msra.mxu0 0
    %6249 = vmatprep.mubr.bf16.mxu0 0
    %6250 = vmatmul.mubr.bf16.gmra.mxu0 %v5628
    %v6251 = vpop.f32.mrf.mxu0
    %v6252 = vadd.f32 %v6211, %v6251
    %v6253 = vpop.f32.mrf.mxu0
    %v6254 = vadd.f32 %v6213, %v6253
    %v6255 = vpop.f32.mrf.mxu0
    %v6256 = vpop.f32.mrf.mxu0
    %6257 = vdwg.mxu0
    %6258 = vmatprep.subr.bf16.mxu0 %v3853
    %6259 = vmatpush1.bf16.msra.mxu0 %v3852
    %6260 = vmatprep.subr.bf16.mxu0 %v3849
    %6261 = vmatpush1.bf16.msra.mxu0 %v3848
    %6262 = vmatprep.subr.bf16.mxu0 %v3845
    %6263 = vmatpush1.bf16.msra.mxu0 %v3844
    %6264 = vmatprep.subr.bf16.mxu0 %v3841
    %6265 = vmatpush1.bf16.msra.mxu0 %v3840
    %6266 = vmatprep.subr.bf16.mxu0 %v3837
    %6267 = vmatpush1.bf16.msra.mxu0 %v3836
    %6268 = vmatprep.subr.bf16.mxu0 %v3833
    %6269 = vmatpush1.bf16.msra.mxu0 %v3832
    %6270 = vmatprep.subr.bf16.mxu0 %v3829
    %6271 = vmatpush1.bf16.msra.mxu0 %v3828
    %6272 = vmatprep.subr.bf16.mxu0 %v3825
    %6273 = vmatpush1.bf16.msra.mxu0 %v3824
    %6274 = vmatprep.subr.bf16.mxu0 %v3885
    %6275 = vmatpush2.bf16.msra.mxu0 %v3884
    %6276 = vmatprep.subr.bf16.mxu0 %v3881
    %6277 = vmatpush2.bf16.msra.mxu0 %v3880
    %6278 = vmatprep.subr.bf16.mxu0 %v3877
    %6279 = vmatpush2.bf16.msra.mxu0 %v3876
    %6280 = vmatprep.subr.bf16.mxu0 %v3873
    %6281 = vmatpush2.bf16.msra.mxu0 %v3872
    %6282 = vmatprep.subr.bf16.mxu0 %v3869
    %6283 = vmatpush2.bf16.msra.mxu0 %v3868
    %6284 = vmatprep.subr.bf16.mxu0 %v3865
    %6285 = vmatpush2.bf16.msra.mxu0 %v3864
    %6286 = vmatprep.subr.bf16.mxu0 %v3861
    %6287 = vmatpush2.bf16.msra.mxu0 %v3860
    %6288 = vmatprep.subr.bf16.mxu0 %v3857
    %6289 = vmatpush2.bf16.msra.mxu0 %v3856
    %6290 = vmatprep.mubr.bf16.mxu0 %v164
    %6291 = vmatmul.mubr.bf16.gmra.mxu0 %v163
    %v6292 = vpop.f32.mrf.mxu0
    %v6293 = vadd.f32 %v1107, %v6292
    %v6294 = vpop.f32.mrf.mxu0
    %v6295 = vadd.f32 %v1111, %v6294
    %v6296 = vpop.f32.mrf.mxu0
    %v6297 = vpop.f32.mrf.mxu0
    %6298 = vdwg.mxu0
    %6299 = vmatprep.subr.bf16.mxu0 %v3917
    %6300 = vmatpush1.bf16.msra.mxu0 %v3916
    %6301 = vmatprep.subr.bf16.mxu0 %v3913
    %6302 = vmatpush1.bf16.msra.mxu0 %v3912
    %6303 = vmatprep.subr.bf16.mxu0 %v3909
    %6304 = vmatpush1.bf16.msra.mxu0 %v3908
    %6305 = vmatprep.subr.bf16.mxu0 %v3905
    %6306 = vmatpush1.bf16.msra.mxu0 %v3904
    %6307 = vmatprep.subr.bf16.mxu0 %v3901
    %6308 = vmatpush1.bf16.msra.mxu0 %v3900
    %6309 = vmatprep.subr.bf16.mxu0 %v3897
    %6310 = vmatpush1.bf16.msra.mxu0 %v3896
    %6311 = vmatprep.subr.bf16.mxu0 %v3893
    %6312 = vmatpush1.bf16.msra.mxu0 %v3892
    %6313 = vmatprep.subr.bf16.mxu0 %v3889
    %6314 = vmatpush1.bf16.msra.mxu0 %v3888
    %6315 = vmatprep.subr.bf16.mxu0 %v3949
    %6316 = vmatpush2.bf16.msra.mxu0 %v3948
    %6317 = vmatprep.subr.bf16.mxu0 %v3945
    %6318 = vmatpush2.bf16.msra.mxu0 %v3944
    %6319 = vmatprep.subr.bf16.mxu0 %v3941
    %6320 = vmatpush2.bf16.msra.mxu0 %v3940
    %6321 = vmatprep.subr.bf16.mxu0 %v3937
    %6322 = vmatpush2.bf16.msra.mxu0 %v3936
    %6323 = vmatprep.subr.bf16.mxu0 %v3933
    %6324 = vmatpush2.bf16.msra.mxu0 %v3932
    %6325 = vmatprep.subr.bf16.mxu0 %v3929
    %6326 = vmatpush2.bf16.msra.mxu0 %v3928
    %6327 = vmatprep.subr.bf16.mxu0 %v3925
    %6328 = vmatpush2.bf16.msra.mxu0 %v3924
    %6329 = vmatprep.subr.bf16.mxu0 %v3921
    %6330 = vmatpush2.bf16.msra.mxu0 %v3920
    %6331 = vmatprep.mubr.bf16.mxu0 %v166
    %6332 = vmatmul.mubr.bf16.gmra.mxu0 %v165
    %v6333 = vpop.f32.mrf.mxu0
    %v6334 = vadd.f32 %v6293, %v6333
    %v6335 = vpop.f32.mrf.mxu0
    %v6336 = vadd.f32 %v6295, %v6335
    %v6337 = vpop.f32.mrf.mxu0
    %v6338 = vpop.f32.mrf.mxu0
    %6339 = vdwg.mxu0
    %6340 = vmatprep.subr.bf16.mxu0 %v3981
    %6341 = vmatpush1.bf16.msra.mxu0 %v3980
    %6342 = vmatprep.subr.bf16.mxu0 %v3977
    %6343 = vmatpush1.bf16.msra.mxu0 %v3976
    %6344 = vmatprep.subr.bf16.mxu0 %v3973
    %6345 = vmatpush1.bf16.msra.mxu0 %v3972
    %6346 = vmatprep.subr.bf16.mxu0 %v3969
    %6347 = vmatpush1.bf16.msra.mxu0 %v3968
    %6348 = vmatprep.subr.bf16.mxu0 %v3965
    %6349 = vmatpush1.bf16.msra.mxu0 %v3964
    %6350 = vmatprep.subr.bf16.mxu0 %v3961
    %6351 = vmatpush1.bf16.msra.mxu0 %v3960
    %6352 = vmatprep.subr.bf16.mxu0 %v3957
    %6353 = vmatpush1.bf16.msra.mxu0 %v3956
    %6354 = vmatprep.subr.bf16.mxu0 %v3953
    %6355 = vmatpush1.bf16.msra.mxu0 %v3952
    %6356 = vmatprep.subr.bf16.mxu0 %v4013
    %6357 = vmatpush2.bf16.msra.mxu0 %v4012
    %6358 = vmatprep.subr.bf16.mxu0 %v4009
    %6359 = vmatpush2.bf16.msra.mxu0 %v4008
    %6360 = vmatprep.subr.bf16.mxu0 %v4005
    %6361 = vmatpush2.bf16.msra.mxu0 %v4004
    %6362 = vmatprep.subr.bf16.mxu0 %v4001
    %6363 = vmatpush2.bf16.msra.mxu0 %v4000
    %6364 = vmatprep.subr.bf16.mxu0 %v3997
    %6365 = vmatpush2.bf16.msra.mxu0 %v3996
    %6366 = vmatprep.subr.bf16.mxu0 %v3993
    %6367 = vmatpush2.bf16.msra.mxu0 %v3992
    %6368 = vmatprep.subr.bf16.mxu0 %v3989
    %6369 = vmatpush2.bf16.msra.mxu0 %v3988
    %6370 = vmatprep.subr.bf16.mxu0 %v3985
    %6371 = vmatpush2.bf16.msra.mxu0 %v3984
    %6372 = vmatprep.mubr.bf16.mxu0 %v168
    %6373 = vmatmul.mubr.bf16.gmra.mxu0 %v167
    %v6374 = vpop.f32.mrf.mxu0
    %v6375 = vadd.f32 %v6334, %v6374
    %v6376 = vpop.f32.mrf.mxu0
    %v6377 = vadd.f32 %v6336, %v6376
    %v6378 = vpop.f32.mrf.mxu0
    %v6379 = vpop.f32.mrf.mxu0
    %6380 = vdwg.mxu0
    %6381 = vmatprep.subr.bf16.mxu0 %v4045
    %6382 = vmatpush1.bf16.msra.mxu0 %v4044
    %6383 = vmatprep.subr.bf16.mxu0 %v4041
    %6384 = vmatpush1.bf16.msra.mxu0 %v4040
    %6385 = vmatprep.subr.bf16.mxu0 %v4037
    %6386 = vmatpush1.bf16.msra.mxu0 %v4036
    %6387 = vmatprep.subr.bf16.mxu0 %v4033
    %6388 = vmatpush1.bf16.msra.mxu0 %v4032
    %6389 = vmatprep.subr.bf16.mxu0 %v4029
    %6390 = vmatpush1.bf16.msra.mxu0 %v4028
    %6391 = vmatprep.subr.bf16.mxu0 %v4025
    %6392 = vmatpush1.bf16.msra.mxu0 %v4024
    %6393 = vmatprep.subr.bf16.mxu0 %v4021
    %6394 = vmatpush1.bf16.msra.mxu0 %v4020
    %6395 = vmatprep.subr.bf16.mxu0 %v4017
    %6396 = vmatpush1.bf16.msra.mxu0 %v4016
    %6397 = vmatprep.subr.bf16.mxu0 %v4077
    %6398 = vmatpush2.bf16.msra.mxu0 %v4076
    %6399 = vmatprep.subr.bf16.mxu0 %v4073
    %6400 = vmatpush2.bf16.msra.mxu0 %v4072
    %6401 = vmatprep.subr.bf16.mxu0 %v4069
    %6402 = vmatpush2.bf16.msra.mxu0 %v4068
    %6403 = vmatprep.subr.bf16.mxu0 %v4065
    %6404 = vmatpush2.bf16.msra.mxu0 %v4064
    %6405 = vmatprep.subr.bf16.mxu0 %v4061
    %6406 = vmatpush2.bf16.msra.mxu0 %v4060
    %6407 = vmatprep.subr.bf16.mxu0 %v4057
    %6408 = vmatpush2.bf16.msra.mxu0 %v4056
    %6409 = vmatprep.subr.bf16.mxu0 %v4053
    %6410 = vmatpush2.bf16.msra.mxu0 %v4052
    %6411 = vmatprep.subr.bf16.mxu0 %v4049
    %6412 = vmatpush2.bf16.msra.mxu0 %v4048
    %6413 = vmatprep.mubr.bf16.mxu0 %v170
    %6414 = vmatmul.mubr.bf16.gmra.mxu0 %v169
    %v6415 = vpop.f32.mrf.mxu0
    %v6416 = vadd.f32 %v6375, %v6415
    %v6417 = vpop.f32.mrf.mxu0
    %v6418 = vadd.f32 %v6377, %v6417
    %v6419 = vpop.f32.mrf.mxu0
    %v6420 = vpop.f32.mrf.mxu0
    %6421 = vdwg.mxu0
    %6422 = vmatprep.subr.bf16.mxu0 %v4109
    %6423 = vmatpush1.bf16.msra.mxu0 %v4108
    %6424 = vmatprep.subr.bf16.mxu0 %v4105
    %6425 = vmatpush1.bf16.msra.mxu0 %v4104
    %6426 = vmatprep.subr.bf16.mxu0 %v4101
    %6427 = vmatpush1.bf16.msra.mxu0 %v4100
    %6428 = vmatprep.subr.bf16.mxu0 %v4097
    %6429 = vmatpush1.bf16.msra.mxu0 %v4096
    %6430 = vmatprep.subr.bf16.mxu0 %v4093
    %6431 = vmatpush1.bf16.msra.mxu0 %v4092
    %6432 = vmatprep.subr.bf16.mxu0 %v4089
    %6433 = vmatpush1.bf16.msra.mxu0 %v4088
    %6434 = vmatprep.subr.bf16.mxu0 %v4085
    %6435 = vmatpush1.bf16.msra.mxu0 %v4084
    %6436 = vmatprep.subr.bf16.mxu0 %v4081
    %6437 = vmatpush1.bf16.msra.mxu0 %v4080
    %6438 = vmatprep.subr.bf16.mxu0 %v4141
    %6439 = vmatpush2.bf16.msra.mxu0 %v4140
    %6440 = vmatprep.subr.bf16.mxu0 %v4137
    %6441 = vmatpush2.bf16.msra.mxu0 %v4136
    %6442 = vmatprep.subr.bf16.mxu0 %v4133
    %6443 = vmatpush2.bf16.msra.mxu0 %v4132
    %6444 = vmatprep.subr.bf16.mxu0 %v4129
    %6445 = vmatpush2.bf16.msra.mxu0 %v4128
    %6446 = vmatprep.subr.bf16.mxu0 %v4125
    %6447 = vmatpush2.bf16.msra.mxu0 %v4124
    %6448 = vmatprep.subr.bf16.mxu0 %v4121
    %6449 = vmatpush2.bf16.msra.mxu0 %v4120
    %6450 = vmatprep.subr.bf16.mxu0 %v4117
    %6451 = vmatpush2.bf16.msra.mxu0 %v4116
    %6452 = vmatprep.subr.bf16.mxu0 %v4113
    %6453 = vmatpush2.bf16.msra.mxu0 %v4112
    %6454 = vmatprep.mubr.bf16.mxu0 %v172
    %6455 = vmatmul.mubr.bf16.gmra.mxu0 %v171
    %v6456 = vpop.f32.mrf.mxu0
    %v6457 = vadd.f32 %v6416, %v6456
    %v6458 = vpop.f32.mrf.mxu0
    %v6459 = vadd.f32 %v6418, %v6458
    %v6460 = vpop.f32.mrf.mxu0
    %v6461 = vpop.f32.mrf.mxu0
    %6462 = vdwg.mxu0
    %6463 = vmatprep.subr.bf16.mxu0 %v4173
    %6464 = vmatpush1.bf16.msra.mxu0 %v4172
    %6465 = vmatprep.subr.bf16.mxu0 %v4169
    %6466 = vmatpush1.bf16.msra.mxu0 %v4168
    %6467 = vmatprep.subr.bf16.mxu0 %v4165
    %6468 = vmatpush1.bf16.msra.mxu0 %v4164
    %6469 = vmatprep.subr.bf16.mxu0 %v4161
    %6470 = vmatpush1.bf16.msra.mxu0 %v4160
    %6471 = vmatprep.subr.bf16.mxu0 %v4157
    %6472 = vmatpush1.bf16.msra.mxu0 %v4156
    %6473 = vmatprep.subr.bf16.mxu0 %v4153
    %6474 = vmatpush1.bf16.msra.mxu0 %v4152
    %6475 = vmatprep.subr.bf16.mxu0 %v4149
    %6476 = vmatpush1.bf16.msra.mxu0 %v4148
    %6477 = vmatprep.subr.bf16.mxu0 %v4145
    %6478 = vmatpush1.bf16.msra.mxu0 %v4144
    %6479 = vmatprep.subr.bf16.mxu0 %v4205
    %6480 = vmatpush2.bf16.msra.mxu0 %v4204
    %6481 = vmatprep.subr.bf16.mxu0 %v4201
    %6482 = vmatpush2.bf16.msra.mxu0 %v4200
    %6483 = vmatprep.subr.bf16.mxu0 %v4197
    %6484 = vmatpush2.bf16.msra.mxu0 %v4196
    %6485 = vmatprep.subr.bf16.mxu0 %v4193
    %6486 = vmatpush2.bf16.msra.mxu0 %v4192
    %6487 = vmatprep.subr.bf16.mxu0 %v4189
    %6488 = vmatpush2.bf16.msra.mxu0 %v4188
    %6489 = vmatprep.subr.bf16.mxu0 %v4185
    %6490 = vmatpush2.bf16.msra.mxu0 %v4184
    %6491 = vmatprep.subr.bf16.mxu0 %v4181
    %6492 = vmatpush2.bf16.msra.mxu0 %v4180
    %6493 = vmatprep.subr.bf16.mxu0 %v4177
    %6494 = vmatpush2.bf16.msra.mxu0 %v4176
    %6495 = vmatprep.mubr.bf16.mxu0 %v174
    %6496 = vmatmul.mubr.bf16.gmra.mxu0 %v173
    %v6497 = vpop.f32.mrf.mxu0
    %v6498 = vadd.f32 %v6457, %v6497
    %v6499 = vpop.f32.mrf.mxu0
    %v6500 = vadd.f32 %v6459, %v6499
    %v6501 = vpop.f32.mrf.mxu0
    %v6502 = vpop.f32.mrf.mxu0
    %6503 = vdwg.mxu0
    %6504 = vmatprep.subr.bf16.mxu0 %v4237
    %6505 = vmatpush1.bf16.msra.mxu0 %v4236
    %6506 = vmatprep.subr.bf16.mxu0 %v4233
    %6507 = vmatpush1.bf16.msra.mxu0 %v4232
    %6508 = vmatprep.subr.bf16.mxu0 %v4229
    %6509 = vmatpush1.bf16.msra.mxu0 %v4228
    %6510 = vmatprep.subr.bf16.mxu0 %v4225
    %6511 = vmatpush1.bf16.msra.mxu0 %v4224
    %6512 = vmatprep.subr.bf16.mxu0 %v4221
    %6513 = vmatpush1.bf16.msra.mxu0 %v4220
    %6514 = vmatprep.subr.bf16.mxu0 %v4217
    %6515 = vmatpush1.bf16.msra.mxu0 %v4216
    %6516 = vmatprep.subr.bf16.mxu0 %v4213
    %6517 = vmatpush1.bf16.msra.mxu0 %v4212
    %6518 = vmatprep.subr.bf16.mxu0 %v4209
    %6519 = vmatpush1.bf16.msra.mxu0 %v4208
    %6520 = vmatprep.subr.bf16.mxu0 %v4269
    %6521 = vmatpush2.bf16.msra.mxu0 %v4268
    %6522 = vmatprep.subr.bf16.mxu0 %v4265
    %6523 = vmatpush2.bf16.msra.mxu0 %v4264
    %6524 = vmatprep.subr.bf16.mxu0 %v4261
    %6525 = vmatpush2.bf16.msra.mxu0 %v4260
    %6526 = vmatprep.subr.bf16.mxu0 %v4257
    %6527 = vmatpush2.bf16.msra.mxu0 %v4256
    %6528 = vmatprep.subr.bf16.mxu0 %v4253
    %6529 = vmatpush2.bf16.msra.mxu0 %v4252
    %6530 = vmatprep.subr.bf16.mxu0 %v4249
    %6531 = vmatpush2.bf16.msra.mxu0 %v4248
    %6532 = vmatprep.subr.bf16.mxu0 %v4245
    %6533 = vmatpush2.bf16.msra.mxu0 %v4244
    %6534 = vmatprep.subr.bf16.mxu0 %v4241
    %6535 = vmatpush2.bf16.msra.mxu0 %v4240
    %6536 = vmatprep.mubr.bf16.mxu0 %v176
    %6537 = vmatmul.mubr.bf16.gmra.mxu0 %v175
    %v6538 = vpop.f32.mrf.mxu0
    %v6539 = vadd.f32 %v6498, %v6538
    %v6540 = vpop.f32.mrf.mxu0
    %v6541 = vadd.f32 %v6500, %v6540
    %v6542 = vpop.f32.mrf.mxu0
    %v6543 = vpop.f32.mrf.mxu0
    %6544 = vdwg.mxu0
    %6545 = vmatprep.subr.bf16.mxu0 %v4301
    %6546 = vmatpush1.bf16.msra.mxu0 %v4300
    %6547 = vmatprep.subr.bf16.mxu0 %v4297
    %6548 = vmatpush1.bf16.msra.mxu0 %v4296
    %6549 = vmatprep.subr.bf16.mxu0 %v4293
    %6550 = vmatpush1.bf16.msra.mxu0 %v4292
    %6551 = vmatprep.subr.bf16.mxu0 %v4289
    %6552 = vmatpush1.bf16.msra.mxu0 %v4288
    %6553 = vmatprep.subr.bf16.mxu0 %v4285
    %6554 = vmatpush1.bf16.msra.mxu0 %v4284
    %6555 = vmatprep.subr.bf16.mxu0 %v4281
    %6556 = vmatpush1.bf16.msra.mxu0 %v4280
    %6557 = vmatprep.subr.bf16.mxu0 %v4277
    %6558 = vmatpush1.bf16.msra.mxu0 %v4276
    %6559 = vmatprep.subr.bf16.mxu0 %v4273
    %6560 = vmatpush1.bf16.msra.mxu0 %v4272
    %6561 = vmatprep.subr.bf16.mxu0 %v4333
    %6562 = vmatpush2.bf16.msra.mxu0 %v4332
    %6563 = vmatprep.subr.bf16.mxu0 %v4329
    %6564 = vmatpush2.bf16.msra.mxu0 %v4328
    %6565 = vmatprep.subr.bf16.mxu0 %v4325
    %6566 = vmatpush2.bf16.msra.mxu0 %v4324
    %6567 = vmatprep.subr.bf16.mxu0 %v4321
    %6568 = vmatpush2.bf16.msra.mxu0 %v4320
    %6569 = vmatprep.subr.bf16.mxu0 %v4317
    %6570 = vmatpush2.bf16.msra.mxu0 %v4316
    %6571 = vmatprep.subr.bf16.mxu0 %v4313
    %6572 = vmatpush2.bf16.msra.mxu0 %v4312
    %6573 = vmatprep.subr.bf16.mxu0 %v4309
    %6574 = vmatpush2.bf16.msra.mxu0 %v4308
    %6575 = vmatprep.subr.bf16.mxu0 %v4305
    %6576 = vmatpush2.bf16.msra.mxu0 %v4304
    %6577 = vmatprep.mubr.bf16.mxu0 %v178
    %6578 = vmatmul.mubr.bf16.gmra.mxu0 %v177
    %v6579 = vpop.f32.mrf.mxu0
    %v6580 = vadd.f32 %v6539, %v6579
    %v6581 = vpop.f32.mrf.mxu0
    %v6582 = vadd.f32 %v6541, %v6581
    %v6583 = vpop.f32.mrf.mxu0
    %v6584 = vpop.f32.mrf.mxu0
    %6585 = vdwg.mxu0
    %6586 = vmatprep.subr.bf16.mxu0 %v4365
    %6587 = vmatpush1.bf16.msra.mxu0 %v4364
    %6588 = vmatprep.subr.bf16.mxu0 %v4361
    %6589 = vmatpush1.bf16.msra.mxu0 %v4360
    %6590 = vmatprep.subr.bf16.mxu0 %v4357
    %6591 = vmatpush1.bf16.msra.mxu0 %v4356
    %6592 = vmatprep.subr.bf16.mxu0 %v4353
    %6593 = vmatpush1.bf16.msra.mxu0 %v4352
    %6594 = vmatprep.subr.bf16.mxu0 %v4349
    %6595 = vmatpush1.bf16.msra.mxu0 %v4348
    %6596 = vmatprep.subr.bf16.mxu0 %v4345
    %6597 = vmatpush1.bf16.msra.mxu0 %v4344
    %6598 = vmatprep.subr.bf16.mxu0 %v4341
    %6599 = vmatpush1.bf16.msra.mxu0 %v4340
    %6600 = vmatprep.subr.bf16.mxu0 %v4337
    %6601 = vmatpush1.bf16.msra.mxu0 %v4336
    %6602 = vmatprep.subr.bf16.mxu0 %v4397
    %6603 = vmatpush2.bf16.msra.mxu0 %v4396
    %6604 = vmatprep.subr.bf16.mxu0 %v4393
    %6605 = vmatpush2.bf16.msra.mxu0 %v4392
    %6606 = vmatprep.subr.bf16.mxu0 %v4389
    %6607 = vmatpush2.bf16.msra.mxu0 %v4388
    %6608 = vmatprep.subr.bf16.mxu0 %v4385
    %6609 = vmatpush2.bf16.msra.mxu0 %v4384
    %6610 = vmatprep.subr.bf16.mxu0 %v4381
    %6611 = vmatpush2.bf16.msra.mxu0 %v4380
    %6612 = vmatprep.subr.bf16.mxu0 %v4377
    %6613 = vmatpush2.bf16.msra.mxu0 %v4376
    %6614 = vmatprep.subr.bf16.mxu0 %v4373
    %6615 = vmatpush2.bf16.msra.mxu0 %v4372
    %6616 = vmatprep.subr.bf16.mxu0 %v4369
    %6617 = vmatpush2.bf16.msra.mxu0 %v4368
    %6618 = vmatprep.mubr.bf16.mxu0 %v180
    %6619 = vmatmul.mubr.bf16.gmra.mxu0 %v179
    %v6620 = vpop.f32.mrf.mxu0
    %v6621 = vadd.f32 %v6580, %v6620
    %v6622 = vpop.f32.mrf.mxu0
    %v6623 = vadd.f32 %v6582, %v6622
    %v6624 = vpop.f32.mrf.mxu0
    %v6625 = vpop.f32.mrf.mxu0
    %6626 = vdwg.mxu0
    %6627 = vmatprep.subr.bf16.mxu0 %v4429
    %6628 = vmatpush1.bf16.msra.mxu0 %v4428
    %6629 = vmatprep.subr.bf16.mxu0 %v4425
    %6630 = vmatpush1.bf16.msra.mxu0 %v4424
    %6631 = vmatprep.subr.bf16.mxu0 %v4421
    %6632 = vmatpush1.bf16.msra.mxu0 %v4420
    %6633 = vmatprep.subr.bf16.mxu0 %v4417
    %6634 = vmatpush1.bf16.msra.mxu0 %v4416
    %6635 = vmatprep.subr.bf16.mxu0 %v4413
    %6636 = vmatpush1.bf16.msra.mxu0 %v4412
    %6637 = vmatprep.subr.bf16.mxu0 %v4409
    %6638 = vmatpush1.bf16.msra.mxu0 %v4408
    %6639 = vmatprep.subr.bf16.mxu0 %v4405
    %6640 = vmatpush1.bf16.msra.mxu0 %v4404
    %6641 = vmatprep.subr.bf16.mxu0 %v4401
    %6642 = vmatpush1.bf16.msra.mxu0 %v4400
    %6643 = vmatprep.subr.bf16.mxu0 %v4461
    %6644 = vmatpush2.bf16.msra.mxu0 %v4460
    %6645 = vmatprep.subr.bf16.mxu0 %v4457
    %6646 = vmatpush2.bf16.msra.mxu0 %v4456
    %6647 = vmatprep.subr.bf16.mxu0 %v4453
    %6648 = vmatpush2.bf16.msra.mxu0 %v4452
    %6649 = vmatprep.subr.bf16.mxu0 %v4449
    %6650 = vmatpush2.bf16.msra.mxu0 %v4448
    %6651 = vmatprep.subr.bf16.mxu0 %v4445
    %6652 = vmatpush2.bf16.msra.mxu0 %v4444
    %6653 = vmatprep.subr.bf16.mxu0 %v4441
    %6654 = vmatpush2.bf16.msra.mxu0 %v4440
    %6655 = vmatprep.subr.bf16.mxu0 %v4437
    %6656 = vmatpush2.bf16.msra.mxu0 %v4436
    %6657 = vmatprep.subr.bf16.mxu0 %v4433
    %6658 = vmatpush2.bf16.msra.mxu0 %v4432
    %6659 = vmatprep.mubr.bf16.mxu0 %v182
    %6660 = vmatmul.mubr.bf16.gmra.mxu0 %v181
    %v6661 = vpop.f32.mrf.mxu0
    %v6662 = vadd.f32 %v6621, %v6661
    %v6663 = vpop.f32.mrf.mxu0
    %v6664 = vadd.f32 %v6623, %v6663
    %v6665 = vpop.f32.mrf.mxu0
    %v6666 = vpop.f32.mrf.mxu0
    %6667 = vdwg.mxu0
    %6668 = vmatprep.subr.bf16.mxu0 %v4493
    %6669 = vmatpush1.bf16.msra.mxu0 %v4492
    %6670 = vmatprep.subr.bf16.mxu0 %v4489
    %6671 = vmatpush1.bf16.msra.mxu0 %v4488
    %6672 = vmatprep.subr.bf16.mxu0 %v4485
    %6673 = vmatpush1.bf16.msra.mxu0 %v4484
    %6674 = vmatprep.subr.bf16.mxu0 %v4481
    %6675 = vmatpush1.bf16.msra.mxu0 %v4480
    %6676 = vmatprep.subr.bf16.mxu0 %v4477
    %6677 = vmatpush1.bf16.msra.mxu0 %v4476
    %6678 = vmatprep.subr.bf16.mxu0 %v4473
    %6679 = vmatpush1.bf16.msra.mxu0 %v4472
    %6680 = vmatprep.subr.bf16.mxu0 %v4469
    %6681 = vmatpush1.bf16.msra.mxu0 %v4468
    %6682 = vmatprep.subr.bf16.mxu0 %v4465
    %6683 = vmatpush1.bf16.msra.mxu0 %v4464
    %6684 = vmatprep.subr.bf16.mxu0 %v4525
    %6685 = vmatpush2.bf16.msra.mxu0 %v4524
    %6686 = vmatprep.subr.bf16.mxu0 %v4521
    %6687 = vmatpush2.bf16.msra.mxu0 %v4520
    %6688 = vmatprep.subr.bf16.mxu0 %v4517
    %6689 = vmatpush2.bf16.msra.mxu0 %v4516
    %6690 = vmatprep.subr.bf16.mxu0 %v4513
    %6691 = vmatpush2.bf16.msra.mxu0 %v4512
    %6692 = vmatprep.subr.bf16.mxu0 %v4509
    %6693 = vmatpush2.bf16.msra.mxu0 %v4508
    %6694 = vmatprep.subr.bf16.mxu0 %v4505
    %6695 = vmatpush2.bf16.msra.mxu0 %v4504
    %6696 = vmatprep.subr.bf16.mxu0 %v4501
    %6697 = vmatpush2.bf16.msra.mxu0 %v4500
    %6698 = vmatprep.subr.bf16.mxu0 %v4497
    %6699 = vmatpush2.bf16.msra.mxu0 %v4496
    %6700 = vmatprep.mubr.bf16.mxu0 %v184
    %6701 = vmatmul.mubr.bf16.gmra.mxu0 %v183
    %v6702 = vpop.f32.mrf.mxu0
    %v6703 = vadd.f32 %v6662, %v6702
    %v6704 = vpop.f32.mrf.mxu0
    %v6705 = vadd.f32 %v6664, %v6704
    %v6706 = vpop.f32.mrf.mxu0
    %v6707 = vpop.f32.mrf.mxu0
    %6708 = vdwg.mxu0
    %6709 = vmatprep.subr.bf16.mxu0 %v4557
    %6710 = vmatpush1.bf16.msra.mxu0 %v4556
    %6711 = vmatprep.subr.bf16.mxu0 %v4553
    %6712 = vmatpush1.bf16.msra.mxu0 %v4552
    %6713 = vmatprep.subr.bf16.mxu0 %v4549
    %6714 = vmatpush1.bf16.msra.mxu0 %v4548
    %6715 = vmatprep.subr.bf16.mxu0 %v4545
    %6716 = vmatpush1.bf16.msra.mxu0 %v4544
    %6717 = vmatprep.subr.bf16.mxu0 %v4541
    %6718 = vmatpush1.bf16.msra.mxu0 %v4540
    %6719 = vmatprep.subr.bf16.mxu0 %v4537
    %6720 = vmatpush1.bf16.msra.mxu0 %v4536
    %6721 = vmatprep.subr.bf16.mxu0 %v4533
    %6722 = vmatpush1.bf16.msra.mxu0 %v4532
    %6723 = vmatprep.subr.bf16.mxu0 %v4529
    %6724 = vmatpush1.bf16.msra.mxu0 %v4528
    %6725 = vmatprep.subr.bf16.mxu0 %v4589
    %6726 = vmatpush2.bf16.msra.mxu0 %v4588
    %6727 = vmatprep.subr.bf16.mxu0 %v4585
    %6728 = vmatpush2.bf16.msra.mxu0 %v4584
    %6729 = vmatprep.subr.bf16.mxu0 %v4581
    %6730 = vmatpush2.bf16.msra.mxu0 %v4580
    %6731 = vmatprep.subr.bf16.mxu0 %v4577
    %6732 = vmatpush2.bf16.msra.mxu0 %v4576
    %6733 = vmatprep.subr.bf16.mxu0 %v4573
    %6734 = vmatpush2.bf16.msra.mxu0 %v4572
    %6735 = vmatprep.subr.bf16.mxu0 %v4569
    %6736 = vmatpush2.bf16.msra.mxu0 %v4568
    %6737 = vmatprep.subr.bf16.mxu0 %v4565
    %6738 = vmatpush2.bf16.msra.mxu0 %v4564
    %6739 = vmatprep.subr.bf16.mxu0 %v4561
    %6740 = vmatpush2.bf16.msra.mxu0 %v4560
    %6741 = vmatprep.mubr.bf16.mxu0 %v186
    %6742 = vmatmul.mubr.bf16.gmra.mxu0 %v185
    %v6743 = vpop.f32.mrf.mxu0
    %v6744 = vadd.f32 %v6703, %v6743
    %v6745 = vpop.f32.mrf.mxu0
    %v6746 = vadd.f32 %v6705, %v6745
    %v6747 = vpop.f32.mrf.mxu0
    %v6748 = vpop.f32.mrf.mxu0
    %6749 = vdwg.mxu0
    %6750 = vmatprep.subr.bf16.mxu0 %v4621
    %6751 = vmatpush1.bf16.msra.mxu0 %v4620
    %6752 = vmatprep.subr.bf16.mxu0 %v4617
    %6753 = vmatpush1.bf16.msra.mxu0 %v4616
    %6754 = vmatprep.subr.bf16.mxu0 %v4613
    %6755 = vmatpush1.bf16.msra.mxu0 %v4612
    %6756 = vmatprep.subr.bf16.mxu0 %v4609
    %6757 = vmatpush1.bf16.msra.mxu0 %v4608
    %6758 = vmatprep.subr.bf16.mxu0 %v4605
    %6759 = vmatpush1.bf16.msra.mxu0 %v4604
    %6760 = vmatprep.subr.bf16.mxu0 %v4601
    %6761 = vmatpush1.bf16.msra.mxu0 %v4600
    %6762 = vmatprep.subr.bf16.mxu0 %v4597
    %6763 = vmatpush1.bf16.msra.mxu0 %v4596
    %6764 = vmatprep.subr.bf16.mxu0 %v4593
    %6765 = vmatpush1.bf16.msra.mxu0 %v4592
    %6766 = vmatprep.subr.bf16.mxu0 %v4653
    %6767 = vmatpush2.bf16.msra.mxu0 %v4652
    %6768 = vmatprep.subr.bf16.mxu0 %v4649
    %6769 = vmatpush2.bf16.msra.mxu0 %v4648
    %6770 = vmatprep.subr.bf16.mxu0 %v4645
    %6771 = vmatpush2.bf16.msra.mxu0 %v4644
    %6772 = vmatprep.subr.bf16.mxu0 %v4641
    %6773 = vmatpush2.bf16.msra.mxu0 %v4640
    %6774 = vmatprep.subr.bf16.mxu0 %v4637
    %6775 = vmatpush2.bf16.msra.mxu0 %v4636
    %6776 = vmatprep.subr.bf16.mxu0 %v4633
    %6777 = vmatpush2.bf16.msra.mxu0 %v4632
    %6778 = vmatprep.subr.bf16.mxu0 %v4629
    %6779 = vmatpush2.bf16.msra.mxu0 %v4628
    %6780 = vmatprep.subr.bf16.mxu0 %v4625
    %6781 = vmatpush2.bf16.msra.mxu0 %v4624
    %6782 = vmatprep.mubr.bf16.mxu0 %v188
    %6783 = vmatmul.mubr.bf16.gmra.mxu0 %v187
    %v6784 = vpop.f32.mrf.mxu0
    %v6785 = vadd.f32 %v6744, %v6784
    %v6786 = vpop.f32.mrf.mxu0
    %v6787 = vadd.f32 %v6746, %v6786
    %v6788 = vpop.f32.mrf.mxu0
    %v6789 = vpop.f32.mrf.mxu0
    %6790 = vdwg.mxu0
    %6791 = vmatprep.subr.bf16.mxu0 %v4685
    %6792 = vmatpush1.bf16.msra.mxu0 %v4684
    %6793 = vmatprep.subr.bf16.mxu0 %v4681
    %6794 = vmatpush1.bf16.msra.mxu0 %v4680
    %6795 = vmatprep.subr.bf16.mxu0 %v4677
    %6796 = vmatpush1.bf16.msra.mxu0 %v4676
    %6797 = vmatprep.subr.bf16.mxu0 %v4673
    %6798 = vmatpush1.bf16.msra.mxu0 %v4672
    %6799 = vmatprep.subr.bf16.mxu0 %v4669
    %6800 = vmatpush1.bf16.msra.mxu0 %v4668
    %6801 = vmatprep.subr.bf16.mxu0 %v4665
    %6802 = vmatpush1.bf16.msra.mxu0 %v4664
    %6803 = vmatprep.subr.bf16.mxu0 %v4661
    %6804 = vmatpush1.bf16.msra.mxu0 %v4660
    %6805 = vmatprep.subr.bf16.mxu0 %v4657
    %6806 = vmatpush1.bf16.msra.mxu0 %v4656
    %6807 = vmatprep.subr.bf16.mxu0 %v4717
    %6808 = vmatpush2.bf16.msra.mxu0 %v4716
    %6809 = vmatprep.subr.bf16.mxu0 %v4713
    %6810 = vmatpush2.bf16.msra.mxu0 %v4712
    %6811 = vmatprep.subr.bf16.mxu0 %v4709
    %6812 = vmatpush2.bf16.msra.mxu0 %v4708
    %6813 = vmatprep.subr.bf16.mxu0 %v4705
    %6814 = vmatpush2.bf16.msra.mxu0 %v4704
    %6815 = vmatprep.subr.bf16.mxu0 %v4701
    %6816 = vmatpush2.bf16.msra.mxu0 %v4700
    %6817 = vmatprep.subr.bf16.mxu0 %v4697
    %6818 = vmatpush2.bf16.msra.mxu0 %v4696
    %6819 = vmatprep.subr.bf16.mxu0 %v4693
    %6820 = vmatpush2.bf16.msra.mxu0 %v4692
    %6821 = vmatprep.subr.bf16.mxu0 %v4689
    %6822 = vmatpush2.bf16.msra.mxu0 %v4688
    %6823 = vmatprep.mubr.bf16.mxu0 %v190
    %6824 = vmatmul.mubr.bf16.gmra.mxu0 %v189
    %v6825 = vpop.f32.mrf.mxu0
    %v6826 = vadd.f32 %v6785, %v6825
    %v6827 = vpop.f32.mrf.mxu0
    %v6828 = vadd.f32 %v6787, %v6827
    %v6829 = vpop.f32.mrf.mxu0
    %v6830 = vpop.f32.mrf.mxu0
    %6831 = vdwg.mxu0
    %6832 = vmatprep.subr.bf16.mxu0 0
    %6833 = vmatpush1.bf16.msra.mxu0 0
    %6834 = vmatprep.subr.bf16.mxu0 0
    %6835 = vmatpush1.bf16.msra.mxu0 0
    %6836 = vmatprep.subr.bf16.mxu0 0
    %6837 = vmatpush1.bf16.msra.mxu0 0
    %6838 = vmatprep.subr.bf16.mxu0 0
    %6839 = vmatpush1.bf16.msra.mxu0 0
    %6840 = vmatprep.subr.bf16.mxu0 0
    %6841 = vmatpush1.bf16.msra.mxu0 0
    %6842 = vmatprep.subr.bf16.mxu0 0
    %6843 = vmatpush1.bf16.msra.mxu0 0
    %6844 = vmatprep.subr.bf16.mxu0 %v5641
    %6845 = vmatpush1.bf16.msra.mxu0 %v5638
    %6846 = vmatprep.subr.bf16.mxu0 %v4721
    %6847 = vmatpush1.bf16.msra.mxu0 %v4720
    %6848 = vmatprep.subr.bf16.mxu0 0
    %6849 = vmatpush2.bf16.msra.mxu0 0
    %6850 = vmatprep.subr.bf16.mxu0 0
    %6851 = vmatpush2.bf16.msra.mxu0 0
    %6852 = vmatprep.subr.bf16.mxu0 0
    %6853 = vmatpush2.bf16.msra.mxu0 0
    %6854 = vmatprep.subr.bf16.mxu0 0
    %6855 = vmatpush2.bf16.msra.mxu0 0
    %6856 = vmatprep.subr.bf16.mxu0 0
    %6857 = vmatpush2.bf16.msra.mxu0 0
    %6858 = vmatprep.subr.bf16.mxu0 0
    %6859 = vmatpush2.bf16.msra.mxu0 0
    %6860 = vmatprep.subr.bf16.mxu0 0
    %6861 = vmatpush2.bf16.msra.mxu0 0
    %6862 = vmatprep.subr.bf16.mxu0 0
    %6863 = vmatpush2.bf16.msra.mxu0 0
    %6864 = vmatprep.mubr.bf16.mxu0 0
    %6865 = vmatmul.mubr.bf16.gmra.mxu0 %v5628
    %v6866 = vpop.f32.mrf.mxu0
    %v6867 = vadd.f32 %v6826, %v6866
    %v6868 = vpop.f32.mrf.mxu0
    %v6869 = vadd.f32 %v6828, %v6868
    %v6870 = vpop.f32.mrf.mxu0
    %v6871 = vpop.f32.mrf.mxu0
    %6872 = vdwg.mxu0
    %vm6873 = vcmp.ge.f32.partialorder %v6252, 0.0
    %vm6874 = vcmp.ge.f32.partialorder %v6254, 0.0
    %vm6875 = vcmp.ge.f32.partialorder %v6867, 0.0
    %vm6876 = vcmp.ge.f32.partialorder %v6869, 0.0
    %v6877 = vmul.f32 %v6252, 0.2
    %v6878 = vmul.f32 %v6254, 0.2
    %v6879 = vmul.f32 %v6867, 0.2
    %v6880 = vmul.f32 %v6869, 0.2
    %v6881 = vsel %vm6873, %v6252, %v6877
    %v6882 = vsel %vm6874, %v6254, %v6878
    %v6883 = vsel %vm6875, %v6867, %v6879
    %v6884 = vsel %vm6876, %v6869, %v6880
    %v6885 = vpack.c.bf16 %v6881, %v6881
    %v6886 = vpack.c.bf16 %v6882, %v6882
    %v6887 = vpack.c.bf16 %v6883, %v6883
    %v6888 = vpack.c.bf16 %v6884, %v6884
    %v6889 = vld [vmem:[#allocation6] sm:$0xf]
    %v6890 = vld [vmem:[#allocation6 + $0x4] sm:$0xf]
    %v6891 = vld [vmem:[#allocation6 + $0x8] sm:$0xf]
    %v6892 = vld [vmem:[#allocation6 + $0xc] sm:$0xf]
    %v6893 = vld [vmem:[#allocation6 + $0x10] sm:$0xf]
    %v6894 = vld [vmem:[#allocation6 + $0x14] sm:$0xf]
    %v6895 = vld [vmem:[#allocation6 + $0x18] sm:$0xf]
    %v6896 = vld [vmem:[#allocation6 + $0x1c] sm:$0xf]
    %v6897 = vld [vmem:[#allocation6 + $0x20] sm:$0xf]
    %v6898 = vld [vmem:[#allocation6 + $0x24] sm:$0xf]
    %v6899 = vld [vmem:[#allocation6 + $0x28] sm:$0xf]
    %v6900 = vld [vmem:[#allocation6 + $0x2c] sm:$0xf]
    %v6901 = vld [vmem:[#allocation6 + $0x30] sm:$0xf]
    %v6902 = vld [vmem:[#allocation6 + $0x34] sm:$0xf]
    %v6903 = vld [vmem:[#allocation6 + $0x38] sm:$0xf]
    %v6904 = vld [vmem:[#allocation6 + $0x3c] sm:$0xf]
    %v6905 = vld [vmem:[#allocation6 + $0x40] sm:$0xf]
    %v6906 = vld [vmem:[#allocation6 + $0x44] sm:$0xf]
    %v6907 = vld [vmem:[#allocation6 + $0x48] sm:$0xf]
    %v6908 = vld [vmem:[#allocation6 + $0x4c] sm:$0xf]
    %v6909 = vld [vmem:[#allocation6 + $0x50] sm:$0xf]
    %v6910 = vld [vmem:[#allocation6 + $0x54] sm:$0xf]
    %v6911 = vld [vmem:[#allocation6 + $0x58] sm:$0xf]
    %v6912 = vld [vmem:[#allocation6 + $0x5c] sm:$0xf]
    %v6913 = vld [vmem:[#allocation6 + $0x60] sm:$0xf]
    %v6914 = vld [vmem:[#allocation6 + $0x64] sm:$0xf]
    %v6915 = vld [vmem:[#allocation6 + $0x68] sm:$0xf]
    %v6916 = vld [vmem:[#allocation6 + $0x6c] sm:$0xf]
    %v6917 = vld [vmem:[#allocation6 + $0x70] sm:$0xf]
    %v6918 = vld [vmem:[#allocation6 + $0x74] sm:$0xf]
    %v6919 = vld [vmem:[#allocation6 + $0x78] sm:$0xf]
    %v6920 = vld [vmem:[#allocation6 + $0x7c] sm:$0xf]
    %v6921 = vld [vmem:[#allocation6 + $0x80] sm:$0xf]
    %v6922 = vld [vmem:[#allocation6 + $0x84] sm:$0xf]
    %v6923 = vld [vmem:[#allocation6 + $0x88] sm:$0xf]
    %v6924 = vld [vmem:[#allocation6 + $0x8c] sm:$0xf]
    %v6925 = vld [vmem:[#allocation6 + $0x90] sm:$0xf]
    %v6926 = vld [vmem:[#allocation6 + $0x94] sm:$0xf]
    %v6927 = vld [vmem:[#allocation6 + $0x98] sm:$0xf]
    %v6928 = vld [vmem:[#allocation6 + $0x9c] sm:$0xf]
    %v6929 = vld [vmem:[#allocation6 + $0xa0] sm:$0xf]
    %v6930 = vld [vmem:[#allocation6 + $0xa4] sm:$0xf]
    %v6931 = vld [vmem:[#allocation6 + $0xa8] sm:$0xf]
    %v6932 = vld [vmem:[#allocation6 + $0xac] sm:$0xf]
    %v6933 = vld [vmem:[#allocation6 + $0xb0] sm:$0xf]
    %v6934 = vld [vmem:[#allocation6 + $0xb4] sm:$0xf]
    %v6935 = vld [vmem:[#allocation6 + $0xb8] sm:$0xf]
    %v6936 = vld [vmem:[#allocation6 + $0xbc] sm:$0xf]
    %v6937 = vld [vmem:[#allocation6 + $0xc0] sm:$0xf]
    %v6938 = vld [vmem:[#allocation6 + $0xc4] sm:$0xf]
    %v6939 = vld [vmem:[#allocation6 + $0xc8] sm:$0xf]
    %v6940 = vld [vmem:[#allocation6 + $0xcc] sm:$0xf]
    %v6941 = vld [vmem:[#allocation6 + $0xd0] sm:$0xf]
    %v6942 = vld [vmem:[#allocation6 + $0xd4] sm:$0xf]
    %v6943 = vld [vmem:[#allocation6 + $0xd8] sm:$0xf]
    %v6944 = vld [vmem:[#allocation6 + $0xdc] sm:$0xf]
    %v6945 = vld [vmem:[#allocation6 + $0xe0] sm:$0xf]
    %v6946 = vld [vmem:[#allocation6 + $0xe4] sm:$0xf]
    %v6947 = vld [vmem:[#allocation6 + $0xe8] sm:$0xf]
    %v6948 = vld [vmem:[#allocation6 + $0xec] sm:$0xf]
    %v6949 = vld [vmem:[#allocation6 + $0xf0] sm:$0xf]
    %v6950 = vld [vmem:[#allocation6 + $0xf4] sm:$0xf]
    %v6951 = vld [vmem:[#allocation6 + $0xf8] sm:$0xf]
    %v6952 = vld [vmem:[#allocation6 + $0xfc] sm:$0xf]
    %v6953 = vld [vmem:[#allocation7] sm:$0x1]
    %v6955 = vlaneseq
    %v6956 = vshrl.u32 %v6955, 7
    %v6957 = vsub.s32 0, %v6956
    %v6958 = vrot.slane %v6953, %v6957
    %v7024 = vunpack.c.l.b16 %v6889
    %v7025 = vunpack.c.l.b16 %v6890
    %v7026 = vunpack.c.l.b16 %v6891
    %v7027 = vunpack.c.l.b16 %v6892
    %v7028 = vunpack.c.l.b16 %v6893
    %v7029 = vunpack.c.l.b16 %v6894
    %v7030 = vunpack.c.l.b16 %v6895
    %v7031 = vunpack.c.l.b16 %v6896
    %v7032 = vunpack.c.l.b16 %v6897
    %v7033 = vunpack.c.l.b16 %v6898
    %v7034 = vunpack.c.l.b16 %v6899
    %v7035 = vunpack.c.l.b16 %v6900
    %v7036 = vunpack.c.l.b16 %v6901
    %v7037 = vunpack.c.l.b16 %v6902
    %v7038 = vunpack.c.l.b16 %v6903
    %v7039 = vunpack.c.l.b16 %v6904
    %v7040 = vunpack.c.l.b16 %v6905
    %v7041 = vunpack.c.l.b16 %v6906
    %v7042 = vunpack.c.l.b16 %v6907
    %v7043 = vunpack.c.l.b16 %v6908
    %v7044 = vunpack.c.l.b16 %v6909
    %v7045 = vunpack.c.l.b16 %v6910
    %v7046 = vunpack.c.l.b16 %v6911
    %v7047 = vunpack.c.l.b16 %v6912
    %v7048 = vunpack.c.l.b16 %v6913
    %v7049 = vunpack.c.l.b16 %v6914
    %v7050 = vunpack.c.l.b16 %v6915
    %v7051 = vunpack.c.l.b16 %v6916
    %v7052 = vunpack.c.l.b16 %v6917
    %v7053 = vunpack.c.l.b16 %v6918
    %v7054 = vunpack.c.l.b16 %v6919
    %v7055 = vunpack.c.l.b16 %v6920
    %v7056 = vunpack.c.l.b16 %v6921
    %v7057 = vunpack.c.l.b16 %v6922
    %v7058 = vunpack.c.l.b16 %v6923
    %v7059 = vunpack.c.l.b16 %v6924
    %v7060 = vunpack.c.l.b16 %v6925
    %v7061 = vunpack.c.l.b16 %v6926
    %v7062 = vunpack.c.l.b16 %v6927
    %v7063 = vunpack.c.l.b16 %v6928
    %v7064 = vunpack.c.l.b16 %v6929
    %v7065 = vunpack.c.l.b16 %v6930
    %v7066 = vunpack.c.l.b16 %v6931
    %v7067 = vunpack.c.l.b16 %v6932
    %v7068 = vunpack.c.l.b16 %v6933
    %v7069 = vunpack.c.l.b16 %v6934
    %v7070 = vunpack.c.l.b16 %v6935
    %v7071 = vunpack.c.l.b16 %v6936
    %v7072 = vunpack.c.l.b16 %v6937
    %v7073 = vunpack.c.l.b16 %v6938
    %v7074 = vunpack.c.l.b16 %v6939
    %v7075 = vunpack.c.l.b16 %v6940
    %v7076 = vunpack.c.l.b16 %v6941
    %v7077 = vunpack.c.l.b16 %v6942
    %v7078 = vunpack.c.l.b16 %v6943
    %v7079 = vunpack.c.l.b16 %v6944
    %v7080 = vunpack.c.l.b16 %v6945
    %v7081 = vunpack.c.l.b16 %v6946
    %v7082 = vunpack.c.l.b16 %v6947
    %v7083 = vunpack.c.l.b16 %v6948
    %v7084 = vunpack.c.l.b16 %v6949
    %v7085 = vunpack.c.l.b16 %v6950
    %v7086 = vunpack.c.l.b16 %v6951
    %v7087 = vunpack.c.l.b16 %v6952
    %v7088 = vpack.c.b16 %v7025, %v7024
    %v7089 = vpack.c.b16 %v7027, %v7026
    %v7090 = vpack.c.b16 %v7029, %v7028
    %v7091 = vpack.c.b16 %v7031, %v7030
    %v7092 = vpack.c.b16 %v7033, %v7032
    %v7093 = vpack.c.b16 %v7035, %v7034
    %v7094 = vpack.c.b16 %v7037, %v7036
    %v7095 = vpack.c.b16 %v7039, %v7038
    %v7096 = vpack.c.b16 %v7041, %v7040
    %v7097 = vpack.c.b16 %v7043, %v7042
    %v7098 = vpack.c.b16 %v7045, %v7044
    %v7099 = vpack.c.b16 %v7047, %v7046
    %v7100 = vpack.c.b16 %v7049, %v7048
    %v7101 = vpack.c.b16 %v7051, %v7050
    %v7102 = vpack.c.b16 %v7053, %v7052
    %v7103 = vpack.c.b16 %v7055, %v7054
    %v7104 = vpack.c.b16 %v7057, %v7056
    %v7105 = vpack.c.b16 %v7059, %v7058
    %v7106 = vpack.c.b16 %v7061, %v7060
    %v7107 = vpack.c.b16 %v7063, %v7062
    %v7108 = vpack.c.b16 %v7065, %v7064
    %v7109 = vpack.c.b16 %v7067, %v7066
    %v7110 = vpack.c.b16 %v7069, %v7068
    %v7111 = vpack.c.b16 %v7071, %v7070
    %v7112 = vpack.c.b16 %v7073, %v7072
    %v7113 = vpack.c.b16 %v7075, %v7074
    %v7114 = vpack.c.b16 %v7077, %v7076
    %v7115 = vpack.c.b16 %v7079, %v7078
    %v7116 = vpack.c.b16 %v7081, %v7080
    %v7117 = vpack.c.b16 %v7083, %v7082
    %v7118 = vpack.c.b16 %v7085, %v7084
    %v7119 = vpack.c.b16 %v7087, %v7086
    %7152 = vmatprep.subr.bf16.mxu0 0
    %7153 = vmatpush1.bf16.msra.mxu0 %v7095
    %7154 = vmatprep.subr.bf16.mxu0 0
    %7155 = vmatpush1.bf16.msra.mxu0 %v7094
    %7156 = vmatprep.subr.bf16.mxu0 0
    %7157 = vmatpush1.bf16.msra.mxu0 %v7093
    %7158 = vmatprep.subr.bf16.mxu0 0
    %7159 = vmatpush1.bf16.msra.mxu0 %v7092
    %7160 = vmatprep.subr.bf16.mxu0 0
    %7161 = vmatpush1.bf16.msra.mxu0 %v7091
    %7162 = vmatprep.subr.bf16.mxu0 0
    %7163 = vmatpush1.bf16.msra.mxu0 %v7090
    %7164 = vmatprep.subr.bf16.mxu0 0
    %7165 = vmatpush1.bf16.msra.mxu0 %v7089
    %7166 = vmatprep.subr.bf16.mxu0 0
    %7167 = vmatpush1.bf16.msra.mxu0 %v7088
    %7168 = vmatprep.subr.bf16.mxu0 0
    %7169 = vmatpush2.bf16.msra.mxu0 %v7103
    %7170 = vmatprep.subr.bf16.mxu0 0
    %7171 = vmatpush2.bf16.msra.mxu0 %v7102
    %7172 = vmatprep.subr.bf16.mxu0 0
    %7173 = vmatpush2.bf16.msra.mxu0 %v7101
    %7174 = vmatprep.subr.bf16.mxu0 0
    %7175 = vmatpush2.bf16.msra.mxu0 %v7100
    %7176 = vmatprep.subr.bf16.mxu0 0
    %7177 = vmatpush2.bf16.msra.mxu0 %v7099
    %7178 = vmatprep.subr.bf16.mxu0 0
    %7179 = vmatpush2.bf16.msra.mxu0 %v7098
    %7180 = vmatprep.subr.bf16.mxu0 0
    %7181 = vmatpush2.bf16.msra.mxu0 %v7097
    %7182 = vmatprep.subr.bf16.mxu0 0
    %7183 = vmatpush2.bf16.msra.mxu0 %v7096
    %7184 = vmatprep.mubr.bf16.mxu0 %v6886
    %7185 = vmatmul.mubr.bf16.gmra.mxu0 %v6885
    %v7186 = vpop.f32.mrf.mxu0
    %v7187 = vadd.f32 %v6958, %v7186
    %v7188 = vpop.f32.mrf.mxu0
    %v7189 = vpop.f32.mrf.mxu0
    %v7190 = vpop.f32.mrf.mxu0
    %7191 = vdwg.mxu0
    %7192 = vmatprep.subr.bf16.mxu0 0
    %7193 = vmatpush1.bf16.msra.mxu0 %v7111
    %7194 = vmatprep.subr.bf16.mxu0 0
    %7195 = vmatpush1.bf16.msra.mxu0 %v7110
    %7196 = vmatprep.subr.bf16.mxu0 0
    %7197 = vmatpush1.bf16.msra.mxu0 %v7109
    %7198 = vmatprep.subr.bf16.mxu0 0
    %7199 = vmatpush1.bf16.msra.mxu0 %v7108
    %7200 = vmatprep.subr.bf16.mxu0 0
    %7201 = vmatpush1.bf16.msra.mxu0 %v7107
    %7202 = vmatprep.subr.bf16.mxu0 0
    %7203 = vmatpush1.bf16.msra.mxu0 %v7106
    %7204 = vmatprep.subr.bf16.mxu0 0
    %7205 = vmatpush1.bf16.msra.mxu0 %v7105
    %7206 = vmatprep.subr.bf16.mxu0 0
    %7207 = vmatpush1.bf16.msra.mxu0 %v7104
    %7208 = vmatprep.subr.bf16.mxu0 0
    %7209 = vmatpush2.bf16.msra.mxu0 %v7119
    %7210 = vmatprep.subr.bf16.mxu0 0
    %7211 = vmatpush2.bf16.msra.mxu0 %v7118
    %7212 = vmatprep.subr.bf16.mxu0 0
    %7213 = vmatpush2.bf16.msra.mxu0 %v7117
    %7214 = vmatprep.subr.bf16.mxu0 0
    %7215 = vmatpush2.bf16.msra.mxu0 %v7116
    %7216 = vmatprep.subr.bf16.mxu0 0
    %7217 = vmatpush2.bf16.msra.mxu0 %v7115
    %7218 = vmatprep.subr.bf16.mxu0 0
    %7219 = vmatpush2.bf16.msra.mxu0 %v7114
    %7220 = vmatprep.subr.bf16.mxu0 0
    %7221 = vmatpush2.bf16.msra.mxu0 %v7113
    %7222 = vmatprep.subr.bf16.mxu0 0
    %7223 = vmatpush2.bf16.msra.mxu0 %v7112
    %7224 = vmatprep.mubr.bf16.mxu0 %v6888
    %7225 = vmatmul.mubr.bf16.gmra.mxu0 %v6887
    %v7226 = vpop.f32.mrf.mxu0
    %v7227 = vadd.f32 %v7187, %v7226
    %v7228 = vpop.f32.mrf.mxu0
    %v7229 = vpop.f32.mrf.mxu0
    %v7230 = vpop.f32.mrf.mxu0
    %7231 = vdwg.mxu0
    %v7232 = vtanh.pop %v7227
    %v7233 = vpack.c.bf16 %v7232, %v7232
    %v7234 = vld [vmem:[#allocation9] sm:$0xff]
    %v7235 = vld [vmem:[#allocation9 + $0x8] sm:$0xff]
    %v7236 = vld [vmem:[#allocation9 + $0x10] sm:$0xff]
    %v7237 = vld [vmem:[#allocation9 + $0x18] sm:$0xff]
    %v7238 = vld [vmem:[#allocation9 + $0x20] sm:$0xff]
    %v7239 = vld [vmem:[#allocation9 + $0x28] sm:$0xff]
    %v7240 = vld [vmem:[#allocation9 + $0x30] sm:$0xff]
    %v7241 = vld [vmem:[#allocation9 + $0x38] sm:$0xff]
    %v7242 = vld [vmem:[#allocation9 + $0x40] sm:$0xff]
    %v7243 = vld [vmem:[#allocation9 + $0x48] sm:$0xff]
    %v7244 = vld [vmem:[#allocation9 + $0x50] sm:$0xff]
    %v7245 = vld [vmem:[#allocation9 + $0x58] sm:$0xff]
    %v7246 = vld [vmem:[#allocation9 + $0x60] sm:$0xff]
    %v7247 = vld [vmem:[#allocation9 + $0x68] sm:$0xff]
    %v7248 = vld [vmem:[#allocation9 + $0x70] sm:$0xff]
    %v7249 = vld [vmem:[#allocation9 + $0x78] sm:$0xff]
    %v7250 = vld [vmem:[#allocation9 + $0x80] sm:$0xff]
    %v7251 = vld [vmem:[#allocation9 + $0x88] sm:$0xff]
    %v7252 = vld [vmem:[#allocation9 + $0x90] sm:$0xff]
    %v7253 = vld [vmem:[#allocation9 + $0x98] sm:$0xff]
    %v7254 = vld [vmem:[#allocation9 + $0xa0] sm:$0xff]
    %v7255 = vld [vmem:[#allocation9 + $0xa8] sm:$0xff]
    %v7256 = vld [vmem:[#allocation9 + $0xb0] sm:$0xff]
    %v7257 = vld [vmem:[#allocation9 + $0xb8] sm:$0xff]
    %v7258 = vld [vmem:[#allocation9 + $0xc0] sm:$0xff]
    %v7259 = vld [vmem:[#allocation9 + $0xc8] sm:$0xff]
    %v7260 = vld [vmem:[#allocation9 + $0xd0] sm:$0xff]
    %v7261 = vld [vmem:[#allocation9 + $0xd8] sm:$0xff]
    %v7262 = vld [vmem:[#allocation9 + $0xe0] sm:$0xff]
    %v7263 = vld [vmem:[#allocation9 + $0xe8] sm:$0xff]
    %v7264 = vld [vmem:[#allocation9 + $0xf0] sm:$0xff]
    %v7265 = vld [vmem:[#allocation9 + $0xf8] sm:$0xff]
    %v7266 = vld [vmem:[#allocation10] sm:$0xf]
    %v7268 = vlaneseq
    %v7269 = vshrl.u32 %v7268, 7
    %v7270 = vsub.s32 0, %v7269
    %v7271 = vrot.slane %v7266, %v7270
    %v7272 = vlaneseq
    %v7273 = vshrl.u32 %v7272, 7
    %v7274 = vsub.s32 1, %v7273
    %v7275 = vrot.slane %v7266, %v7274
    %v7276 = vlaneseq
    %v7277 = vshrl.u32 %v7276, 7
    %v7278 = vsub.s32 2, %v7277
    %v7279 = vrot.slane %v7266, %v7278
    %v7280 = vlaneseq
    %v7281 = vshrl.u32 %v7280, 7
    %v7282 = vsub.s32 3, %v7281
    %v7283 = vrot.slane %v7266, %v7282
    %v7320 = vunpack.c.l.b16 %v7234
    %v7321 = vunpack.c.h.b16 %v7234
    %v7322 = vunpack.c.l.b16 %v7235
    %v7323 = vunpack.c.h.b16 %v7235
    %v7324 = vunpack.c.l.b16 %v7236
    %v7325 = vunpack.c.h.b16 %v7236
    %v7326 = vunpack.c.l.b16 %v7237
    %v7327 = vunpack.c.h.b16 %v7237
    %v7328 = vunpack.c.l.b16 %v7238
    %v7329 = vunpack.c.h.b16 %v7238
    %v7330 = vunpack.c.l.b16 %v7239
    %v7331 = vunpack.c.h.b16 %v7239
    %v7332 = vunpack.c.l.b16 %v7240
    %v7333 = vunpack.c.h.b16 %v7240
    %v7334 = vunpack.c.l.b16 %v7241
    %v7335 = vunpack.c.h.b16 %v7241
    %v7336 = vunpack.c.l.b16 %v7242
    %v7337 = vunpack.c.h.b16 %v7242
    %v7338 = vunpack.c.l.b16 %v7243
    %v7339 = vunpack.c.h.b16 %v7243
    %v7340 = vunpack.c.l.b16 %v7244
    %v7341 = vunpack.c.h.b16 %v7244
    %v7342 = vunpack.c.l.b16 %v7245
    %v7343 = vunpack.c.h.b16 %v7245
    %v7344 = vunpack.c.l.b16 %v7246
    %v7345 = vunpack.c.h.b16 %v7246
    %v7346 = vunpack.c.l.b16 %v7247
    %v7347 = vunpack.c.h.b16 %v7247
    %v7348 = vunpack.c.l.b16 %v7248
    %v7349 = vunpack.c.h.b16 %v7248
    %v7350 = vunpack.c.l.b16 %v7249
    %v7351 = vunpack.c.h.b16 %v7249
    %v7352 = vunpack.c.l.b16 %v7250
    %v7353 = vunpack.c.h.b16 %v7250
    %v7354 = vunpack.c.l.b16 %v7251
    %v7355 = vunpack.c.h.b16 %v7251
    %v7356 = vunpack.c.l.b16 %v7252
    %v7357 = vunpack.c.h.b16 %v7252
    %v7358 = vunpack.c.l.b16 %v7253
    %v7359 = vunpack.c.h.b16 %v7253
    %v7360 = vunpack.c.l.b16 %v7254
    %v7361 = vunpack.c.h.b16 %v7254
    %v7362 = vunpack.c.l.b16 %v7255
    %v7363 = vunpack.c.h.b16 %v7255
    %v7364 = vunpack.c.l.b16 %v7256
    %v7365 = vunpack.c.h.b16 %v7256
    %v7366 = vunpack.c.l.b16 %v7257
    %v7367 = vunpack.c.h.b16 %v7257
    %v7368 = vunpack.c.l.b16 %v7258
    %v7369 = vunpack.c.h.b16 %v7258
    %v7370 = vunpack.c.l.b16 %v7259
    %v7371 = vunpack.c.h.b16 %v7259
    %v7372 = vunpack.c.l.b16 %v7260
    %v7373 = vunpack.c.h.b16 %v7260
    %v7374 = vunpack.c.l.b16 %v7261
    %v7375 = vunpack.c.h.b16 %v7261
    %v7376 = vunpack.c.l.b16 %v7262
    %v7377 = vunpack.c.h.b16 %v7262
    %v7378 = vunpack.c.l.b16 %v7263
    %v7379 = vunpack.c.h.b16 %v7263
    %v7380 = vunpack.c.l.b16 %v7264
    %v7381 = vunpack.c.h.b16 %v7264
    %v7382 = vunpack.c.l.b16 %v7265
    %v7383 = vunpack.c.h.b16 %v7265
    %v7384 = vpack.c.b16 %v7324, %v7320
    %v7385 = vpack.c.b16 %v7325, %v7321
    %v7386 = vpack.c.b16 %v7326, %v7322
    %v7387 = vpack.c.b16 %v7327, %v7323
    %v7388 = vpack.c.b16 %v7332, %v7328
    %v7389 = vpack.c.b16 %v7333, %v7329
    %v7390 = vpack.c.b16 %v7334, %v7330
    %v7391 = vpack.c.b16 %v7335, %v7331
    %v7392 = vpack.c.b16 %v7340, %v7336
    %v7393 = vpack.c.b16 %v7341, %v7337
    %v7394 = vpack.c.b16 %v7342, %v7338
    %v7395 = vpack.c.b16 %v7343, %v7339
    %v7396 = vpack.c.b16 %v7348, %v7344
    %v7397 = vpack.c.b16 %v7349, %v7345
    %v7398 = vpack.c.b16 %v7350, %v7346
    %v7399 = vpack.c.b16 %v7351, %v7347
    %v7400 = vpack.c.b16 %v7356, %v7352
    %v7401 = vpack.c.b16 %v7357, %v7353
    %v7402 = vpack.c.b16 %v7358, %v7354
    %v7403 = vpack.c.b16 %v7359, %v7355
    %v7404 = vpack.c.b16 %v7364, %v7360
    %v7405 = vpack.c.b16 %v7365, %v7361
    %v7406 = vpack.c.b16 %v7366, %v7362
    %v7407 = vpack.c.b16 %v7367, %v7363
    %v7408 = vpack.c.b16 %v7372, %v7368
    %v7409 = vpack.c.b16 %v7373, %v7369
    %v7410 = vpack.c.b16 %v7374, %v7370
    %v7411 = vpack.c.b16 %v7375, %v7371
    %v7412 = vpack.c.b16 %v7380, %v7376
    %v7413 = vpack.c.b16 %v7381, %v7377
    %v7414 = vpack.c.b16 %v7382, %v7378
    %v7415 = vpack.c.b16 %v7383, %v7379
    %7448 = vmatprep.subr.bf16.mxu0 %v7413
    %7449 = vmatpush1.bf16.msra.mxu0 %v7412
    %7450 = vmatprep.subr.bf16.mxu0 %v7409
    %7451 = vmatpush1.bf16.msra.mxu0 %v7408
    %7452 = vmatprep.subr.bf16.mxu0 %v7405
    %7453 = vmatpush1.bf16.msra.mxu0 %v7404
    %7454 = vmatprep.subr.bf16.mxu0 %v7401
    %7455 = vmatpush1.bf16.msra.mxu0 %v7400
    %7456 = vmatprep.subr.bf16.mxu0 %v7397
    %7457 = vmatpush1.bf16.msra.mxu0 %v7396
    %7458 = vmatprep.subr.bf16.mxu0 %v7393
    %7459 = vmatpush1.bf16.msra.mxu0 %v7392
    %7460 = vmatprep.subr.bf16.mxu0 %v7389
    %7461 = vmatpush1.bf16.msra.mxu0 %v7388
    %7462 = vmatprep.subr.bf16.mxu0 %v7385
    %7463 = vmatpush1.bf16.msra.mxu0 %v7384
    %7464 = vmatprep.subr.bf16.mxu0 0
    %7465 = vmatpush2.bf16.msra.mxu0 0
    %7466 = vmatprep.subr.bf16.mxu0 0
    %7467 = vmatpush2.bf16.msra.mxu0 0
    %7468 = vmatprep.subr.bf16.mxu0 0
    %7469 = vmatpush2.bf16.msra.mxu0 0
    %7470 = vmatprep.subr.bf16.mxu0 0
    %7471 = vmatpush2.bf16.msra.mxu0 0
    %7472 = vmatprep.subr.bf16.mxu0 0
    %7473 = vmatpush2.bf16.msra.mxu0 0
    %7474 = vmatprep.subr.bf16.mxu0 0
    %7475 = vmatpush2.bf16.msra.mxu0 0
    %7476 = vmatprep.subr.bf16.mxu0 0
    %7477 = vmatpush2.bf16.msra.mxu0 0
    %7478 = vmatprep.subr.bf16.mxu0 0
    %7479 = vmatpush2.bf16.msra.mxu0 0
    %7480 = vmatprep.mubr.bf16.mxu0 0
    %7481 = vmatmul.mubr.bf16.gmra.mxu0 %v7233
    %v7482 = vpop.f32.mrf.mxu0
    %v7483 = vadd.f32 %v7271, %v7482
    %v7484 = vpop.f32.mrf.mxu0
    %v7485 = vadd.f32 %v7275, %v7484
    %v7486 = vpop.f32.mrf.mxu0
    %v7487 = vpop.f32.mrf.mxu0
    %7488 = vdwg.mxu0
    %7489 = vmatprep.subr.bf16.mxu0 %v7415
    %7490 = vmatpush1.bf16.msra.mxu0 %v7414
    %7491 = vmatprep.subr.bf16.mxu0 %v7411
    %7492 = vmatpush1.bf16.msra.mxu0 %v7410
    %7493 = vmatprep.subr.bf16.mxu0 %v7407
    %7494 = vmatpush1.bf16.msra.mxu0 %v7406
    %7495 = vmatprep.subr.bf16.mxu0 %v7403
    %7496 = vmatpush1.bf16.msra.mxu0 %v7402
    %7497 = vmatprep.subr.bf16.mxu0 %v7399
    %7498 = vmatpush1.bf16.msra.mxu0 %v7398
    %7499 = vmatprep.subr.bf16.mxu0 %v7395
    %7500 = vmatpush1.bf16.msra.mxu0 %v7394
    %7501 = vmatprep.subr.bf16.mxu0 %v7391
    %7502 = vmatpush1.bf16.msra.mxu0 %v7390
    %7503 = vmatprep.subr.bf16.mxu0 %v7387
    %7504 = vmatpush1.bf16.msra.mxu0 %v7386
    %7505 = vmatprep.subr.bf16.mxu0 0
    %7506 = vmatpush2.bf16.msra.mxu0 0
    %7507 = vmatprep.subr.bf16.mxu0 0
    %7508 = vmatpush2.bf16.msra.mxu0 0
    %7509 = vmatprep.subr.bf16.mxu0 0
    %7510 = vmatpush2.bf16.msra.mxu0 0
    %7511 = vmatprep.subr.bf16.mxu0 0
    %7512 = vmatpush2.bf16.msra.mxu0 0
    %7513 = vmatprep.subr.bf16.mxu0 0
    %7514 = vmatpush2.bf16.msra.mxu0 0
    %7515 = vmatprep.subr.bf16.mxu0 0
    %7516 = vmatpush2.bf16.msra.mxu0 0
    %7517 = vmatprep.subr.bf16.mxu0 0
    %7518 = vmatpush2.bf16.msra.mxu0 0
    %7519 = vmatprep.subr.bf16.mxu0 0
    %7520 = vmatpush2.bf16.msra.mxu0 0
    %7521 = vmatprep.mubr.bf16.mxu0 0
    %7522 = vmatmul.mubr.bf16.gmra.mxu0 %v7233
    %v7523 = vpop.f32.mrf.mxu0
    %v7524 = vadd.f32 %v7279, %v7523
    %v7525 = vpop.f32.mrf.mxu0
    %v7526 = vadd.f32 %v7283, %v7525
    %v7527 = vpop.f32.mrf.mxu0
    %v7528 = vpop.f32.mrf.mxu0
    %7529 = vdwg.mxu0
    %v7530 = vmax.f32 %v7483, 0.0
    %v7531 = vmax.f32 %v7485, 0.0
    %v7532 = vmax.f32 %v7524, 0.0
    %v7533 = vmax.f32 %v7526, 0.0
    %v7534 = vpack.c.bf16 %v7530, %v7530
    %v7535 = vpack.c.bf16 %v7531, %v7531
    %v7536 = vpack.c.bf16 %v7532, %v7532
    %v7537 = vpack.c.bf16 %v7533, %v7533
    %v7538 = vld [vmem:[#allocation12] sm:$0xff]
    %v7539 = vld [vmem:[#allocation12 + $0x8] sm:$0xff]
    %v7540 = vld [vmem:[#allocation12 + $0x10] sm:$0xff]
    %v7541 = vld [vmem:[#allocation12 + $0x18] sm:$0xff]
    %v7542 = vld [vmem:[#allocation12 + $0x20] sm:$0xff]
    %v7543 = vld [vmem:[#allocation12 + $0x28] sm:$0xff]
    %v7544 = vld [vmem:[#allocation12 + $0x30] sm:$0xff]
    %v7545 = vld [vmem:[#allocation12 + $0x38] sm:$0xff]
    %v7546 = vld [vmem:[#allocation12 + $0x40] sm:$0xff]
    %v7547 = vld [vmem:[#allocation12 + $0x48] sm:$0xff]
    %v7548 = vld [vmem:[#allocation12 + $0x50] sm:$0xff]
    %v7549 = vld [vmem:[#allocation12 + $0x58] sm:$0xff]
    %v7550 = vld [vmem:[#allocation12 + $0x60] sm:$0xff]
    %v7551 = vld [vmem:[#allocation12 + $0x68] sm:$0xff]
    %v7552 = vld [vmem:[#allocation12 + $0x70] sm:$0xf]
    %v7553 = vld [vmem:[#allocation12 + $0x74] sm:$0xff]
    %v7554 = vld [vmem:[#allocation12 + $0x7c] sm:$0xff]
    %v7555 = vld [vmem:[#allocation12 + $0x84] sm:$0xff]
    %v7556 = vld [vmem:[#allocation12 + $0x8c] sm:$0xff]
    %v7557 = vld [vmem:[#allocation12 + $0x94] sm:$0xff]
    %v7558 = vld [vmem:[#allocation12 + $0x9c] sm:$0xff]
    %v7559 = vld [vmem:[#allocation12 + $0xa4] sm:$0xff]
    %v7560 = vld [vmem:[#allocation12 + $0xac] sm:$0xff]
    %v7561 = vld [vmem:[#allocation12 + $0xb4] sm:$0xff]
    %v7562 = vld [vmem:[#allocation12 + $0xbc] sm:$0xff]
    %v7563 = vld [vmem:[#allocation12 + $0xc4] sm:$0xff]
    %v7564 = vld [vmem:[#allocation12 + $0xcc] sm:$0xff]
    %v7565 = vld [vmem:[#allocation12 + $0xd4] sm:$0xff]
    %v7566 = vld [vmem:[#allocation12 + $0xdc] sm:$0xff]
    %v7567 = vld [vmem:[#allocation12 + $0xe4] sm:$0xf]
    %v7568 = vld [vmem:[#allocation12 + $0xe8] sm:$0xff]
    %v7569 = vld [vmem:[#allocation12 + $0xf0] sm:$0xff]
    %v7570 = vld [vmem:[#allocation12 + $0xf8] sm:$0xff]
    %v7571 = vld [vmem:[#allocation12 + $0x100] sm:$0xff]
    %v7572 = vld [vmem:[#allocation12 + $0x108] sm:$0xff]
    %v7573 = vld [vmem:[#allocation12 + $0x110] sm:$0xff]
    %v7574 = vld [vmem:[#allocation12 + $0x118] sm:$0xff]
    %v7575 = vld [vmem:[#allocation12 + $0x120] sm:$0xff]
    %v7576 = vld [vmem:[#allocation12 + $0x128] sm:$0xff]
    %v7577 = vld [vmem:[#allocation12 + $0x130] sm:$0xff]
    %v7578 = vld [vmem:[#allocation12 + $0x138] sm:$0xff]
    %v7579 = vld [vmem:[#allocation12 + $0x140] sm:$0xff]
    %v7580 = vld [vmem:[#allocation12 + $0x148] sm:$0xff]
    %v7581 = vld [vmem:[#allocation12 + $0x150] sm:$0xff]
    %v7582 = vld [vmem:[#allocation12 + $0x158] sm:$0xf]
    %v7583 = vld [vmem:[#allocation12 + $0x15c] sm:$0xff]
    %v7584 = vld [vmem:[#allocation12 + $0x164] sm:$0xff]
    %v7585 = vld [vmem:[#allocation12 + $0x16c] sm:$0xff]
    %v7586 = vld [vmem:[#allocation12 + $0x174] sm:$0xff]
    %v7587 = vld [vmem:[#allocation12 + $0x17c] sm:$0xff]
    %v7588 = vld [vmem:[#allocation12 + $0x184] sm:$0xff]
    %v7589 = vld [vmem:[#allocation12 + $0x18c] sm:$0xff]
    %v7590 = vld [vmem:[#allocation12 + $0x194] sm:$0xff]
    %v7591 = vld [vmem:[#allocation12 + $0x19c] sm:$0xff]
    %v7592 = vld [vmem:[#allocation12 + $0x1a4] sm:$0xff]
    %v7593 = vld [vmem:[#allocation12 + $0x1ac] sm:$0xff]
    %v7594 = vld [vmem:[#allocation12 + $0x1b4] sm:$0xff]
    %v7595 = vld [vmem:[#allocation12 + $0x1bc] sm:$0xff]
    %v7596 = vld [vmem:[#allocation12 + $0x1c4] sm:$0xff]
    %v7597 = vld [vmem:[#allocation12 + $0x1cc] sm:$0xf]
    %v7598 = vld [vmem:[#allocation12 + $0x1d0] sm:$0xff]
    %v7599 = vld [vmem:[#allocation12 + $0x1d8] sm:$0xff]
    %v7600 = vld [vmem:[#allocation12 + $0x1e0] sm:$0xff]
    %v7601 = vld [vmem:[#allocation12 + $0x1e8] sm:$0xff]
    %v7602 = vld [vmem:[#allocation12 + $0x1f0] sm:$0xff]
    %v7603 = vld [vmem:[#allocation12 + $0x1f8] sm:$0xff]
    %v7604 = vld [vmem:[#allocation12 + $0x200] sm:$0xff]
    %v7605 = vld [vmem:[#allocation12 + $0x208] sm:$0xff]
    %v7606 = vld [vmem:[#allocation12 + $0x210] sm:$0xff]
    %v7607 = vld [vmem:[#allocation12 + $0x218] sm:$0xff]
    %v7608 = vld [vmem:[#allocation12 + $0x220] sm:$0xff]
    %v7609 = vld [vmem:[#allocation12 + $0x228] sm:$0xff]
    %v7610 = vld [vmem:[#allocation12 + $0x230] sm:$0xff]
    %v7611 = vld [vmem:[#allocation12 + $0x238] sm:$0xff]
    %v7612 = vld [vmem:[#allocation12 + $0x240] sm:$0xf]
    %v7613 = vld [vmem:[#allocation12 + $0x244] sm:$0xff]
    %v7614 = vld [vmem:[#allocation12 + $0x24c] sm:$0xff]
    %v7615 = vld [vmem:[#allocation12 + $0x254] sm:$0xff]
    %v7616 = vld [vmem:[#allocation12 + $0x25c] sm:$0xff]
    %v7617 = vld [vmem:[#allocation12 + $0x264] sm:$0xff]
    %v7618 = vld [vmem:[#allocation12 + $0x26c] sm:$0xff]
    %v7619 = vld [vmem:[#allocation12 + $0x274] sm:$0xff]
    %v7620 = vld [vmem:[#allocation12 + $0x27c] sm:$0xff]
    %v7621 = vld [vmem:[#allocation12 + $0x284] sm:$0xff]
    %v7622 = vld [vmem:[#allocation12 + $0x28c] sm:$0xff]
    %v7623 = vld [vmem:[#allocation12 + $0x294] sm:$0xff]
    %v7624 = vld [vmem:[#allocation12 + $0x29c] sm:$0xff]
    %v7625 = vld [vmem:[#allocation12 + $0x2a4] sm:$0xff]
    %v7626 = vld [vmem:[#allocation12 + $0x2ac] sm:$0xff]
    %v7627 = vld [vmem:[#allocation12 + $0x2b4] sm:$0xf]
    %v7628 = vld [vmem:[#allocation12 + $0x2b8] sm:$0xff]
    %v7629 = vld [vmem:[#allocation12 + $0x2c0] sm:$0xff]
    %v7630 = vld [vmem:[#allocation12 + $0x2c8] sm:$0xff]
    %v7631 = vld [vmem:[#allocation12 + $0x2d0] sm:$0xff]
    %v7632 = vld [vmem:[#allocation12 + $0x2d8] sm:$0xff]
    %v7633 = vld [vmem:[#allocation12 + $0x2e0] sm:$0xff]
    %v7634 = vld [vmem:[#allocation12 + $0x2e8] sm:$0xff]
    %v7635 = vld [vmem:[#allocation12 + $0x2f0] sm:$0xff]
    %v7636 = vld [vmem:[#allocation12 + $0x2f8] sm:$0xff]
    %v7637 = vld [vmem:[#allocation12 + $0x300] sm:$0xff]
    %v7638 = vld [vmem:[#allocation12 + $0x308] sm:$0xff]
    %v7639 = vld [vmem:[#allocation12 + $0x310] sm:$0xff]
    %v7640 = vld [vmem:[#allocation12 + $0x318] sm:$0xff]
    %v7641 = vld [vmem:[#allocation12 + $0x320] sm:$0xff]
    %v7642 = vld [vmem:[#allocation12 + $0x328] sm:$0xf]
    %v7643 = vld [vmem:[#allocation12 + $0x32c] sm:$0xff]
    %v7644 = vld [vmem:[#allocation12 + $0x334] sm:$0xff]
    %v7645 = vld [vmem:[#allocation12 + $0x33c] sm:$0xff]
    %v7646 = vld [vmem:[#allocation12 + $0x344] sm:$0xff]
    %v7647 = vld [vmem:[#allocation12 + $0x34c] sm:$0xff]
    %v7648 = vld [vmem:[#allocation12 + $0x354] sm:$0xff]
    %v7649 = vld [vmem:[#allocation12 + $0x35c] sm:$0xff]
    %v7650 = vld [vmem:[#allocation12 + $0x364] sm:$0xff]
    %v7651 = vld [vmem:[#allocation12 + $0x36c] sm:$0xff]
    %v7652 = vld [vmem:[#allocation12 + $0x374] sm:$0xff]
    %v7653 = vld [vmem:[#allocation12 + $0x37c] sm:$0xff]
    %v7654 = vld [vmem:[#allocation12 + $0x384] sm:$0xff]
    %v7655 = vld [vmem:[#allocation12 + $0x38c] sm:$0xff]
    %v7656 = vld [vmem:[#allocation12 + $0x394] sm:$0xff]
    %v7657 = vld [vmem:[#allocation12 + $0x39c] sm:$0xf]
    %v7658 = vld [vmem:[#allocation12 + $0x3a0] sm:$0xff]
    %v7659 = vld [vmem:[#allocation12 + $0x3a8] sm:$0xff]
    %v7660 = vld [vmem:[#allocation12 + $0x3b0] sm:$0xff]
    %v7661 = vld [vmem:[#allocation12 + $0x3b8] sm:$0xff]
    %v7662 = vld [vmem:[#allocation12 + $0x3c0] sm:$0xff]
    %v7663 = vld [vmem:[#allocation12 + $0x3c8] sm:$0xff]
    %v7664 = vld [vmem:[#allocation12 + $0x3d0] sm:$0xff]
    %v7665 = vld [vmem:[#allocation12 + $0x3d8] sm:$0xff]
    %v7666 = vld [vmem:[#allocation12 + $0x3e0] sm:$0xff]
    %v7667 = vld [vmem:[#allocation12 + $0x3e8] sm:$0xff]
    %v7668 = vld [vmem:[#allocation12 + $0x3f0] sm:$0xff]
    %v7669 = vld [vmem:[#allocation12 + $0x3f8] sm:$0xff]
    %v7670 = vld [vmem:[#allocation12 + $0x400] sm:$0xff]
    %v7671 = vld [vmem:[#allocation12 + $0x408] sm:$0xff]
    %v7672 = vld [vmem:[#allocation12 + $0x410] sm:$0xf]
    %v7673 = vld [vmem:[#allocation12 + $0x414] sm:$0xff]
    %v7674 = vld [vmem:[#allocation12 + $0x41c] sm:$0xff]
    %v7675 = vld [vmem:[#allocation12 + $0x424] sm:$0xff]
    %v7676 = vld [vmem:[#allocation12 + $0x42c] sm:$0xff]
    %v7677 = vld [vmem:[#allocation12 + $0x434] sm:$0xff]
    %v7678 = vld [vmem:[#allocation12 + $0x43c] sm:$0xff]
    %v7679 = vld [vmem:[#allocation12 + $0x444] sm:$0xff]
    %v7680 = vld [vmem:[#allocation12 + $0x44c] sm:$0xff]
    %v7681 = vld [vmem:[#allocation12 + $0x454] sm:$0xff]
    %v7682 = vld [vmem:[#allocation12 + $0x45c] sm:$0xff]
    %v7683 = vld [vmem:[#allocation12 + $0x464] sm:$0xff]
    %v7684 = vld [vmem:[#allocation12 + $0x46c] sm:$0xff]
    %v7685 = vld [vmem:[#allocation12 + $0x474] sm:$0xff]
    %v7686 = vld [vmem:[#allocation12 + $0x47c] sm:$0xff]
    %v7687 = vld [vmem:[#allocation12 + $0x484] sm:$0xf]
    %v7688 = vld [vmem:[#allocation12 + $0x488] sm:$0xff]
    %v7689 = vld [vmem:[#allocation12 + $0x490] sm:$0xff]
    %v7690 = vld [vmem:[#allocation12 + $0x498] sm:$0xff]
    %v7691 = vld [vmem:[#allocation12 + $0x4a0] sm:$0xff]
    %v7692 = vld [vmem:[#allocation12 + $0x4a8] sm:$0xff]
    %v7693 = vld [vmem:[#allocation12 + $0x4b0] sm:$0xff]
    %v7694 = vld [vmem:[#allocation12 + $0x4b8] sm:$0xff]
    %v7695 = vld [vmem:[#allocation12 + $0x4c0] sm:$0xff]
    %v7696 = vld [vmem:[#allocation12 + $0x4c8] sm:$0xff]
    %v7697 = vld [vmem:[#allocation12 + $0x4d0] sm:$0xff]
    %v7698 = vld [vmem:[#allocation12 + $0x4d8] sm:$0xff]
    %v7699 = vld [vmem:[#allocation12 + $0x4e0] sm:$0xff]
    %v7700 = vld [vmem:[#allocation12 + $0x4e8] sm:$0xff]
    %v7701 = vld [vmem:[#allocation12 + $0x4f0] sm:$0xff]
    %v7702 = vld [vmem:[#allocation12 + $0x4f8] sm:$0xf]
    %v7703 = vld [vmem:[#allocation12 + $0x4fc] sm:$0xff]
    %v7704 = vld [vmem:[#allocation12 + $0x504] sm:$0xff]
    %v7705 = vld [vmem:[#allocation12 + $0x50c] sm:$0xff]
    %v7706 = vld [vmem:[#allocation12 + $0x514] sm:$0xff]
    %v7707 = vld [vmem:[#allocation12 + $0x51c] sm:$0xff]
    %v7708 = vld [vmem:[#allocation12 + $0x524] sm:$0xff]
    %v7709 = vld [vmem:[#allocation12 + $0x52c] sm:$0xff]
    %v7710 = vld [vmem:[#allocation12 + $0x534] sm:$0xff]
    %v7711 = vld [vmem:[#allocation12 + $0x53c] sm:$0xff]
    %v7712 = vld [vmem:[#allocation12 + $0x544] sm:$0xff]
    %v7713 = vld [vmem:[#allocation12 + $0x54c] sm:$0xff]
    %v7714 = vld [vmem:[#allocation12 + $0x554] sm:$0xff]
    %v7715 = vld [vmem:[#allocation12 + $0x55c] sm:$0xff]
    %v7716 = vld [vmem:[#allocation12 + $0x564] sm:$0xff]
    %v7717 = vld [vmem:[#allocation12 + $0x56c] sm:$0xf]
    %v7718 = vld [vmem:[#allocation12 + $0x570] sm:$0xff]
    %v7719 = vld [vmem:[#allocation12 + $0x578] sm:$0xff]
    %v7720 = vld [vmem:[#allocation12 + $0x580] sm:$0xff]
    %v7721 = vld [vmem:[#allocation12 + $0x588] sm:$0xff]
    %v7722 = vld [vmem:[#allocation12 + $0x590] sm:$0xff]
    %v7723 = vld [vmem:[#allocation12 + $0x598] sm:$0xff]
    %v7724 = vld [vmem:[#allocation12 + $0x5a0] sm:$0xff]
    %v7725 = vld [vmem:[#allocation12 + $0x5a8] sm:$0xff]
    %v7726 = vld [vmem:[#allocation12 + $0x5b0] sm:$0xff]
    %v7727 = vld [vmem:[#allocation12 + $0x5b8] sm:$0xff]
    %v7728 = vld [vmem:[#allocation12 + $0x5c0] sm:$0xff]
    %v7729 = vld [vmem:[#allocation12 + $0x5c8] sm:$0xff]
    %v7730 = vld [vmem:[#allocation12 + $0x5d0] sm:$0xff]
    %v7731 = vld [vmem:[#allocation12 + $0x5d8] sm:$0xff]
    %v7732 = vld [vmem:[#allocation12 + $0x5e0] sm:$0xf]
    %v7733 = vld [vmem:[#allocation12 + $0x5e4] sm:$0xff]
    %v7734 = vld [vmem:[#allocation12 + $0x5ec] sm:$0xff]
    %v7735 = vld [vmem:[#allocation12 + $0x5f4] sm:$0xff]
    %v7736 = vld [vmem:[#allocation12 + $0x5fc] sm:$0xff]
    %v7737 = vld [vmem:[#allocation12 + $0x604] sm:$0xff]
    %v7738 = vld [vmem:[#allocation12 + $0x60c] sm:$0xff]
    %v7739 = vld [vmem:[#allocation12 + $0x614] sm:$0xff]
    %v7740 = vld [vmem:[#allocation12 + $0x61c] sm:$0xff]
    %v7741 = vld [vmem:[#allocation12 + $0x624] sm:$0xff]
    %v7742 = vld [vmem:[#allocation12 + $0x62c] sm:$0xff]
    %v7743 = vld [vmem:[#allocation12 + $0x634] sm:$0xff]
    %v7744 = vld [vmem:[#allocation12 + $0x63c] sm:$0xff]
    %v7745 = vld [vmem:[#allocation12 + $0x644] sm:$0xff]
    %v7746 = vld [vmem:[#allocation12 + $0x64c] sm:$0xff]
    %v7747 = vld [vmem:[#allocation12 + $0x654] sm:$0xf]
    %v7748 = vld [vmem:[#allocation12 + $0x658] sm:$0xff]
    %v7749 = vld [vmem:[#allocation12 + $0x660] sm:$0xff]
    %v7750 = vld [vmem:[#allocation12 + $0x668] sm:$0xff]
    %v7751 = vld [vmem:[#allocation12 + $0x670] sm:$0xff]
    %v7752 = vld [vmem:[#allocation12 + $0x678] sm:$0xff]
    %v7753 = vld [vmem:[#allocation12 + $0x680] sm:$0xff]
    %v7754 = vld [vmem:[#allocation12 + $0x688] sm:$0xff]
    %v7755 = vld [vmem:[#allocation12 + $0x690] sm:$0xff]
    %v7756 = vld [vmem:[#allocation12 + $0x698] sm:$0xff]
    %v7757 = vld [vmem:[#allocation12 + $0x6a0] sm:$0xff]
    %v7758 = vld [vmem:[#allocation12 + $0x6a8] sm:$0xff]
    %v7759 = vld [vmem:[#allocation12 + $0x6b0] sm:$0xff]
    %v7760 = vld [vmem:[#allocation12 + $0x6b8] sm:$0xff]
    %v7761 = vld [vmem:[#allocation12 + $0x6c0] sm:$0xff]
    %v7762 = vld [vmem:[#allocation12 + $0x6c8] sm:$0xf]
    %v7763 = vld [vmem:[#allocation12 + $0x6cc] sm:$0xff]
    %v7764 = vld [vmem:[#allocation12 + $0x6d4] sm:$0xff]
    %v7765 = vld [vmem:[#allocation12 + $0x6dc] sm:$0xff]
    %v7766 = vld [vmem:[#allocation12 + $0x6e4] sm:$0xff]
    %v7767 = vld [vmem:[#allocation12 + $0x6ec] sm:$0xff]
    %v7768 = vld [vmem:[#allocation12 + $0x6f4] sm:$0xff]
    %v7769 = vld [vmem:[#allocation12 + $0x6fc] sm:$0xff]
    %v7770 = vld [vmem:[#allocation12 + $0x704] sm:$0xff]
    %v7771 = vld [vmem:[#allocation12 + $0x70c] sm:$0xff]
    %v7772 = vld [vmem:[#allocation12 + $0x714] sm:$0xff]
    %v7773 = vld [vmem:[#allocation12 + $0x71c] sm:$0xff]
    %v7774 = vld [vmem:[#allocation12 + $0x724] sm:$0xff]
    %v7775 = vld [vmem:[#allocation12 + $0x72c] sm:$0xff]
    %v7776 = vld [vmem:[#allocation12 + $0x734] sm:$0xff]
    %v7777 = vld [vmem:[#allocation12 + $0x73c] sm:$0xf]
    %v7778 = vld [vmem:[#allocation12 + $0x740] sm:$0xff]
    %v7779 = vld [vmem:[#allocation12 + $0x748] sm:$0xff]
    %v7780 = vld [vmem:[#allocation12 + $0x750] sm:$0xff]
    %v7781 = vld [vmem:[#allocation12 + $0x758] sm:$0xff]
    %v7782 = vld [vmem:[#allocation12 + $0x760] sm:$0xff]
    %v7783 = vld [vmem:[#allocation12 + $0x768] sm:$0xff]
    %v7784 = vld [vmem:[#allocation12 + $0x770] sm:$0xff]
    %v7785 = vld [vmem:[#allocation12 + $0x778] sm:$0xff]
    %v7786 = vld [vmem:[#allocation12 + $0x780] sm:$0xff]
    %v7787 = vld [vmem:[#allocation12 + $0x788] sm:$0xff]
    %v7788 = vld [vmem:[#allocation12 + $0x790] sm:$0xff]
    %v7789 = vld [vmem:[#allocation12 + $0x798] sm:$0xff]
    %v7790 = vld [vmem:[#allocation12 + $0x7a0] sm:$0xff]
    %v7791 = vld [vmem:[#allocation12 + $0x7a8] sm:$0xff]
    %v7792 = vld [vmem:[#allocation12 + $0x7b0] sm:$0xf]
    %v7793 = vld [vmem:[#allocation12 + $0x7b4] sm:$0xff]
    %v7794 = vld [vmem:[#allocation12 + $0x7bc] sm:$0xff]
    %v7795 = vld [vmem:[#allocation12 + $0x7c4] sm:$0xff]
    %v7796 = vld [vmem:[#allocation12 + $0x7cc] sm:$0xff]
    %v7797 = vld [vmem:[#allocation12 + $0x7d4] sm:$0xff]
    %v7798 = vld [vmem:[#allocation12 + $0x7dc] sm:$0xff]
    %v7799 = vld [vmem:[#allocation12 + $0x7e4] sm:$0xff]
    %v7800 = vld [vmem:[#allocation12 + $0x7ec] sm:$0xff]
    %v7801 = vld [vmem:[#allocation12 + $0x7f4] sm:$0xff]
    %v7802 = vld [vmem:[#allocation12 + $0x7fc] sm:$0xff]
    %v7803 = vld [vmem:[#allocation12 + $0x804] sm:$0xff]
    %v7804 = vld [vmem:[#allocation12 + $0x80c] sm:$0xff]
    %v7805 = vld [vmem:[#allocation12 + $0x814] sm:$0xff]
    %v7806 = vld [vmem:[#allocation12 + $0x81c] sm:$0xff]
    %v7807 = vld [vmem:[#allocation12 + $0x824] sm:$0xf]
    %v7808 = vld [vmem:[#allocation12 + $0x828] sm:$0xff]
    %v7809 = vld [vmem:[#allocation12 + $0x830] sm:$0xff]
    %v7810 = vld [vmem:[#allocation12 + $0x838] sm:$0xff]
    %v7811 = vld [vmem:[#allocation12 + $0x840] sm:$0xff]
    %v7812 = vld [vmem:[#allocation12 + $0x848] sm:$0xff]
    %v7813 = vld [vmem:[#allocation12 + $0x850] sm:$0xff]
    %v7814 = vld [vmem:[#allocation12 + $0x858] sm:$0xff]
    %v7815 = vld [vmem:[#allocation12 + $0x860] sm:$0xff]
    %v7816 = vld [vmem:[#allocation12 + $0x868] sm:$0xff]
    %v7817 = vld [vmem:[#allocation12 + $0x870] sm:$0xff]
    %v7818 = vld [vmem:[#allocation12 + $0x878] sm:$0xff]
    %v7819 = vld [vmem:[#allocation12 + $0x880] sm:$0xff]
    %v7820 = vld [vmem:[#allocation12 + $0x888] sm:$0xff]
    %v7821 = vld [vmem:[#allocation12 + $0x890] sm:$0xff]
    %v7822 = vld [vmem:[#allocation12 + $0x898] sm:$0xf]
    %v7823 = vld [vmem:[#allocation12 + $0x89c] sm:$0xff]
    %v7824 = vld [vmem:[#allocation12 + $0x8a4] sm:$0xff]
    %v7825 = vld [vmem:[#allocation12 + $0x8ac] sm:$0xff]
    %v7826 = vld [vmem:[#allocation12 + $0x8b4] sm:$0xff]
    %v7827 = vld [vmem:[#allocation12 + $0x8bc] sm:$0xff]
    %v7828 = vld [vmem:[#allocation12 + $0x8c4] sm:$0xff]
    %v7829 = vld [vmem:[#allocation12 + $0x8cc] sm:$0xff]
    %v7830 = vld [vmem:[#allocation12 + $0x8d4] sm:$0xff]
    %v7831 = vld [vmem:[#allocation12 + $0x8dc] sm:$0xff]
    %v7832 = vld [vmem:[#allocation12 + $0x8e4] sm:$0xff]
    %v7833 = vld [vmem:[#allocation12 + $0x8ec] sm:$0xff]
    %v7834 = vld [vmem:[#allocation12 + $0x8f4] sm:$0xff]
    %v7835 = vld [vmem:[#allocation12 + $0x8fc] sm:$0xff]
    %v7836 = vld [vmem:[#allocation12 + $0x904] sm:$0xff]
    %v7837 = vld [vmem:[#allocation12 + $0x90c] sm:$0xf]
    %v7838 = vld [vmem:[#allocation12 + $0x910] sm:$0xff]
    %v7839 = vld [vmem:[#allocation12 + $0x918] sm:$0xff]
    %v7840 = vld [vmem:[#allocation12 + $0x920] sm:$0xff]
    %v7841 = vld [vmem:[#allocation12 + $0x928] sm:$0xff]
    %v7842 = vld [vmem:[#allocation12 + $0x930] sm:$0xff]
    %v7843 = vld [vmem:[#allocation12 + $0x938] sm:$0xff]
    %v7844 = vld [vmem:[#allocation12 + $0x940] sm:$0xff]
    %v7845 = vld [vmem:[#allocation12 + $0x948] sm:$0xff]
    %v7846 = vld [vmem:[#allocation12 + $0x950] sm:$0xff]
    %v7847 = vld [vmem:[#allocation12 + $0x958] sm:$0xff]
    %v7848 = vld [vmem:[#allocation12 + $0x960] sm:$0xff]
    %v7849 = vld [vmem:[#allocation12 + $0x968] sm:$0xff]
    %v7850 = vld [vmem:[#allocation12 + $0x970] sm:$0xff]
    %v7851 = vld [vmem:[#allocation12 + $0x978] sm:$0xff]
    %v7852 = vld [vmem:[#allocation12 + $0x980] sm:$0xf]
    %v7853 = vld [vmem:[#allocation12 + $0x984] sm:$0xff]
    %v7854 = vld [vmem:[#allocation12 + $0x98c] sm:$0xff]
    %v7855 = vld [vmem:[#allocation12 + $0x994] sm:$0xff]
    %v7856 = vld [vmem:[#allocation12 + $0x99c] sm:$0xff]
    %v7857 = vld [vmem:[#allocation12 + $0x9a4] sm:$0xff]
    %v7858 = vld [vmem:[#allocation12 + $0x9ac] sm:$0xff]
    %v7859 = vld [vmem:[#allocation12 + $0x9b4] sm:$0xff]
    %v7860 = vld [vmem:[#allocation12 + $0x9bc] sm:$0xff]
    %v7861 = vld [vmem:[#allocation12 + $0x9c4] sm:$0xff]
    %v7862 = vld [vmem:[#allocation12 + $0x9cc] sm:$0xff]
    %v7863 = vld [vmem:[#allocation12 + $0x9d4] sm:$0xff]
    %v7864 = vld [vmem:[#allocation12 + $0x9dc] sm:$0xff]
    %v7865 = vld [vmem:[#allocation12 + $0x9e4] sm:$0xff]
    %v7866 = vld [vmem:[#allocation12 + $0x9ec] sm:$0xff]
    %v7867 = vld [vmem:[#allocation12 + $0x9f4] sm:$0xf]
    %v7868 = vld [vmem:[#allocation12 + $0x9f8] sm:$0xff]
    %v7869 = vld [vmem:[#allocation12 + $0xa00] sm:$0xff]
    %v7870 = vld [vmem:[#allocation12 + $0xa08] sm:$0xff]
    %v7871 = vld [vmem:[#allocation12 + $0xa10] sm:$0xff]
    %v7872 = vld [vmem:[#allocation12 + $0xa18] sm:$0xff]
    %v7873 = vld [vmem:[#allocation12 + $0xa20] sm:$0xff]
    %v7874 = vld [vmem:[#allocation12 + $0xa28] sm:$0xff]
    %v7875 = vld [vmem:[#allocation12 + $0xa30] sm:$0xff]
    %v7876 = vld [vmem:[#allocation12 + $0xa38] sm:$0xff]
    %v7877 = vld [vmem:[#allocation12 + $0xa40] sm:$0xff]
    %v7878 = vld [vmem:[#allocation12 + $0xa48] sm:$0xff]
    %v7879 = vld [vmem:[#allocation12 + $0xa50] sm:$0xff]
    %v7880 = vld [vmem:[#allocation12 + $0xa58] sm:$0xff]
    %v7881 = vld [vmem:[#allocation12 + $0xa60] sm:$0xff]
    %v7882 = vld [vmem:[#allocation12 + $0xa68] sm:$0xf]
    %v7883 = vld [vmem:[#allocation12 + $0xa6c] sm:$0xff]
    %v7884 = vld [vmem:[#allocation12 + $0xa74] sm:$0xff]
    %v7885 = vld [vmem:[#allocation12 + $0xa7c] sm:$0xff]
    %v7886 = vld [vmem:[#allocation12 + $0xa84] sm:$0xff]
    %v7887 = vld [vmem:[#allocation12 + $0xa8c] sm:$0xff]
    %v7888 = vld [vmem:[#allocation12 + $0xa94] sm:$0xff]
    %v7889 = vld [vmem:[#allocation12 + $0xa9c] sm:$0xff]
    %v7890 = vld [vmem:[#allocation12 + $0xaa4] sm:$0xff]
    %v7891 = vld [vmem:[#allocation12 + $0xaac] sm:$0xff]
    %v7892 = vld [vmem:[#allocation12 + $0xab4] sm:$0xff]
    %v7893 = vld [vmem:[#allocation12 + $0xabc] sm:$0xff]
    %v7894 = vld [vmem:[#allocation12 + $0xac4] sm:$0xff]
    %v7895 = vld [vmem:[#allocation12 + $0xacc] sm:$0xff]
    %v7896 = vld [vmem:[#allocation12 + $0xad4] sm:$0xff]
    %v7897 = vld [vmem:[#allocation12 + $0xadc] sm:$0xf]
    %v7898 = vld [vmem:[#allocation12 + $0xae0] sm:$0xff]
    %v7899 = vld [vmem:[#allocation12 + $0xae8] sm:$0xff]
    %v7900 = vld [vmem:[#allocation12 + $0xaf0] sm:$0xff]
    %v7901 = vld [vmem:[#allocation12 + $0xaf8] sm:$0xff]
    %v7902 = vld [vmem:[#allocation12 + $0xb00] sm:$0xff]
    %v7903 = vld [vmem:[#allocation12 + $0xb08] sm:$0xff]
    %v7904 = vld [vmem:[#allocation12 + $0xb10] sm:$0xff]
    %v7905 = vld [vmem:[#allocation12 + $0xb18] sm:$0xff]
    %v7906 = vld [vmem:[#allocation12 + $0xb20] sm:$0xff]
    %v7907 = vld [vmem:[#allocation12 + $0xb28] sm:$0xff]
    %v7908 = vld [vmem:[#allocation12 + $0xb30] sm:$0xff]
    %v7909 = vld [vmem:[#allocation12 + $0xb38] sm:$0xff]
    %v7910 = vld [vmem:[#allocation12 + $0xb40] sm:$0xff]
    %v7911 = vld [vmem:[#allocation12 + $0xb48] sm:$0xff]
    %v7912 = vld [vmem:[#allocation12 + $0xb50] sm:$0xf]
    %v7913 = vld [vmem:[#allocation12 + $0xb54] sm:$0xff]
    %v7914 = vld [vmem:[#allocation12 + $0xb5c] sm:$0xff]
    %v7915 = vld [vmem:[#allocation12 + $0xb64] sm:$0xff]
    %v7916 = vld [vmem:[#allocation12 + $0xb6c] sm:$0xff]
    %v7917 = vld [vmem:[#allocation12 + $0xb74] sm:$0xff]
    %v7918 = vld [vmem:[#allocation12 + $0xb7c] sm:$0xff]
    %v7919 = vld [vmem:[#allocation12 + $0xb84] sm:$0xff]
    %v7920 = vld [vmem:[#allocation12 + $0xb8c] sm:$0xff]
    %v7921 = vld [vmem:[#allocation12 + $0xb94] sm:$0xff]
    %v7922 = vld [vmem:[#allocation12 + $0xb9c] sm:$0xff]
    %v7923 = vld [vmem:[#allocation12 + $0xba4] sm:$0xff]
    %v7924 = vld [vmem:[#allocation12 + $0xbac] sm:$0xff]
    %v7925 = vld [vmem:[#allocation12 + $0xbb4] sm:$0xff]
    %v7926 = vld [vmem:[#allocation12 + $0xbbc] sm:$0xff]
    %v7927 = vld [vmem:[#allocation12 + $0xbc4] sm:$0xf]
    %v7928 = vld [vmem:[#allocation12 + $0xbc8] sm:$0xff]
    %v7929 = vld [vmem:[#allocation12 + $0xbd0] sm:$0xff]
    %v7930 = vld [vmem:[#allocation12 + $0xbd8] sm:$0xff]
    %v7931 = vld [vmem:[#allocation12 + $0xbe0] sm:$0xff]
    %v7932 = vld [vmem:[#allocation12 + $0xbe8] sm:$0xff]
    %v7933 = vld [vmem:[#allocation12 + $0xbf0] sm:$0xff]
    %v7934 = vld [vmem:[#allocation12 + $0xbf8] sm:$0xff]
    %v7935 = vld [vmem:[#allocation12 + $0xc00] sm:$0xff]
    %v7936 = vld [vmem:[#allocation12 + $0xc08] sm:$0xff]
    %v7937 = vld [vmem:[#allocation12 + $0xc10] sm:$0xff]
    %v7938 = vld [vmem:[#allocation12 + $0xc18] sm:$0xff]
    %v7939 = vld [vmem:[#allocation12 + $0xc20] sm:$0xff]
    %v7940 = vld [vmem:[#allocation12 + $0xc28] sm:$0xff]
    %v7941 = vld [vmem:[#allocation12 + $0xc30] sm:$0xff]
    %v7942 = vld [vmem:[#allocation12 + $0xc38] sm:$0xf]
    %v7943 = vld [vmem:[#allocation12 + $0xc3c] sm:$0xff]
    %v7944 = vld [vmem:[#allocation12 + $0xc44] sm:$0xff]
    %v7945 = vld [vmem:[#allocation12 + $0xc4c] sm:$0xff]
    %v7946 = vld [vmem:[#allocation12 + $0xc54] sm:$0xff]
    %v7947 = vld [vmem:[#allocation12 + $0xc5c] sm:$0xff]
    %v7948 = vld [vmem:[#allocation12 + $0xc64] sm:$0xff]
    %v7949 = vld [vmem:[#allocation12 + $0xc6c] sm:$0xff]
    %v7950 = vld [vmem:[#allocation12 + $0xc74] sm:$0xff]
    %v7951 = vld [vmem:[#allocation12 + $0xc7c] sm:$0xff]
    %v7952 = vld [vmem:[#allocation12 + $0xc84] sm:$0xff]
    %v7953 = vld [vmem:[#allocation12 + $0xc8c] sm:$0xff]
    %v7954 = vld [vmem:[#allocation12 + $0xc94] sm:$0xff]
    %v7955 = vld [vmem:[#allocation12 + $0xc9c] sm:$0xff]
    %v7956 = vld [vmem:[#allocation12 + $0xca4] sm:$0xff]
    %v7957 = vld [vmem:[#allocation12 + $0xcac] sm:$0xf]
    %v7958 = vld [vmem:[#allocation12 + $0xcb0] sm:$0xff]
    %v7959 = vld [vmem:[#allocation12 + $0xcb8] sm:$0xff]
    %v7960 = vld [vmem:[#allocation12 + $0xcc0] sm:$0xff]
    %v7961 = vld [vmem:[#allocation12 + $0xcc8] sm:$0xff]
    %v7962 = vld [vmem:[#allocation12 + $0xcd0] sm:$0xff]
    %v7963 = vld [vmem:[#allocation12 + $0xcd8] sm:$0xff]
    %v7964 = vld [vmem:[#allocation12 + $0xce0] sm:$0xff]
    %v7965 = vld [vmem:[#allocation12 + $0xce8] sm:$0xff]
    %v7966 = vld [vmem:[#allocation12 + $0xcf0] sm:$0xff]
    %v7967 = vld [vmem:[#allocation12 + $0xcf8] sm:$0xff]
    %v7968 = vld [vmem:[#allocation12 + $0xd00] sm:$0xff]
    %v7969 = vld [vmem:[#allocation12 + $0xd08] sm:$0xff]
    %v7970 = vld [vmem:[#allocation12 + $0xd10] sm:$0xff]
    %v7971 = vld [vmem:[#allocation12 + $0xd18] sm:$0xff]
    %v7972 = vld [vmem:[#allocation12 + $0xd20] sm:$0xf]
    %v7973 = vld [vmem:[#allocation12 + $0xd24] sm:$0xff]
    %v7974 = vld [vmem:[#allocation12 + $0xd2c] sm:$0xff]
    %v7975 = vld [vmem:[#allocation12 + $0xd34] sm:$0xff]
    %v7976 = vld [vmem:[#allocation12 + $0xd3c] sm:$0xff]
    %v7977 = vld [vmem:[#allocation12 + $0xd44] sm:$0xff]
    %v7978 = vld [vmem:[#allocation12 + $0xd4c] sm:$0xff]
    %v7979 = vld [vmem:[#allocation12 + $0xd54] sm:$0xff]
    %v7980 = vld [vmem:[#allocation12 + $0xd5c] sm:$0xff]
    %v7981 = vld [vmem:[#allocation12 + $0xd64] sm:$0xff]
    %v7982 = vld [vmem:[#allocation12 + $0xd6c] sm:$0xff]
    %v7983 = vld [vmem:[#allocation12 + $0xd74] sm:$0xff]
    %v7984 = vld [vmem:[#allocation12 + $0xd7c] sm:$0xff]
    %v7985 = vld [vmem:[#allocation12 + $0xd84] sm:$0xff]
    %v7986 = vld [vmem:[#allocation12 + $0xd8c] sm:$0xff]
    %v7987 = vld [vmem:[#allocation12 + $0xd94] sm:$0xf]
    %v7988 = vld [vmem:[#allocation12 + $0xd98] sm:$0xff]
    %v7989 = vld [vmem:[#allocation12 + $0xda0] sm:$0xff]
    %v7990 = vld [vmem:[#allocation12 + $0xda8] sm:$0xff]
    %v7991 = vld [vmem:[#allocation12 + $0xdb0] sm:$0xff]
    %v7992 = vld [vmem:[#allocation12 + $0xdb8] sm:$0xff]
    %v7993 = vld [vmem:[#allocation12 + $0xdc0] sm:$0xff]
    %v7994 = vld [vmem:[#allocation12 + $0xdc8] sm:$0xff]
    %v7995 = vld [vmem:[#allocation12 + $0xdd0] sm:$0xff]
    %v7996 = vld [vmem:[#allocation12 + $0xdd8] sm:$0xff]
    %v7997 = vld [vmem:[#allocation12 + $0xde0] sm:$0xff]
    %v7998 = vld [vmem:[#allocation12 + $0xde8] sm:$0xff]
    %v7999 = vld [vmem:[#allocation12 + $0xdf0] sm:$0xff]
    %v8000 = vld [vmem:[#allocation12 + $0xdf8] sm:$0xff]
    %v8001 = vld [vmem:[#allocation12 + $0xe00] sm:$0xff]
    %v8002 = vld [vmem:[#allocation12 + $0xe08] sm:$0xf]
    %v8003 = vld [vmem:[#allocation12 + $0xe0c] sm:$0xff]
    %v8004 = vld [vmem:[#allocation12 + $0xe14] sm:$0xff]
    %v8005 = vld [vmem:[#allocation12 + $0xe1c] sm:$0xff]
    %v8006 = vld [vmem:[#allocation12 + $0xe24] sm:$0xff]
    %v8007 = vld [vmem:[#allocation12 + $0xe2c] sm:$0xff]
    %v8008 = vld [vmem:[#allocation12 + $0xe34] sm:$0xff]
    %v8009 = vld [vmem:[#allocation12 + $0xe3c] sm:$0xff]
    %v8010 = vld [vmem:[#allocation12 + $0xe44] sm:$0xff]
    %v8011 = vld [vmem:[#allocation12 + $0xe4c] sm:$0xff]
    %v8012 = vld [vmem:[#allocation12 + $0xe54] sm:$0xff]
    %v8013 = vld [vmem:[#allocation12 + $0xe5c] sm:$0xff]
    %v8014 = vld [vmem:[#allocation12 + $0xe64] sm:$0xff]
    %v8015 = vld [vmem:[#allocation12 + $0xe6c] sm:$0xff]
    %v8016 = vld [vmem:[#allocation12 + $0xe74] sm:$0xff]
    %v8017 = vld [vmem:[#allocation12 + $0xe7c] sm:$0xf]
    %v8018 = vld [vmem:[#allocation12 + $0xe80] sm:$0xff]
    %v8019 = vld [vmem:[#allocation12 + $0xe88] sm:$0xff]
    %v8020 = vld [vmem:[#allocation12 + $0xe90] sm:$0xff]
    %v8021 = vld [vmem:[#allocation12 + $0xe98] sm:$0xff]
    %v8022 = vld [vmem:[#allocation12 + $0xea0] sm:$0xff]
    %v8023 = vld [vmem:[#allocation12 + $0xea8] sm:$0xff]
    %v8024 = vld [vmem:[#allocation12 + $0xeb0] sm:$0xff]
    %v8025 = vld [vmem:[#allocation12 + $0xeb8] sm:$0xff]
    %v8026 = vld [vmem:[#allocation12 + $0xec0] sm:$0xff]
    %v8027 = vld [vmem:[#allocation12 + $0xec8] sm:$0xff]
    %v8028 = vld [vmem:[#allocation12 + $0xed0] sm:$0xff]
    %v8029 = vld [vmem:[#allocation12 + $0xed8] sm:$0xff]
    %v8030 = vld [vmem:[#allocation12 + $0xee0] sm:$0xff]
    %v8031 = vld [vmem:[#allocation12 + $0xee8] sm:$0xff]
    %v8032 = vld [vmem:[#allocation12 + $0xef0] sm:$0xf]
    %v8033 = vld [vmem:[#allocation12 + $0xef4] sm:$0xff]
    %v8034 = vld [vmem:[#allocation12 + $0xefc] sm:$0xff]
    %v8035 = vld [vmem:[#allocation12 + $0xf04] sm:$0xff]
    %v8036 = vld [vmem:[#allocation12 + $0xf0c] sm:$0xff]
    %v8037 = vld [vmem:[#allocation12 + $0xf14] sm:$0xff]
    %v8038 = vld [vmem:[#allocation12 + $0xf1c] sm:$0xff]
    %v8039 = vld [vmem:[#allocation12 + $0xf24] sm:$0xff]
    %v8040 = vld [vmem:[#allocation12 + $0xf2c] sm:$0xff]
    %v8041 = vld [vmem:[#allocation12 + $0xf34] sm:$0xff]
    %v8042 = vld [vmem:[#allocation12 + $0xf3c] sm:$0xff]
    %v8043 = vld [vmem:[#allocation12 + $0xf44] sm:$0xff]
    %v8044 = vld [vmem:[#allocation12 + $0xf4c] sm:$0xff]
    %v8045 = vld [vmem:[#allocation12 + $0xf54] sm:$0xff]
    %v8046 = vld [vmem:[#allocation12 + $0xf5c] sm:$0xff]
    %v8047 = vld [vmem:[#allocation12 + $0xf64] sm:$0xf]
    %v8048 = vld [vmem:[#allocation12 + $0xf68] sm:$0xff]
    %v8049 = vld [vmem:[#allocation12 + $0xf70] sm:$0xff]
    %v8050 = vld [vmem:[#allocation12 + $0xf78] sm:$0xff]
    %v8051 = vld [vmem:[#allocation12 + $0xf80] sm:$0xff]
    %v8052 = vld [vmem:[#allocation12 + $0xf88] sm:$0xff]
    %v8053 = vld [vmem:[#allocation12 + $0xf90] sm:$0xff]
    %v8054 = vld [vmem:[#allocation12 + $0xf98] sm:$0xff]
    %v8055 = vld [vmem:[#allocation12 + $0xfa0] sm:$0xff]
    %v8056 = vld [vmem:[#allocation12 + $0xfa8] sm:$0xff]
    %v8057 = vld [vmem:[#allocation12 + $0xfb0] sm:$0xff]
    %v8058 = vld [vmem:[#allocation12 + $0xfb8] sm:$0xff]
    %v8059 = vld [vmem:[#allocation12 + $0xfc0] sm:$0xff]
    %v8060 = vld [vmem:[#allocation12 + $0xfc8] sm:$0xff]
    %v8061 = vld [vmem:[#allocation12 + $0xfd0] sm:$0xff]
    %v8062 = vld [vmem:[#allocation12 + $0xfd8] sm:$0xf]
    %v8063 = vld [vmem:[#allocation12 + $0xfdc] sm:$0xff]
    %v8064 = vld [vmem:[#allocation12 + $0xfe4] sm:$0xff]
    %v8065 = vld [vmem:[#allocation12 + $0xfec] sm:$0xff]
    %v8066 = vld [vmem:[#allocation12 + $0xff4] sm:$0xff]
    %v8067 = vld [vmem:[#allocation12 + $0xffc] sm:$0xff]
    %v8068 = vld [vmem:[#allocation12 + $0x1004] sm:$0xff]
    %v8069 = vld [vmem:[#allocation12 + $0x100c] sm:$0xff]
    %v8070 = vld [vmem:[#allocation12 + $0x1014] sm:$0xff]
    %v8071 = vld [vmem:[#allocation12 + $0x101c] sm:$0xff]
    %v8072 = vld [vmem:[#allocation12 + $0x1024] sm:$0xff]
    %v8073 = vld [vmem:[#allocation12 + $0x102c] sm:$0xff]
    %v8074 = vld [vmem:[#allocation12 + $0x1034] sm:$0xff]
    %v8075 = vld [vmem:[#allocation12 + $0x103c] sm:$0xff]
    %v8076 = vld [vmem:[#allocation12 + $0x1044] sm:$0xff]
    %v8077 = vld [vmem:[#allocation12 + $0x104c] sm:$0xf]
    %v8078 = vld [vmem:[#allocation12 + $0x1050] sm:$0xff]
    %v8079 = vld [vmem:[#allocation12 + $0x1058] sm:$0xff]
    %v8080 = vld [vmem:[#allocation12 + $0x1060] sm:$0xff]
    %v8081 = vld [vmem:[#allocation12 + $0x1068] sm:$0xff]
    %v8082 = vld [vmem:[#allocation12 + $0x1070] sm:$0xff]
    %v8083 = vld [vmem:[#allocation12 + $0x1078] sm:$0xff]
    %v8084 = vld [vmem:[#allocation12 + $0x1080] sm:$0xff]
    %v8085 = vld [vmem:[#allocation12 + $0x1088] sm:$0xff]
    %v8086 = vld [vmem:[#allocation12 + $0x1090] sm:$0xff]
    %v8087 = vld [vmem:[#allocation12 + $0x1098] sm:$0xff]
    %v8088 = vld [vmem:[#allocation12 + $0x10a0] sm:$0xff]
    %v8089 = vld [vmem:[#allocation12 + $0x10a8] sm:$0xff]
    %v8090 = vld [vmem:[#allocation12 + $0x10b0] sm:$0xff]
    %v8091 = vld [vmem:[#allocation12 + $0x10b8] sm:$0xff]
    %v8092 = vld [vmem:[#allocation12 + $0x10c0] sm:$0xf]
    %v8093 = vld [vmem:[#allocation12 + $0x10c4] sm:$0xff]
    %v8094 = vld [vmem:[#allocation12 + $0x10cc] sm:$0xff]
    %v8095 = vld [vmem:[#allocation12 + $0x10d4] sm:$0xff]
    %v8096 = vld [vmem:[#allocation12 + $0x10dc] sm:$0xff]
    %v8097 = vld [vmem:[#allocation12 + $0x10e4] sm:$0xff]
    %v8098 = vld [vmem:[#allocation12 + $0x10ec] sm:$0xff]
    %v8099 = vld [vmem:[#allocation12 + $0x10f4] sm:$0xff]
    %v8100 = vld [vmem:[#allocation12 + $0x10fc] sm:$0xff]
    %v8101 = vld [vmem:[#allocation12 + $0x1104] sm:$0xff]
    %v8102 = vld [vmem:[#allocation12 + $0x110c] sm:$0xff]
    %v8103 = vld [vmem:[#allocation12 + $0x1114] sm:$0xff]
    %v8104 = vld [vmem:[#allocation12 + $0x111c] sm:$0xff]
    %v8105 = vld [vmem:[#allocation12 + $0x1124] sm:$0xff]
    %v8106 = vld [vmem:[#allocation12 + $0x112c] sm:$0xff]
    %v8107 = vld [vmem:[#allocation12 + $0x1134] sm:$0xf]
    %v8108 = vld [vmem:[#allocation12 + $0x1138] sm:$0xff]
    %v8109 = vld [vmem:[#allocation12 + $0x1140] sm:$0xff]
    %v8110 = vld [vmem:[#allocation12 + $0x1148] sm:$0xff]
    %v8111 = vld [vmem:[#allocation12 + $0x1150] sm:$0xff]
    %v8112 = vld [vmem:[#allocation12 + $0x1158] sm:$0xff]
    %v8113 = vld [vmem:[#allocation12 + $0x1160] sm:$0xff]
    %v8114 = vld [vmem:[#allocation12 + $0x1168] sm:$0xff]
    %v8115 = vld [vmem:[#allocation12 + $0x1170] sm:$0xff]
    %v8116 = vld [vmem:[#allocation12 + $0x1178] sm:$0xff]
    %v8117 = vld [vmem:[#allocation12 + $0x1180] sm:$0xff]
    %v8118 = vld [vmem:[#allocation12 + $0x1188] sm:$0xff]
    %v8119 = vld [vmem:[#allocation12 + $0x1190] sm:$0xff]
    %v8120 = vld [vmem:[#allocation12 + $0x1198] sm:$0xff]
    %v8121 = vld [vmem:[#allocation12 + $0x11a0] sm:$0xff]
    %v8122 = vld [vmem:[#allocation12 + $0x11a8] sm:$0xf]
    %v8123 = vld [vmem:[#allocation12 + $0x11ac] sm:$0xff]
    %v8124 = vld [vmem:[#allocation12 + $0x11b4] sm:$0xff]
    %v8125 = vld [vmem:[#allocation12 + $0x11bc] sm:$0xff]
    %v8126 = vld [vmem:[#allocation12 + $0x11c4] sm:$0xff]
    %v8127 = vld [vmem:[#allocation12 + $0x11cc] sm:$0xff]
    %v8128 = vld [vmem:[#allocation12 + $0x11d4] sm:$0xff]
    %v8129 = vld [vmem:[#allocation12 + $0x11dc] sm:$0xff]
    %v8130 = vld [vmem:[#allocation12 + $0x11e4] sm:$0xff]
    %v8131 = vld [vmem:[#allocation12 + $0x11ec] sm:$0xff]
    %v8132 = vld [vmem:[#allocation12 + $0x11f4] sm:$0xff]
    %v8133 = vld [vmem:[#allocation12 + $0x11fc] sm:$0xff]
    %v8134 = vld [vmem:[#allocation12 + $0x1204] sm:$0xff]
    %v8135 = vld [vmem:[#allocation12 + $0x120c] sm:$0xff]
    %v8136 = vld [vmem:[#allocation12 + $0x1214] sm:$0xff]
    %v8137 = vld [vmem:[#allocation12 + $0x121c] sm:$0xf]
    %v8138 = vld [vmem:[#allocation12 + $0x1220] sm:$0xff]
    %v8139 = vld [vmem:[#allocation12 + $0x1228] sm:$0xff]
    %v8140 = vld [vmem:[#allocation12 + $0x1230] sm:$0xff]
    %v8141 = vld [vmem:[#allocation12 + $0x1238] sm:$0xff]
    %v8142 = vld [vmem:[#allocation12 + $0x1240] sm:$0xff]
    %v8143 = vld [vmem:[#allocation12 + $0x1248] sm:$0xff]
    %v8144 = vld [vmem:[#allocation12 + $0x1250] sm:$0xff]
    %v8145 = vld [vmem:[#allocation12 + $0x1258] sm:$0xff]
    %v8146 = vld [vmem:[#allocation12 + $0x1260] sm:$0xff]
    %v8147 = vld [vmem:[#allocation12 + $0x1268] sm:$0xff]
    %v8148 = vld [vmem:[#allocation12 + $0x1270] sm:$0xff]
    %v8149 = vld [vmem:[#allocation12 + $0x1278] sm:$0xff]
    %v8150 = vld [vmem:[#allocation12 + $0x1280] sm:$0xff]
    %v8151 = vld [vmem:[#allocation12 + $0x1288] sm:$0xff]
    %v8152 = vld [vmem:[#allocation12 + $0x1290] sm:$0xf]
    %v8153 = vld [vmem:[#allocation12 + $0x1294] sm:$0xff]
    %v8154 = vld [vmem:[#allocation12 + $0x129c] sm:$0xff]
    %v8155 = vld [vmem:[#allocation12 + $0x12a4] sm:$0xff]
    %v8156 = vld [vmem:[#allocation12 + $0x12ac] sm:$0xff]
    %v8157 = vld [vmem:[#allocation12 + $0x12b4] sm:$0xff]
    %v8158 = vld [vmem:[#allocation12 + $0x12bc] sm:$0xff]
    %v8159 = vld [vmem:[#allocation12 + $0x12c4] sm:$0xff]
    %v8160 = vld [vmem:[#allocation12 + $0x12cc] sm:$0xff]
    %v8161 = vld [vmem:[#allocation12 + $0x12d4] sm:$0xff]
    %v8162 = vld [vmem:[#allocation12 + $0x12dc] sm:$0xff]
    %v8163 = vld [vmem:[#allocation12 + $0x12e4] sm:$0xff]
    %v8164 = vld [vmem:[#allocation12 + $0x12ec] sm:$0xff]
    %v8165 = vld [vmem:[#allocation12 + $0x12f4] sm:$0xff]
    %v8166 = vld [vmem:[#allocation12 + $0x12fc] sm:$0xff]
    %v8167 = vld [vmem:[#allocation12 + $0x1304] sm:$0xf]
    %v8168 = vld [vmem:[#allocation12 + $0x1308] sm:$0xff]
    %v8169 = vld [vmem:[#allocation12 + $0x1310] sm:$0xff]
    %v8170 = vld [vmem:[#allocation12 + $0x1318] sm:$0xff]
    %v8171 = vld [vmem:[#allocation12 + $0x1320] sm:$0xff]
    %v8172 = vld [vmem:[#allocation12 + $0x1328] sm:$0xff]
    %v8173 = vld [vmem:[#allocation12 + $0x1330] sm:$0xff]
    %v8174 = vld [vmem:[#allocation12 + $0x1338] sm:$0xff]
    %v8175 = vld [vmem:[#allocation12 + $0x1340] sm:$0xff]
    %v8176 = vld [vmem:[#allocation12 + $0x1348] sm:$0xff]
    %v8177 = vld [vmem:[#allocation12 + $0x1350] sm:$0xff]
    %v8178 = vld [vmem:[#allocation12 + $0x1358] sm:$0xff]
    %v8179 = vld [vmem:[#allocation12 + $0x1360] sm:$0xff]
    %v8180 = vld [vmem:[#allocation12 + $0x1368] sm:$0xff]
    %v8181 = vld [vmem:[#allocation12 + $0x1370] sm:$0xff]
    %v8182 = vld [vmem:[#allocation12 + $0x1378] sm:$0xf]
    %v8183 = vld [vmem:[#allocation12 + $0x137c] sm:$0xff]
    %v8184 = vld [vmem:[#allocation12 + $0x1384] sm:$0xff]
    %v8185 = vld [vmem:[#allocation12 + $0x138c] sm:$0xff]
    %v8186 = vld [vmem:[#allocation12 + $0x1394] sm:$0xff]
    %v8187 = vld [vmem:[#allocation12 + $0x139c] sm:$0xff]
    %v8188 = vld [vmem:[#allocation12 + $0x13a4] sm:$0xff]
    %v8189 = vld [vmem:[#allocation12 + $0x13ac] sm:$0xff]
    %v8190 = vld [vmem:[#allocation12 + $0x13b4] sm:$0xff]
    %v8191 = vld [vmem:[#allocation12 + $0x13bc] sm:$0xff]
    %v8192 = vld [vmem:[#allocation12 + $0x13c4] sm:$0xff]
    %v8193 = vld [vmem:[#allocation12 + $0x13cc] sm:$0xff]
    %v8194 = vld [vmem:[#allocation12 + $0x13d4] sm:$0xff]
    %v8195 = vld [vmem:[#allocation12 + $0x13dc] sm:$0xff]
    %v8196 = vld [vmem:[#allocation12 + $0x13e4] sm:$0xff]
    %v8197 = vld [vmem:[#allocation12 + $0x13ec] sm:$0xf]
    %v8198 = vld [vmem:[#allocation12 + $0x13f0] sm:$0xff]
    %v8199 = vld [vmem:[#allocation12 + $0x13f8] sm:$0xff]
    %v8200 = vld [vmem:[#allocation12 + $0x1400] sm:$0xff]
    %v8201 = vld [vmem:[#allocation12 + $0x1408] sm:$0xff]
    %v8202 = vld [vmem:[#allocation12 + $0x1410] sm:$0xff]
    %v8203 = vld [vmem:[#allocation12 + $0x1418] sm:$0xff]
    %v8204 = vld [vmem:[#allocation12 + $0x1420] sm:$0xff]
    %v8205 = vld [vmem:[#allocation12 + $0x1428] sm:$0xff]
    %v8206 = vld [vmem:[#allocation12 + $0x1430] sm:$0xff]
    %v8207 = vld [vmem:[#allocation12 + $0x1438] sm:$0xff]
    %v8208 = vld [vmem:[#allocation12 + $0x1440] sm:$0xff]
    %v8209 = vld [vmem:[#allocation12 + $0x1448] sm:$0xff]
    %v8210 = vld [vmem:[#allocation12 + $0x1450] sm:$0xff]
    %v8211 = vld [vmem:[#allocation12 + $0x1458] sm:$0xff]
    %v8212 = vld [vmem:[#allocation12 + $0x1460] sm:$0xf]
    %v8213 = vld [vmem:[#allocation12 + $0x1464] sm:$0xff]
    %v8214 = vld [vmem:[#allocation12 + $0x146c] sm:$0xff]
    %v8215 = vld [vmem:[#allocation12 + $0x1474] sm:$0xff]
    %v8216 = vld [vmem:[#allocation12 + $0x147c] sm:$0xff]
    %v8217 = vld [vmem:[#allocation12 + $0x1484] sm:$0xff]
    %v8218 = vld [vmem:[#allocation12 + $0x148c] sm:$0xff]
    %v8219 = vld [vmem:[#allocation12 + $0x1494] sm:$0xff]
    %v8220 = vld [vmem:[#allocation12 + $0x149c] sm:$0xff]
    %v8221 = vld [vmem:[#allocation12 + $0x14a4] sm:$0xff]
    %v8222 = vld [vmem:[#allocation12 + $0x14ac] sm:$0xff]
    %v8223 = vld [vmem:[#allocation12 + $0x14b4] sm:$0xff]
    %v8224 = vld [vmem:[#allocation12 + $0x14bc] sm:$0xff]
    %v8225 = vld [vmem:[#allocation12 + $0x14c4] sm:$0xff]
    %v8226 = vld [vmem:[#allocation12 + $0x14cc] sm:$0xff]
    %v8227 = vld [vmem:[#allocation12 + $0x14d4] sm:$0xf]
    %v8228 = vld [vmem:[#allocation12 + $0x14d8] sm:$0xff]
    %v8229 = vld [vmem:[#allocation12 + $0x14e0] sm:$0xff]
    %v8230 = vld [vmem:[#allocation12 + $0x14e8] sm:$0xff]
    %v8231 = vld [vmem:[#allocation12 + $0x14f0] sm:$0xff]
    %v8232 = vld [vmem:[#allocation12 + $0x14f8] sm:$0xff]
    %v8233 = vld [vmem:[#allocation12 + $0x1500] sm:$0xff]
    %v8234 = vld [vmem:[#allocation12 + $0x1508] sm:$0xff]
    %v8235 = vld [vmem:[#allocation12 + $0x1510] sm:$0xff]
    %v8236 = vld [vmem:[#allocation12 + $0x1518] sm:$0xff]
    %v8237 = vld [vmem:[#allocation12 + $0x1520] sm:$0xff]
    %v8238 = vld [vmem:[#allocation12 + $0x1528] sm:$0xff]
    %v8239 = vld [vmem:[#allocation12 + $0x1530] sm:$0xff]
    %v8240 = vld [vmem:[#allocation12 + $0x1538] sm:$0xff]
    %v8241 = vld [vmem:[#allocation12 + $0x1540] sm:$0xff]
    %v8242 = vld [vmem:[#allocation12 + $0x1548] sm:$0xf]
    %v8243 = vld [vmem:[#allocation12 + $0x154c] sm:$0xff]
    %v8244 = vld [vmem:[#allocation12 + $0x1554] sm:$0xff]
    %v8245 = vld [vmem:[#allocation12 + $0x155c] sm:$0xff]
    %v8246 = vld [vmem:[#allocation12 + $0x1564] sm:$0xff]
    %v8247 = vld [vmem:[#allocation12 + $0x156c] sm:$0xff]
    %v8248 = vld [vmem:[#allocation12 + $0x1574] sm:$0xff]
    %v8249 = vld [vmem:[#allocation12 + $0x157c] sm:$0xff]
    %v8250 = vld [vmem:[#allocation12 + $0x1584] sm:$0xff]
    %v8251 = vld [vmem:[#allocation12 + $0x158c] sm:$0xff]
    %v8252 = vld [vmem:[#allocation12 + $0x1594] sm:$0xff]
    %v8253 = vld [vmem:[#allocation12 + $0x159c] sm:$0xff]
    %v8254 = vld [vmem:[#allocation12 + $0x15a4] sm:$0xff]
    %v8255 = vld [vmem:[#allocation12 + $0x15ac] sm:$0xff]
    %v8256 = vld [vmem:[#allocation12 + $0x15b4] sm:$0xff]
    %v8257 = vld [vmem:[#allocation12 + $0x15bc] sm:$0xf]
    %v8258 = vld [vmem:[#allocation12 + $0x15c0] sm:$0xff]
    %v8259 = vld [vmem:[#allocation12 + $0x15c8] sm:$0xff]
    %v8260 = vld [vmem:[#allocation12 + $0x15d0] sm:$0xff]
    %v8261 = vld [vmem:[#allocation12 + $0x15d8] sm:$0xff]
    %v8262 = vld [vmem:[#allocation12 + $0x15e0] sm:$0xff]
    %v8263 = vld [vmem:[#allocation12 + $0x15e8] sm:$0xff]
    %v8264 = vld [vmem:[#allocation12 + $0x15f0] sm:$0xff]
    %v8265 = vld [vmem:[#allocation12 + $0x15f8] sm:$0xff]
    %v8266 = vld [vmem:[#allocation12 + $0x1600] sm:$0xff]
    %v8267 = vld [vmem:[#allocation12 + $0x1608] sm:$0xff]
    %v8268 = vld [vmem:[#allocation12 + $0x1610] sm:$0xff]
    %v8269 = vld [vmem:[#allocation12 + $0x1618] sm:$0xff]
    %v8270 = vld [vmem:[#allocation12 + $0x1620] sm:$0xff]
    %v8271 = vld [vmem:[#allocation12 + $0x1628] sm:$0xff]
    %v8272 = vld [vmem:[#allocation12 + $0x1630] sm:$0xf]
    %v8273 = vld [vmem:[#allocation12 + $0x1634] sm:$0xff]
    %v8274 = vld [vmem:[#allocation12 + $0x163c] sm:$0xff]
    %v8275 = vld [vmem:[#allocation12 + $0x1644] sm:$0xff]
    %v8276 = vld [vmem:[#allocation12 + $0x164c] sm:$0xff]
    %v8277 = vld [vmem:[#allocation12 + $0x1654] sm:$0xff]
    %v8278 = vld [vmem:[#allocation12 + $0x165c] sm:$0xff]
    %v8279 = vld [vmem:[#allocation12 + $0x1664] sm:$0xff]
    %v8280 = vld [vmem:[#allocation12 + $0x166c] sm:$0xff]
    %v8281 = vld [vmem:[#allocation12 + $0x1674] sm:$0xff]
    %v8282 = vld [vmem:[#allocation12 + $0x167c] sm:$0xff]
    %v8283 = vld [vmem:[#allocation12 + $0x1684] sm:$0xff]
    %v8284 = vld [vmem:[#allocation12 + $0x168c] sm:$0xff]
    %v8285 = vld [vmem:[#allocation12 + $0x1694] sm:$0xff]
    %v8286 = vld [vmem:[#allocation12 + $0x169c] sm:$0xff]
    %v8287 = vld [vmem:[#allocation12 + $0x16a4] sm:$0xf]
    %v8288 = vld [vmem:[#allocation12 + $0x16a8] sm:$0xff]
    %v8289 = vld [vmem:[#allocation12 + $0x16b0] sm:$0xff]
    %v8290 = vld [vmem:[#allocation12 + $0x16b8] sm:$0xff]
    %v8291 = vld [vmem:[#allocation12 + $0x16c0] sm:$0xff]
    %v8292 = vld [vmem:[#allocation12 + $0x16c8] sm:$0xff]
    %v8293 = vld [vmem:[#allocation12 + $0x16d0] sm:$0xff]
    %v8294 = vld [vmem:[#allocation12 + $0x16d8] sm:$0xff]
    %v8295 = vld [vmem:[#allocation12 + $0x16e0] sm:$0xff]
    %v8296 = vld [vmem:[#allocation12 + $0x16e8] sm:$0xff]
    %v8297 = vld [vmem:[#allocation12 + $0x16f0] sm:$0xff]
    %v8298 = vld [vmem:[#allocation12 + $0x16f8] sm:$0xff]
    %v8299 = vld [vmem:[#allocation12 + $0x1700] sm:$0xff]
    %v8300 = vld [vmem:[#allocation12 + $0x1708] sm:$0xff]
    %v8301 = vld [vmem:[#allocation12 + $0x1710] sm:$0xff]
    %v8302 = vld [vmem:[#allocation12 + $0x1718] sm:$0xf]
    %v8303 = vld [vmem:[#allocation12 + $0x171c] sm:$0xff]
    %v8304 = vld [vmem:[#allocation12 + $0x1724] sm:$0xff]
    %v8305 = vld [vmem:[#allocation12 + $0x172c] sm:$0xff]
    %v8306 = vld [vmem:[#allocation12 + $0x1734] sm:$0xff]
    %v8307 = vld [vmem:[#allocation12 + $0x173c] sm:$0xff]
    %v8308 = vld [vmem:[#allocation12 + $0x1744] sm:$0xff]
    %v8309 = vld [vmem:[#allocation12 + $0x174c] sm:$0xff]
    %v8310 = vld [vmem:[#allocation12 + $0x1754] sm:$0xff]
    %v8311 = vld [vmem:[#allocation12 + $0x175c] sm:$0xff]
    %v8312 = vld [vmem:[#allocation12 + $0x1764] sm:$0xff]
    %v8313 = vld [vmem:[#allocation12 + $0x176c] sm:$0xff]
    %v8314 = vld [vmem:[#allocation12 + $0x1774] sm:$0xff]
    %v8315 = vld [vmem:[#allocation12 + $0x177c] sm:$0xff]
    %v8316 = vld [vmem:[#allocation12 + $0x1784] sm:$0xff]
    %v8317 = vld [vmem:[#allocation12 + $0x178c] sm:$0xf]
    %v8318 = vld [vmem:[#allocation12 + $0x1790] sm:$0xff]
    %v8319 = vld [vmem:[#allocation12 + $0x1798] sm:$0xff]
    %v8320 = vld [vmem:[#allocation12 + $0x17a0] sm:$0xff]
    %v8321 = vld [vmem:[#allocation12 + $0x17a8] sm:$0xff]
    %v8322 = vld [vmem:[#allocation12 + $0x17b0] sm:$0xff]
    %v8323 = vld [vmem:[#allocation12 + $0x17b8] sm:$0xff]
    %v8324 = vld [vmem:[#allocation12 + $0x17c0] sm:$0xff]
    %v8325 = vld [vmem:[#allocation12 + $0x17c8] sm:$0xff]
    %v8326 = vld [vmem:[#allocation12 + $0x17d0] sm:$0xff]
    %v8327 = vld [vmem:[#allocation12 + $0x17d8] sm:$0xff]
    %v8328 = vld [vmem:[#allocation12 + $0x17e0] sm:$0xff]
    %v8329 = vld [vmem:[#allocation12 + $0x17e8] sm:$0xff]
    %v8330 = vld [vmem:[#allocation12 + $0x17f0] sm:$0xff]
    %v8331 = vld [vmem:[#allocation12 + $0x17f8] sm:$0xff]
    %v8332 = vld [vmem:[#allocation12 + $0x1800] sm:$0xf]
    %v8333 = vld [vmem:[#allocation12 + $0x1804] sm:$0xff]
    %v8334 = vld [vmem:[#allocation12 + $0x180c] sm:$0xff]
    %v8335 = vld [vmem:[#allocation12 + $0x1814] sm:$0xff]
    %v8336 = vld [vmem:[#allocation12 + $0x181c] sm:$0xff]
    %v8337 = vld [vmem:[#allocation12 + $0x1824] sm:$0xff]
    %v8338 = vld [vmem:[#allocation12 + $0x182c] sm:$0xff]
    %v8339 = vld [vmem:[#allocation12 + $0x1834] sm:$0xff]
    %v8340 = vld [vmem:[#allocation12 + $0x183c] sm:$0xff]
    %v8341 = vld [vmem:[#allocation12 + $0x1844] sm:$0xff]
    %v8342 = vld [vmem:[#allocation12 + $0x184c] sm:$0xff]
    %v8343 = vld [vmem:[#allocation12 + $0x1854] sm:$0xff]
    %v8344 = vld [vmem:[#allocation12 + $0x185c] sm:$0xff]
    %v8345 = vld [vmem:[#allocation12 + $0x1864] sm:$0xff]
    %v8346 = vld [vmem:[#allocation12 + $0x186c] sm:$0xff]
    %v8347 = vld [vmem:[#allocation12 + $0x1874] sm:$0xf]
    %v8348 = vld [vmem:[#allocation12 + $0x1878] sm:$0xff]
    %v8349 = vld [vmem:[#allocation12 + $0x1880] sm:$0xff]
    %v8350 = vld [vmem:[#allocation12 + $0x1888] sm:$0xff]
    %v8351 = vld [vmem:[#allocation12 + $0x1890] sm:$0xff]
    %v8352 = vld [vmem:[#allocation12 + $0x1898] sm:$0xff]
    %v8353 = vld [vmem:[#allocation12 + $0x18a0] sm:$0xff]
    %v8354 = vld [vmem:[#allocation12 + $0x18a8] sm:$0xff]
    %v8355 = vld [vmem:[#allocation12 + $0x18b0] sm:$0xff]
    %v8356 = vld [vmem:[#allocation12 + $0x18b8] sm:$0xff]
    %v8357 = vld [vmem:[#allocation12 + $0x18c0] sm:$0xff]
    %v8358 = vld [vmem:[#allocation12 + $0x18c8] sm:$0xff]
    %v8359 = vld [vmem:[#allocation12 + $0x18d0] sm:$0xff]
    %v8360 = vld [vmem:[#allocation12 + $0x18d8] sm:$0xff]
    %v8361 = vld [vmem:[#allocation12 + $0x18e0] sm:$0xff]
    %v8362 = vld [vmem:[#allocation12 + $0x18e8] sm:$0xf]
    %v8363 = vld [vmem:[#allocation12 + $0x18ec] sm:$0xff]
    %v8364 = vld [vmem:[#allocation12 + $0x18f4] sm:$0xff]
    %v8365 = vld [vmem:[#allocation12 + $0x18fc] sm:$0xff]
    %v8366 = vld [vmem:[#allocation12 + $0x1904] sm:$0xff]
    %v8367 = vld [vmem:[#allocation12 + $0x190c] sm:$0xff]
    %v8368 = vld [vmem:[#allocation12 + $0x1914] sm:$0xff]
    %v8369 = vld [vmem:[#allocation12 + $0x191c] sm:$0xff]
    %v8370 = vld [vmem:[#allocation12 + $0x1924] sm:$0xff]
    %v8371 = vld [vmem:[#allocation12 + $0x192c] sm:$0xff]
    %v8372 = vld [vmem:[#allocation12 + $0x1934] sm:$0xff]
    %v8373 = vld [vmem:[#allocation12 + $0x193c] sm:$0xff]
    %v8374 = vld [vmem:[#allocation12 + $0x1944] sm:$0xff]
    %v8375 = vld [vmem:[#allocation12 + $0x194c] sm:$0xff]
    %v8376 = vld [vmem:[#allocation12 + $0x1954] sm:$0xff]
    %v8377 = vld [vmem:[#allocation12 + $0x195c] sm:$0xf]
    %v8378 = vld [vmem:[#allocation12 + $0x1960] sm:$0xff]
    %v8379 = vld [vmem:[#allocation12 + $0x1968] sm:$0xff]
    %v8380 = vld [vmem:[#allocation12 + $0x1970] sm:$0xff]
    %v8381 = vld [vmem:[#allocation12 + $0x1978] sm:$0xff]
    %v8382 = vld [vmem:[#allocation12 + $0x1980] sm:$0xff]
    %v8383 = vld [vmem:[#allocation12 + $0x1988] sm:$0xff]
    %v8384 = vld [vmem:[#allocation12 + $0x1990] sm:$0xff]
    %v8385 = vld [vmem:[#allocation12 + $0x1998] sm:$0xff]
    %v8386 = vld [vmem:[#allocation12 + $0x19a0] sm:$0xff]
    %v8387 = vld [vmem:[#allocation12 + $0x19a8] sm:$0xff]
    %v8388 = vld [vmem:[#allocation12 + $0x19b0] sm:$0xff]
    %v8389 = vld [vmem:[#allocation12 + $0x19b8] sm:$0xff]
    %v8390 = vld [vmem:[#allocation12 + $0x19c0] sm:$0xff]
    %v8391 = vld [vmem:[#allocation12 + $0x19c8] sm:$0xff]
    %v8392 = vld [vmem:[#allocation12 + $0x19d0] sm:$0xf]
    %v8393 = vld [vmem:[#allocation12 + $0x19d4] sm:$0xff]
    %v8394 = vld [vmem:[#allocation12 + $0x19dc] sm:$0xff]
    %v8395 = vld [vmem:[#allocation12 + $0x19e4] sm:$0xff]
    %v8396 = vld [vmem:[#allocation12 + $0x19ec] sm:$0xff]
    %v8397 = vld [vmem:[#allocation12 + $0x19f4] sm:$0xff]
    %v8398 = vld [vmem:[#allocation12 + $0x19fc] sm:$0xff]
    %v8399 = vld [vmem:[#allocation12 + $0x1a04] sm:$0xff]
    %v8400 = vld [vmem:[#allocation12 + $0x1a0c] sm:$0xff]
    %v8401 = vld [vmem:[#allocation12 + $0x1a14] sm:$0xff]
    %v8402 = vld [vmem:[#allocation12 + $0x1a1c] sm:$0xff]
    %v8403 = vld [vmem:[#allocation12 + $0x1a24] sm:$0xff]
    %v8404 = vld [vmem:[#allocation12 + $0x1a2c] sm:$0xff]
    %v8405 = vld [vmem:[#allocation12 + $0x1a34] sm:$0xff]
    %v8406 = vld [vmem:[#allocation12 + $0x1a3c] sm:$0xff]
    %v8407 = vld [vmem:[#allocation12 + $0x1a44] sm:$0xf]
    %v8408 = vld [vmem:[#allocation12 + $0x1a48] sm:$0xff]
    %v8409 = vld [vmem:[#allocation12 + $0x1a50] sm:$0xff]
    %v8410 = vld [vmem:[#allocation12 + $0x1a58] sm:$0xff]
    %v8411 = vld [vmem:[#allocation12 + $0x1a60] sm:$0xff]
    %v8412 = vld [vmem:[#allocation12 + $0x1a68] sm:$0xff]
    %v8413 = vld [vmem:[#allocation12 + $0x1a70] sm:$0xff]
    %v8414 = vld [vmem:[#allocation12 + $0x1a78] sm:$0xff]
    %v8415 = vld [vmem:[#allocation12 + $0x1a80] sm:$0xff]
    %v8416 = vld [vmem:[#allocation12 + $0x1a88] sm:$0xff]
    %v8417 = vld [vmem:[#allocation12 + $0x1a90] sm:$0xff]
    %v8418 = vld [vmem:[#allocation12 + $0x1a98] sm:$0xff]
    %v8419 = vld [vmem:[#allocation12 + $0x1aa0] sm:$0xff]
    %v8420 = vld [vmem:[#allocation12 + $0x1aa8] sm:$0xff]
    %v8421 = vld [vmem:[#allocation12 + $0x1ab0] sm:$0xff]
    %v8422 = vld [vmem:[#allocation12 + $0x1ab8] sm:$0xf]
    %v8423 = vld [vmem:[#allocation12 + $0x1abc] sm:$0xff]
    %v8424 = vld [vmem:[#allocation12 + $0x1ac4] sm:$0xff]
    %v8425 = vld [vmem:[#allocation12 + $0x1acc] sm:$0xff]
    %v8426 = vld [vmem:[#allocation12 + $0x1ad4] sm:$0xff]
    %v8427 = vld [vmem:[#allocation12 + $0x1adc] sm:$0xff]
    %v8428 = vld [vmem:[#allocation12 + $0x1ae4] sm:$0xff]
    %v8429 = vld [vmem:[#allocation12 + $0x1aec] sm:$0xff]
    %v8430 = vld [vmem:[#allocation12 + $0x1af4] sm:$0xff]
    %v8431 = vld [vmem:[#allocation12 + $0x1afc] sm:$0xff]
    %v8432 = vld [vmem:[#allocation12 + $0x1b04] sm:$0xff]
    %v8433 = vld [vmem:[#allocation12 + $0x1b0c] sm:$0xff]
    %v8434 = vld [vmem:[#allocation12 + $0x1b14] sm:$0xff]
    %v8435 = vld [vmem:[#allocation12 + $0x1b1c] sm:$0xff]
    %v8436 = vld [vmem:[#allocation12 + $0x1b24] sm:$0xff]
    %v8437 = vld [vmem:[#allocation12 + $0x1b2c] sm:$0xf]
    %v8438 = vld [vmem:[#allocation12 + $0x1b30] sm:$0xff]
    %v8439 = vld [vmem:[#allocation12 + $0x1b38] sm:$0xff]
    %v8440 = vld [vmem:[#allocation12 + $0x1b40] sm:$0xff]
    %v8441 = vld [vmem:[#allocation12 + $0x1b48] sm:$0xff]
    %v8442 = vld [vmem:[#allocation12 + $0x1b50] sm:$0xff]
    %v8443 = vld [vmem:[#allocation12 + $0x1b58] sm:$0xff]
    %v8444 = vld [vmem:[#allocation12 + $0x1b60] sm:$0xff]
    %v8445 = vld [vmem:[#allocation12 + $0x1b68] sm:$0xff]
    %v8446 = vld [vmem:[#allocation12 + $0x1b70] sm:$0xff]
    %v8447 = vld [vmem:[#allocation12 + $0x1b78] sm:$0xff]
    %v8448 = vld [vmem:[#allocation12 + $0x1b80] sm:$0xff]
    %v8449 = vld [vmem:[#allocation12 + $0x1b88] sm:$0xff]
    %v8450 = vld [vmem:[#allocation12 + $0x1b90] sm:$0xff]
    %v8451 = vld [vmem:[#allocation12 + $0x1b98] sm:$0xff]
    %v8452 = vld [vmem:[#allocation12 + $0x1ba0] sm:$0xf]
    %v8453 = vld [vmem:[#allocation12 + $0x1ba4] sm:$0xff]
    %v8454 = vld [vmem:[#allocation12 + $0x1bac] sm:$0xff]
    %v8455 = vld [vmem:[#allocation12 + $0x1bb4] sm:$0xff]
    %v8456 = vld [vmem:[#allocation12 + $0x1bbc] sm:$0xff]
    %v8457 = vld [vmem:[#allocation12 + $0x1bc4] sm:$0xff]
    %v8458 = vld [vmem:[#allocation12 + $0x1bcc] sm:$0xff]
    %v8459 = vld [vmem:[#allocation12 + $0x1bd4] sm:$0xff]
    %v8460 = vld [vmem:[#allocation12 + $0x1bdc] sm:$0xff]
    %v8461 = vld [vmem:[#allocation12 + $0x1be4] sm:$0xff]
    %v8462 = vld [vmem:[#allocation12 + $0x1bec] sm:$0xff]
    %v8463 = vld [vmem:[#allocation12 + $0x1bf4] sm:$0xff]
    %v8464 = vld [vmem:[#allocation12 + $0x1bfc] sm:$0xff]
    %v8465 = vld [vmem:[#allocation12 + $0x1c04] sm:$0xff]
    %v8466 = vld [vmem:[#allocation12 + $0x1c0c] sm:$0xff]
    %v8467 = vld [vmem:[#allocation12 + $0x1c14] sm:$0xf]
    %v8468 = vld [vmem:[#allocation12 + $0x1c18] sm:$0xff]
    %v8469 = vld [vmem:[#allocation12 + $0x1c20] sm:$0xff]
    %v8470 = vld [vmem:[#allocation12 + $0x1c28] sm:$0xff]
    %v8471 = vld [vmem:[#allocation12 + $0x1c30] sm:$0xff]
    %v8472 = vld [vmem:[#allocation12 + $0x1c38] sm:$0xff]
    %v8473 = vld [vmem:[#allocation12 + $0x1c40] sm:$0xff]
    %v8474 = vld [vmem:[#allocation12 + $0x1c48] sm:$0xff]
    %v8475 = vld [vmem:[#allocation12 + $0x1c50] sm:$0xff]
    %v8476 = vld [vmem:[#allocation12 + $0x1c58] sm:$0xff]
    %v8477 = vld [vmem:[#allocation12 + $0x1c60] sm:$0xff]
    %v8478 = vld [vmem:[#allocation12 + $0x1c68] sm:$0xff]
    %v8479 = vld [vmem:[#allocation12 + $0x1c70] sm:$0xff]
    %v8480 = vld [vmem:[#allocation12 + $0x1c78] sm:$0xff]
    %v8481 = vld [vmem:[#allocation12 + $0x1c80] sm:$0xff]
    %v8482 = vld [vmem:[#allocation12 + $0x1c88] sm:$0xf]
    %v8483 = vld [vmem:[#allocation12 + $0x1c8c] sm:$0xff]
    %v8484 = vld [vmem:[#allocation12 + $0x1c94] sm:$0xff]
    %v8485 = vld [vmem:[#allocation12 + $0x1c9c] sm:$0xff]
    %v8486 = vld [vmem:[#allocation12 + $0x1ca4] sm:$0xff]
    %v8487 = vld [vmem:[#allocation12 + $0x1cac] sm:$0xff]
    %v8488 = vld [vmem:[#allocation12 + $0x1cb4] sm:$0xff]
    %v8489 = vld [vmem:[#allocation12 + $0x1cbc] sm:$0xff]
    %v8490 = vld [vmem:[#allocation12 + $0x1cc4] sm:$0xff]
    %v8491 = vld [vmem:[#allocation12 + $0x1ccc] sm:$0xff]
    %v8492 = vld [vmem:[#allocation12 + $0x1cd4] sm:$0xff]
    %v8493 = vld [vmem:[#allocation12 + $0x1cdc] sm:$0xff]
    %v8494 = vld [vmem:[#allocation12 + $0x1ce4] sm:$0xff]
    %v8495 = vld [vmem:[#allocation12 + $0x1cec] sm:$0xff]
    %v8496 = vld [vmem:[#allocation12 + $0x1cf4] sm:$0xff]
    %v8497 = vld [vmem:[#allocation12 + $0x1cfc] sm:$0xf]
    %v8498 = vld [vmem:[#allocation13] sm:$0xff]
    %v8499 = vld [vmem:[#allocation13 + $0x8] sm:$0xff]
    %v8500 = vld [vmem:[#allocation13 + $0x10] sm:$0xff]
    %v8501 = vld [vmem:[#allocation13 + $0x18] sm:$0x1f]
    %v8506 = vlaneseq
    %v8507 = vshrl.u32 %v8506, 7
    %v8508 = vsub.s32 0, %v8507
    %v8509 = vrot.slane %v8498, %v8508
    %v8510 = vlaneseq
    %v8511 = vshrl.u32 %v8510, 7
    %v8512 = vsub.s32 1, %v8511
    %v8513 = vrot.slane %v8498, %v8512
    %v8514 = vlaneseq
    %v8515 = vshrl.u32 %v8514, 7
    %v8516 = vsub.s32 2, %v8515
    %v8517 = vrot.slane %v8498, %v8516
    %v8518 = vlaneseq
    %v8519 = vshrl.u32 %v8518, 7
    %v8520 = vsub.s32 3, %v8519
    %v8521 = vrot.slane %v8498, %v8520
    %v8522 = vlaneseq
    %v8523 = vshrl.u32 %v8522, 7
    %v8524 = vsub.s32 4, %v8523
    %v8525 = vrot.slane %v8498, %v8524
    %v8526 = vlaneseq
    %v8527 = vshrl.u32 %v8526, 7
    %v8528 = vsub.s32 5, %v8527
    %v8529 = vrot.slane %v8498, %v8528
    %v8530 = vlaneseq
    %v8531 = vshrl.u32 %v8530, 7
    %v8532 = vsub.s32 6, %v8531
    %v8533 = vrot.slane %v8498, %v8532
    %v8534 = vlaneseq
    %v8535 = vshrl.u32 %v8534, 7
    %v8536 = vsub.s32 7, %v8535
    %v8537 = vrot.slane %v8498, %v8536
    %v8538 = vlaneseq
    %v8539 = vshrl.u32 %v8538, 7
    %v8540 = vsub.s32 0, %v8539
    %v8541 = vrot.slane %v8499, %v8540
    %v8542 = vlaneseq
    %v8543 = vshrl.u32 %v8542, 7
    %v8544 = vsub.s32 1, %v8543
    %v8545 = vrot.slane %v8499, %v8544
    %v8546 = vlaneseq
    %v8547 = vshrl.u32 %v8546, 7
    %v8548 = vsub.s32 2, %v8547
    %v8549 = vrot.slane %v8499, %v8548
    %v8550 = vlaneseq
    %v8551 = vshrl.u32 %v8550, 7
    %v8552 = vsub.s32 3, %v8551
    %v8553 = vrot.slane %v8499, %v8552
    %v8554 = vlaneseq
    %v8555 = vshrl.u32 %v8554, 7
    %v8556 = vsub.s32 4, %v8555
    %v8557 = vrot.slane %v8499, %v8556
    %v8558 = vlaneseq
    %v8559 = vshrl.u32 %v8558, 7
    %v8560 = vsub.s32 5, %v8559
    %v8561 = vrot.slane %v8499, %v8560
    %v8562 = vlaneseq
    %v8563 = vshrl.u32 %v8562, 7
    %v8564 = vsub.s32 6, %v8563
    %v8565 = vrot.slane %v8499, %v8564
    %v8566 = vlaneseq
    %v8567 = vshrl.u32 %v8566, 7
    %v8568 = vsub.s32 7, %v8567
    %v8569 = vrot.slane %v8499, %v8568
    %v8570 = vlaneseq
    %v8571 = vshrl.u32 %v8570, 7
    %v8572 = vsub.s32 0, %v8571
    %v8573 = vrot.slane %v8500, %v8572
    %v8574 = vlaneseq
    %v8575 = vshrl.u32 %v8574, 7
    %v8576 = vsub.s32 1, %v8575
    %v8577 = vrot.slane %v8500, %v8576
    %v8578 = vlaneseq
    %v8579 = vshrl.u32 %v8578, 7
    %v8580 = vsub.s32 2, %v8579
    %v8581 = vrot.slane %v8500, %v8580
    %v8582 = vlaneseq
    %v8583 = vshrl.u32 %v8582, 7
    %v8584 = vsub.s32 3, %v8583
    %v8585 = vrot.slane %v8500, %v8584
    %v8586 = vlaneseq
    %v8587 = vshrl.u32 %v8586, 7
    %v8588 = vsub.s32 4, %v8587
    %v8589 = vrot.slane %v8500, %v8588
    %v8590 = vlaneseq
    %v8591 = vshrl.u32 %v8590, 7
    %v8592 = vsub.s32 5, %v8591
    %v8593 = vrot.slane %v8500, %v8592
    %v8594 = vlaneseq
    %v8595 = vshrl.u32 %v8594, 7
    %v8596 = vsub.s32 6, %v8595
    %v8597 = vrot.slane %v8500, %v8596
    %v8598 = vlaneseq
    %v8599 = vshrl.u32 %v8598, 7
    %v8600 = vsub.s32 7, %v8599
    %v8601 = vrot.slane %v8500, %v8600
    %v8602 = vlaneseq
    %v8603 = vshrl.u32 %v8602, 7
    %v8604 = vsub.s32 0, %v8603
    %v8605 = vrot.slane %v8501, %v8604
    %v8606 = vlaneseq
    %v8607 = vshrl.u32 %v8606, 7
    %v8608 = vsub.s32 1, %v8607
    %v8609 = vrot.slane %v8501, %v8608
    %v8610 = vlaneseq
    %v8611 = vshrl.u32 %v8610, 7
    %v8612 = vsub.s32 2, %v8611
    %v8613 = vrot.slane %v8501, %v8612
    %v8614 = vlaneseq
    %v8615 = vshrl.u32 %v8614, 7
    %v8616 = vsub.s32 3, %v8615
    %v8617 = vrot.slane %v8501, %v8616
    %v8618 = vlaneseq
    %v8619 = vshrl.u32 %v8618, 7
    %v8620 = vsub.s32 4, %v8619
    %v8621 = vrot.slane %v8501, %v8620
    %v9611 = vunpack.c.l.b16 %v7538
    %v9612 = vunpack.c.h.b16 %v7538
    %v9613 = vunpack.c.l.b16 %v7539
    %v9614 = vunpack.c.h.b16 %v7539
    %v9615 = vunpack.c.l.b16 %v7540
    %v9616 = vunpack.c.h.b16 %v7540
    %v9617 = vunpack.c.l.b16 %v7541
    %v9618 = vunpack.c.h.b16 %v7541
    %v9619 = vunpack.c.l.b16 %v7542
    %v9620 = vunpack.c.h.b16 %v7542
    %v9621 = vunpack.c.l.b16 %v7543
    %v9622 = vunpack.c.h.b16 %v7543
    %v9623 = vunpack.c.l.b16 %v7544
    %v9624 = vunpack.c.h.b16 %v7544
    %v9625 = vunpack.c.l.b16 %v7545
    %v9626 = vunpack.c.h.b16 %v7545
    %v9627 = vunpack.c.l.b16 %v7546
    %v9628 = vunpack.c.h.b16 %v7546
    %v9629 = vunpack.c.l.b16 %v7547
    %v9630 = vunpack.c.h.b16 %v7547
    %v9631 = vunpack.c.l.b16 %v7548
    %v9632 = vunpack.c.h.b16 %v7548
    %v9633 = vunpack.c.l.b16 %v7549
    %v9634 = vunpack.c.h.b16 %v7549
    %v9635 = vunpack.c.l.b16 %v7550
    %v9636 = vunpack.c.h.b16 %v7550
    %v9637 = vunpack.c.l.b16 %v7551
    %v9638 = vunpack.c.h.b16 %v7551
    %v9639 = vunpack.c.l.b16 %v7552
    %v9640 = vunpack.c.l.b16 %v7553
    %v9641 = vunpack.c.h.b16 %v7553
    %v9642 = vunpack.c.l.b16 %v7554
    %v9643 = vunpack.c.h.b16 %v7554
    %v9644 = vunpack.c.l.b16 %v7555
    %v9645 = vunpack.c.h.b16 %v7555
    %v9646 = vunpack.c.l.b16 %v7556
    %v9647 = vunpack.c.h.b16 %v7556
    %v9648 = vunpack.c.l.b16 %v7557
    %v9649 = vunpack.c.h.b16 %v7557
    %v9650 = vunpack.c.l.b16 %v7558
    %v9651 = vunpack.c.h.b16 %v7558
    %v9652 = vunpack.c.l.b16 %v7559
    %v9653 = vunpack.c.h.b16 %v7559
    %v9654 = vunpack.c.l.b16 %v7560
    %v9655 = vunpack.c.h.b16 %v7560
    %v9656 = vunpack.c.l.b16 %v7561
    %v9657 = vunpack.c.h.b16 %v7561
    %v9658 = vunpack.c.l.b16 %v7562
    %v9659 = vunpack.c.h.b16 %v7562
    %v9660 = vunpack.c.l.b16 %v7563
    %v9661 = vunpack.c.h.b16 %v7563
    %v9662 = vunpack.c.l.b16 %v7564
    %v9663 = vunpack.c.h.b16 %v7564
    %v9664 = vunpack.c.l.b16 %v7565
    %v9665 = vunpack.c.h.b16 %v7565
    %v9666 = vunpack.c.l.b16 %v7566
    %v9667 = vunpack.c.h.b16 %v7566
    %v9668 = vunpack.c.l.b16 %v7567
    %v9669 = vunpack.c.l.b16 %v7568
    %v9670 = vunpack.c.h.b16 %v7568
    %v9671 = vunpack.c.l.b16 %v7569
    %v9672 = vunpack.c.h.b16 %v7569
    %v9673 = vunpack.c.l.b16 %v7570
    %v9674 = vunpack.c.h.b16 %v7570
    %v9675 = vunpack.c.l.b16 %v7571
    %v9676 = vunpack.c.h.b16 %v7571
    %v9677 = vunpack.c.l.b16 %v7572
    %v9678 = vunpack.c.h.b16 %v7572
    %v9679 = vunpack.c.l.b16 %v7573
    %v9680 = vunpack.c.h.b16 %v7573
    %v9681 = vunpack.c.l.b16 %v7574
    %v9682 = vunpack.c.h.b16 %v7574
    %v9683 = vunpack.c.l.b16 %v7575
    %v9684 = vunpack.c.h.b16 %v7575
    %v9685 = vunpack.c.l.b16 %v7576
    %v9686 = vunpack.c.h.b16 %v7576
    %v9687 = vunpack.c.l.b16 %v7577
    %v9688 = vunpack.c.h.b16 %v7577
    %v9689 = vunpack.c.l.b16 %v7578
    %v9690 = vunpack.c.h.b16 %v7578
    %v9691 = vunpack.c.l.b16 %v7579
    %v9692 = vunpack.c.h.b16 %v7579
    %v9693 = vunpack.c.l.b16 %v7580
    %v9694 = vunpack.c.h.b16 %v7580
    %v9695 = vunpack.c.l.b16 %v7581
    %v9696 = vunpack.c.h.b16 %v7581
    %v9697 = vunpack.c.l.b16 %v7582
    %v9698 = vunpack.c.l.b16 %v7583
    %v9699 = vunpack.c.h.b16 %v7583
    %v9700 = vunpack.c.l.b16 %v7584
    %v9701 = vunpack.c.h.b16 %v7584
    %v9702 = vunpack.c.l.b16 %v7585
    %v9703 = vunpack.c.h.b16 %v7585
    %v9704 = vunpack.c.l.b16 %v7586
    %v9705 = vunpack.c.h.b16 %v7586
    %v9706 = vunpack.c.l.b16 %v7587
    %v9707 = vunpack.c.h.b16 %v7587
    %v9708 = vunpack.c.l.b16 %v7588
    %v9709 = vunpack.c.h.b16 %v7588
    %v9710 = vunpack.c.l.b16 %v7589
    %v9711 = vunpack.c.h.b16 %v7589
    %v9712 = vunpack.c.l.b16 %v7590
    %v9713 = vunpack.c.h.b16 %v7590
    %v9714 = vunpack.c.l.b16 %v7591
    %v9715 = vunpack.c.h.b16 %v7591
    %v9716 = vunpack.c.l.b16 %v7592
    %v9717 = vunpack.c.h.b16 %v7592
    %v9718 = vunpack.c.l.b16 %v7593
    %v9719 = vunpack.c.h.b16 %v7593
    %v9720 = vunpack.c.l.b16 %v7594
    %v9721 = vunpack.c.h.b16 %v7594
    %v9722 = vunpack.c.l.b16 %v7595
    %v9723 = vunpack.c.h.b16 %v7595
    %v9724 = vunpack.c.l.b16 %v7596
    %v9725 = vunpack.c.h.b16 %v7596
    %v9726 = vunpack.c.l.b16 %v7597
    %v9727 = vunpack.c.l.b16 %v7598
    %v9728 = vunpack.c.h.b16 %v7598
    %v9729 = vunpack.c.l.b16 %v7599
    %v9730 = vunpack.c.h.b16 %v7599
    %v9731 = vunpack.c.l.b16 %v7600
    %v9732 = vunpack.c.h.b16 %v7600
    %v9733 = vunpack.c.l.b16 %v7601
    %v9734 = vunpack.c.h.b16 %v7601
    %v9735 = vunpack.c.l.b16 %v7602
    %v9736 = vunpack.c.h.b16 %v7602
    %v9737 = vunpack.c.l.b16 %v7603
    %v9738 = vunpack.c.h.b16 %v7603
    %v9739 = vunpack.c.l.b16 %v7604
    %v9740 = vunpack.c.h.b16 %v7604
    %v9741 = vunpack.c.l.b16 %v7605
    %v9742 = vunpack.c.h.b16 %v7605
    %v9743 = vunpack.c.l.b16 %v7606
    %v9744 = vunpack.c.h.b16 %v7606
    %v9745 = vunpack.c.l.b16 %v7607
    %v9746 = vunpack.c.h.b16 %v7607
    %v9747 = vunpack.c.l.b16 %v7608
    %v9748 = vunpack.c.h.b16 %v7608
    %v9749 = vunpack.c.l.b16 %v7609
    %v9750 = vunpack.c.h.b16 %v7609
    %v9751 = vunpack.c.l.b16 %v7610
    %v9752 = vunpack.c.h.b16 %v7610
    %v9753 = vunpack.c.l.b16 %v7611
    %v9754 = vunpack.c.h.b16 %v7611
    %v9755 = vunpack.c.l.b16 %v7612
    %v9756 = vunpack.c.l.b16 %v7613
    %v9757 = vunpack.c.h.b16 %v7613
    %v9758 = vunpack.c.l.b16 %v7614
    %v9759 = vunpack.c.h.b16 %v7614
    %v9760 = vunpack.c.l.b16 %v7615
    %v9761 = vunpack.c.h.b16 %v7615
    %v9762 = vunpack.c.l.b16 %v7616
    %v9763 = vunpack.c.h.b16 %v7616
    %v9764 = vunpack.c.l.b16 %v7617
    %v9765 = vunpack.c.h.b16 %v7617
    %v9766 = vunpack.c.l.b16 %v7618
    %v9767 = vunpack.c.h.b16 %v7618
    %v9768 = vunpack.c.l.b16 %v7619
    %v9769 = vunpack.c.h.b16 %v7619
    %v9770 = vunpack.c.l.b16 %v7620
    %v9771 = vunpack.c.h.b16 %v7620
    %v9772 = vunpack.c.l.b16 %v7621
    %v9773 = vunpack.c.h.b16 %v7621
    %v9774 = vunpack.c.l.b16 %v7622
    %v9775 = vunpack.c.h.b16 %v7622
    %v9776 = vunpack.c.l.b16 %v7623
    %v9777 = vunpack.c.h.b16 %v7623
    %v9778 = vunpack.c.l.b16 %v7624
    %v9779 = vunpack.c.h.b16 %v7624
    %v9780 = vunpack.c.l.b16 %v7625
    %v9781 = vunpack.c.h.b16 %v7625
    %v9782 = vunpack.c.l.b16 %v7626
    %v9783 = vunpack.c.h.b16 %v7626
    %v9784 = vunpack.c.l.b16 %v7627
    %v9785 = vunpack.c.l.b16 %v7628
    %v9786 = vunpack.c.h.b16 %v7628
    %v9787 = vunpack.c.l.b16 %v7629
    %v9788 = vunpack.c.h.b16 %v7629
    %v9789 = vunpack.c.l.b16 %v7630
    %v9790 = vunpack.c.h.b16 %v7630
    %v9791 = vunpack.c.l.b16 %v7631
    %v9792 = vunpack.c.h.b16 %v7631
    %v9793 = vunpack.c.l.b16 %v7632
    %v9794 = vunpack.c.h.b16 %v7632
    %v9795 = vunpack.c.l.b16 %v7633
    %v9796 = vunpack.c.h.b16 %v7633
    %v9797 = vunpack.c.l.b16 %v7634
    %v9798 = vunpack.c.h.b16 %v7634
    %v9799 = vunpack.c.l.b16 %v7635
    %v9800 = vunpack.c.h.b16 %v7635
    %v9801 = vunpack.c.l.b16 %v7636
    %v9802 = vunpack.c.h.b16 %v7636
    %v9803 = vunpack.c.l.b16 %v7637
    %v9804 = vunpack.c.h.b16 %v7637
    %v9805 = vunpack.c.l.b16 %v7638
    %v9806 = vunpack.c.h.b16 %v7638
    %v9807 = vunpack.c.l.b16 %v7639
    %v9808 = vunpack.c.h.b16 %v7639
    %v9809 = vunpack.c.l.b16 %v7640
    %v9810 = vunpack.c.h.b16 %v7640
    %v9811 = vunpack.c.l.b16 %v7641
    %v9812 = vunpack.c.h.b16 %v7641
    %v9813 = vunpack.c.l.b16 %v7642
    %v9814 = vunpack.c.l.b16 %v7643
    %v9815 = vunpack.c.h.b16 %v7643
    %v9816 = vunpack.c.l.b16 %v7644
    %v9817 = vunpack.c.h.b16 %v7644
    %v9818 = vunpack.c.l.b16 %v7645
    %v9819 = vunpack.c.h.b16 %v7645
    %v9820 = vunpack.c.l.b16 %v7646
    %v9821 = vunpack.c.h.b16 %v7646
    %v9822 = vunpack.c.l.b16 %v7647
    %v9823 = vunpack.c.h.b16 %v7647
    %v9824 = vunpack.c.l.b16 %v7648
    %v9825 = vunpack.c.h.b16 %v7648
    %v9826 = vunpack.c.l.b16 %v7649
    %v9827 = vunpack.c.h.b16 %v7649
    %v9828 = vunpack.c.l.b16 %v7650
    %v9829 = vunpack.c.h.b16 %v7650
    %v9830 = vunpack.c.l.b16 %v7651
    %v9831 = vunpack.c.h.b16 %v7651
    %v9832 = vunpack.c.l.b16 %v7652
    %v9833 = vunpack.c.h.b16 %v7652
    %v9834 = vunpack.c.l.b16 %v7653
    %v9835 = vunpack.c.h.b16 %v7653
    %v9836 = vunpack.c.l.b16 %v7654
    %v9837 = vunpack.c.h.b16 %v7654
    %v9838 = vunpack.c.l.b16 %v7655
    %v9839 = vunpack.c.h.b16 %v7655
    %v9840 = vunpack.c.l.b16 %v7656
    %v9841 = vunpack.c.h.b16 %v7656
    %v9842 = vunpack.c.l.b16 %v7657
    %v9843 = vunpack.c.l.b16 %v7658
    %v9844 = vunpack.c.h.b16 %v7658
    %v9845 = vunpack.c.l.b16 %v7659
    %v9846 = vunpack.c.h.b16 %v7659
    %v9847 = vunpack.c.l.b16 %v7660
    %v9848 = vunpack.c.h.b16 %v7660
    %v9849 = vunpack.c.l.b16 %v7661
    %v9850 = vunpack.c.h.b16 %v7661
    %v9851 = vunpack.c.l.b16 %v7662
    %v9852 = vunpack.c.h.b16 %v7662
    %v9853 = vunpack.c.l.b16 %v7663
    %v9854 = vunpack.c.h.b16 %v7663
    %v9855 = vunpack.c.l.b16 %v7664
    %v9856 = vunpack.c.h.b16 %v7664
    %v9857 = vunpack.c.l.b16 %v7665
    %v9858 = vunpack.c.h.b16 %v7665
    %v9859 = vunpack.c.l.b16 %v7666
    %v9860 = vunpack.c.h.b16 %v7666
    %v9861 = vunpack.c.l.b16 %v7667
    %v9862 = vunpack.c.h.b16 %v7667
    %v9863 = vunpack.c.l.b16 %v7668
    %v9864 = vunpack.c.h.b16 %v7668
    %v9865 = vunpack.c.l.b16 %v7669
    %v9866 = vunpack.c.h.b16 %v7669
    %v9867 = vunpack.c.l.b16 %v7670
    %v9868 = vunpack.c.h.b16 %v7670
    %v9869 = vunpack.c.l.b16 %v7671
    %v9870 = vunpack.c.h.b16 %v7671
    %v9871 = vunpack.c.l.b16 %v7672
    %v9872 = vunpack.c.l.b16 %v7673
    %v9873 = vunpack.c.h.b16 %v7673
    %v9874 = vunpack.c.l.b16 %v7674
    %v9875 = vunpack.c.h.b16 %v7674
    %v9876 = vunpack.c.l.b16 %v7675
    %v9877 = vunpack.c.h.b16 %v7675
    %v9878 = vunpack.c.l.b16 %v7676
    %v9879 = vunpack.c.h.b16 %v7676
    %v9880 = vunpack.c.l.b16 %v7677
    %v9881 = vunpack.c.h.b16 %v7677
    %v9882 = vunpack.c.l.b16 %v7678
    %v9883 = vunpack.c.h.b16 %v7678
    %v9884 = vunpack.c.l.b16 %v7679
    %v9885 = vunpack.c.h.b16 %v7679
    %v9886 = vunpack.c.l.b16 %v7680
    %v9887 = vunpack.c.h.b16 %v7680
    %v9888 = vunpack.c.l.b16 %v7681
    %v9889 = vunpack.c.h.b16 %v7681
    %v9890 = vunpack.c.l.b16 %v7682
    %v9891 = vunpack.c.h.b16 %v7682
    %v9892 = vunpack.c.l.b16 %v7683
    %v9893 = vunpack.c.h.b16 %v7683
    %v9894 = vunpack.c.l.b16 %v7684
    %v9895 = vunpack.c.h.b16 %v7684
    %v9896 = vunpack.c.l.b16 %v7685
    %v9897 = vunpack.c.h.b16 %v7685
    %v9898 = vunpack.c.l.b16 %v7686
    %v9899 = vunpack.c.h.b16 %v7686
    %v9900 = vunpack.c.l.b16 %v7687
    %v9901 = vunpack.c.l.b16 %v7688
    %v9902 = vunpack.c.h.b16 %v7688
    %v9903 = vunpack.c.l.b16 %v7689
    %v9904 = vunpack.c.h.b16 %v7689
    %v9905 = vunpack.c.l.b16 %v7690
    %v9906 = vunpack.c.h.b16 %v7690
    %v9907 = vunpack.c.l.b16 %v7691
    %v9908 = vunpack.c.h.b16 %v7691
    %v9909 = vunpack.c.l.b16 %v7692
    %v9910 = vunpack.c.h.b16 %v7692
    %v9911 = vunpack.c.l.b16 %v7693
    %v9912 = vunpack.c.h.b16 %v7693
    %v9913 = vunpack.c.l.b16 %v7694
    %v9914 = vunpack.c.h.b16 %v7694
    %v9915 = vunpack.c.l.b16 %v7695
    %v9916 = vunpack.c.h.b16 %v7695
    %v9917 = vunpack.c.l.b16 %v7696
    %v9918 = vunpack.c.h.b16 %v7696
    %v9919 = vunpack.c.l.b16 %v7697
    %v9920 = vunpack.c.h.b16 %v7697
    %v9921 = vunpack.c.l.b16 %v7698
    %v9922 = vunpack.c.h.b16 %v7698
    %v9923 = vunpack.c.l.b16 %v7699
    %v9924 = vunpack.c.h.b16 %v7699
    %v9925 = vunpack.c.l.b16 %v7700
    %v9926 = vunpack.c.h.b16 %v7700
    %v9927 = vunpack.c.l.b16 %v7701
    %v9928 = vunpack.c.h.b16 %v7701
    %v9929 = vunpack.c.l.b16 %v7702
    %v9930 = vunpack.c.l.b16 %v7703
    %v9931 = vunpack.c.h.b16 %v7703
    %v9932 = vunpack.c.l.b16 %v7704
    %v9933 = vunpack.c.h.b16 %v7704
    %v9934 = vunpack.c.l.b16 %v7705
    %v9935 = vunpack.c.h.b16 %v7705
    %v9936 = vunpack.c.l.b16 %v7706
    %v9937 = vunpack.c.h.b16 %v7706
    %v9938 = vunpack.c.l.b16 %v7707
    %v9939 = vunpack.c.h.b16 %v7707
    %v9940 = vunpack.c.l.b16 %v7708
    %v9941 = vunpack.c.h.b16 %v7708
    %v9942 = vunpack.c.l.b16 %v7709
    %v9943 = vunpack.c.h.b16 %v7709
    %v9944 = vunpack.c.l.b16 %v7710
    %v9945 = vunpack.c.h.b16 %v7710
    %v9946 = vunpack.c.l.b16 %v7711
    %v9947 = vunpack.c.h.b16 %v7711
    %v9948 = vunpack.c.l.b16 %v7712
    %v9949 = vunpack.c.h.b16 %v7712
    %v9950 = vunpack.c.l.b16 %v7713
    %v9951 = vunpack.c.h.b16 %v7713
    %v9952 = vunpack.c.l.b16 %v7714
    %v9953 = vunpack.c.h.b16 %v7714
    %v9954 = vunpack.c.l.b16 %v7715
    %v9955 = vunpack.c.h.b16 %v7715
    %v9956 = vunpack.c.l.b16 %v7716
    %v9957 = vunpack.c.h.b16 %v7716
    %v9958 = vunpack.c.l.b16 %v7717
    %v9959 = vunpack.c.l.b16 %v7718
    %v9960 = vunpack.c.h.b16 %v7718
    %v9961 = vunpack.c.l.b16 %v7719
    %v9962 = vunpack.c.h.b16 %v7719
    %v9963 = vunpack.c.l.b16 %v7720
    %v9964 = vunpack.c.h.b16 %v7720
    %v9965 = vunpack.c.l.b16 %v7721
    %v9966 = vunpack.c.h.b16 %v7721
    %v9967 = vunpack.c.l.b16 %v7722
    %v9968 = vunpack.c.h.b16 %v7722
    %v9969 = vunpack.c.l.b16 %v7723
    %v9970 = vunpack.c.h.b16 %v7723
    %v9971 = vunpack.c.l.b16 %v7724
    %v9972 = vunpack.c.h.b16 %v7724
    %v9973 = vunpack.c.l.b16 %v7725
    %v9974 = vunpack.c.h.b16 %v7725
    %v9975 = vunpack.c.l.b16 %v7726
    %v9976 = vunpack.c.h.b16 %v7726
    %v9977 = vunpack.c.l.b16 %v7727
    %v9978 = vunpack.c.h.b16 %v7727
    %v9979 = vunpack.c.l.b16 %v7728
    %v9980 = vunpack.c.h.b16 %v7728
    %v9981 = vunpack.c.l.b16 %v7729
    %v9982 = vunpack.c.h.b16 %v7729
    %v9983 = vunpack.c.l.b16 %v7730
    %v9984 = vunpack.c.h.b16 %v7730
    %v9985 = vunpack.c.l.b16 %v7731
    %v9986 = vunpack.c.h.b16 %v7731
    %v9987 = vunpack.c.l.b16 %v7732
    %v9988 = vunpack.c.l.b16 %v7733
    %v9989 = vunpack.c.h.b16 %v7733
    %v9990 = vunpack.c.l.b16 %v7734
    %v9991 = vunpack.c.h.b16 %v7734
    %v9992 = vunpack.c.l.b16 %v7735
    %v9993 = vunpack.c.h.b16 %v7735
    %v9994 = vunpack.c.l.b16 %v7736
    %v9995 = vunpack.c.h.b16 %v7736
    %v9996 = vunpack.c.l.b16 %v7737
    %v9997 = vunpack.c.h.b16 %v7737
    %v9998 = vunpack.c.l.b16 %v7738
    %v9999 = vunpack.c.h.b16 %v7738
    %v10000 = vunpack.c.l.b16 %v7739
    %v10001 = vunpack.c.h.b16 %v7739
    %v10002 = vunpack.c.l.b16 %v7740
    %v10003 = vunpack.c.h.b16 %v7740
    %v10004 = vunpack.c.l.b16 %v7741
    %v10005 = vunpack.c.h.b16 %v7741
    %v10006 = vunpack.c.l.b16 %v7742
    %v10007 = vunpack.c.h.b16 %v7742
    %v10008 = vunpack.c.l.b16 %v7743
    %v10009 = vunpack.c.h.b16 %v7743
    %v10010 = vunpack.c.l.b16 %v7744
    %v10011 = vunpack.c.h.b16 %v7744
    %v10012 = vunpack.c.l.b16 %v7745
    %v10013 = vunpack.c.h.b16 %v7745
    %v10014 = vunpack.c.l.b16 %v7746
    %v10015 = vunpack.c.h.b16 %v7746
    %v10016 = vunpack.c.l.b16 %v7747
    %v10017 = vunpack.c.l.b16 %v7748
    %v10018 = vunpack.c.h.b16 %v7748
    %v10019 = vunpack.c.l.b16 %v7749
    %v10020 = vunpack.c.h.b16 %v7749
    %v10021 = vunpack.c.l.b16 %v7750
    %v10022 = vunpack.c.h.b16 %v7750
    %v10023 = vunpack.c.l.b16 %v7751
    %v10024 = vunpack.c.h.b16 %v7751
    %v10025 = vunpack.c.l.b16 %v7752
    %v10026 = vunpack.c.h.b16 %v7752
    %v10027 = vunpack.c.l.b16 %v7753
    %v10028 = vunpack.c.h.b16 %v7753
    %v10029 = vunpack.c.l.b16 %v7754
    %v10030 = vunpack.c.h.b16 %v7754
    %v10031 = vunpack.c.l.b16 %v7755
    %v10032 = vunpack.c.h.b16 %v7755
    %v10033 = vunpack.c.l.b16 %v7756
    %v10034 = vunpack.c.h.b16 %v7756
    %v10035 = vunpack.c.l.b16 %v7757
    %v10036 = vunpack.c.h.b16 %v7757
    %v10037 = vunpack.c.l.b16 %v7758
    %v10038 = vunpack.c.h.b16 %v7758
    %v10039 = vunpack.c.l.b16 %v7759
    %v10040 = vunpack.c.h.b16 %v7759
    %v10041 = vunpack.c.l.b16 %v7760
    %v10042 = vunpack.c.h.b16 %v7760
    %v10043 = vunpack.c.l.b16 %v7761
    %v10044 = vunpack.c.h.b16 %v7761
    %v10045 = vunpack.c.l.b16 %v7762
    %v10046 = vunpack.c.l.b16 %v7763
    %v10047 = vunpack.c.h.b16 %v7763
    %v10048 = vunpack.c.l.b16 %v7764
    %v10049 = vunpack.c.h.b16 %v7764
    %v10050 = vunpack.c.l.b16 %v7765
    %v10051 = vunpack.c.h.b16 %v7765
    %v10052 = vunpack.c.l.b16 %v7766
    %v10053 = vunpack.c.h.b16 %v7766
    %v10054 = vunpack.c.l.b16 %v7767
    %v10055 = vunpack.c.h.b16 %v7767
    %v10056 = vunpack.c.l.b16 %v7768
    %v10057 = vunpack.c.h.b16 %v7768
    %v10058 = vunpack.c.l.b16 %v7769
    %v10059 = vunpack.c.h.b16 %v7769
    %v10060 = vunpack.c.l.b16 %v7770
    %v10061 = vunpack.c.h.b16 %v7770
    %v10062 = vunpack.c.l.b16 %v7771
    %v10063 = vunpack.c.h.b16 %v7771
    %v10064 = vunpack.c.l.b16 %v7772
    %v10065 = vunpack.c.h.b16 %v7772
    %v10066 = vunpack.c.l.b16 %v7773
    %v10067 = vunpack.c.h.b16 %v7773
    %v10068 = vunpack.c.l.b16 %v7774
    %v10069 = vunpack.c.h.b16 %v7774
    %v10070 = vunpack.c.l.b16 %v7775
    %v10071 = vunpack.c.h.b16 %v7775
    %v10072 = vunpack.c.l.b16 %v7776
    %v10073 = vunpack.c.h.b16 %v7776
    %v10074 = vunpack.c.l.b16 %v7777
    %v10075 = vunpack.c.l.b16 %v7778
    %v10076 = vunpack.c.h.b16 %v7778
    %v10077 = vunpack.c.l.b16 %v7779
    %v10078 = vunpack.c.h.b16 %v7779
    %v10079 = vunpack.c.l.b16 %v7780
    %v10080 = vunpack.c.h.b16 %v7780
    %v10081 = vunpack.c.l.b16 %v7781
    %v10082 = vunpack.c.h.b16 %v7781
    %v10083 = vunpack.c.l.b16 %v7782
    %v10084 = vunpack.c.h.b16 %v7782
    %v10085 = vunpack.c.l.b16 %v7783
    %v10086 = vunpack.c.h.b16 %v7783
    %v10087 = vunpack.c.l.b16 %v7784
    %v10088 = vunpack.c.h.b16 %v7784
    %v10089 = vunpack.c.l.b16 %v7785
    %v10090 = vunpack.c.h.b16 %v7785
    %v10091 = vunpack.c.l.b16 %v7786
    %v10092 = vunpack.c.h.b16 %v7786
    %v10093 = vunpack.c.l.b16 %v7787
    %v10094 = vunpack.c.h.b16 %v7787
    %v10095 = vunpack.c.l.b16 %v7788
    %v10096 = vunpack.c.h.b16 %v7788
    %v10097 = vunpack.c.l.b16 %v7789
    %v10098 = vunpack.c.h.b16 %v7789
    %v10099 = vunpack.c.l.b16 %v7790
    %v10100 = vunpack.c.h.b16 %v7790
    %v10101 = vunpack.c.l.b16 %v7791
    %v10102 = vunpack.c.h.b16 %v7791
    %v10103 = vunpack.c.l.b16 %v7792
    %v10104 = vunpack.c.l.b16 %v7793
    %v10105 = vunpack.c.h.b16 %v7793
    %v10106 = vunpack.c.l.b16 %v7794
    %v10107 = vunpack.c.h.b16 %v7794
    %v10108 = vunpack.c.l.b16 %v7795
    %v10109 = vunpack.c.h.b16 %v7795
    %v10110 = vunpack.c.l.b16 %v7796
    %v10111 = vunpack.c.h.b16 %v7796
    %v10112 = vunpack.c.l.b16 %v7797
    %v10113 = vunpack.c.h.b16 %v7797
    %v10114 = vunpack.c.l.b16 %v7798
    %v10115 = vunpack.c.h.b16 %v7798
    %v10116 = vunpack.c.l.b16 %v7799
    %v10117 = vunpack.c.h.b16 %v7799
    %v10118 = vunpack.c.l.b16 %v7800
    %v10119 = vunpack.c.h.b16 %v7800
    %v10120 = vunpack.c.l.b16 %v7801
    %v10121 = vunpack.c.h.b16 %v7801
    %v10122 = vunpack.c.l.b16 %v7802
    %v10123 = vunpack.c.h.b16 %v7802
    %v10124 = vunpack.c.l.b16 %v7803
    %v10125 = vunpack.c.h.b16 %v7803
    %v10126 = vunpack.c.l.b16 %v7804
    %v10127 = vunpack.c.h.b16 %v7804
    %v10128 = vunpack.c.l.b16 %v7805
    %v10129 = vunpack.c.h.b16 %v7805
    %v10130 = vunpack.c.l.b16 %v7806
    %v10131 = vunpack.c.h.b16 %v7806
    %v10132 = vunpack.c.l.b16 %v7807
    %v10133 = vunpack.c.l.b16 %v7808
    %v10134 = vunpack.c.h.b16 %v7808
    %v10135 = vunpack.c.l.b16 %v7809
    %v10136 = vunpack.c.h.b16 %v7809
    %v10137 = vunpack.c.l.b16 %v7810
    %v10138 = vunpack.c.h.b16 %v7810
    %v10139 = vunpack.c.l.b16 %v7811
    %v10140 = vunpack.c.h.b16 %v7811
    %v10141 = vunpack.c.l.b16 %v7812
    %v10142 = vunpack.c.h.b16 %v7812
    %v10143 = vunpack.c.l.b16 %v7813
    %v10144 = vunpack.c.h.b16 %v7813
    %v10145 = vunpack.c.l.b16 %v7814
    %v10146 = vunpack.c.h.b16 %v7814
    %v10147 = vunpack.c.l.b16 %v7815
    %v10148 = vunpack.c.h.b16 %v7815
    %v10149 = vunpack.c.l.b16 %v7816
    %v10150 = vunpack.c.h.b16 %v7816
    %v10151 = vunpack.c.l.b16 %v7817
    %v10152 = vunpack.c.h.b16 %v7817
    %v10153 = vunpack.c.l.b16 %v7818
    %v10154 = vunpack.c.h.b16 %v7818
    %v10155 = vunpack.c.l.b16 %v7819
    %v10156 = vunpack.c.h.b16 %v7819
    %v10157 = vunpack.c.l.b16 %v7820
    %v10158 = vunpack.c.h.b16 %v7820
    %v10159 = vunpack.c.l.b16 %v7821
    %v10160 = vunpack.c.h.b16 %v7821
    %v10161 = vunpack.c.l.b16 %v7822
    %v10162 = vunpack.c.l.b16 %v7823
    %v10163 = vunpack.c.h.b16 %v7823
    %v10164 = vunpack.c.l.b16 %v7824
    %v10165 = vunpack.c.h.b16 %v7824
    %v10166 = vunpack.c.l.b16 %v7825
    %v10167 = vunpack.c.h.b16 %v7825
    %v10168 = vunpack.c.l.b16 %v7826
    %v10169 = vunpack.c.h.b16 %v7826
    %v10170 = vunpack.c.l.b16 %v7827
    %v10171 = vunpack.c.h.b16 %v7827
    %v10172 = vunpack.c.l.b16 %v7828
    %v10173 = vunpack.c.h.b16 %v7828
    %v10174 = vunpack.c.l.b16 %v7829
    %v10175 = vunpack.c.h.b16 %v7829
    %v10176 = vunpack.c.l.b16 %v7830
    %v10177 = vunpack.c.h.b16 %v7830
    %v10178 = vunpack.c.l.b16 %v7831
    %v10179 = vunpack.c.h.b16 %v7831
    %v10180 = vunpack.c.l.b16 %v7832
    %v10181 = vunpack.c.h.b16 %v7832
    %v10182 = vunpack.c.l.b16 %v7833
    %v10183 = vunpack.c.h.b16 %v7833
    %v10184 = vunpack.c.l.b16 %v7834
    %v10185 = vunpack.c.h.b16 %v7834
    %v10186 = vunpack.c.l.b16 %v7835
    %v10187 = vunpack.c.h.b16 %v7835
    %v10188 = vunpack.c.l.b16 %v7836
    %v10189 = vunpack.c.h.b16 %v7836
    %v10190 = vunpack.c.l.b16 %v7837
    %v10191 = vunpack.c.l.b16 %v7838
    %v10192 = vunpack.c.h.b16 %v7838
    %v10193 = vunpack.c.l.b16 %v7839
    %v10194 = vunpack.c.h.b16 %v7839
    %v10195 = vunpack.c.l.b16 %v7840
    %v10196 = vunpack.c.h.b16 %v7840
    %v10197 = vunpack.c.l.b16 %v7841
    %v10198 = vunpack.c.h.b16 %v7841
    %v10199 = vunpack.c.l.b16 %v7842
    %v10200 = vunpack.c.h.b16 %v7842
    %v10201 = vunpack.c.l.b16 %v7843
    %v10202 = vunpack.c.h.b16 %v7843
    %v10203 = vunpack.c.l.b16 %v7844
    %v10204 = vunpack.c.h.b16 %v7844
    %v10205 = vunpack.c.l.b16 %v7845
    %v10206 = vunpack.c.h.b16 %v7845
    %v10207 = vunpack.c.l.b16 %v7846
    %v10208 = vunpack.c.h.b16 %v7846
    %v10209 = vunpack.c.l.b16 %v7847
    %v10210 = vunpack.c.h.b16 %v7847
    %v10211 = vunpack.c.l.b16 %v7848
    %v10212 = vunpack.c.h.b16 %v7848
    %v10213 = vunpack.c.l.b16 %v7849
    %v10214 = vunpack.c.h.b16 %v7849
    %v10215 = vunpack.c.l.b16 %v7850
    %v10216 = vunpack.c.h.b16 %v7850
    %v10217 = vunpack.c.l.b16 %v7851
    %v10218 = vunpack.c.h.b16 %v7851
    %v10219 = vunpack.c.l.b16 %v7852
    %v10220 = vunpack.c.l.b16 %v7853
    %v10221 = vunpack.c.h.b16 %v7853
    %v10222 = vunpack.c.l.b16 %v7854
    %v10223 = vunpack.c.h.b16 %v7854
    %v10224 = vunpack.c.l.b16 %v7855
    %v10225 = vunpack.c.h.b16 %v7855
    %v10226 = vunpack.c.l.b16 %v7856
    %v10227 = vunpack.c.h.b16 %v7856
    %v10228 = vunpack.c.l.b16 %v7857
    %v10229 = vunpack.c.h.b16 %v7857
    %v10230 = vunpack.c.l.b16 %v7858
    %v10231 = vunpack.c.h.b16 %v7858
    %v10232 = vunpack.c.l.b16 %v7859
    %v10233 = vunpack.c.h.b16 %v7859
    %v10234 = vunpack.c.l.b16 %v7860
    %v10235 = vunpack.c.h.b16 %v7860
    %v10236 = vunpack.c.l.b16 %v7861
    %v10237 = vunpack.c.h.b16 %v7861
    %v10238 = vunpack.c.l.b16 %v7862
    %v10239 = vunpack.c.h.b16 %v7862
    %v10240 = vunpack.c.l.b16 %v7863
    %v10241 = vunpack.c.h.b16 %v7863
    %v10242 = vunpack.c.l.b16 %v7864
    %v10243 = vunpack.c.h.b16 %v7864
    %v10244 = vunpack.c.l.b16 %v7865
    %v10245 = vunpack.c.h.b16 %v7865
    %v10246 = vunpack.c.l.b16 %v7866
    %v10247 = vunpack.c.h.b16 %v7866
    %v10248 = vunpack.c.l.b16 %v7867
    %v10249 = vunpack.c.l.b16 %v7868
    %v10250 = vunpack.c.h.b16 %v7868
    %v10251 = vunpack.c.l.b16 %v7869
    %v10252 = vunpack.c.h.b16 %v7869
    %v10253 = vunpack.c.l.b16 %v7870
    %v10254 = vunpack.c.h.b16 %v7870
    %v10255 = vunpack.c.l.b16 %v7871
    %v10256 = vunpack.c.h.b16 %v7871
    %v10257 = vunpack.c.l.b16 %v7872
    %v10258 = vunpack.c.h.b16 %v7872
    %v10259 = vunpack.c.l.b16 %v7873
    %v10260 = vunpack.c.h.b16 %v7873
    %v10261 = vunpack.c.l.b16 %v7874
    %v10262 = vunpack.c.h.b16 %v7874
    %v10263 = vunpack.c.l.b16 %v7875
    %v10264 = vunpack.c.h.b16 %v7875
    %v10265 = vunpack.c.l.b16 %v7876
    %v10266 = vunpack.c.h.b16 %v7876
    %v10267 = vunpack.c.l.b16 %v7877
    %v10268 = vunpack.c.h.b16 %v7877
    %v10269 = vunpack.c.l.b16 %v7878
    %v10270 = vunpack.c.h.b16 %v7878
    %v10271 = vunpack.c.l.b16 %v7879
    %v10272 = vunpack.c.h.b16 %v7879
    %v10273 = vunpack.c.l.b16 %v7880
    %v10274 = vunpack.c.h.b16 %v7880
    %v10275 = vunpack.c.l.b16 %v7881
    %v10276 = vunpack.c.h.b16 %v7881
    %v10277 = vunpack.c.l.b16 %v7882
    %v10278 = vunpack.c.l.b16 %v7883
    %v10279 = vunpack.c.h.b16 %v7883
    %v10280 = vunpack.c.l.b16 %v7884
    %v10281 = vunpack.c.h.b16 %v7884
    %v10282 = vunpack.c.l.b16 %v7885
    %v10283 = vunpack.c.h.b16 %v7885
    %v10284 = vunpack.c.l.b16 %v7886
    %v10285 = vunpack.c.h.b16 %v7886
    %v10286 = vunpack.c.l.b16 %v7887
    %v10287 = vunpack.c.h.b16 %v7887
    %v10288 = vunpack.c.l.b16 %v7888
    %v10289 = vunpack.c.h.b16 %v7888
    %v10290 = vunpack.c.l.b16 %v7889
    %v10291 = vunpack.c.h.b16 %v7889
    %v10292 = vunpack.c.l.b16 %v7890
    %v10293 = vunpack.c.h.b16 %v7890
    %v10294 = vunpack.c.l.b16 %v7891
    %v10295 = vunpack.c.h.b16 %v7891
    %v10296 = vunpack.c.l.b16 %v7892
    %v10297 = vunpack.c.h.b16 %v7892
    %v10298 = vunpack.c.l.b16 %v7893
    %v10299 = vunpack.c.h.b16 %v7893
    %v10300 = vunpack.c.l.b16 %v7894
    %v10301 = vunpack.c.h.b16 %v7894
    %v10302 = vunpack.c.l.b16 %v7895
    %v10303 = vunpack.c.h.b16 %v7895
    %v10304 = vunpack.c.l.b16 %v7896
    %v10305 = vunpack.c.h.b16 %v7896
    %v10306 = vunpack.c.l.b16 %v7897
    %v10307 = vunpack.c.l.b16 %v7898
    %v10308 = vunpack.c.h.b16 %v7898
    %v10309 = vunpack.c.l.b16 %v7899
    %v10310 = vunpack.c.h.b16 %v7899
    %v10311 = vunpack.c.l.b16 %v7900
    %v10312 = vunpack.c.h.b16 %v7900
    %v10313 = vunpack.c.l.b16 %v7901
    %v10314 = vunpack.c.h.b16 %v7901
    %v10315 = vunpack.c.l.b16 %v7902
    %v10316 = vunpack.c.h.b16 %v7902
    %v10317 = vunpack.c.l.b16 %v7903
    %v10318 = vunpack.c.h.b16 %v7903
    %v10319 = vunpack.c.l.b16 %v7904
    %v10320 = vunpack.c.h.b16 %v7904
    %v10321 = vunpack.c.l.b16 %v7905
    %v10322 = vunpack.c.h.b16 %v7905
    %v10323 = vunpack.c.l.b16 %v7906
    %v10324 = vunpack.c.h.b16 %v7906
    %v10325 = vunpack.c.l.b16 %v7907
    %v10326 = vunpack.c.h.b16 %v7907
    %v10327 = vunpack.c.l.b16 %v7908
    %v10328 = vunpack.c.h.b16 %v7908
    %v10329 = vunpack.c.l.b16 %v7909
    %v10330 = vunpack.c.h.b16 %v7909
    %v10331 = vunpack.c.l.b16 %v7910
    %v10332 = vunpack.c.h.b16 %v7910
    %v10333 = vunpack.c.l.b16 %v7911
    %v10334 = vunpack.c.h.b16 %v7911
    %v10335 = vunpack.c.l.b16 %v7912
    %v10336 = vunpack.c.l.b16 %v7913
    %v10337 = vunpack.c.h.b16 %v7913
    %v10338 = vunpack.c.l.b16 %v7914
    %v10339 = vunpack.c.h.b16 %v7914
    %v10340 = vunpack.c.l.b16 %v7915
    %v10341 = vunpack.c.h.b16 %v7915
    %v10342 = vunpack.c.l.b16 %v7916
    %v10343 = vunpack.c.h.b16 %v7916
    %v10344 = vunpack.c.l.b16 %v7917
    %v10345 = vunpack.c.h.b16 %v7917
    %v10346 = vunpack.c.l.b16 %v7918
    %v10347 = vunpack.c.h.b16 %v7918
    %v10348 = vunpack.c.l.b16 %v7919
    %v10349 = vunpack.c.h.b16 %v7919
    %v10350 = vunpack.c.l.b16 %v7920
    %v10351 = vunpack.c.h.b16 %v7920
    %v10352 = vunpack.c.l.b16 %v7921
    %v10353 = vunpack.c.h.b16 %v7921
    %v10354 = vunpack.c.l.b16 %v7922
    %v10355 = vunpack.c.h.b16 %v7922
    %v10356 = vunpack.c.l.b16 %v7923
    %v10357 = vunpack.c.h.b16 %v7923
    %v10358 = vunpack.c.l.b16 %v7924
    %v10359 = vunpack.c.h.b16 %v7924
    %v10360 = vunpack.c.l.b16 %v7925
    %v10361 = vunpack.c.h.b16 %v7925
    %v10362 = vunpack.c.l.b16 %v7926
    %v10363 = vunpack.c.h.b16 %v7926
    %v10364 = vunpack.c.l.b16 %v7927
    %v10365 = vunpack.c.l.b16 %v7928
    %v10366 = vunpack.c.h.b16 %v7928
    %v10367 = vunpack.c.l.b16 %v7929
    %v10368 = vunpack.c.h.b16 %v7929
    %v10369 = vunpack.c.l.b16 %v7930
    %v10370 = vunpack.c.h.b16 %v7930
    %v10371 = vunpack.c.l.b16 %v7931
    %v10372 = vunpack.c.h.b16 %v7931
    %v10373 = vunpack.c.l.b16 %v7932
    %v10374 = vunpack.c.h.b16 %v7932
    %v10375 = vunpack.c.l.b16 %v7933
    %v10376 = vunpack.c.h.b16 %v7933
    %v10377 = vunpack.c.l.b16 %v7934
    %v10378 = vunpack.c.h.b16 %v7934
    %v10379 = vunpack.c.l.b16 %v7935
    %v10380 = vunpack.c.h.b16 %v7935
    %v10381 = vunpack.c.l.b16 %v7936
    %v10382 = vunpack.c.h.b16 %v7936
    %v10383 = vunpack.c.l.b16 %v7937
    %v10384 = vunpack.c.h.b16 %v7937
    %v10385 = vunpack.c.l.b16 %v7938
    %v10386 = vunpack.c.h.b16 %v7938
    %v10387 = vunpack.c.l.b16 %v7939
    %v10388 = vunpack.c.h.b16 %v7939
    %v10389 = vunpack.c.l.b16 %v7940
    %v10390 = vunpack.c.h.b16 %v7940
    %v10391 = vunpack.c.l.b16 %v7941
    %v10392 = vunpack.c.h.b16 %v7941
    %v10393 = vunpack.c.l.b16 %v7942
    %v10394 = vunpack.c.l.b16 %v7943
    %v10395 = vunpack.c.h.b16 %v7943
    %v10396 = vunpack.c.l.b16 %v7944
    %v10397 = vunpack.c.h.b16 %v7944
    %v10398 = vunpack.c.l.b16 %v7945
    %v10399 = vunpack.c.h.b16 %v7945
    %v10400 = vunpack.c.l.b16 %v7946
    %v10401 = vunpack.c.h.b16 %v7946
    %v10402 = vunpack.c.l.b16 %v7947
    %v10403 = vunpack.c.h.b16 %v7947
    %v10404 = vunpack.c.l.b16 %v7948
    %v10405 = vunpack.c.h.b16 %v7948
    %v10406 = vunpack.c.l.b16 %v7949
    %v10407 = vunpack.c.h.b16 %v7949
    %v10408 = vunpack.c.l.b16 %v7950
    %v10409 = vunpack.c.h.b16 %v7950
    %v10410 = vunpack.c.l.b16 %v7951
    %v10411 = vunpack.c.h.b16 %v7951
    %v10412 = vunpack.c.l.b16 %v7952
    %v10413 = vunpack.c.h.b16 %v7952
    %v10414 = vunpack.c.l.b16 %v7953
    %v10415 = vunpack.c.h.b16 %v7953
    %v10416 = vunpack.c.l.b16 %v7954
    %v10417 = vunpack.c.h.b16 %v7954
    %v10418 = vunpack.c.l.b16 %v7955
    %v10419 = vunpack.c.h.b16 %v7955
    %v10420 = vunpack.c.l.b16 %v7956
    %v10421 = vunpack.c.h.b16 %v7956
    %v10422 = vunpack.c.l.b16 %v7957
    %v10423 = vunpack.c.l.b16 %v7958
    %v10424 = vunpack.c.h.b16 %v7958
    %v10425 = vunpack.c.l.b16 %v7959
    %v10426 = vunpack.c.h.b16 %v7959
    %v10427 = vunpack.c.l.b16 %v7960
    %v10428 = vunpack.c.h.b16 %v7960
    %v10429 = vunpack.c.l.b16 %v7961
    %v10430 = vunpack.c.h.b16 %v7961
    %v10431 = vunpack.c.l.b16 %v7962
    %v10432 = vunpack.c.h.b16 %v7962
    %v10433 = vunpack.c.l.b16 %v7963
    %v10434 = vunpack.c.h.b16 %v7963
    %v10435 = vunpack.c.l.b16 %v7964
    %v10436 = vunpack.c.h.b16 %v7964
    %v10437 = vunpack.c.l.b16 %v7965
    %v10438 = vunpack.c.h.b16 %v7965
    %v10439 = vunpack.c.l.b16 %v7966
    %v10440 = vunpack.c.h.b16 %v7966
    %v10441 = vunpack.c.l.b16 %v7967
    %v10442 = vunpack.c.h.b16 %v7967
    %v10443 = vunpack.c.l.b16 %v7968
    %v10444 = vunpack.c.h.b16 %v7968
    %v10445 = vunpack.c.l.b16 %v7969
    %v10446 = vunpack.c.h.b16 %v7969
    %v10447 = vunpack.c.l.b16 %v7970
    %v10448 = vunpack.c.h.b16 %v7970
    %v10449 = vunpack.c.l.b16 %v7971
    %v10450 = vunpack.c.h.b16 %v7971
    %v10451 = vunpack.c.l.b16 %v7972
    %v10452 = vunpack.c.l.b16 %v7973
    %v10453 = vunpack.c.h.b16 %v7973
    %v10454 = vunpack.c.l.b16 %v7974
    %v10455 = vunpack.c.h.b16 %v7974
    %v10456 = vunpack.c.l.b16 %v7975
    %v10457 = vunpack.c.h.b16 %v7975
    %v10458 = vunpack.c.l.b16 %v7976
    %v10459 = vunpack.c.h.b16 %v7976
    %v10460 = vunpack.c.l.b16 %v7977
    %v10461 = vunpack.c.h.b16 %v7977
    %v10462 = vunpack.c.l.b16 %v7978
    %v10463 = vunpack.c.h.b16 %v7978
    %v10464 = vunpack.c.l.b16 %v7979
    %v10465 = vunpack.c.h.b16 %v7979
    %v10466 = vunpack.c.l.b16 %v7980
    %v10467 = vunpack.c.h.b16 %v7980
    %v10468 = vunpack.c.l.b16 %v7981
    %v10469 = vunpack.c.h.b16 %v7981
    %v10470 = vunpack.c.l.b16 %v7982
    %v10471 = vunpack.c.h.b16 %v7982
    %v10472 = vunpack.c.l.b16 %v7983
    %v10473 = vunpack.c.h.b16 %v7983
    %v10474 = vunpack.c.l.b16 %v7984
    %v10475 = vunpack.c.h.b16 %v7984
    %v10476 = vunpack.c.l.b16 %v7985
    %v10477 = vunpack.c.h.b16 %v7985
    %v10478 = vunpack.c.l.b16 %v7986
    %v10479 = vunpack.c.h.b16 %v7986
    %v10480 = vunpack.c.l.b16 %v7987
    %v10481 = vunpack.c.l.b16 %v7988
    %v10482 = vunpack.c.h.b16 %v7988
    %v10483 = vunpack.c.l.b16 %v7989
    %v10484 = vunpack.c.h.b16 %v7989
    %v10485 = vunpack.c.l.b16 %v7990
    %v10486 = vunpack.c.h.b16 %v7990
    %v10487 = vunpack.c.l.b16 %v7991
    %v10488 = vunpack.c.h.b16 %v7991
    %v10489 = vunpack.c.l.b16 %v7992
    %v10490 = vunpack.c.h.b16 %v7992
    %v10491 = vunpack.c.l.b16 %v7993
    %v10492 = vunpack.c.h.b16 %v7993
    %v10493 = vunpack.c.l.b16 %v7994
    %v10494 = vunpack.c.h.b16 %v7994
    %v10495 = vunpack.c.l.b16 %v7995
    %v10496 = vunpack.c.h.b16 %v7995
    %v10497 = vunpack.c.l.b16 %v7996
    %v10498 = vunpack.c.h.b16 %v7996
    %v10499 = vunpack.c.l.b16 %v7997
    %v10500 = vunpack.c.h.b16 %v7997
    %v10501 = vunpack.c.l.b16 %v7998
    %v10502 = vunpack.c.h.b16 %v7998
    %v10503 = vunpack.c.l.b16 %v7999
    %v10504 = vunpack.c.h.b16 %v7999
    %v10505 = vunpack.c.l.b16 %v8000
    %v10506 = vunpack.c.h.b16 %v8000
    %v10507 = vunpack.c.l.b16 %v8001
    %v10508 = vunpack.c.h.b16 %v8001
    %v10509 = vunpack.c.l.b16 %v8002
    %v10510 = vunpack.c.l.b16 %v8003
    %v10511 = vunpack.c.h.b16 %v8003
    %v10512 = vunpack.c.l.b16 %v8004
    %v10513 = vunpack.c.h.b16 %v8004
    %v10514 = vunpack.c.l.b16 %v8005
    %v10515 = vunpack.c.h.b16 %v8005
    %v10516 = vunpack.c.l.b16 %v8006
    %v10517 = vunpack.c.h.b16 %v8006
    %v10518 = vunpack.c.l.b16 %v8007
    %v10519 = vunpack.c.h.b16 %v8007
    %v10520 = vunpack.c.l.b16 %v8008
    %v10521 = vunpack.c.h.b16 %v8008
    %v10522 = vunpack.c.l.b16 %v8009
    %v10523 = vunpack.c.h.b16 %v8009
    %v10524 = vunpack.c.l.b16 %v8010
    %v10525 = vunpack.c.h.b16 %v8010
    %v10526 = vunpack.c.l.b16 %v8011
    %v10527 = vunpack.c.h.b16 %v8011
    %v10528 = vunpack.c.l.b16 %v8012
    %v10529 = vunpack.c.h.b16 %v8012
    %v10530 = vunpack.c.l.b16 %v8013
    %v10531 = vunpack.c.h.b16 %v8013
    %v10532 = vunpack.c.l.b16 %v8014
    %v10533 = vunpack.c.h.b16 %v8014
    %v10534 = vunpack.c.l.b16 %v8015
    %v10535 = vunpack.c.h.b16 %v8015
    %v10536 = vunpack.c.l.b16 %v8016
    %v10537 = vunpack.c.h.b16 %v8016
    %v10538 = vunpack.c.l.b16 %v8017
    %v10539 = vunpack.c.l.b16 %v8018
    %v10540 = vunpack.c.h.b16 %v8018
    %v10541 = vunpack.c.l.b16 %v8019
    %v10542 = vunpack.c.h.b16 %v8019
    %v10543 = vunpack.c.l.b16 %v8020
    %v10544 = vunpack.c.h.b16 %v8020
    %v10545 = vunpack.c.l.b16 %v8021
    %v10546 = vunpack.c.h.b16 %v8021
    %v10547 = vunpack.c.l.b16 %v8022
    %v10548 = vunpack.c.h.b16 %v8022
    %v10549 = vunpack.c.l.b16 %v8023
    %v10550 = vunpack.c.h.b16 %v8023
    %v10551 = vunpack.c.l.b16 %v8024
    %v10552 = vunpack.c.h.b16 %v8024
    %v10553 = vunpack.c.l.b16 %v8025
    %v10554 = vunpack.c.h.b16 %v8025
    %v10555 = vunpack.c.l.b16 %v8026
    %v10556 = vunpack.c.h.b16 %v8026
    %v10557 = vunpack.c.l.b16 %v8027
    %v10558 = vunpack.c.h.b16 %v8027
    %v10559 = vunpack.c.l.b16 %v8028
    %v10560 = vunpack.c.h.b16 %v8028
    %v10561 = vunpack.c.l.b16 %v8029
    %v10562 = vunpack.c.h.b16 %v8029
    %v10563 = vunpack.c.l.b16 %v8030
    %v10564 = vunpack.c.h.b16 %v8030
    %v10565 = vunpack.c.l.b16 %v8031
    %v10566 = vunpack.c.h.b16 %v8031
    %v10567 = vunpack.c.l.b16 %v8032
    %v10568 = vunpack.c.l.b16 %v8033
    %v10569 = vunpack.c.h.b16 %v8033
    %v10570 = vunpack.c.l.b16 %v8034
    %v10571 = vunpack.c.h.b16 %v8034
    %v10572 = vunpack.c.l.b16 %v8035
    %v10573 = vunpack.c.h.b16 %v8035
    %v10574 = vunpack.c.l.b16 %v8036
    %v10575 = vunpack.c.h.b16 %v8036
    %v10576 = vunpack.c.l.b16 %v8037
    %v10577 = vunpack.c.h.b16 %v8037
    %v10578 = vunpack.c.l.b16 %v8038
    %v10579 = vunpack.c.h.b16 %v8038
    %v10580 = vunpack.c.l.b16 %v8039
    %v10581 = vunpack.c.h.b16 %v8039
    %v10582 = vunpack.c.l.b16 %v8040
    %v10583 = vunpack.c.h.b16 %v8040
    %v10584 = vunpack.c.l.b16 %v8041
    %v10585 = vunpack.c.h.b16 %v8041
    %v10586 = vunpack.c.l.b16 %v8042
    %v10587 = vunpack.c.h.b16 %v8042
    %v10588 = vunpack.c.l.b16 %v8043
    %v10589 = vunpack.c.h.b16 %v8043
    %v10590 = vunpack.c.l.b16 %v8044
    %v10591 = vunpack.c.h.b16 %v8044
    %v10592 = vunpack.c.l.b16 %v8045
    %v10593 = vunpack.c.h.b16 %v8045
    %v10594 = vunpack.c.l.b16 %v8046
    %v10595 = vunpack.c.h.b16 %v8046
    %v10596 = vunpack.c.l.b16 %v8047
    %v10597 = vunpack.c.l.b16 %v8048
    %v10598 = vunpack.c.h.b16 %v8048
    %v10599 = vunpack.c.l.b16 %v8049
    %v10600 = vunpack.c.h.b16 %v8049
    %v10601 = vunpack.c.l.b16 %v8050
    %v10602 = vunpack.c.h.b16 %v8050
    %v10603 = vunpack.c.l.b16 %v8051
    %v10604 = vunpack.c.h.b16 %v8051
    %v10605 = vunpack.c.l.b16 %v8052
    %v10606 = vunpack.c.h.b16 %v8052
    %v10607 = vunpack.c.l.b16 %v8053
    %v10608 = vunpack.c.h.b16 %v8053
    %v10609 = vunpack.c.l.b16 %v8054
    %v10610 = vunpack.c.h.b16 %v8054
    %v10611 = vunpack.c.l.b16 %v8055
    %v10612 = vunpack.c.h.b16 %v8055
    %v10613 = vunpack.c.l.b16 %v8056
    %v10614 = vunpack.c.h.b16 %v8056
    %v10615 = vunpack.c.l.b16 %v8057
    %v10616 = vunpack.c.h.b16 %v8057
    %v10617 = vunpack.c.l.b16 %v8058
    %v10618 = vunpack.c.h.b16 %v8058
    %v10619 = vunpack.c.l.b16 %v8059
    %v10620 = vunpack.c.h.b16 %v8059
    %v10621 = vunpack.c.l.b16 %v8060
    %v10622 = vunpack.c.h.b16 %v8060
    %v10623 = vunpack.c.l.b16 %v8061
    %v10624 = vunpack.c.h.b16 %v8061
    %v10625 = vunpack.c.l.b16 %v8062
    %v10626 = vunpack.c.l.b16 %v8063
    %v10627 = vunpack.c.h.b16 %v8063
    %v10628 = vunpack.c.l.b16 %v8064
    %v10629 = vunpack.c.h.b16 %v8064
    %v10630 = vunpack.c.l.b16 %v8065
    %v10631 = vunpack.c.h.b16 %v8065
    %v10632 = vunpack.c.l.b16 %v8066
    %v10633 = vunpack.c.h.b16 %v8066
    %v10634 = vunpack.c.l.b16 %v8067
    %v10635 = vunpack.c.h.b16 %v8067
    %v10636 = vunpack.c.l.b16 %v8068
    %v10637 = vunpack.c.h.b16 %v8068
    %v10638 = vunpack.c.l.b16 %v8069
    %v10639 = vunpack.c.h.b16 %v8069
    %v10640 = vunpack.c.l.b16 %v8070
    %v10641 = vunpack.c.h.b16 %v8070
    %v10642 = vunpack.c.l.b16 %v8071
    %v10643 = vunpack.c.h.b16 %v8071
    %v10644 = vunpack.c.l.b16 %v8072
    %v10645 = vunpack.c.h.b16 %v8072
    %v10646 = vunpack.c.l.b16 %v8073
    %v10647 = vunpack.c.h.b16 %v8073
    %v10648 = vunpack.c.l.b16 %v8074
    %v10649 = vunpack.c.h.b16 %v8074
    %v10650 = vunpack.c.l.b16 %v8075
    %v10651 = vunpack.c.h.b16 %v8075
    %v10652 = vunpack.c.l.b16 %v8076
    %v10653 = vunpack.c.h.b16 %v8076
    %v10654 = vunpack.c.l.b16 %v8077
    %v10655 = vunpack.c.l.b16 %v8078
    %v10656 = vunpack.c.h.b16 %v8078
    %v10657 = vunpack.c.l.b16 %v8079
    %v10658 = vunpack.c.h.b16 %v8079
    %v10659 = vunpack.c.l.b16 %v8080
    %v10660 = vunpack.c.h.b16 %v8080
    %v10661 = vunpack.c.l.b16 %v8081
    %v10662 = vunpack.c.h.b16 %v8081
    %v10663 = vunpack.c.l.b16 %v8082
    %v10664 = vunpack.c.h.b16 %v8082
    %v10665 = vunpack.c.l.b16 %v8083
    %v10666 = vunpack.c.h.b16 %v8083
    %v10667 = vunpack.c.l.b16 %v8084
    %v10668 = vunpack.c.h.b16 %v8084
    %v10669 = vunpack.c.l.b16 %v8085
    %v10670 = vunpack.c.h.b16 %v8085
    %v10671 = vunpack.c.l.b16 %v8086
    %v10672 = vunpack.c.h.b16 %v8086
    %v10673 = vunpack.c.l.b16 %v8087
    %v10674 = vunpack.c.h.b16 %v8087
    %v10675 = vunpack.c.l.b16 %v8088
    %v10676 = vunpack.c.h.b16 %v8088
    %v10677 = vunpack.c.l.b16 %v8089
    %v10678 = vunpack.c.h.b16 %v8089
    %v10679 = vunpack.c.l.b16 %v8090
    %v10680 = vunpack.c.h.b16 %v8090
    %v10681 = vunpack.c.l.b16 %v8091
    %v10682 = vunpack.c.h.b16 %v8091
    %v10683 = vunpack.c.l.b16 %v8092
    %v10684 = vunpack.c.l.b16 %v8093
    %v10685 = vunpack.c.h.b16 %v8093
    %v10686 = vunpack.c.l.b16 %v8094
    %v10687 = vunpack.c.h.b16 %v8094
    %v10688 = vunpack.c.l.b16 %v8095
    %v10689 = vunpack.c.h.b16 %v8095
    %v10690 = vunpack.c.l.b16 %v8096
    %v10691 = vunpack.c.h.b16 %v8096
    %v10692 = vunpack.c.l.b16 %v8097
    %v10693 = vunpack.c.h.b16 %v8097
    %v10694 = vunpack.c.l.b16 %v8098
    %v10695 = vunpack.c.h.b16 %v8098
    %v10696 = vunpack.c.l.b16 %v8099
    %v10697 = vunpack.c.h.b16 %v8099
    %v10698 = vunpack.c.l.b16 %v8100
    %v10699 = vunpack.c.h.b16 %v8100
    %v10700 = vunpack.c.l.b16 %v8101
    %v10701 = vunpack.c.h.b16 %v8101
    %v10702 = vunpack.c.l.b16 %v8102
    %v10703 = vunpack.c.h.b16 %v8102
    %v10704 = vunpack.c.l.b16 %v8103
    %v10705 = vunpack.c.h.b16 %v8103
    %v10706 = vunpack.c.l.b16 %v8104
    %v10707 = vunpack.c.h.b16 %v8104
    %v10708 = vunpack.c.l.b16 %v8105
    %v10709 = vunpack.c.h.b16 %v8105
    %v10710 = vunpack.c.l.b16 %v8106
    %v10711 = vunpack.c.h.b16 %v8106
    %v10712 = vunpack.c.l.b16 %v8107
    %v10713 = vunpack.c.l.b16 %v8108
    %v10714 = vunpack.c.h.b16 %v8108
    %v10715 = vunpack.c.l.b16 %v8109
    %v10716 = vunpack.c.h.b16 %v8109
    %v10717 = vunpack.c.l.b16 %v8110
    %v10718 = vunpack.c.h.b16 %v8110
    %v10719 = vunpack.c.l.b16 %v8111
    %v10720 = vunpack.c.h.b16 %v8111
    %v10721 = vunpack.c.l.b16 %v8112
    %v10722 = vunpack.c.h.b16 %v8112
    %v10723 = vunpack.c.l.b16 %v8113
    %v10724 = vunpack.c.h.b16 %v8113
    %v10725 = vunpack.c.l.b16 %v8114
    %v10726 = vunpack.c.h.b16 %v8114
    %v10727 = vunpack.c.l.b16 %v8115
    %v10728 = vunpack.c.h.b16 %v8115
    %v10729 = vunpack.c.l.b16 %v8116
    %v10730 = vunpack.c.h.b16 %v8116
    %v10731 = vunpack.c.l.b16 %v8117
    %v10732 = vunpack.c.h.b16 %v8117
    %v10733 = vunpack.c.l.b16 %v8118
    %v10734 = vunpack.c.h.b16 %v8118
    %v10735 = vunpack.c.l.b16 %v8119
    %v10736 = vunpack.c.h.b16 %v8119
    %v10737 = vunpack.c.l.b16 %v8120
    %v10738 = vunpack.c.h.b16 %v8120
    %v10739 = vunpack.c.l.b16 %v8121
    %v10740 = vunpack.c.h.b16 %v8121
    %v10741 = vunpack.c.l.b16 %v8122
    %v10742 = vunpack.c.l.b16 %v8123
    %v10743 = vunpack.c.h.b16 %v8123
    %v10744 = vunpack.c.l.b16 %v8124
    %v10745 = vunpack.c.h.b16 %v8124
    %v10746 = vunpack.c.l.b16 %v8125
    %v10747 = vunpack.c.h.b16 %v8125
    %v10748 = vunpack.c.l.b16 %v8126
    %v10749 = vunpack.c.h.b16 %v8126
    %v10750 = vunpack.c.l.b16 %v8127
    %v10751 = vunpack.c.h.b16 %v8127
    %v10752 = vunpack.c.l.b16 %v8128
    %v10753 = vunpack.c.h.b16 %v8128
    %v10754 = vunpack.c.l.b16 %v8129
    %v10755 = vunpack.c.h.b16 %v8129
    %v10756 = vunpack.c.l.b16 %v8130
    %v10757 = vunpack.c.h.b16 %v8130
    %v10758 = vunpack.c.l.b16 %v8131
    %v10759 = vunpack.c.h.b16 %v8131
    %v10760 = vunpack.c.l.b16 %v8132
    %v10761 = vunpack.c.h.b16 %v8132
    %v10762 = vunpack.c.l.b16 %v8133
    %v10763 = vunpack.c.h.b16 %v8133
    %v10764 = vunpack.c.l.b16 %v8134
    %v10765 = vunpack.c.h.b16 %v8134
    %v10766 = vunpack.c.l.b16 %v8135
    %v10767 = vunpack.c.h.b16 %v8135
    %v10768 = vunpack.c.l.b16 %v8136
    %v10769 = vunpack.c.h.b16 %v8136
    %v10770 = vunpack.c.l.b16 %v8137
    %v10771 = vunpack.c.l.b16 %v8138
    %v10772 = vunpack.c.h.b16 %v8138
    %v10773 = vunpack.c.l.b16 %v8139
    %v10774 = vunpack.c.h.b16 %v8139
    %v10775 = vunpack.c.l.b16 %v8140
    %v10776 = vunpack.c.h.b16 %v8140
    %v10777 = vunpack.c.l.b16 %v8141
    %v10778 = vunpack.c.h.b16 %v8141
    %v10779 = vunpack.c.l.b16 %v8142
    %v10780 = vunpack.c.h.b16 %v8142
    %v10781 = vunpack.c.l.b16 %v8143
    %v10782 = vunpack.c.h.b16 %v8143
    %v10783 = vunpack.c.l.b16 %v8144
    %v10784 = vunpack.c.h.b16 %v8144
    %v10785 = vunpack.c.l.b16 %v8145
    %v10786 = vunpack.c.h.b16 %v8145
    %v10787 = vunpack.c.l.b16 %v8146
    %v10788 = vunpack.c.h.b16 %v8146
    %v10789 = vunpack.c.l.b16 %v8147
    %v10790 = vunpack.c.h.b16 %v8147
    %v10791 = vunpack.c.l.b16 %v8148
    %v10792 = vunpack.c.h.b16 %v8148
    %v10793 = vunpack.c.l.b16 %v8149
    %v10794 = vunpack.c.h.b16 %v8149
    %v10795 = vunpack.c.l.b16 %v8150
    %v10796 = vunpack.c.h.b16 %v8150
    %v10797 = vunpack.c.l.b16 %v8151
    %v10798 = vunpack.c.h.b16 %v8151
    %v10799 = vunpack.c.l.b16 %v8152
    %v10800 = vunpack.c.l.b16 %v8153
    %v10801 = vunpack.c.h.b16 %v8153
    %v10802 = vunpack.c.l.b16 %v8154
    %v10803 = vunpack.c.h.b16 %v8154
    %v10804 = vunpack.c.l.b16 %v8155
    %v10805 = vunpack.c.h.b16 %v8155
    %v10806 = vunpack.c.l.b16 %v8156
    %v10807 = vunpack.c.h.b16 %v8156
    %v10808 = vunpack.c.l.b16 %v8157
    %v10809 = vunpack.c.h.b16 %v8157
    %v10810 = vunpack.c.l.b16 %v8158
    %v10811 = vunpack.c.h.b16 %v8158
    %v10812 = vunpack.c.l.b16 %v8159
    %v10813 = vunpack.c.h.b16 %v8159
    %v10814 = vunpack.c.l.b16 %v8160
    %v10815 = vunpack.c.h.b16 %v8160
    %v10816 = vunpack.c.l.b16 %v8161
    %v10817 = vunpack.c.h.b16 %v8161
    %v10818 = vunpack.c.l.b16 %v8162
    %v10819 = vunpack.c.h.b16 %v8162
    %v10820 = vunpack.c.l.b16 %v8163
    %v10821 = vunpack.c.h.b16 %v8163
    %v10822 = vunpack.c.l.b16 %v8164
    %v10823 = vunpack.c.h.b16 %v8164
    %v10824 = vunpack.c.l.b16 %v8165
    %v10825 = vunpack.c.h.b16 %v8165
    %v10826 = vunpack.c.l.b16 %v8166
    %v10827 = vunpack.c.h.b16 %v8166
    %v10828 = vunpack.c.l.b16 %v8167
    %v10829 = vunpack.c.l.b16 %v8168
    %v10830 = vunpack.c.h.b16 %v8168
    %v10831 = vunpack.c.l.b16 %v8169
    %v10832 = vunpack.c.h.b16 %v8169
    %v10833 = vunpack.c.l.b16 %v8170
    %v10834 = vunpack.c.h.b16 %v8170
    %v10835 = vunpack.c.l.b16 %v8171
    %v10836 = vunpack.c.h.b16 %v8171
    %v10837 = vunpack.c.l.b16 %v8172
    %v10838 = vunpack.c.h.b16 %v8172
    %v10839 = vunpack.c.l.b16 %v8173
    %v10840 = vunpack.c.h.b16 %v8173
    %v10841 = vunpack.c.l.b16 %v8174
    %v10842 = vunpack.c.h.b16 %v8174
    %v10843 = vunpack.c.l.b16 %v8175
    %v10844 = vunpack.c.h.b16 %v8175
    %v10845 = vunpack.c.l.b16 %v8176
    %v10846 = vunpack.c.h.b16 %v8176
    %v10847 = vunpack.c.l.b16 %v8177
    %v10848 = vunpack.c.h.b16 %v8177
    %v10849 = vunpack.c.l.b16 %v8178
    %v10850 = vunpack.c.h.b16 %v8178
    %v10851 = vunpack.c.l.b16 %v8179
    %v10852 = vunpack.c.h.b16 %v8179
    %v10853 = vunpack.c.l.b16 %v8180
    %v10854 = vunpack.c.h.b16 %v8180
    %v10855 = vunpack.c.l.b16 %v8181
    %v10856 = vunpack.c.h.b16 %v8181
    %v10857 = vunpack.c.l.b16 %v8182
    %v10858 = vunpack.c.l.b16 %v8183
    %v10859 = vunpack.c.h.b16 %v8183
    %v10860 = vunpack.c.l.b16 %v8184
    %v10861 = vunpack.c.h.b16 %v8184
    %v10862 = vunpack.c.l.b16 %v8185
    %v10863 = vunpack.c.h.b16 %v8185
    %v10864 = vunpack.c.l.b16 %v8186
    %v10865 = vunpack.c.h.b16 %v8186
    %v10866 = vunpack.c.l.b16 %v8187
    %v10867 = vunpack.c.h.b16 %v8187
    %v10868 = vunpack.c.l.b16 %v8188
    %v10869 = vunpack.c.h.b16 %v8188
    %v10870 = vunpack.c.l.b16 %v8189
    %v10871 = vunpack.c.h.b16 %v8189
    %v10872 = vunpack.c.l.b16 %v8190
    %v10873 = vunpack.c.h.b16 %v8190
    %v10874 = vunpack.c.l.b16 %v8191
    %v10875 = vunpack.c.h.b16 %v8191
    %v10876 = vunpack.c.l.b16 %v8192
    %v10877 = vunpack.c.h.b16 %v8192
    %v10878 = vunpack.c.l.b16 %v8193
    %v10879 = vunpack.c.h.b16 %v8193
    %v10880 = vunpack.c.l.b16 %v8194
    %v10881 = vunpack.c.h.b16 %v8194
    %v10882 = vunpack.c.l.b16 %v8195
    %v10883 = vunpack.c.h.b16 %v8195
    %v10884 = vunpack.c.l.b16 %v8196
    %v10885 = vunpack.c.h.b16 %v8196
    %v10886 = vunpack.c.l.b16 %v8197
    %v10887 = vunpack.c.l.b16 %v8198
    %v10888 = vunpack.c.h.b16 %v8198
    %v10889 = vunpack.c.l.b16 %v8199
    %v10890 = vunpack.c.h.b16 %v8199
    %v10891 = vunpack.c.l.b16 %v8200
    %v10892 = vunpack.c.h.b16 %v8200
    %v10893 = vunpack.c.l.b16 %v8201
    %v10894 = vunpack.c.h.b16 %v8201
    %v10895 = vunpack.c.l.b16 %v8202
    %v10896 = vunpack.c.h.b16 %v8202
    %v10897 = vunpack.c.l.b16 %v8203
    %v10898 = vunpack.c.h.b16 %v8203
    %v10899 = vunpack.c.l.b16 %v8204
    %v10900 = vunpack.c.h.b16 %v8204
    %v10901 = vunpack.c.l.b16 %v8205
    %v10902 = vunpack.c.h.b16 %v8205
    %v10903 = vunpack.c.l.b16 %v8206
    %v10904 = vunpack.c.h.b16 %v8206
    %v10905 = vunpack.c.l.b16 %v8207
    %v10906 = vunpack.c.h.b16 %v8207
    %v10907 = vunpack.c.l.b16 %v8208
    %v10908 = vunpack.c.h.b16 %v8208
    %v10909 = vunpack.c.l.b16 %v8209
    %v10910 = vunpack.c.h.b16 %v8209
    %v10911 = vunpack.c.l.b16 %v8210
    %v10912 = vunpack.c.h.b16 %v8210
    %v10913 = vunpack.c.l.b16 %v8211
    %v10914 = vunpack.c.h.b16 %v8211
    %v10915 = vunpack.c.l.b16 %v8212
    %v10916 = vunpack.c.l.b16 %v8213
    %v10917 = vunpack.c.h.b16 %v8213
    %v10918 = vunpack.c.l.b16 %v8214
    %v10919 = vunpack.c.h.b16 %v8214
    %v10920 = vunpack.c.l.b16 %v8215
    %v10921 = vunpack.c.h.b16 %v8215
    %v10922 = vunpack.c.l.b16 %v8216
    %v10923 = vunpack.c.h.b16 %v8216
    %v10924 = vunpack.c.l.b16 %v8217
    %v10925 = vunpack.c.h.b16 %v8217
    %v10926 = vunpack.c.l.b16 %v8218
    %v10927 = vunpack.c.h.b16 %v8218
    %v10928 = vunpack.c.l.b16 %v8219
    %v10929 = vunpack.c.h.b16 %v8219
    %v10930 = vunpack.c.l.b16 %v8220
    %v10931 = vunpack.c.h.b16 %v8220
    %v10932 = vunpack.c.l.b16 %v8221
    %v10933 = vunpack.c.h.b16 %v8221
    %v10934 = vunpack.c.l.b16 %v8222
    %v10935 = vunpack.c.h.b16 %v8222
    %v10936 = vunpack.c.l.b16 %v8223
    %v10937 = vunpack.c.h.b16 %v8223
    %v10938 = vunpack.c.l.b16 %v8224
    %v10939 = vunpack.c.h.b16 %v8224
    %v10940 = vunpack.c.l.b16 %v8225
    %v10941 = vunpack.c.h.b16 %v8225
    %v10942 = vunpack.c.l.b16 %v8226
    %v10943 = vunpack.c.h.b16 %v8226
    %v10944 = vunpack.c.l.b16 %v8227
    %v10945 = vunpack.c.l.b16 %v8228
    %v10946 = vunpack.c.h.b16 %v8228
    %v10947 = vunpack.c.l.b16 %v8229
    %v10948 = vunpack.c.h.b16 %v8229
    %v10949 = vunpack.c.l.b16 %v8230
    %v10950 = vunpack.c.h.b16 %v8230
    %v10951 = vunpack.c.l.b16 %v8231
    %v10952 = vunpack.c.h.b16 %v8231
    %v10953 = vunpack.c.l.b16 %v8232
    %v10954 = vunpack.c.h.b16 %v8232
    %v10955 = vunpack.c.l.b16 %v8233
    %v10956 = vunpack.c.h.b16 %v8233
    %v10957 = vunpack.c.l.b16 %v8234
    %v10958 = vunpack.c.h.b16 %v8234
    %v10959 = vunpack.c.l.b16 %v8235
    %v10960 = vunpack.c.h.b16 %v8235
    %v10961 = vunpack.c.l.b16 %v8236
    %v10962 = vunpack.c.h.b16 %v8236
    %v10963 = vunpack.c.l.b16 %v8237
    %v10964 = vunpack.c.h.b16 %v8237
    %v10965 = vunpack.c.l.b16 %v8238
    %v10966 = vunpack.c.h.b16 %v8238
    %v10967 = vunpack.c.l.b16 %v8239
    %v10968 = vunpack.c.h.b16 %v8239
    %v10969 = vunpack.c.l.b16 %v8240
    %v10970 = vunpack.c.h.b16 %v8240
    %v10971 = vunpack.c.l.b16 %v8241
    %v10972 = vunpack.c.h.b16 %v8241
    %v10973 = vunpack.c.l.b16 %v8242
    %v10974 = vunpack.c.l.b16 %v8243
    %v10975 = vunpack.c.h.b16 %v8243
    %v10976 = vunpack.c.l.b16 %v8244
    %v10977 = vunpack.c.h.b16 %v8244
    %v10978 = vunpack.c.l.b16 %v8245
    %v10979 = vunpack.c.h.b16 %v8245
    %v10980 = vunpack.c.l.b16 %v8246
    %v10981 = vunpack.c.h.b16 %v8246
    %v10982 = vunpack.c.l.b16 %v8247
    %v10983 = vunpack.c.h.b16 %v8247
    %v10984 = vunpack.c.l.b16 %v8248
    %v10985 = vunpack.c.h.b16 %v8248
    %v10986 = vunpack.c.l.b16 %v8249
    %v10987 = vunpack.c.h.b16 %v8249
    %v10988 = vunpack.c.l.b16 %v8250
    %v10989 = vunpack.c.h.b16 %v8250
    %v10990 = vunpack.c.l.b16 %v8251
    %v10991 = vunpack.c.h.b16 %v8251
    %v10992 = vunpack.c.l.b16 %v8252
    %v10993 = vunpack.c.h.b16 %v8252
    %v10994 = vunpack.c.l.b16 %v8253
    %v10995 = vunpack.c.h.b16 %v8253
    %v10996 = vunpack.c.l.b16 %v8254
    %v10997 = vunpack.c.h.b16 %v8254
    %v10998 = vunpack.c.l.b16 %v8255
    %v10999 = vunpack.c.h.b16 %v8255
    %v11000 = vunpack.c.l.b16 %v8256
    %v11001 = vunpack.c.h.b16 %v8256
    %v11002 = vunpack.c.l.b16 %v8257
    %v11003 = vunpack.c.l.b16 %v8258
    %v11004 = vunpack.c.h.b16 %v8258
    %v11005 = vunpack.c.l.b16 %v8259
    %v11006 = vunpack.c.h.b16 %v8259
    %v11007 = vunpack.c.l.b16 %v8260
    %v11008 = vunpack.c.h.b16 %v8260
    %v11009 = vunpack.c.l.b16 %v8261
    %v11010 = vunpack.c.h.b16 %v8261
    %v11011 = vunpack.c.l.b16 %v8262
    %v11012 = vunpack.c.h.b16 %v8262
    %v11013 = vunpack.c.l.b16 %v8263
    %v11014 = vunpack.c.h.b16 %v8263
    %v11015 = vunpack.c.l.b16 %v8264
    %v11016 = vunpack.c.h.b16 %v8264
    %v11017 = vunpack.c.l.b16 %v8265
    %v11018 = vunpack.c.h.b16 %v8265
    %v11019 = vunpack.c.l.b16 %v8266
    %v11020 = vunpack.c.h.b16 %v8266
    %v11021 = vunpack.c.l.b16 %v8267
    %v11022 = vunpack.c.h.b16 %v8267
    %v11023 = vunpack.c.l.b16 %v8268
    %v11024 = vunpack.c.h.b16 %v8268
    %v11025 = vunpack.c.l.b16 %v8269
    %v11026 = vunpack.c.h.b16 %v8269
    %v11027 = vunpack.c.l.b16 %v8270
    %v11028 = vunpack.c.h.b16 %v8270
    %v11029 = vunpack.c.l.b16 %v8271
    %v11030 = vunpack.c.h.b16 %v8271
    %v11031 = vunpack.c.l.b16 %v8272
    %v11032 = vunpack.c.l.b16 %v8273
    %v11033 = vunpack.c.h.b16 %v8273
    %v11034 = vunpack.c.l.b16 %v8274
    %v11035 = vunpack.c.h.b16 %v8274
    %v11036 = vunpack.c.l.b16 %v8275
    %v11037 = vunpack.c.h.b16 %v8275
    %v11038 = vunpack.c.l.b16 %v8276
    %v11039 = vunpack.c.h.b16 %v8276
    %v11040 = vunpack.c.l.b16 %v8277
    %v11041 = vunpack.c.h.b16 %v8277
    %v11042 = vunpack.c.l.b16 %v8278
    %v11043 = vunpack.c.h.b16 %v8278
    %v11044 = vunpack.c.l.b16 %v8279
    %v11045 = vunpack.c.h.b16 %v8279
    %v11046 = vunpack.c.l.b16 %v8280
    %v11047 = vunpack.c.h.b16 %v8280
    %v11048 = vunpack.c.l.b16 %v8281
    %v11049 = vunpack.c.h.b16 %v8281
    %v11050 = vunpack.c.l.b16 %v8282
    %v11051 = vunpack.c.h.b16 %v8282
    %v11052 = vunpack.c.l.b16 %v8283
    %v11053 = vunpack.c.h.b16 %v8283
    %v11054 = vunpack.c.l.b16 %v8284
    %v11055 = vunpack.c.h.b16 %v8284
    %v11056 = vunpack.c.l.b16 %v8285
    %v11057 = vunpack.c.h.b16 %v8285
    %v11058 = vunpack.c.l.b16 %v8286
    %v11059 = vunpack.c.h.b16 %v8286
    %v11060 = vunpack.c.l.b16 %v8287
    %v11061 = vunpack.c.l.b16 %v8288
    %v11062 = vunpack.c.h.b16 %v8288
    %v11063 = vunpack.c.l.b16 %v8289
    %v11064 = vunpack.c.h.b16 %v8289
    %v11065 = vunpack.c.l.b16 %v8290
    %v11066 = vunpack.c.h.b16 %v8290
    %v11067 = vunpack.c.l.b16 %v8291
    %v11068 = vunpack.c.h.b16 %v8291
    %v11069 = vunpack.c.l.b16 %v8292
    %v11070 = vunpack.c.h.b16 %v8292
    %v11071 = vunpack.c.l.b16 %v8293
    %v11072 = vunpack.c.h.b16 %v8293
    %v11073 = vunpack.c.l.b16 %v8294
    %v11074 = vunpack.c.h.b16 %v8294
    %v11075 = vunpack.c.l.b16 %v8295
    %v11076 = vunpack.c.h.b16 %v8295
    %v11077 = vunpack.c.l.b16 %v8296
    %v11078 = vunpack.c.h.b16 %v8296
    %v11079 = vunpack.c.l.b16 %v8297
    %v11080 = vunpack.c.h.b16 %v8297
    %v11081 = vunpack.c.l.b16 %v8298
    %v11082 = vunpack.c.h.b16 %v8298
    %v11083 = vunpack.c.l.b16 %v8299
    %v11084 = vunpack.c.h.b16 %v8299
    %v11085 = vunpack.c.l.b16 %v8300
    %v11086 = vunpack.c.h.b16 %v8300
    %v11087 = vunpack.c.l.b16 %v8301
    %v11088 = vunpack.c.h.b16 %v8301
    %v11089 = vunpack.c.l.b16 %v8302
    %v11090 = vunpack.c.l.b16 %v8303
    %v11091 = vunpack.c.h.b16 %v8303
    %v11092 = vunpack.c.l.b16 %v8304
    %v11093 = vunpack.c.h.b16 %v8304
    %v11094 = vunpack.c.l.b16 %v8305
    %v11095 = vunpack.c.h.b16 %v8305
    %v11096 = vunpack.c.l.b16 %v8306
    %v11097 = vunpack.c.h.b16 %v8306
    %v11098 = vunpack.c.l.b16 %v8307
    %v11099 = vunpack.c.h.b16 %v8307
    %v11100 = vunpack.c.l.b16 %v8308
    %v11101 = vunpack.c.h.b16 %v8308
    %v11102 = vunpack.c.l.b16 %v8309
    %v11103 = vunpack.c.h.b16 %v8309
    %v11104 = vunpack.c.l.b16 %v8310
    %v11105 = vunpack.c.h.b16 %v8310
    %v11106 = vunpack.c.l.b16 %v8311
    %v11107 = vunpack.c.h.b16 %v8311
    %v11108 = vunpack.c.l.b16 %v8312
    %v11109 = vunpack.c.h.b16 %v8312
    %v11110 = vunpack.c.l.b16 %v8313
    %v11111 = vunpack.c.h.b16 %v8313
    %v11112 = vunpack.c.l.b16 %v8314
    %v11113 = vunpack.c.h.b16 %v8314
    %v11114 = vunpack.c.l.b16 %v8315
    %v11115 = vunpack.c.h.b16 %v8315
    %v11116 = vunpack.c.l.b16 %v8316
    %v11117 = vunpack.c.h.b16 %v8316
    %v11118 = vunpack.c.l.b16 %v8317
    %v11119 = vunpack.c.l.b16 %v8318
    %v11120 = vunpack.c.h.b16 %v8318
    %v11121 = vunpack.c.l.b16 %v8319
    %v11122 = vunpack.c.h.b16 %v8319
    %v11123 = vunpack.c.l.b16 %v8320
    %v11124 = vunpack.c.h.b16 %v8320
    %v11125 = vunpack.c.l.b16 %v8321
    %v11126 = vunpack.c.h.b16 %v8321
    %v11127 = vunpack.c.l.b16 %v8322
    %v11128 = vunpack.c.h.b16 %v8322
    %v11129 = vunpack.c.l.b16 %v8323
    %v11130 = vunpack.c.h.b16 %v8323
    %v11131 = vunpack.c.l.b16 %v8324
    %v11132 = vunpack.c.h.b16 %v8324
    %v11133 = vunpack.c.l.b16 %v8325
    %v11134 = vunpack.c.h.b16 %v8325
    %v11135 = vunpack.c.l.b16 %v8326
    %v11136 = vunpack.c.h.b16 %v8326
    %v11137 = vunpack.c.l.b16 %v8327
    %v11138 = vunpack.c.h.b16 %v8327
    %v11139 = vunpack.c.l.b16 %v8328
    %v11140 = vunpack.c.h.b16 %v8328
    %v11141 = vunpack.c.l.b16 %v8329
    %v11142 = vunpack.c.h.b16 %v8329
    %v11143 = vunpack.c.l.b16 %v8330
    %v11144 = vunpack.c.h.b16 %v8330
    %v11145 = vunpack.c.l.b16 %v8331
    %v11146 = vunpack.c.h.b16 %v8331
    %v11147 = vunpack.c.l.b16 %v8332
    %v11148 = vunpack.c.l.b16 %v8333
    %v11149 = vunpack.c.h.b16 %v8333
    %v11150 = vunpack.c.l.b16 %v8334
    %v11151 = vunpack.c.h.b16 %v8334
    %v11152 = vunpack.c.l.b16 %v8335
    %v11153 = vunpack.c.h.b16 %v8335
    %v11154 = vunpack.c.l.b16 %v8336
    %v11155 = vunpack.c.h.b16 %v8336
    %v11156 = vunpack.c.l.b16 %v8337
    %v11157 = vunpack.c.h.b16 %v8337
    %v11158 = vunpack.c.l.b16 %v8338
    %v11159 = vunpack.c.h.b16 %v8338
    %v11160 = vunpack.c.l.b16 %v8339
    %v11161 = vunpack.c.h.b16 %v8339
    %v11162 = vunpack.c.l.b16 %v8340
    %v11163 = vunpack.c.h.b16 %v8340
    %v11164 = vunpack.c.l.b16 %v8341
    %v11165 = vunpack.c.h.b16 %v8341
    %v11166 = vunpack.c.l.b16 %v8342
    %v11167 = vunpack.c.h.b16 %v8342
    %v11168 = vunpack.c.l.b16 %v8343
    %v11169 = vunpack.c.h.b16 %v8343
    %v11170 = vunpack.c.l.b16 %v8344
    %v11171 = vunpack.c.h.b16 %v8344
    %v11172 = vunpack.c.l.b16 %v8345
    %v11173 = vunpack.c.h.b16 %v8345
    %v11174 = vunpack.c.l.b16 %v8346
    %v11175 = vunpack.c.h.b16 %v8346
    %v11176 = vunpack.c.l.b16 %v8347
    %v11177 = vunpack.c.l.b16 %v8348
    %v11178 = vunpack.c.h.b16 %v8348
    %v11179 = vunpack.c.l.b16 %v8349
    %v11180 = vunpack.c.h.b16 %v8349
    %v11181 = vunpack.c.l.b16 %v8350
    %v11182 = vunpack.c.h.b16 %v8350
    %v11183 = vunpack.c.l.b16 %v8351
    %v11184 = vunpack.c.h.b16 %v8351
    %v11185 = vunpack.c.l.b16 %v8352
    %v11186 = vunpack.c.h.b16 %v8352
    %v11187 = vunpack.c.l.b16 %v8353
    %v11188 = vunpack.c.h.b16 %v8353
    %v11189 = vunpack.c.l.b16 %v8354
    %v11190 = vunpack.c.h.b16 %v8354
    %v11191 = vunpack.c.l.b16 %v8355
    %v11192 = vunpack.c.h.b16 %v8355
    %v11193 = vunpack.c.l.b16 %v8356
    %v11194 = vunpack.c.h.b16 %v8356
    %v11195 = vunpack.c.l.b16 %v8357
    %v11196 = vunpack.c.h.b16 %v8357
    %v11197 = vunpack.c.l.b16 %v8358
    %v11198 = vunpack.c.h.b16 %v8358
    %v11199 = vunpack.c.l.b16 %v8359
    %v11200 = vunpack.c.h.b16 %v8359
    %v11201 = vunpack.c.l.b16 %v8360
    %v11202 = vunpack.c.h.b16 %v8360
    %v11203 = vunpack.c.l.b16 %v8361
    %v11204 = vunpack.c.h.b16 %v8361
    %v11205 = vunpack.c.l.b16 %v8362
    %v11206 = vunpack.c.l.b16 %v8363
    %v11207 = vunpack.c.h.b16 %v8363
    %v11208 = vunpack.c.l.b16 %v8364
    %v11209 = vunpack.c.h.b16 %v8364
    %v11210 = vunpack.c.l.b16 %v8365
    %v11211 = vunpack.c.h.b16 %v8365
    %v11212 = vunpack.c.l.b16 %v8366
    %v11213 = vunpack.c.h.b16 %v8366
    %v11214 = vunpack.c.l.b16 %v8367
    %v11215 = vunpack.c.h.b16 %v8367
    %v11216 = vunpack.c.l.b16 %v8368
    %v11217 = vunpack.c.h.b16 %v8368
    %v11218 = vunpack.c.l.b16 %v8369
    %v11219 = vunpack.c.h.b16 %v8369
    %v11220 = vunpack.c.l.b16 %v8370
    %v11221 = vunpack.c.h.b16 %v8370
    %v11222 = vunpack.c.l.b16 %v8371
    %v11223 = vunpack.c.h.b16 %v8371
    %v11224 = vunpack.c.l.b16 %v8372
    %v11225 = vunpack.c.h.b16 %v8372
    %v11226 = vunpack.c.l.b16 %v8373
    %v11227 = vunpack.c.h.b16 %v8373
    %v11228 = vunpack.c.l.b16 %v8374
    %v11229 = vunpack.c.h.b16 %v8374
    %v11230 = vunpack.c.l.b16 %v8375
    %v11231 = vunpack.c.h.b16 %v8375
    %v11232 = vunpack.c.l.b16 %v8376
    %v11233 = vunpack.c.h.b16 %v8376
    %v11234 = vunpack.c.l.b16 %v8377
    %v11235 = vunpack.c.l.b16 %v8378
    %v11236 = vunpack.c.h.b16 %v8378
    %v11237 = vunpack.c.l.b16 %v8379
    %v11238 = vunpack.c.h.b16 %v8379
    %v11239 = vunpack.c.l.b16 %v8380
    %v11240 = vunpack.c.h.b16 %v8380
    %v11241 = vunpack.c.l.b16 %v8381
    %v11242 = vunpack.c.h.b16 %v8381
    %v11243 = vunpack.c.l.b16 %v8382
    %v11244 = vunpack.c.h.b16 %v8382
    %v11245 = vunpack.c.l.b16 %v8383
    %v11246 = vunpack.c.h.b16 %v8383
    %v11247 = vunpack.c.l.b16 %v8384
    %v11248 = vunpack.c.h.b16 %v8384
    %v11249 = vunpack.c.l.b16 %v8385
    %v11250 = vunpack.c.h.b16 %v8385
    %v11251 = vunpack.c.l.b16 %v8386
    %v11252 = vunpack.c.h.b16 %v8386
    %v11253 = vunpack.c.l.b16 %v8387
    %v11254 = vunpack.c.h.b16 %v8387
    %v11255 = vunpack.c.l.b16 %v8388
    %v11256 = vunpack.c.h.b16 %v8388
    %v11257 = vunpack.c.l.b16 %v8389
    %v11258 = vunpack.c.h.b16 %v8389
    %v11259 = vunpack.c.l.b16 %v8390
    %v11260 = vunpack.c.h.b16 %v8390
    %v11261 = vunpack.c.l.b16 %v8391
    %v11262 = vunpack.c.h.b16 %v8391
    %v11263 = vunpack.c.l.b16 %v8392
    %v11264 = vunpack.c.l.b16 %v8393
    %v11265 = vunpack.c.h.b16 %v8393
    %v11266 = vunpack.c.l.b16 %v8394
    %v11267 = vunpack.c.h.b16 %v8394
    %v11268 = vunpack.c.l.b16 %v8395
    %v11269 = vunpack.c.h.b16 %v8395
    %v11270 = vunpack.c.l.b16 %v8396
    %v11271 = vunpack.c.h.b16 %v8396
    %v11272 = vunpack.c.l.b16 %v8397
    %v11273 = vunpack.c.h.b16 %v8397
    %v11274 = vunpack.c.l.b16 %v8398
    %v11275 = vunpack.c.h.b16 %v8398
    %v11276 = vunpack.c.l.b16 %v8399
    %v11277 = vunpack.c.h.b16 %v8399
    %v11278 = vunpack.c.l.b16 %v8400
    %v11279 = vunpack.c.h.b16 %v8400
    %v11280 = vunpack.c.l.b16 %v8401
    %v11281 = vunpack.c.h.b16 %v8401
    %v11282 = vunpack.c.l.b16 %v8402
    %v11283 = vunpack.c.h.b16 %v8402
    %v11284 = vunpack.c.l.b16 %v8403
    %v11285 = vunpack.c.h.b16 %v8403
    %v11286 = vunpack.c.l.b16 %v8404
    %v11287 = vunpack.c.h.b16 %v8404
    %v11288 = vunpack.c.l.b16 %v8405
    %v11289 = vunpack.c.h.b16 %v8405
    %v11290 = vunpack.c.l.b16 %v8406
    %v11291 = vunpack.c.h.b16 %v8406
    %v11292 = vunpack.c.l.b16 %v8407
    %v11293 = vunpack.c.l.b16 %v8408
    %v11294 = vunpack.c.h.b16 %v8408
    %v11295 = vunpack.c.l.b16 %v8409
    %v11296 = vunpack.c.h.b16 %v8409
    %v11297 = vunpack.c.l.b16 %v8410
    %v11298 = vunpack.c.h.b16 %v8410
    %v11299 = vunpack.c.l.b16 %v8411
    %v11300 = vunpack.c.h.b16 %v8411
    %v11301 = vunpack.c.l.b16 %v8412
    %v11302 = vunpack.c.h.b16 %v8412
    %v11303 = vunpack.c.l.b16 %v8413
    %v11304 = vunpack.c.h.b16 %v8413
    %v11305 = vunpack.c.l.b16 %v8414
    %v11306 = vunpack.c.h.b16 %v8414
    %v11307 = vunpack.c.l.b16 %v8415
    %v11308 = vunpack.c.h.b16 %v8415
    %v11309 = vunpack.c.l.b16 %v8416
    %v11310 = vunpack.c.h.b16 %v8416
    %v11311 = vunpack.c.l.b16 %v8417
    %v11312 = vunpack.c.h.b16 %v8417
    %v11313 = vunpack.c.l.b16 %v8418
    %v11314 = vunpack.c.h.b16 %v8418
    %v11315 = vunpack.c.l.b16 %v8419
    %v11316 = vunpack.c.h.b16 %v8419
    %v11317 = vunpack.c.l.b16 %v8420
    %v11318 = vunpack.c.h.b16 %v8420
    %v11319 = vunpack.c.l.b16 %v8421
    %v11320 = vunpack.c.h.b16 %v8421
    %v11321 = vunpack.c.l.b16 %v8422
    %v11322 = vunpack.c.l.b16 %v8423
    %v11323 = vunpack.c.h.b16 %v8423
    %v11324 = vunpack.c.l.b16 %v8424
    %v11325 = vunpack.c.h.b16 %v8424
    %v11326 = vunpack.c.l.b16 %v8425
    %v11327 = vunpack.c.h.b16 %v8425
    %v11328 = vunpack.c.l.b16 %v8426
    %v11329 = vunpack.c.h.b16 %v8426
    %v11330 = vunpack.c.l.b16 %v8427
    %v11331 = vunpack.c.h.b16 %v8427
    %v11332 = vunpack.c.l.b16 %v8428
    %v11333 = vunpack.c.h.b16 %v8428
    %v11334 = vunpack.c.l.b16 %v8429
    %v11335 = vunpack.c.h.b16 %v8429
    %v11336 = vunpack.c.l.b16 %v8430
    %v11337 = vunpack.c.h.b16 %v8430
    %v11338 = vunpack.c.l.b16 %v8431
    %v11339 = vunpack.c.h.b16 %v8431
    %v11340 = vunpack.c.l.b16 %v8432
    %v11341 = vunpack.c.h.b16 %v8432
    %v11342 = vunpack.c.l.b16 %v8433
    %v11343 = vunpack.c.h.b16 %v8433
    %v11344 = vunpack.c.l.b16 %v8434
    %v11345 = vunpack.c.h.b16 %v8434
    %v11346 = vunpack.c.l.b16 %v8435
    %v11347 = vunpack.c.h.b16 %v8435
    %v11348 = vunpack.c.l.b16 %v8436
    %v11349 = vunpack.c.h.b16 %v8436
    %v11350 = vunpack.c.l.b16 %v8437
    %v11351 = vunpack.c.l.b16 %v8438
    %v11352 = vunpack.c.h.b16 %v8438
    %v11353 = vunpack.c.l.b16 %v8439
    %v11354 = vunpack.c.h.b16 %v8439
    %v11355 = vunpack.c.l.b16 %v8440
    %v11356 = vunpack.c.h.b16 %v8440
    %v11357 = vunpack.c.l.b16 %v8441
    %v11358 = vunpack.c.h.b16 %v8441
    %v11359 = vunpack.c.l.b16 %v8442
    %v11360 = vunpack.c.h.b16 %v8442
    %v11361 = vunpack.c.l.b16 %v8443
    %v11362 = vunpack.c.h.b16 %v8443
    %v11363 = vunpack.c.l.b16 %v8444
    %v11364 = vunpack.c.h.b16 %v8444
    %v11365 = vunpack.c.l.b16 %v8445
    %v11366 = vunpack.c.h.b16 %v8445
    %v11367 = vunpack.c.l.b16 %v8446
    %v11368 = vunpack.c.h.b16 %v8446
    %v11369 = vunpack.c.l.b16 %v8447
    %v11370 = vunpack.c.h.b16 %v8447
    %v11371 = vunpack.c.l.b16 %v8448
    %v11372 = vunpack.c.h.b16 %v8448
    %v11373 = vunpack.c.l.b16 %v8449
    %v11374 = vunpack.c.h.b16 %v8449
    %v11375 = vunpack.c.l.b16 %v8450
    %v11376 = vunpack.c.h.b16 %v8450
    %v11377 = vunpack.c.l.b16 %v8451
    %v11378 = vunpack.c.h.b16 %v8451
    %v11379 = vunpack.c.l.b16 %v8452
    %v11380 = vunpack.c.l.b16 %v8453
    %v11381 = vunpack.c.h.b16 %v8453
    %v11382 = vunpack.c.l.b16 %v8454
    %v11383 = vunpack.c.h.b16 %v8454
    %v11384 = vunpack.c.l.b16 %v8455
    %v11385 = vunpack.c.h.b16 %v8455
    %v11386 = vunpack.c.l.b16 %v8456
    %v11387 = vunpack.c.h.b16 %v8456
    %v11388 = vunpack.c.l.b16 %v8457
    %v11389 = vunpack.c.h.b16 %v8457
    %v11390 = vunpack.c.l.b16 %v8458
    %v11391 = vunpack.c.h.b16 %v8458
    %v11392 = vunpack.c.l.b16 %v8459
    %v11393 = vunpack.c.h.b16 %v8459
    %v11394 = vunpack.c.l.b16 %v8460
    %v11395 = vunpack.c.h.b16 %v8460
    %v11396 = vunpack.c.l.b16 %v8461
    %v11397 = vunpack.c.h.b16 %v8461
    %v11398 = vunpack.c.l.b16 %v8462
    %v11399 = vunpack.c.h.b16 %v8462
    %v11400 = vunpack.c.l.b16 %v8463
    %v11401 = vunpack.c.h.b16 %v8463
    %v11402 = vunpack.c.l.b16 %v8464
    %v11403 = vunpack.c.h.b16 %v8464
    %v11404 = vunpack.c.l.b16 %v8465
    %v11405 = vunpack.c.h.b16 %v8465
    %v11406 = vunpack.c.l.b16 %v8466
    %v11407 = vunpack.c.h.b16 %v8466
    %v11408 = vunpack.c.l.b16 %v8467
    %v11409 = vunpack.c.l.b16 %v8468
    %v11410 = vunpack.c.h.b16 %v8468
    %v11411 = vunpack.c.l.b16 %v8469
    %v11412 = vunpack.c.h.b16 %v8469
    %v11413 = vunpack.c.l.b16 %v8470
    %v11414 = vunpack.c.h.b16 %v8470
    %v11415 = vunpack.c.l.b16 %v8471
    %v11416 = vunpack.c.h.b16 %v8471
    %v11417 = vunpack.c.l.b16 %v8472
    %v11418 = vunpack.c.h.b16 %v8472
    %v11419 = vunpack.c.l.b16 %v8473
    %v11420 = vunpack.c.h.b16 %v8473
    %v11421 = vunpack.c.l.b16 %v8474
    %v11422 = vunpack.c.h.b16 %v8474
    %v11423 = vunpack.c.l.b16 %v8475
    %v11424 = vunpack.c.h.b16 %v8475
    %v11425 = vunpack.c.l.b16 %v8476
    %v11426 = vunpack.c.h.b16 %v8476
    %v11427 = vunpack.c.l.b16 %v8477
    %v11428 = vunpack.c.h.b16 %v8477
    %v11429 = vunpack.c.l.b16 %v8478
    %v11430 = vunpack.c.h.b16 %v8478
    %v11431 = vunpack.c.l.b16 %v8479
    %v11432 = vunpack.c.h.b16 %v8479
    %v11433 = vunpack.c.l.b16 %v8480
    %v11434 = vunpack.c.h.b16 %v8480
    %v11435 = vunpack.c.l.b16 %v8481
    %v11436 = vunpack.c.h.b16 %v8481
    %v11437 = vunpack.c.l.b16 %v8482
    %v11438 = vunpack.c.l.b16 %v8483
    %v11439 = vunpack.c.h.b16 %v8483
    %v11440 = vunpack.c.l.b16 %v8484
    %v11441 = vunpack.c.h.b16 %v8484
    %v11442 = vunpack.c.l.b16 %v8485
    %v11443 = vunpack.c.h.b16 %v8485
    %v11444 = vunpack.c.l.b16 %v8486
    %v11445 = vunpack.c.h.b16 %v8486
    %v11446 = vunpack.c.l.b16 %v8487
    %v11447 = vunpack.c.h.b16 %v8487
    %v11448 = vunpack.c.l.b16 %v8488
    %v11449 = vunpack.c.h.b16 %v8488
    %v11450 = vunpack.c.l.b16 %v8489
    %v11451 = vunpack.c.h.b16 %v8489
    %v11452 = vunpack.c.l.b16 %v8490
    %v11453 = vunpack.c.h.b16 %v8490
    %v11454 = vunpack.c.l.b16 %v8491
    %v11455 = vunpack.c.h.b16 %v8491
    %v11456 = vunpack.c.l.b16 %v8492
    %v11457 = vunpack.c.h.b16 %v8492
    %v11458 = vunpack.c.l.b16 %v8493
    %v11459 = vunpack.c.h.b16 %v8493
    %v11460 = vunpack.c.l.b16 %v8494
    %v11461 = vunpack.c.h.b16 %v8494
    %v11462 = vunpack.c.l.b16 %v8495
    %v11463 = vunpack.c.h.b16 %v8495
    %v11464 = vunpack.c.l.b16 %v8496
    %v11465 = vunpack.c.h.b16 %v8496
    %v11466 = vunpack.c.l.b16 %v8497
    %v11467 = vpack.c.b16 %v9640, %v9611
    %v11468 = vpack.c.b16 %v9641, %v9612
    %v11469 = vpack.c.b16 %v9642, %v9613
    %v11470 = vpack.c.b16 %v9643, %v9614
    %v11471 = vpack.c.b16 %v9644, %v9615
    %v11472 = vpack.c.b16 %v9645, %v9616
    %v11473 = vpack.c.b16 %v9646, %v9617
    %v11474 = vpack.c.b16 %v9647, %v9618
    %v11475 = vpack.c.b16 %v9648, %v9619
    %v11476 = vpack.c.b16 %v9649, %v9620
    %v11477 = vpack.c.b16 %v9650, %v9621
    %v11478 = vpack.c.b16 %v9651, %v9622
    %v11479 = vpack.c.b16 %v9652, %v9623
    %v11480 = vpack.c.b16 %v9653, %v9624
    %v11481 = vpack.c.b16 %v9654, %v9625
    %v11482 = vpack.c.b16 %v9655, %v9626
    %v11483 = vpack.c.b16 %v9656, %v9627
    %v11484 = vpack.c.b16 %v9657, %v9628
    %v11485 = vpack.c.b16 %v9658, %v9629
    %v11486 = vpack.c.b16 %v9659, %v9630
    %v11487 = vpack.c.b16 %v9660, %v9631
    %v11488 = vpack.c.b16 %v9661, %v9632
    %v11489 = vpack.c.b16 %v9662, %v9633
    %v11490 = vpack.c.b16 %v9663, %v9634
    %v11491 = vpack.c.b16 %v9664, %v9635
    %v11492 = vpack.c.b16 %v9665, %v9636
    %v11493 = vpack.c.b16 %v9666, %v9637
    %v11494 = vpack.c.b16 %v9667, %v9638
    %v11495 = vpack.c.b16 %v9668, %v9639
    %v11496 = vpack.c.b16 %v9698, %v9669
    %v11497 = vpack.c.b16 %v9699, %v9670
    %v11498 = vpack.c.b16 %v9700, %v9671
    %v11499 = vpack.c.b16 %v9701, %v9672
    %v11500 = vpack.c.b16 %v9702, %v9673
    %v11501 = vpack.c.b16 %v9703, %v9674
    %v11502 = vpack.c.b16 %v9704, %v9675
    %v11503 = vpack.c.b16 %v9705, %v9676
    %v11504 = vpack.c.b16 %v9706, %v9677
    %v11505 = vpack.c.b16 %v9707, %v9678
    %v11506 = vpack.c.b16 %v9708, %v9679
    %v11507 = vpack.c.b16 %v9709, %v9680
    %v11508 = vpack.c.b16 %v9710, %v9681
    %v11509 = vpack.c.b16 %v9711, %v9682
    %v11510 = vpack.c.b16 %v9712, %v9683
    %v11511 = vpack.c.b16 %v9713, %v9684
    %v11512 = vpack.c.b16 %v9714, %v9685
    %v11513 = vpack.c.b16 %v9715, %v9686
    %v11514 = vpack.c.b16 %v9716, %v9687
    %v11515 = vpack.c.b16 %v9717, %v9688
    %v11516 = vpack.c.b16 %v9718, %v9689
    %v11517 = vpack.c.b16 %v9719, %v9690
    %v11518 = vpack.c.b16 %v9720, %v9691
    %v11519 = vpack.c.b16 %v9721, %v9692
    %v11520 = vpack.c.b16 %v9722, %v9693
    %v11521 = vpack.c.b16 %v9723, %v9694
    %v11522 = vpack.c.b16 %v9724, %v9695
    %v11523 = vpack.c.b16 %v9725, %v9696
    %v11524 = vpack.c.b16 %v9726, %v9697
    %v11525 = vpack.c.b16 %v9756, %v9727
    %v11526 = vpack.c.b16 %v9757, %v9728
    %v11527 = vpack.c.b16 %v9758, %v9729
    %v11528 = vpack.c.b16 %v9759, %v9730
    %v11529 = vpack.c.b16 %v9760, %v9731
    %v11530 = vpack.c.b16 %v9761, %v9732
    %v11531 = vpack.c.b16 %v9762, %v9733
    %v11532 = vpack.c.b16 %v9763, %v9734
    %v11533 = vpack.c.b16 %v9764, %v9735
    %v11534 = vpack.c.b16 %v9765, %v9736
    %v11535 = vpack.c.b16 %v9766, %v9737
    %v11536 = vpack.c.b16 %v9767, %v9738
    %v11537 = vpack.c.b16 %v9768, %v9739
    %v11538 = vpack.c.b16 %v9769, %v9740
    %v11539 = vpack.c.b16 %v9770, %v9741
    %v11540 = vpack.c.b16 %v9771, %v9742
    %v11541 = vpack.c.b16 %v9772, %v9743
    %v11542 = vpack.c.b16 %v9773, %v9744
    %v11543 = vpack.c.b16 %v9774, %v9745
    %v11544 = vpack.c.b16 %v9775, %v9746
    %v11545 = vpack.c.b16 %v9776, %v9747
    %v11546 = vpack.c.b16 %v9777, %v9748
    %v11547 = vpack.c.b16 %v9778, %v9749
    %v11548 = vpack.c.b16 %v9779, %v9750
    %v11549 = vpack.c.b16 %v9780, %v9751
    %v11550 = vpack.c.b16 %v9781, %v9752
    %v11551 = vpack.c.b16 %v9782, %v9753
    %v11552 = vpack.c.b16 %v9783, %v9754
    %v11553 = vpack.c.b16 %v9784, %v9755
    %v11554 = vpack.c.b16 %v9814, %v9785
    %v11555 = vpack.c.b16 %v9815, %v9786
    %v11556 = vpack.c.b16 %v9816, %v9787
    %v11557 = vpack.c.b16 %v9817, %v9788
    %v11558 = vpack.c.b16 %v9818, %v9789
    %v11559 = vpack.c.b16 %v9819, %v9790
    %v11560 = vpack.c.b16 %v9820, %v9791
    %v11561 = vpack.c.b16 %v9821, %v9792
    %v11562 = vpack.c.b16 %v9822, %v9793
    %v11563 = vpack.c.b16 %v9823, %v9794
    %v11564 = vpack.c.b16 %v9824, %v9795
    %v11565 = vpack.c.b16 %v9825, %v9796
    %v11566 = vpack.c.b16 %v9826, %v9797
    %v11567 = vpack.c.b16 %v9827, %v9798
    %v11568 = vpack.c.b16 %v9828, %v9799
    %v11569 = vpack.c.b16 %v9829, %v9800
    %v11570 = vpack.c.b16 %v9830, %v9801
    %v11571 = vpack.c.b16 %v9831, %v9802
    %v11572 = vpack.c.b16 %v9832, %v9803
    %v11573 = vpack.c.b16 %v9833, %v9804
    %v11574 = vpack.c.b16 %v9834, %v9805
    %v11575 = vpack.c.b16 %v9835, %v9806
    %v11576 = vpack.c.b16 %v9836, %v9807
    %v11577 = vpack.c.b16 %v9837, %v9808
    %v11578 = vpack.c.b16 %v9838, %v9809
    %v11579 = vpack.c.b16 %v9839, %v9810
    %v11580 = vpack.c.b16 %v9840, %v9811
    %v11581 = vpack.c.b16 %v9841, %v9812
    %v11582 = vpack.c.b16 %v9842, %v9813
    %v11583 = vpack.c.b16 %v9872, %v9843
    %v11584 = vpack.c.b16 %v9873, %v9844
    %v11585 = vpack.c.b16 %v9874, %v9845
    %v11586 = vpack.c.b16 %v9875, %v9846
    %v11587 = vpack.c.b16 %v9876, %v9847
    %v11588 = vpack.c.b16 %v9877, %v9848
    %v11589 = vpack.c.b16 %v9878, %v9849
    %v11590 = vpack.c.b16 %v9879, %v9850
    %v11591 = vpack.c.b16 %v9880, %v9851
    %v11592 = vpack.c.b16 %v9881, %v9852
    %v11593 = vpack.c.b16 %v9882, %v9853
    %v11594 = vpack.c.b16 %v9883, %v9854
    %v11595 = vpack.c.b16 %v9884, %v9855
    %v11596 = vpack.c.b16 %v9885, %v9856
    %v11597 = vpack.c.b16 %v9886, %v9857
    %v11598 = vpack.c.b16 %v9887, %v9858
    %v11599 = vpack.c.b16 %v9888, %v9859
    %v11600 = vpack.c.b16 %v9889, %v9860
    %v11601 = vpack.c.b16 %v9890, %v9861
    %v11602 = vpack.c.b16 %v9891, %v9862
    %v11603 = vpack.c.b16 %v9892, %v9863
    %v11604 = vpack.c.b16 %v9893, %v9864
    %v11605 = vpack.c.b16 %v9894, %v9865
    %v11606 = vpack.c.b16 %v9895, %v9866
    %v11607 = vpack.c.b16 %v9896, %v9867
    %v11608 = vpack.c.b16 %v9897, %v9868
    %v11609 = vpack.c.b16 %v9898, %v9869
    %v11610 = vpack.c.b16 %v9899, %v9870
    %v11611 = vpack.c.b16 %v9900, %v9871
    %v11612 = vpack.c.b16 %v9930, %v9901
    %v11613 = vpack.c.b16 %v9931, %v9902
    %v11614 = vpack.c.b16 %v9932, %v9903
    %v11615 = vpack.c.b16 %v9933, %v9904
    %v11616 = vpack.c.b16 %v9934, %v9905
    %v11617 = vpack.c.b16 %v9935, %v9906
    %v11618 = vpack.c.b16 %v9936, %v9907
    %v11619 = vpack.c.b16 %v9937, %v9908
    %v11620 = vpack.c.b16 %v9938, %v9909
    %v11621 = vpack.c.b16 %v9939, %v9910
    %v11622 = vpack.c.b16 %v9940, %v9911
    %v11623 = vpack.c.b16 %v9941, %v9912
    %v11624 = vpack.c.b16 %v9942, %v9913
    %v11625 = vpack.c.b16 %v9943, %v9914
    %v11626 = vpack.c.b16 %v9944, %v9915
    %v11627 = vpack.c.b16 %v9945, %v9916
    %v11628 = vpack.c.b16 %v9946, %v9917
    %v11629 = vpack.c.b16 %v9947, %v9918
    %v11630 = vpack.c.b16 %v9948, %v9919
    %v11631 = vpack.c.b16 %v9949, %v9920
    %v11632 = vpack.c.b16 %v9950, %v9921
    %v11633 = vpack.c.b16 %v9951, %v9922
    %v11634 = vpack.c.b16 %v9952, %v9923
    %v11635 = vpack.c.b16 %v9953, %v9924
    %v11636 = vpack.c.b16 %v9954, %v9925
    %v11637 = vpack.c.b16 %v9955, %v9926
    %v11638 = vpack.c.b16 %v9956, %v9927
    %v11639 = vpack.c.b16 %v9957, %v9928
    %v11640 = vpack.c.b16 %v9958, %v9929
    %v11641 = vpack.c.b16 %v9988, %v9959
    %v11642 = vpack.c.b16 %v9989, %v9960
    %v11643 = vpack.c.b16 %v9990, %v9961
    %v11644 = vpack.c.b16 %v9991, %v9962
    %v11645 = vpack.c.b16 %v9992, %v9963
    %v11646 = vpack.c.b16 %v9993, %v9964
    %v11647 = vpack.c.b16 %v9994, %v9965
    %v11648 = vpack.c.b16 %v9995, %v9966
    %v11649 = vpack.c.b16 %v9996, %v9967
    %v11650 = vpack.c.b16 %v9997, %v9968
    %v11651 = vpack.c.b16 %v9998, %v9969
    %v11652 = vpack.c.b16 %v9999, %v9970
    %v11653 = vpack.c.b16 %v10000, %v9971
    %v11654 = vpack.c.b16 %v10001, %v9972
    %v11655 = vpack.c.b16 %v10002, %v9973
    %v11656 = vpack.c.b16 %v10003, %v9974
    %v11657 = vpack.c.b16 %v10004, %v9975
    %v11658 = vpack.c.b16 %v10005, %v9976
    %v11659 = vpack.c.b16 %v10006, %v9977
    %v11660 = vpack.c.b16 %v10007, %v9978
    %v11661 = vpack.c.b16 %v10008, %v9979
    %v11662 = vpack.c.b16 %v10009, %v9980
    %v11663 = vpack.c.b16 %v10010, %v9981
    %v11664 = vpack.c.b16 %v10011, %v9982
    %v11665 = vpack.c.b16 %v10012, %v9983
    %v11666 = vpack.c.b16 %v10013, %v9984
    %v11667 = vpack.c.b16 %v10014, %v9985
    %v11668 = vpack.c.b16 %v10015, %v9986
    %v11669 = vpack.c.b16 %v10016, %v9987
    %v11670 = vpack.c.b16 %v10046, %v10017
    %v11671 = vpack.c.b16 %v10047, %v10018
    %v11672 = vpack.c.b16 %v10048, %v10019
    %v11673 = vpack.c.b16 %v10049, %v10020
    %v11674 = vpack.c.b16 %v10050, %v10021
    %v11675 = vpack.c.b16 %v10051, %v10022
    %v11676 = vpack.c.b16 %v10052, %v10023
    %v11677 = vpack.c.b16 %v10053, %v10024
    %v11678 = vpack.c.b16 %v10054, %v10025
    %v11679 = vpack.c.b16 %v10055, %v10026
    %v11680 = vpack.c.b16 %v10056, %v10027
    %v11681 = vpack.c.b16 %v10057, %v10028
    %v11682 = vpack.c.b16 %v10058, %v10029
    %v11683 = vpack.c.b16 %v10059, %v10030
    %v11684 = vpack.c.b16 %v10060, %v10031
    %v11685 = vpack.c.b16 %v10061, %v10032
    %v11686 = vpack.c.b16 %v10062, %v10033
    %v11687 = vpack.c.b16 %v10063, %v10034
    %v11688 = vpack.c.b16 %v10064, %v10035
    %v11689 = vpack.c.b16 %v10065, %v10036
    %v11690 = vpack.c.b16 %v10066, %v10037
    %v11691 = vpack.c.b16 %v10067, %v10038
    %v11692 = vpack.c.b16 %v10068, %v10039
    %v11693 = vpack.c.b16 %v10069, %v10040
    %v11694 = vpack.c.b16 %v10070, %v10041
    %v11695 = vpack.c.b16 %v10071, %v10042
    %v11696 = vpack.c.b16 %v10072, %v10043
    %v11697 = vpack.c.b16 %v10073, %v10044
    %v11698 = vpack.c.b16 %v10074, %v10045
    %v11699 = vpack.c.b16 %v10104, %v10075
    %v11700 = vpack.c.b16 %v10105, %v10076
    %v11701 = vpack.c.b16 %v10106, %v10077
    %v11702 = vpack.c.b16 %v10107, %v10078
    %v11703 = vpack.c.b16 %v10108, %v10079
    %v11704 = vpack.c.b16 %v10109, %v10080
    %v11705 = vpack.c.b16 %v10110, %v10081
    %v11706 = vpack.c.b16 %v10111, %v10082
    %v11707 = vpack.c.b16 %v10112, %v10083
    %v11708 = vpack.c.b16 %v10113, %v10084
    %v11709 = vpack.c.b16 %v10114, %v10085
    %v11710 = vpack.c.b16 %v10115, %v10086
    %v11711 = vpack.c.b16 %v10116, %v10087
    %v11712 = vpack.c.b16 %v10117, %v10088
    %v11713 = vpack.c.b16 %v10118, %v10089
    %v11714 = vpack.c.b16 %v10119, %v10090
    %v11715 = vpack.c.b16 %v10120, %v10091
    %v11716 = vpack.c.b16 %v10121, %v10092
    %v11717 = vpack.c.b16 %v10122, %v10093
    %v11718 = vpack.c.b16 %v10123, %v10094
    %v11719 = vpack.c.b16 %v10124, %v10095
    %v11720 = vpack.c.b16 %v10125, %v10096
    %v11721 = vpack.c.b16 %v10126, %v10097
    %v11722 = vpack.c.b16 %v10127, %v10098
    %v11723 = vpack.c.b16 %v10128, %v10099
    %v11724 = vpack.c.b16 %v10129, %v10100
    %v11725 = vpack.c.b16 %v10130, %v10101
    %v11726 = vpack.c.b16 %v10131, %v10102
    %v11727 = vpack.c.b16 %v10132, %v10103
    %v11728 = vpack.c.b16 %v10162, %v10133
    %v11729 = vpack.c.b16 %v10163, %v10134
    %v11730 = vpack.c.b16 %v10164, %v10135
    %v11731 = vpack.c.b16 %v10165, %v10136
    %v11732 = vpack.c.b16 %v10166, %v10137
    %v11733 = vpack.c.b16 %v10167, %v10138
    %v11734 = vpack.c.b16 %v10168, %v10139
    %v11735 = vpack.c.b16 %v10169, %v10140
    %v11736 = vpack.c.b16 %v10170, %v10141
    %v11737 = vpack.c.b16 %v10171, %v10142
    %v11738 = vpack.c.b16 %v10172, %v10143
    %v11739 = vpack.c.b16 %v10173, %v10144
    %v11740 = vpack.c.b16 %v10174, %v10145
    %v11741 = vpack.c.b16 %v10175, %v10146
    %v11742 = vpack.c.b16 %v10176, %v10147
    %v11743 = vpack.c.b16 %v10177, %v10148
    %v11744 = vpack.c.b16 %v10178, %v10149
    %v11745 = vpack.c.b16 %v10179, %v10150
    %v11746 = vpack.c.b16 %v10180, %v10151
    %v11747 = vpack.c.b16 %v10181, %v10152
    %v11748 = vpack.c.b16 %v10182, %v10153
    %v11749 = vpack.c.b16 %v10183, %v10154
    %v11750 = vpack.c.b16 %v10184, %v10155
    %v11751 = vpack.c.b16 %v10185, %v10156
    %v11752 = vpack.c.b16 %v10186, %v10157
    %v11753 = vpack.c.b16 %v10187, %v10158
    %v11754 = vpack.c.b16 %v10188, %v10159
    %v11755 = vpack.c.b16 %v10189, %v10160
    %v11756 = vpack.c.b16 %v10190, %v10161
    %v11757 = vpack.c.b16 %v10220, %v10191
    %v11758 = vpack.c.b16 %v10221, %v10192
    %v11759 = vpack.c.b16 %v10222, %v10193
    %v11760 = vpack.c.b16 %v10223, %v10194
    %v11761 = vpack.c.b16 %v10224, %v10195
    %v11762 = vpack.c.b16 %v10225, %v10196
    %v11763 = vpack.c.b16 %v10226, %v10197
    %v11764 = vpack.c.b16 %v10227, %v10198
    %v11765 = vpack.c.b16 %v10228, %v10199
    %v11766 = vpack.c.b16 %v10229, %v10200
    %v11767 = vpack.c.b16 %v10230, %v10201
    %v11768 = vpack.c.b16 %v10231, %v10202
    %v11769 = vpack.c.b16 %v10232, %v10203
    %v11770 = vpack.c.b16 %v10233, %v10204
    %v11771 = vpack.c.b16 %v10234, %v10205
    %v11772 = vpack.c.b16 %v10235, %v10206
    %v11773 = vpack.c.b16 %v10236, %v10207
    %v11774 = vpack.c.b16 %v10237, %v10208
    %v11775 = vpack.c.b16 %v10238, %v10209
    %v11776 = vpack.c.b16 %v10239, %v10210
    %v11777 = vpack.c.b16 %v10240, %v10211
    %v11778 = vpack.c.b16 %v10241, %v10212
    %v11779 = vpack.c.b16 %v10242, %v10213
    %v11780 = vpack.c.b16 %v10243, %v10214
    %v11781 = vpack.c.b16 %v10244, %v10215
    %v11782 = vpack.c.b16 %v10245, %v10216
    %v11783 = vpack.c.b16 %v10246, %v10217
    %v11784 = vpack.c.b16 %v10247, %v10218
    %v11785 = vpack.c.b16 %v10248, %v10219
    %v11786 = vpack.c.b16 %v10278, %v10249
    %v11787 = vpack.c.b16 %v10279, %v10250
    %v11788 = vpack.c.b16 %v10280, %v10251
    %v11789 = vpack.c.b16 %v10281, %v10252
    %v11790 = vpack.c.b16 %v10282, %v10253
    %v11791 = vpack.c.b16 %v10283, %v10254
    %v11792 = vpack.c.b16 %v10284, %v10255
    %v11793 = vpack.c.b16 %v10285, %v10256
    %v11794 = vpack.c.b16 %v10286, %v10257
    %v11795 = vpack.c.b16 %v10287, %v10258
    %v11796 = vpack.c.b16 %v10288, %v10259
    %v11797 = vpack.c.b16 %v10289, %v10260
    %v11798 = vpack.c.b16 %v10290, %v10261
    %v11799 = vpack.c.b16 %v10291, %v10262
    %v11800 = vpack.c.b16 %v10292, %v10263
    %v11801 = vpack.c.b16 %v10293, %v10264
    %v11802 = vpack.c.b16 %v10294, %v10265
    %v11803 = vpack.c.b16 %v10295, %v10266
    %v11804 = vpack.c.b16 %v10296, %v10267
    %v11805 = vpack.c.b16 %v10297, %v10268
    %v11806 = vpack.c.b16 %v10298, %v10269
    %v11807 = vpack.c.b16 %v10299, %v10270
    %v11808 = vpack.c.b16 %v10300, %v10271
    %v11809 = vpack.c.b16 %v10301, %v10272
    %v11810 = vpack.c.b16 %v10302, %v10273
    %v11811 = vpack.c.b16 %v10303, %v10274
    %v11812 = vpack.c.b16 %v10304, %v10275
    %v11813 = vpack.c.b16 %v10305, %v10276
    %v11814 = vpack.c.b16 %v10306, %v10277
    %v11815 = vpack.c.b16 %v10336, %v10307
    %v11816 = vpack.c.b16 %v10337, %v10308
    %v11817 = vpack.c.b16 %v10338, %v10309
    %v11818 = vpack.c.b16 %v10339, %v10310
    %v11819 = vpack.c.b16 %v10340, %v10311
    %v11820 = vpack.c.b16 %v10341, %v10312
    %v11821 = vpack.c.b16 %v10342, %v10313
    %v11822 = vpack.c.b16 %v10343, %v10314
    %v11823 = vpack.c.b16 %v10344, %v10315
    %v11824 = vpack.c.b16 %v10345, %v10316
    %v11825 = vpack.c.b16 %v10346, %v10317
    %v11826 = vpack.c.b16 %v10347, %v10318
    %v11827 = vpack.c.b16 %v10348, %v10319
    %v11828 = vpack.c.b16 %v10349, %v10320
    %v11829 = vpack.c.b16 %v10350, %v10321
    %v11830 = vpack.c.b16 %v10351, %v10322
    %v11831 = vpack.c.b16 %v10352, %v10323
    %v11832 = vpack.c.b16 %v10353, %v10324
    %v11833 = vpack.c.b16 %v10354, %v10325
    %v11834 = vpack.c.b16 %v10355, %v10326
    %v11835 = vpack.c.b16 %v10356, %v10327
    %v11836 = vpack.c.b16 %v10357, %v10328
    %v11837 = vpack.c.b16 %v10358, %v10329
    %v11838 = vpack.c.b16 %v10359, %v10330
    %v11839 = vpack.c.b16 %v10360, %v10331
    %v11840 = vpack.c.b16 %v10361, %v10332
    %v11841 = vpack.c.b16 %v10362, %v10333
    %v11842 = vpack.c.b16 %v10363, %v10334
    %v11843 = vpack.c.b16 %v10364, %v10335
    %v11844 = vpack.c.b16 %v10394, %v10365
    %v11845 = vpack.c.b16 %v10395, %v10366
    %v11846 = vpack.c.b16 %v10396, %v10367
    %v11847 = vpack.c.b16 %v10397, %v10368
    %v11848 = vpack.c.b16 %v10398, %v10369
    %v11849 = vpack.c.b16 %v10399, %v10370
    %v11850 = vpack.c.b16 %v10400, %v10371
    %v11851 = vpack.c.b16 %v10401, %v10372
    %v11852 = vpack.c.b16 %v10402, %v10373
    %v11853 = vpack.c.b16 %v10403, %v10374
    %v11854 = vpack.c.b16 %v10404, %v10375
    %v11855 = vpack.c.b16 %v10405, %v10376
    %v11856 = vpack.c.b16 %v10406, %v10377
    %v11857 = vpack.c.b16 %v10407, %v10378
    %v11858 = vpack.c.b16 %v10408, %v10379
    %v11859 = vpack.c.b16 %v10409, %v10380
    %v11860 = vpack.c.b16 %v10410, %v10381
    %v11861 = vpack.c.b16 %v10411, %v10382
    %v11862 = vpack.c.b16 %v10412, %v10383
    %v11863 = vpack.c.b16 %v10413, %v10384
    %v11864 = vpack.c.b16 %v10414, %v10385
    %v11865 = vpack.c.b16 %v10415, %v10386
    %v11866 = vpack.c.b16 %v10416, %v10387
    %v11867 = vpack.c.b16 %v10417, %v10388
    %v11868 = vpack.c.b16 %v10418, %v10389
    %v11869 = vpack.c.b16 %v10419, %v10390
    %v11870 = vpack.c.b16 %v10420, %v10391
    %v11871 = vpack.c.b16 %v10421, %v10392
    %v11872 = vpack.c.b16 %v10422, %v10393
    %v11873 = vpack.c.b16 %v10452, %v10423
    %v11874 = vpack.c.b16 %v10453, %v10424
    %v11875 = vpack.c.b16 %v10454, %v10425
    %v11876 = vpack.c.b16 %v10455, %v10426
    %v11877 = vpack.c.b16 %v10456, %v10427
    %v11878 = vpack.c.b16 %v10457, %v10428
    %v11879 = vpack.c.b16 %v10458, %v10429
    %v11880 = vpack.c.b16 %v10459, %v10430
    %v11881 = vpack.c.b16 %v10460, %v10431
    %v11882 = vpack.c.b16 %v10461, %v10432
    %v11883 = vpack.c.b16 %v10462, %v10433
    %v11884 = vpack.c.b16 %v10463, %v10434
    %v11885 = vpack.c.b16 %v10464, %v10435
    %v11886 = vpack.c.b16 %v10465, %v10436
    %v11887 = vpack.c.b16 %v10466, %v10437
    %v11888 = vpack.c.b16 %v10467, %v10438
    %v11889 = vpack.c.b16 %v10468, %v10439
    %v11890 = vpack.c.b16 %v10469, %v10440
    %v11891 = vpack.c.b16 %v10470, %v10441
    %v11892 = vpack.c.b16 %v10471, %v10442
    %v11893 = vpack.c.b16 %v10472, %v10443
    %v11894 = vpack.c.b16 %v10473, %v10444
    %v11895 = vpack.c.b16 %v10474, %v10445
    %v11896 = vpack.c.b16 %v10475, %v10446
    %v11897 = vpack.c.b16 %v10476, %v10447
    %v11898 = vpack.c.b16 %v10477, %v10448
    %v11899 = vpack.c.b16 %v10478, %v10449
    %v11900 = vpack.c.b16 %v10479, %v10450
    %v11901 = vpack.c.b16 %v10480, %v10451
    %v11902 = vpack.c.b16 %v10510, %v10481
    %v11903 = vpack.c.b16 %v10511, %v10482
    %v11904 = vpack.c.b16 %v10512, %v10483
    %v11905 = vpack.c.b16 %v10513, %v10484
    %v11906 = vpack.c.b16 %v10514, %v10485
    %v11907 = vpack.c.b16 %v10515, %v10486
    %v11908 = vpack.c.b16 %v10516, %v10487
    %v11909 = vpack.c.b16 %v10517, %v10488
    %v11910 = vpack.c.b16 %v10518, %v10489
    %v11911 = vpack.c.b16 %v10519, %v10490
    %v11912 = vpack.c.b16 %v10520, %v10491
    %v11913 = vpack.c.b16 %v10521, %v10492
    %v11914 = vpack.c.b16 %v10522, %v10493
    %v11915 = vpack.c.b16 %v10523, %v10494
    %v11916 = vpack.c.b16 %v10524, %v10495
    %v11917 = vpack.c.b16 %v10525, %v10496
    %v11918 = vpack.c.b16 %v10526, %v10497
    %v11919 = vpack.c.b16 %v10527, %v10498
    %v11920 = vpack.c.b16 %v10528, %v10499
    %v11921 = vpack.c.b16 %v10529, %v10500
    %v11922 = vpack.c.b16 %v10530, %v10501
    %v11923 = vpack.c.b16 %v10531, %v10502
    %v11924 = vpack.c.b16 %v10532, %v10503
    %v11925 = vpack.c.b16 %v10533, %v10504
    %v11926 = vpack.c.b16 %v10534, %v10505
    %v11927 = vpack.c.b16 %v10535, %v10506
    %v11928 = vpack.c.b16 %v10536, %v10507
    %v11929 = vpack.c.b16 %v10537, %v10508
    %v11930 = vpack.c.b16 %v10538, %v10509
    %v11931 = vpack.c.b16 %v10568, %v10539
    %v11932 = vpack.c.b16 %v10569, %v10540
    %v11933 = vpack.c.b16 %v10570, %v10541
    %v11934 = vpack.c.b16 %v10571, %v10542
    %v11935 = vpack.c.b16 %v10572, %v10543
    %v11936 = vpack.c.b16 %v10573, %v10544
    %v11937 = vpack.c.b16 %v10574, %v10545
    %v11938 = vpack.c.b16 %v10575, %v10546
    %v11939 = vpack.c.b16 %v10576, %v10547
    %v11940 = vpack.c.b16 %v10577, %v10548
    %v11941 = vpack.c.b16 %v10578, %v10549
    %v11942 = vpack.c.b16 %v10579, %v10550
    %v11943 = vpack.c.b16 %v10580, %v10551
    %v11944 = vpack.c.b16 %v10581, %v10552
    %v11945 = vpack.c.b16 %v10582, %v10553
    %v11946 = vpack.c.b16 %v10583, %v10554
    %v11947 = vpack.c.b16 %v10584, %v10555
    %v11948 = vpack.c.b16 %v10585, %v10556
    %v11949 = vpack.c.b16 %v10586, %v10557
    %v11950 = vpack.c.b16 %v10587, %v10558
    %v11951 = vpack.c.b16 %v10588, %v10559
    %v11952 = vpack.c.b16 %v10589, %v10560
    %v11953 = vpack.c.b16 %v10590, %v10561
    %v11954 = vpack.c.b16 %v10591, %v10562
    %v11955 = vpack.c.b16 %v10592, %v10563
    %v11956 = vpack.c.b16 %v10593, %v10564
    %v11957 = vpack.c.b16 %v10594, %v10565
    %v11958 = vpack.c.b16 %v10595, %v10566
    %v11959 = vpack.c.b16 %v10596, %v10567
    %v11960 = vpack.c.b16 %v10626, %v10597
    %v11961 = vpack.c.b16 %v10627, %v10598
    %v11962 = vpack.c.b16 %v10628, %v10599
    %v11963 = vpack.c.b16 %v10629, %v10600
    %v11964 = vpack.c.b16 %v10630, %v10601
    %v11965 = vpack.c.b16 %v10631, %v10602
    %v11966 = vpack.c.b16 %v10632, %v10603
    %v11967 = vpack.c.b16 %v10633, %v10604
    %v11968 = vpack.c.b16 %v10634, %v10605
    %v11969 = vpack.c.b16 %v10635, %v10606
    %v11970 = vpack.c.b16 %v10636, %v10607
    %v11971 = vpack.c.b16 %v10637, %v10608
    %v11972 = vpack.c.b16 %v10638, %v10609
    %v11973 = vpack.c.b16 %v10639, %v10610
    %v11974 = vpack.c.b16 %v10640, %v10611
    %v11975 = vpack.c.b16 %v10641, %v10612
    %v11976 = vpack.c.b16 %v10642, %v10613
    %v11977 = vpack.c.b16 %v10643, %v10614
    %v11978 = vpack.c.b16 %v10644, %v10615
    %v11979 = vpack.c.b16 %v10645, %v10616
    %v11980 = vpack.c.b16 %v10646, %v10617
    %v11981 = vpack.c.b16 %v10647, %v10618
    %v11982 = vpack.c.b16 %v10648, %v10619
    %v11983 = vpack.c.b16 %v10649, %v10620
    %v11984 = vpack.c.b16 %v10650, %v10621
    %v11985 = vpack.c.b16 %v10651, %v10622
    %v11986 = vpack.c.b16 %v10652, %v10623
    %v11987 = vpack.c.b16 %v10653, %v10624
    %v11988 = vpack.c.b16 %v10654, %v10625
    %v11989 = vpack.c.b16 %v10684, %v10655
    %v11990 = vpack.c.b16 %v10685, %v10656
    %v11991 = vpack.c.b16 %v10686, %v10657
    %v11992 = vpack.c.b16 %v10687, %v10658
    %v11993 = vpack.c.b16 %v10688, %v10659
    %v11994 = vpack.c.b16 %v10689, %v10660
    %v11995 = vpack.c.b16 %v10690, %v10661
    %v11996 = vpack.c.b16 %v10691, %v10662
    %v11997 = vpack.c.b16 %v10692, %v10663
    %v11998 = vpack.c.b16 %v10693, %v10664
    %v11999 = vpack.c.b16 %v10694, %v10665
    %v12000 = vpack.c.b16 %v10695, %v10666
    %v12001 = vpack.c.b16 %v10696, %v10667
    %v12002 = vpack.c.b16 %v10697, %v10668
    %v12003 = vpack.c.b16 %v10698, %v10669
    %v12004 = vpack.c.b16 %v10699, %v10670
    %v12005 = vpack.c.b16 %v10700, %v10671
    %v12006 = vpack.c.b16 %v10701, %v10672
    %v12007 = vpack.c.b16 %v10702, %v10673
    %v12008 = vpack.c.b16 %v10703, %v10674
    %v12009 = vpack.c.b16 %v10704, %v10675
    %v12010 = vpack.c.b16 %v10705, %v10676
    %v12011 = vpack.c.b16 %v10706, %v10677
    %v12012 = vpack.c.b16 %v10707, %v10678
    %v12013 = vpack.c.b16 %v10708, %v10679
    %v12014 = vpack.c.b16 %v10709, %v10680
    %v12015 = vpack.c.b16 %v10710, %v10681
    %v12016 = vpack.c.b16 %v10711, %v10682
    %v12017 = vpack.c.b16 %v10712, %v10683
    %v12018 = vpack.c.b16 %v10742, %v10713
    %v12019 = vpack.c.b16 %v10743, %v10714
    %v12020 = vpack.c.b16 %v10744, %v10715
    %v12021 = vpack.c.b16 %v10745, %v10716
    %v12022 = vpack.c.b16 %v10746, %v10717
    %v12023 = vpack.c.b16 %v10747, %v10718
    %v12024 = vpack.c.b16 %v10748, %v10719
    %v12025 = vpack.c.b16 %v10749, %v10720
    %v12026 = vpack.c.b16 %v10750, %v10721
    %v12027 = vpack.c.b16 %v10751, %v10722
    %v12028 = vpack.c.b16 %v10752, %v10723
    %v12029 = vpack.c.b16 %v10753, %v10724
    %v12030 = vpack.c.b16 %v10754, %v10725
    %v12031 = vpack.c.b16 %v10755, %v10726
    %v12032 = vpack.c.b16 %v10756, %v10727
    %v12033 = vpack.c.b16 %v10757, %v10728
    %v12034 = vpack.c.b16 %v10758, %v10729
    %v12035 = vpack.c.b16 %v10759, %v10730
    %v12036 = vpack.c.b16 %v10760, %v10731
    %v12037 = vpack.c.b16 %v10761, %v10732
    %v12038 = vpack.c.b16 %v10762, %v10733
    %v12039 = vpack.c.b16 %v10763, %v10734
    %v12040 = vpack.c.b16 %v10764, %v10735
    %v12041 = vpack.c.b16 %v10765, %v10736
    %v12042 = vpack.c.b16 %v10766, %v10737
    %v12043 = vpack.c.b16 %v10767, %v10738
    %v12044 = vpack.c.b16 %v10768, %v10739
    %v12045 = vpack.c.b16 %v10769, %v10740
    %v12046 = vpack.c.b16 %v10770, %v10741
    %v12047 = vpack.c.b16 %v10800, %v10771
    %v12048 = vpack.c.b16 %v10801, %v10772
    %v12049 = vpack.c.b16 %v10802, %v10773
    %v12050 = vpack.c.b16 %v10803, %v10774
    %v12051 = vpack.c.b16 %v10804, %v10775
    %v12052 = vpack.c.b16 %v10805, %v10776
    %v12053 = vpack.c.b16 %v10806, %v10777
    %v12054 = vpack.c.b16 %v10807, %v10778
    %v12055 = vpack.c.b16 %v10808, %v10779
    %v12056 = vpack.c.b16 %v10809, %v10780
    %v12057 = vpack.c.b16 %v10810, %v10781
    %v12058 = vpack.c.b16 %v10811, %v10782
    %v12059 = vpack.c.b16 %v10812, %v10783
    %v12060 = vpack.c.b16 %v10813, %v10784
    %v12061 = vpack.c.b16 %v10814, %v10785
    %v12062 = vpack.c.b16 %v10815, %v10786
    %v12063 = vpack.c.b16 %v10816, %v10787
    %v12064 = vpack.c.b16 %v10817, %v10788
    %v12065 = vpack.c.b16 %v10818, %v10789
    %v12066 = vpack.c.b16 %v10819, %v10790
    %v12067 = vpack.c.b16 %v10820, %v10791
    %v12068 = vpack.c.b16 %v10821, %v10792
    %v12069 = vpack.c.b16 %v10822, %v10793
    %v12070 = vpack.c.b16 %v10823, %v10794
    %v12071 = vpack.c.b16 %v10824, %v10795
    %v12072 = vpack.c.b16 %v10825, %v10796
    %v12073 = vpack.c.b16 %v10826, %v10797
    %v12074 = vpack.c.b16 %v10827, %v10798
    %v12075 = vpack.c.b16 %v10828, %v10799
    %v12076 = vpack.c.b16 %v10858, %v10829
    %v12077 = vpack.c.b16 %v10859, %v10830
    %v12078 = vpack.c.b16 %v10860, %v10831
    %v12079 = vpack.c.b16 %v10861, %v10832
    %v12080 = vpack.c.b16 %v10862, %v10833
    %v12081 = vpack.c.b16 %v10863, %v10834
    %v12082 = vpack.c.b16 %v10864, %v10835
    %v12083 = vpack.c.b16 %v10865, %v10836
    %v12084 = vpack.c.b16 %v10866, %v10837
    %v12085 = vpack.c.b16 %v10867, %v10838
    %v12086 = vpack.c.b16 %v10868, %v10839
    %v12087 = vpack.c.b16 %v10869, %v10840
    %v12088 = vpack.c.b16 %v10870, %v10841
    %v12089 = vpack.c.b16 %v10871, %v10842
    %v12090 = vpack.c.b16 %v10872, %v10843
    %v12091 = vpack.c.b16 %v10873, %v10844
    %v12092 = vpack.c.b16 %v10874, %v10845
    %v12093 = vpack.c.b16 %v10875, %v10846
    %v12094 = vpack.c.b16 %v10876, %v10847
    %v12095 = vpack.c.b16 %v10877, %v10848
    %v12096 = vpack.c.b16 %v10878, %v10849
    %v12097 = vpack.c.b16 %v10879, %v10850
    %v12098 = vpack.c.b16 %v10880, %v10851
    %v12099 = vpack.c.b16 %v10881, %v10852
    %v12100 = vpack.c.b16 %v10882, %v10853
    %v12101 = vpack.c.b16 %v10883, %v10854
    %v12102 = vpack.c.b16 %v10884, %v10855
    %v12103 = vpack.c.b16 %v10885, %v10856
    %v12104 = vpack.c.b16 %v10886, %v10857
    %v12105 = vpack.c.b16 %v10916, %v10887
    %v12106 = vpack.c.b16 %v10917, %v10888
    %v12107 = vpack.c.b16 %v10918, %v10889
    %v12108 = vpack.c.b16 %v10919, %v10890
    %v12109 = vpack.c.b16 %v10920, %v10891
    %v12110 = vpack.c.b16 %v10921, %v10892
    %v12111 = vpack.c.b16 %v10922, %v10893
    %v12112 = vpack.c.b16 %v10923, %v10894
    %v12113 = vpack.c.b16 %v10924, %v10895
    %v12114 = vpack.c.b16 %v10925, %v10896
    %v12115 = vpack.c.b16 %v10926, %v10897
    %v12116 = vpack.c.b16 %v10927, %v10898
    %v12117 = vpack.c.b16 %v10928, %v10899
    %v12118 = vpack.c.b16 %v10929, %v10900
    %v12119 = vpack.c.b16 %v10930, %v10901
    %v12120 = vpack.c.b16 %v10931, %v10902
    %v12121 = vpack.c.b16 %v10932, %v10903
    %v12122 = vpack.c.b16 %v10933, %v10904
    %v12123 = vpack.c.b16 %v10934, %v10905
    %v12124 = vpack.c.b16 %v10935, %v10906
    %v12125 = vpack.c.b16 %v10936, %v10907
    %v12126 = vpack.c.b16 %v10937, %v10908
    %v12127 = vpack.c.b16 %v10938, %v10909
    %v12128 = vpack.c.b16 %v10939, %v10910
    %v12129 = vpack.c.b16 %v10940, %v10911
    %v12130 = vpack.c.b16 %v10941, %v10912
    %v12131 = vpack.c.b16 %v10942, %v10913
    %v12132 = vpack.c.b16 %v10943, %v10914
    %v12133 = vpack.c.b16 %v10944, %v10915
    %v12134 = vpack.c.b16 %v10974, %v10945
    %v12135 = vpack.c.b16 %v10975, %v10946
    %v12136 = vpack.c.b16 %v10976, %v10947
    %v12137 = vpack.c.b16 %v10977, %v10948
    %v12138 = vpack.c.b16 %v10978, %v10949
    %v12139 = vpack.c.b16 %v10979, %v10950
    %v12140 = vpack.c.b16 %v10980, %v10951
    %v12141 = vpack.c.b16 %v10981, %v10952
    %v12142 = vpack.c.b16 %v10982, %v10953
    %v12143 = vpack.c.b16 %v10983, %v10954
    %v12144 = vpack.c.b16 %v10984, %v10955
    %v12145 = vpack.c.b16 %v10985, %v10956
    %v12146 = vpack.c.b16 %v10986, %v10957
    %v12147 = vpack.c.b16 %v10987, %v10958
    %v12148 = vpack.c.b16 %v10988, %v10959
    %v12149 = vpack.c.b16 %v10989, %v10960
    %v12150 = vpack.c.b16 %v10990, %v10961
    %v12151 = vpack.c.b16 %v10991, %v10962
    %v12152 = vpack.c.b16 %v10992, %v10963
    %v12153 = vpack.c.b16 %v10993, %v10964
    %v12154 = vpack.c.b16 %v10994, %v10965
    %v12155 = vpack.c.b16 %v10995, %v10966
    %v12156 = vpack.c.b16 %v10996, %v10967
    %v12157 = vpack.c.b16 %v10997, %v10968
    %v12158 = vpack.c.b16 %v10998, %v10969
    %v12159 = vpack.c.b16 %v10999, %v10970
    %v12160 = vpack.c.b16 %v11000, %v10971
    %v12161 = vpack.c.b16 %v11001, %v10972
    %v12162 = vpack.c.b16 %v11002, %v10973
    %v12163 = vpack.c.b16 %v11032, %v11003
    %v12164 = vpack.c.b16 %v11033, %v11004
    %v12165 = vpack.c.b16 %v11034, %v11005
    %v12166 = vpack.c.b16 %v11035, %v11006
    %v12167 = vpack.c.b16 %v11036, %v11007
    %v12168 = vpack.c.b16 %v11037, %v11008
    %v12169 = vpack.c.b16 %v11038, %v11009
    %v12170 = vpack.c.b16 %v11039, %v11010
    %v12171 = vpack.c.b16 %v11040, %v11011
    %v12172 = vpack.c.b16 %v11041, %v11012
    %v12173 = vpack.c.b16 %v11042, %v11013
    %v12174 = vpack.c.b16 %v11043, %v11014
    %v12175 = vpack.c.b16 %v11044, %v11015
    %v12176 = vpack.c.b16 %v11045, %v11016
    %v12177 = vpack.c.b16 %v11046, %v11017
    %v12178 = vpack.c.b16 %v11047, %v11018
    %v12179 = vpack.c.b16 %v11048, %v11019
    %v12180 = vpack.c.b16 %v11049, %v11020
    %v12181 = vpack.c.b16 %v11050, %v11021
    %v12182 = vpack.c.b16 %v11051, %v11022
    %v12183 = vpack.c.b16 %v11052, %v11023
    %v12184 = vpack.c.b16 %v11053, %v11024
    %v12185 = vpack.c.b16 %v11054, %v11025
    %v12186 = vpack.c.b16 %v11055, %v11026
    %v12187 = vpack.c.b16 %v11056, %v11027
    %v12188 = vpack.c.b16 %v11057, %v11028
    %v12189 = vpack.c.b16 %v11058, %v11029
    %v12190 = vpack.c.b16 %v11059, %v11030
    %v12191 = vpack.c.b16 %v11060, %v11031
    %v12192 = vpack.c.b16 %v11090, %v11061
    %v12193 = vpack.c.b16 %v11091, %v11062
    %v12194 = vpack.c.b16 %v11092, %v11063
    %v12195 = vpack.c.b16 %v11093, %v11064
    %v12196 = vpack.c.b16 %v11094, %v11065
    %v12197 = vpack.c.b16 %v11095, %v11066
    %v12198 = vpack.c.b16 %v11096, %v11067
    %v12199 = vpack.c.b16 %v11097, %v11068
    %v12200 = vpack.c.b16 %v11098, %v11069
    %v12201 = vpack.c.b16 %v11099, %v11070
    %v12202 = vpack.c.b16 %v11100, %v11071
    %v12203 = vpack.c.b16 %v11101, %v11072
    %v12204 = vpack.c.b16 %v11102, %v11073
    %v12205 = vpack.c.b16 %v11103, %v11074
    %v12206 = vpack.c.b16 %v11104, %v11075
    %v12207 = vpack.c.b16 %v11105, %v11076
    %v12208 = vpack.c.b16 %v11106, %v11077
    %v12209 = vpack.c.b16 %v11107, %v11078
    %v12210 = vpack.c.b16 %v11108, %v11079
    %v12211 = vpack.c.b16 %v11109, %v11080
    %v12212 = vpack.c.b16 %v11110, %v11081
    %v12213 = vpack.c.b16 %v11111, %v11082
    %v12214 = vpack.c.b16 %v11112, %v11083
    %v12215 = vpack.c.b16 %v11113, %v11084
    %v12216 = vpack.c.b16 %v11114, %v11085
    %v12217 = vpack.c.b16 %v11115, %v11086
    %v12218 = vpack.c.b16 %v11116, %v11087
    %v12219 = vpack.c.b16 %v11117, %v11088
    %v12220 = vpack.c.b16 %v11118, %v11089
    %v12221 = vpack.c.b16 %v11148, %v11119
    %v12222 = vpack.c.b16 %v11149, %v11120
    %v12223 = vpack.c.b16 %v11150, %v11121
    %v12224 = vpack.c.b16 %v11151, %v11122
    %v12225 = vpack.c.b16 %v11152, %v11123
    %v12226 = vpack.c.b16 %v11153, %v11124
    %v12227 = vpack.c.b16 %v11154, %v11125
    %v12228 = vpack.c.b16 %v11155, %v11126
    %v12229 = vpack.c.b16 %v11156, %v11127
    %v12230 = vpack.c.b16 %v11157, %v11128
    %v12231 = vpack.c.b16 %v11158, %v11129
    %v12232 = vpack.c.b16 %v11159, %v11130
    %v12233 = vpack.c.b16 %v11160, %v11131
    %v12234 = vpack.c.b16 %v11161, %v11132
    %v12235 = vpack.c.b16 %v11162, %v11133
    %v12236 = vpack.c.b16 %v11163, %v11134
    %v12237 = vpack.c.b16 %v11164, %v11135
    %v12238 = vpack.c.b16 %v11165, %v11136
    %v12239 = vpack.c.b16 %v11166, %v11137
    %v12240 = vpack.c.b16 %v11167, %v11138
    %v12241 = vpack.c.b16 %v11168, %v11139
    %v12242 = vpack.c.b16 %v11169, %v11140
    %v12243 = vpack.c.b16 %v11170, %v11141
    %v12244 = vpack.c.b16 %v11171, %v11142
    %v12245 = vpack.c.b16 %v11172, %v11143
    %v12246 = vpack.c.b16 %v11173, %v11144
    %v12247 = vpack.c.b16 %v11174, %v11145
    %v12248 = vpack.c.b16 %v11175, %v11146
    %v12249 = vpack.c.b16 %v11176, %v11147
    %v12250 = vpack.c.b16 %v11206, %v11177
    %v12251 = vpack.c.b16 %v11207, %v11178
    %v12252 = vpack.c.b16 %v11208, %v11179
    %v12253 = vpack.c.b16 %v11209, %v11180
    %v12254 = vpack.c.b16 %v11210, %v11181
    %v12255 = vpack.c.b16 %v11211, %v11182
    %v12256 = vpack.c.b16 %v11212, %v11183
    %v12257 = vpack.c.b16 %v11213, %v11184
    %v12258 = vpack.c.b16 %v11214, %v11185
    %v12259 = vpack.c.b16 %v11215, %v11186
    %v12260 = vpack.c.b16 %v11216, %v11187
    %v12261 = vpack.c.b16 %v11217, %v11188
    %v12262 = vpack.c.b16 %v11218, %v11189
    %v12263 = vpack.c.b16 %v11219, %v11190
    %v12264 = vpack.c.b16 %v11220, %v11191
    %v12265 = vpack.c.b16 %v11221, %v11192
    %v12266 = vpack.c.b16 %v11222, %v11193
    %v12267 = vpack.c.b16 %v11223, %v11194
    %v12268 = vpack.c.b16 %v11224, %v11195
    %v12269 = vpack.c.b16 %v11225, %v11196
    %v12270 = vpack.c.b16 %v11226, %v11197
    %v12271 = vpack.c.b16 %v11227, %v11198
    %v12272 = vpack.c.b16 %v11228, %v11199
    %v12273 = vpack.c.b16 %v11229, %v11200
    %v12274 = vpack.c.b16 %v11230, %v11201
    %v12275 = vpack.c.b16 %v11231, %v11202
    %v12276 = vpack.c.b16 %v11232, %v11203
    %v12277 = vpack.c.b16 %v11233, %v11204
    %v12278 = vpack.c.b16 %v11234, %v11205
    %v12279 = vpack.c.b16 %v11264, %v11235
    %v12280 = vpack.c.b16 %v11265, %v11236
    %v12281 = vpack.c.b16 %v11266, %v11237
    %v12282 = vpack.c.b16 %v11267, %v11238
    %v12283 = vpack.c.b16 %v11268, %v11239
    %v12284 = vpack.c.b16 %v11269, %v11240
    %v12285 = vpack.c.b16 %v11270, %v11241
    %v12286 = vpack.c.b16 %v11271, %v11242
    %v12287 = vpack.c.b16 %v11272, %v11243
    %v12288 = vpack.c.b16 %v11273, %v11244
    %v12289 = vpack.c.b16 %v11274, %v11245
    %v12290 = vpack.c.b16 %v11275, %v11246
    %v12291 = vpack.c.b16 %v11276, %v11247
    %v12292 = vpack.c.b16 %v11277, %v11248
    %v12293 = vpack.c.b16 %v11278, %v11249
    %v12294 = vpack.c.b16 %v11279, %v11250
    %v12295 = vpack.c.b16 %v11280, %v11251
    %v12296 = vpack.c.b16 %v11281, %v11252
    %v12297 = vpack.c.b16 %v11282, %v11253
    %v12298 = vpack.c.b16 %v11283, %v11254
    %v12299 = vpack.c.b16 %v11284, %v11255
    %v12300 = vpack.c.b16 %v11285, %v11256
    %v12301 = vpack.c.b16 %v11286, %v11257
    %v12302 = vpack.c.b16 %v11287, %v11258
    %v12303 = vpack.c.b16 %v11288, %v11259
    %v12304 = vpack.c.b16 %v11289, %v11260
    %v12305 = vpack.c.b16 %v11290, %v11261
    %v12306 = vpack.c.b16 %v11291, %v11262
    %v12307 = vpack.c.b16 %v11292, %v11263
    %v12308 = vpack.c.b16 %v11322, %v11293
    %v12309 = vpack.c.b16 %v11323, %v11294
    %v12310 = vpack.c.b16 %v11324, %v11295
    %v12311 = vpack.c.b16 %v11325, %v11296
    %v12312 = vpack.c.b16 %v11326, %v11297
    %v12313 = vpack.c.b16 %v11327, %v11298
    %v12314 = vpack.c.b16 %v11328, %v11299
    %v12315 = vpack.c.b16 %v11329, %v11300
    %v12316 = vpack.c.b16 %v11330, %v11301
    %v12317 = vpack.c.b16 %v11331, %v11302
    %v12318 = vpack.c.b16 %v11332, %v11303
    %v12319 = vpack.c.b16 %v11333, %v11304
    %v12320 = vpack.c.b16 %v11334, %v11305
    %v12321 = vpack.c.b16 %v11335, %v11306
    %v12322 = vpack.c.b16 %v11336, %v11307
    %v12323 = vpack.c.b16 %v11337, %v11308
    %v12324 = vpack.c.b16 %v11338, %v11309
    %v12325 = vpack.c.b16 %v11339, %v11310
    %v12326 = vpack.c.b16 %v11340, %v11311
    %v12327 = vpack.c.b16 %v11341, %v11312
    %v12328 = vpack.c.b16 %v11342, %v11313
    %v12329 = vpack.c.b16 %v11343, %v11314
    %v12330 = vpack.c.b16 %v11344, %v11315
    %v12331 = vpack.c.b16 %v11345, %v11316
    %v12332 = vpack.c.b16 %v11346, %v11317
    %v12333 = vpack.c.b16 %v11347, %v11318
    %v12334 = vpack.c.b16 %v11348, %v11319
    %v12335 = vpack.c.b16 %v11349, %v11320
    %v12336 = vpack.c.b16 %v11350, %v11321
    %v12337 = vpack.c.b16 %v11380, %v11351
    %v12338 = vpack.c.b16 %v11381, %v11352
    %v12339 = vpack.c.b16 %v11382, %v11353
    %v12340 = vpack.c.b16 %v11383, %v11354
    %v12341 = vpack.c.b16 %v11384, %v11355
    %v12342 = vpack.c.b16 %v11385, %v11356
    %v12343 = vpack.c.b16 %v11386, %v11357
    %v12344 = vpack.c.b16 %v11387, %v11358
    %v12345 = vpack.c.b16 %v11388, %v11359
    %v12346 = vpack.c.b16 %v11389, %v11360
    %v12347 = vpack.c.b16 %v11390, %v11361
    %v12348 = vpack.c.b16 %v11391, %v11362
    %v12349 = vpack.c.b16 %v11392, %v11363
    %v12350 = vpack.c.b16 %v11393, %v11364
    %v12351 = vpack.c.b16 %v11394, %v11365
    %v12352 = vpack.c.b16 %v11395, %v11366
    %v12353 = vpack.c.b16 %v11396, %v11367
    %v12354 = vpack.c.b16 %v11397, %v11368
    %v12355 = vpack.c.b16 %v11398, %v11369
    %v12356 = vpack.c.b16 %v11399, %v11370
    %v12357 = vpack.c.b16 %v11400, %v11371
    %v12358 = vpack.c.b16 %v11401, %v11372
    %v12359 = vpack.c.b16 %v11402, %v11373
    %v12360 = vpack.c.b16 %v11403, %v11374
    %v12361 = vpack.c.b16 %v11404, %v11375
    %v12362 = vpack.c.b16 %v11405, %v11376
    %v12363 = vpack.c.b16 %v11406, %v11377
    %v12364 = vpack.c.b16 %v11407, %v11378
    %v12365 = vpack.c.b16 %v11408, %v11379
    %v12366 = vpack.c.b16 %v11438, %v11409
    %v12367 = vpack.c.b16 %v11439, %v11410
    %v12368 = vpack.c.b16 %v11440, %v11411
    %v12369 = vpack.c.b16 %v11441, %v11412
    %v12370 = vpack.c.b16 %v11442, %v11413
    %v12371 = vpack.c.b16 %v11443, %v11414
    %v12372 = vpack.c.b16 %v11444, %v11415
    %v12373 = vpack.c.b16 %v11445, %v11416
    %v12374 = vpack.c.b16 %v11446, %v11417
    %v12375 = vpack.c.b16 %v11447, %v11418
    %v12376 = vpack.c.b16 %v11448, %v11419
    %v12377 = vpack.c.b16 %v11449, %v11420
    %v12378 = vpack.c.b16 %v11450, %v11421
    %v12379 = vpack.c.b16 %v11451, %v11422
    %v12380 = vpack.c.b16 %v11452, %v11423
    %v12381 = vpack.c.b16 %v11453, %v11424
    %v12382 = vpack.c.b16 %v11454, %v11425
    %v12383 = vpack.c.b16 %v11455, %v11426
    %v12384 = vpack.c.b16 %v11456, %v11427
    %v12385 = vpack.c.b16 %v11457, %v11428
    %v12386 = vpack.c.b16 %v11458, %v11429
    %v12387 = vpack.c.b16 %v11459, %v11430
    %v12388 = vpack.c.b16 %v11460, %v11431
    %v12389 = vpack.c.b16 %v11461, %v11432
    %v12390 = vpack.c.b16 %v11462, %v11433
    %v12391 = vpack.c.b16 %v11463, %v11434
    %v12392 = vpack.c.b16 %v11464, %v11435
    %v12393 = vpack.c.b16 %v11465, %v11436
    %v12394 = vpack.c.b16 %v11466, %v11437
    %13323 = vmatprep.subr.bf16.mxu0 %v11671
    %13324 = vmatpush1.bf16.msra.mxu0 %v11670
    %13325 = vmatprep.subr.bf16.mxu0 %v11642
    %13326 = vmatpush1.bf16.msra.mxu0 %v11641
    %13327 = vmatprep.subr.bf16.mxu0 %v11613
    %13328 = vmatpush1.bf16.msra.mxu0 %v11612
    %13329 = vmatprep.subr.bf16.mxu0 %v11584
    %13330 = vmatpush1.bf16.msra.mxu0 %v11583
    %13331 = vmatprep.subr.bf16.mxu0 %v11555
    %13332 = vmatpush1.bf16.msra.mxu0 %v11554
    %13333 = vmatprep.subr.bf16.mxu0 %v11526
    %13334 = vmatpush1.bf16.msra.mxu0 %v11525
    %13335 = vmatprep.subr.bf16.mxu0 %v11497
    %13336 = vmatpush1.bf16.msra.mxu0 %v11496
    %13337 = vmatprep.subr.bf16.mxu0 %v11468
    %13338 = vmatpush1.bf16.msra.mxu0 %v11467
    %13339 = vmatprep.subr.bf16.mxu0 %v11903
    %13340 = vmatpush2.bf16.msra.mxu0 %v11902
    %13341 = vmatprep.subr.bf16.mxu0 %v11874
    %13342 = vmatpush2.bf16.msra.mxu0 %v11873
    %13343 = vmatprep.subr.bf16.mxu0 %v11845
    %13344 = vmatpush2.bf16.msra.mxu0 %v11844
    %13345 = vmatprep.subr.bf16.mxu0 %v11816
    %13346 = vmatpush2.bf16.msra.mxu0 %v11815
    %13347 = vmatprep.subr.bf16.mxu0 %v11787
    %13348 = vmatpush2.bf16.msra.mxu0 %v11786
    %13349 = vmatprep.subr.bf16.mxu0 %v11758
    %13350 = vmatpush2.bf16.msra.mxu0 %v11757
    %13351 = vmatprep.subr.bf16.mxu0 %v11729
    %13352 = vmatpush2.bf16.msra.mxu0 %v11728
    %13353 = vmatprep.subr.bf16.mxu0 %v11700
    %13354 = vmatpush2.bf16.msra.mxu0 %v11699
    %13355 = vmatprep.mubr.bf16.mxu0 %v7535
    %13356 = vmatmul.mubr.bf16.gmra.mxu0 %v7534
    %v13357 = vpop.f32.mrf.mxu0
    %v13358 = vadd.f32 %v8509, %v13357
    %v13359 = vpop.f32.mrf.mxu0
    %v13360 = vadd.f32 %v8513, %v13359
    %v13361 = vpop.f32.mrf.mxu0
    %v13362 = vpop.f32.mrf.mxu0
    %13363 = vdwg.mxu0
    %13364 = vmatprep.subr.bf16.mxu0 %v12135
    %13365 = vmatpush1.bf16.msra.mxu0 %v12134
    %13366 = vmatprep.subr.bf16.mxu0 %v12106
    %13367 = vmatpush1.bf16.msra.mxu0 %v12105
    %13368 = vmatprep.subr.bf16.mxu0 %v12077
    %13369 = vmatpush1.bf16.msra.mxu0 %v12076
    %13370 = vmatprep.subr.bf16.mxu0 %v12048
    %13371 = vmatpush1.bf16.msra.mxu0 %v12047
    %13372 = vmatprep.subr.bf16.mxu0 %v12019
    %13373 = vmatpush1.bf16.msra.mxu0 %v12018
    %13374 = vmatprep.subr.bf16.mxu0 %v11990
    %13375 = vmatpush1.bf16.msra.mxu0 %v11989
    %13376 = vmatprep.subr.bf16.mxu0 %v11961
    %13377 = vmatpush1.bf16.msra.mxu0 %v11960
    %13378 = vmatprep.subr.bf16.mxu0 %v11932
    %13379 = vmatpush1.bf16.msra.mxu0 %v11931
    %13380 = vmatprep.subr.bf16.mxu0 %v12367
    %13381 = vmatpush2.bf16.msra.mxu0 %v12366
    %13382 = vmatprep.subr.bf16.mxu0 %v12338
    %13383 = vmatpush2.bf16.msra.mxu0 %v12337
    %13384 = vmatprep.subr.bf16.mxu0 %v12309
    %13385 = vmatpush2.bf16.msra.mxu0 %v12308
    %13386 = vmatprep.subr.bf16.mxu0 %v12280
    %13387 = vmatpush2.bf16.msra.mxu0 %v12279
    %13388 = vmatprep.subr.bf16.mxu0 %v12251
    %13389 = vmatpush2.bf16.msra.mxu0 %v12250
    %13390 = vmatprep.subr.bf16.mxu0 %v12222
    %13391 = vmatpush2.bf16.msra.mxu0 %v12221
    %13392 = vmatprep.subr.bf16.mxu0 %v12193
    %13393 = vmatpush2.bf16.msra.mxu0 %v12192
    %13394 = vmatprep.subr.bf16.mxu0 %v12164
    %13395 = vmatpush2.bf16.msra.mxu0 %v12163
    %13396 = vmatprep.mubr.bf16.mxu0 %v7537
    %13397 = vmatmul.mubr.bf16.gmra.mxu0 %v7536
    %v13398 = vpop.f32.mrf.mxu0
    %v13399 = vadd.f32 %v13358, %v13398
    %v13400 = vpop.f32.mrf.mxu0
    %v13401 = vadd.f32 %v13360, %v13400
    %v13402 = vpop.f32.mrf.mxu0
    %v13403 = vpop.f32.mrf.mxu0
    %13404 = vdwg.mxu0
    %13405 = vmatprep.subr.bf16.mxu0 %v11673
    %13406 = vmatpush1.bf16.msra.mxu0 %v11672
    %13407 = vmatprep.subr.bf16.mxu0 %v11644
    %13408 = vmatpush1.bf16.msra.mxu0 %v11643
    %13409 = vmatprep.subr.bf16.mxu0 %v11615
    %13410 = vmatpush1.bf16.msra.mxu0 %v11614
    %13411 = vmatprep.subr.bf16.mxu0 %v11586
    %13412 = vmatpush1.bf16.msra.mxu0 %v11585
    %13413 = vmatprep.subr.bf16.mxu0 %v11557
    %13414 = vmatpush1.bf16.msra.mxu0 %v11556
    %13415 = vmatprep.subr.bf16.mxu0 %v11528
    %13416 = vmatpush1.bf16.msra.mxu0 %v11527
    %13417 = vmatprep.subr.bf16.mxu0 %v11499
    %13418 = vmatpush1.bf16.msra.mxu0 %v11498
    %13419 = vmatprep.subr.bf16.mxu0 %v11470
    %13420 = vmatpush1.bf16.msra.mxu0 %v11469
    %13421 = vmatprep.subr.bf16.mxu0 %v11905
    %13422 = vmatpush2.bf16.msra.mxu0 %v11904
    %13423 = vmatprep.subr.bf16.mxu0 %v11876
    %13424 = vmatpush2.bf16.msra.mxu0 %v11875
    %13425 = vmatprep.subr.bf16.mxu0 %v11847
    %13426 = vmatpush2.bf16.msra.mxu0 %v11846
    %13427 = vmatprep.subr.bf16.mxu0 %v11818
    %13428 = vmatpush2.bf16.msra.mxu0 %v11817
    %13429 = vmatprep.subr.bf16.mxu0 %v11789
    %13430 = vmatpush2.bf16.msra.mxu0 %v11788
    %13431 = vmatprep.subr.bf16.mxu0 %v11760
    %13432 = vmatpush2.bf16.msra.mxu0 %v11759
    %13433 = vmatprep.subr.bf16.mxu0 %v11731
    %13434 = vmatpush2.bf16.msra.mxu0 %v11730
    %13435 = vmatprep.subr.bf16.mxu0 %v11702
    %13436 = vmatpush2.bf16.msra.mxu0 %v11701
    %13437 = vmatprep.mubr.bf16.mxu0 %v7535
    %13438 = vmatmul.mubr.bf16.gmra.mxu0 %v7534
    %v13439 = vpop.f32.mrf.mxu0
    %v13440 = vadd.f32 %v8517, %v13439
    %v13441 = vpop.f32.mrf.mxu0
    %v13442 = vadd.f32 %v8521, %v13441
    %v13443 = vpop.f32.mrf.mxu0
    %v13444 = vpop.f32.mrf.mxu0
    %13445 = vdwg.mxu0
    %13446 = vmatprep.subr.bf16.mxu0 %v12137
    %13447 = vmatpush1.bf16.msra.mxu0 %v12136
    %13448 = vmatprep.subr.bf16.mxu0 %v12108
    %13449 = vmatpush1.bf16.msra.mxu0 %v12107
    %13450 = vmatprep.subr.bf16.mxu0 %v12079
    %13451 = vmatpush1.bf16.msra.mxu0 %v12078
    %13452 = vmatprep.subr.bf16.mxu0 %v12050
    %13453 = vmatpush1.bf16.msra.mxu0 %v12049
    %13454 = vmatprep.subr.bf16.mxu0 %v12021
    %13455 = vmatpush1.bf16.msra.mxu0 %v12020
    %13456 = vmatprep.subr.bf16.mxu0 %v11992
    %13457 = vmatpush1.bf16.msra.mxu0 %v11991
    %13458 = vmatprep.subr.bf16.mxu0 %v11963
    %13459 = vmatpush1.bf16.msra.mxu0 %v11962
    %13460 = vmatprep.subr.bf16.mxu0 %v11934
    %13461 = vmatpush1.bf16.msra.mxu0 %v11933
    %13462 = vmatprep.subr.bf16.mxu0 %v12369
    %13463 = vmatpush2.bf16.msra.mxu0 %v12368
    %13464 = vmatprep.subr.bf16.mxu0 %v12340
    %13465 = vmatpush2.bf16.msra.mxu0 %v12339
    %13466 = vmatprep.subr.bf16.mxu0 %v12311
    %13467 = vmatpush2.bf16.msra.mxu0 %v12310
    %13468 = vmatprep.subr.bf16.mxu0 %v12282
    %13469 = vmatpush2.bf16.msra.mxu0 %v12281
    %13470 = vmatprep.subr.bf16.mxu0 %v12253
    %13471 = vmatpush2.bf16.msra.mxu0 %v12252
    %13472 = vmatprep.subr.bf16.mxu0 %v12224
    %13473 = vmatpush2.bf16.msra.mxu0 %v12223
    %13474 = vmatprep.subr.bf16.mxu0 %v12195
    %13475 = vmatpush2.bf16.msra.mxu0 %v12194
    %13476 = vmatprep.subr.bf16.mxu0 %v12166
    %13477 = vmatpush2.bf16.msra.mxu0 %v12165
    %13478 = vmatprep.mubr.bf16.mxu0 %v7537
    %13479 = vmatmul.mubr.bf16.gmra.mxu0 %v7536
    %v13480 = vpop.f32.mrf.mxu0
    %v13481 = vadd.f32 %v13440, %v13480
    %v13482 = vpop.f32.mrf.mxu0
    %v13483 = vadd.f32 %v13442, %v13482
    %v13484 = vpop.f32.mrf.mxu0
    %v13485 = vpop.f32.mrf.mxu0
    %13486 = vdwg.mxu0
    %13487 = vmatprep.subr.bf16.mxu0 %v11675
    %13488 = vmatpush1.bf16.msra.mxu0 %v11674
    %13489 = vmatprep.subr.bf16.mxu0 %v11646
    %13490 = vmatpush1.bf16.msra.mxu0 %v11645
    %13491 = vmatprep.subr.bf16.mxu0 %v11617
    %13492 = vmatpush1.bf16.msra.mxu0 %v11616
    %13493 = vmatprep.subr.bf16.mxu0 %v11588
    %13494 = vmatpush1.bf16.msra.mxu0 %v11587
    %13495 = vmatprep.subr.bf16.mxu0 %v11559
    %13496 = vmatpush1.bf16.msra.mxu0 %v11558
    %13497 = vmatprep.subr.bf16.mxu0 %v11530
    %13498 = vmatpush1.bf16.msra.mxu0 %v11529
    %13499 = vmatprep.subr.bf16.mxu0 %v11501
    %13500 = vmatpush1.bf16.msra.mxu0 %v11500
    %13501 = vmatprep.subr.bf16.mxu0 %v11472
    %13502 = vmatpush1.bf16.msra.mxu0 %v11471
    %13503 = vmatprep.subr.bf16.mxu0 %v11907
    %13504 = vmatpush2.bf16.msra.mxu0 %v11906
    %13505 = vmatprep.subr.bf16.mxu0 %v11878
    %13506 = vmatpush2.bf16.msra.mxu0 %v11877
    %13507 = vmatprep.subr.bf16.mxu0 %v11849
    %13508 = vmatpush2.bf16.msra.mxu0 %v11848
    %13509 = vmatprep.subr.bf16.mxu0 %v11820
    %13510 = vmatpush2.bf16.msra.mxu0 %v11819
    %13511 = vmatprep.subr.bf16.mxu0 %v11791
    %13512 = vmatpush2.bf16.msra.mxu0 %v11790
    %13513 = vmatprep.subr.bf16.mxu0 %v11762
    %13514 = vmatpush2.bf16.msra.mxu0 %v11761
    %13515 = vmatprep.subr.bf16.mxu0 %v11733
    %13516 = vmatpush2.bf16.msra.mxu0 %v11732
    %13517 = vmatprep.subr.bf16.mxu0 %v11704
    %13518 = vmatpush2.bf16.msra.mxu0 %v11703
    %13519 = vmatprep.mubr.bf16.mxu0 %v7535
    %13520 = vmatmul.mubr.bf16.gmra.mxu0 %v7534
    %v13521 = vpop.f32.mrf.mxu0
    %v13522 = vadd.f32 %v8525, %v13521
    %v13523 = vpop.f32.mrf.mxu0
    %v13524 = vadd.f32 %v8529, %v13523
    %v13525 = vpop.f32.mrf.mxu0
    %v13526 = vpop.f32.mrf.mxu0
    %13527 = vdwg.mxu0
    %13528 = vmatprep.subr.bf16.mxu0 %v12139
    %13529 = vmatpush1.bf16.msra.mxu0 %v12138
    %13530 = vmatprep.subr.bf16.mxu0 %v12110
    %13531 = vmatpush1.bf16.msra.mxu0 %v12109
    %13532 = vmatprep.subr.bf16.mxu0 %v12081
    %13533 = vmatpush1.bf16.msra.mxu0 %v12080
    %13534 = vmatprep.subr.bf16.mxu0 %v12052
    %13535 = vmatpush1.bf16.msra.mxu0 %v12051
    %13536 = vmatprep.subr.bf16.mxu0 %v12023
    %13537 = vmatpush1.bf16.msra.mxu0 %v12022
    %13538 = vmatprep.subr.bf16.mxu0 %v11994
    %13539 = vmatpush1.bf16.msra.mxu0 %v11993
    %13540 = vmatprep.subr.bf16.mxu0 %v11965
    %13541 = vmatpush1.bf16.msra.mxu0 %v11964
    %13542 = vmatprep.subr.bf16.mxu0 %v11936
    %13543 = vmatpush1.bf16.msra.mxu0 %v11935
    %13544 = vmatprep.subr.bf16.mxu0 %v12371
    %13545 = vmatpush2.bf16.msra.mxu0 %v12370
    %13546 = vmatprep.subr.bf16.mxu0 %v12342
    %13547 = vmatpush2.bf16.msra.mxu0 %v12341
    %13548 = vmatprep.subr.bf16.mxu0 %v12313
    %13549 = vmatpush2.bf16.msra.mxu0 %v12312
    %13550 = vmatprep.subr.bf16.mxu0 %v12284
    %13551 = vmatpush2.bf16.msra.mxu0 %v12283
    %13552 = vmatprep.subr.bf16.mxu0 %v12255
    %13553 = vmatpush2.bf16.msra.mxu0 %v12254
    %13554 = vmatprep.subr.bf16.mxu0 %v12226
    %13555 = vmatpush2.bf16.msra.mxu0 %v12225
    %13556 = vmatprep.subr.bf16.mxu0 %v12197
    %13557 = vmatpush2.bf16.msra.mxu0 %v12196
    %13558 = vmatprep.subr.bf16.mxu0 %v12168
    %13559 = vmatpush2.bf16.msra.mxu0 %v12167
    %13560 = vmatprep.mubr.bf16.mxu0 %v7537
    %13561 = vmatmul.mubr.bf16.gmra.mxu0 %v7536
    %v13562 = vpop.f32.mrf.mxu0
    %v13563 = vadd.f32 %v13522, %v13562
    %v13564 = vpop.f32.mrf.mxu0
    %v13565 = vadd.f32 %v13524, %v13564
    %v13566 = vpop.f32.mrf.mxu0
    %v13567 = vpop.f32.mrf.mxu0
    %13568 = vdwg.mxu0
    %13569 = vmatprep.subr.bf16.mxu0 %v11677
    %13570 = vmatpush1.bf16.msra.mxu0 %v11676
    %13571 = vmatprep.subr.bf16.mxu0 %v11648
    %13572 = vmatpush1.bf16.msra.mxu0 %v11647
    %13573 = vmatprep.subr.bf16.mxu0 %v11619
    %13574 = vmatpush1.bf16.msra.mxu0 %v11618
    %13575 = vmatprep.subr.bf16.mxu0 %v11590
    %13576 = vmatpush1.bf16.msra.mxu0 %v11589
    %13577 = vmatprep.subr.bf16.mxu0 %v11561
    %13578 = vmatpush1.bf16.msra.mxu0 %v11560
    %13579 = vmatprep.subr.bf16.mxu0 %v11532
    %13580 = vmatpush1.bf16.msra.mxu0 %v11531
    %13581 = vmatprep.subr.bf16.mxu0 %v11503
    %13582 = vmatpush1.bf16.msra.mxu0 %v11502
    %13583 = vmatprep.subr.bf16.mxu0 %v11474
    %13584 = vmatpush1.bf16.msra.mxu0 %v11473
    %13585 = vmatprep.subr.bf16.mxu0 %v11909
    %13586 = vmatpush2.bf16.msra.mxu0 %v11908
    %13587 = vmatprep.subr.bf16.mxu0 %v11880
    %13588 = vmatpush2.bf16.msra.mxu0 %v11879
    %13589 = vmatprep.subr.bf16.mxu0 %v11851
    %13590 = vmatpush2.bf16.msra.mxu0 %v11850
    %13591 = vmatprep.subr.bf16.mxu0 %v11822
    %13592 = vmatpush2.bf16.msra.mxu0 %v11821
    %13593 = vmatprep.subr.bf16.mxu0 %v11793
    %13594 = vmatpush2.bf16.msra.mxu0 %v11792
    %13595 = vmatprep.subr.bf16.mxu0 %v11764
    %13596 = vmatpush2.bf16.msra.mxu0 %v11763
    %13597 = vmatprep.subr.bf16.mxu0 %v11735
    %13598 = vmatpush2.bf16.msra.mxu0 %v11734
    %13599 = vmatprep.subr.bf16.mxu0 %v11706
    %13600 = vmatpush2.bf16.msra.mxu0 %v11705
    %13601 = vmatprep.mubr.bf16.mxu0 %v7535
    %13602 = vmatmul.mubr.bf16.gmra.mxu0 %v7534
    %v13603 = vpop.f32.mrf.mxu0
    %v13604 = vadd.f32 %v8533, %v13603
    %v13605 = vpop.f32.mrf.mxu0
    %v13606 = vadd.f32 %v8537, %v13605
    %v13607 = vpop.f32.mrf.mxu0
    %v13608 = vpop.f32.mrf.mxu0
    %13609 = vdwg.mxu0
    %13610 = vmatprep.subr.bf16.mxu0 %v12141
    %13611 = vmatpush1.bf16.msra.mxu0 %v12140
    %13612 = vmatprep.subr.bf16.mxu0 %v12112
    %13613 = vmatpush1.bf16.msra.mxu0 %v12111
    %13614 = vmatprep.subr.bf16.mxu0 %v12083
    %13615 = vmatpush1.bf16.msra.mxu0 %v12082
    %13616 = vmatprep.subr.bf16.mxu0 %v12054
    %13617 = vmatpush1.bf16.msra.mxu0 %v12053
    %13618 = vmatprep.subr.bf16.mxu0 %v12025
    %13619 = vmatpush1.bf16.msra.mxu0 %v12024
    %13620 = vmatprep.subr.bf16.mxu0 %v11996
    %13621 = vmatpush1.bf16.msra.mxu0 %v11995
    %13622 = vmatprep.subr.bf16.mxu0 %v11967
    %13623 = vmatpush1.bf16.msra.mxu0 %v11966
    %13624 = vmatprep.subr.bf16.mxu0 %v11938
    %13625 = vmatpush1.bf16.msra.mxu0 %v11937
    %13626 = vmatprep.subr.bf16.mxu0 %v12373
    %13627 = vmatpush2.bf16.msra.mxu0 %v12372
    %13628 = vmatprep.subr.bf16.mxu0 %v12344
    %13629 = vmatpush2.bf16.msra.mxu0 %v12343
    %13630 = vmatprep.subr.bf16.mxu0 %v12315
    %13631 = vmatpush2.bf16.msra.mxu0 %v12314
    %13632 = vmatprep.subr.bf16.mxu0 %v12286
    %13633 = vmatpush2.bf16.msra.mxu0 %v12285
    %13634 = vmatprep.subr.bf16.mxu0 %v12257
    %13635 = vmatpush2.bf16.msra.mxu0 %v12256
    %13636 = vmatprep.subr.bf16.mxu0 %v12228
    %13637 = vmatpush2.bf16.msra.mxu0 %v12227
    %13638 = vmatprep.subr.bf16.mxu0 %v12199
    %13639 = vmatpush2.bf16.msra.mxu0 %v12198
    %13640 = vmatprep.subr.bf16.mxu0 %v12170
    %13641 = vmatpush2.bf16.msra.mxu0 %v12169
    %13642 = vmatprep.mubr.bf16.mxu0 %v7537
    %13643 = vmatmul.mubr.bf16.gmra.mxu0 %v7536
    %v13644 = vpop.f32.mrf.mxu0
    %v13645 = vadd.f32 %v13604, %v13644
    %v13646 = vpop.f32.mrf.mxu0
    %v13647 = vadd.f32 %v13606, %v13646
    %v13648 = vpop.f32.mrf.mxu0
    %v13649 = vpop.f32.mrf.mxu0
    %13650 = vdwg.mxu0
    %13651 = vmatprep.subr.bf16.mxu0 %v11679
    %13652 = vmatpush1.bf16.msra.mxu0 %v11678
    %13653 = vmatprep.subr.bf16.mxu0 %v11650
    %13654 = vmatpush1.bf16.msra.mxu0 %v11649
    %13655 = vmatprep.subr.bf16.mxu0 %v11621
    %13656 = vmatpush1.bf16.msra.mxu0 %v11620
    %13657 = vmatprep.subr.bf16.mxu0 %v11592
    %13658 = vmatpush1.bf16.msra.mxu0 %v11591
    %13659 = vmatprep.subr.bf16.mxu0 %v11563
    %13660 = vmatpush1.bf16.msra.mxu0 %v11562
    %13661 = vmatprep.subr.bf16.mxu0 %v11534
    %13662 = vmatpush1.bf16.msra.mxu0 %v11533
    %13663 = vmatprep.subr.bf16.mxu0 %v11505
    %13664 = vmatpush1.bf16.msra.mxu0 %v11504
    %13665 = vmatprep.subr.bf16.mxu0 %v11476
    %13666 = vmatpush1.bf16.msra.mxu0 %v11475
    %13667 = vmatprep.subr.bf16.mxu0 %v11911
    %13668 = vmatpush2.bf16.msra.mxu0 %v11910
    %13669 = vmatprep.subr.bf16.mxu0 %v11882
    %13670 = vmatpush2.bf16.msra.mxu0 %v11881
    %13671 = vmatprep.subr.bf16.mxu0 %v11853
    %13672 = vmatpush2.bf16.msra.mxu0 %v11852
    %13673 = vmatprep.subr.bf16.mxu0 %v11824
    %13674 = vmatpush2.bf16.msra.mxu0 %v11823
    %13675 = vmatprep.subr.bf16.mxu0 %v11795
    %13676 = vmatpush2.bf16.msra.mxu0 %v11794
    %13677 = vmatprep.subr.bf16.mxu0 %v11766
    %13678 = vmatpush2.bf16.msra.mxu0 %v11765
    %13679 = vmatprep.subr.bf16.mxu0 %v11737
    %13680 = vmatpush2.bf16.msra.mxu0 %v11736
    %13681 = vmatprep.subr.bf16.mxu0 %v11708
    %13682 = vmatpush2.bf16.msra.mxu0 %v11707
    %13683 = vmatprep.mubr.bf16.mxu0 %v7535
    %13684 = vmatmul.mubr.bf16.gmra.mxu0 %v7534
    %v13685 = vpop.f32.mrf.mxu0
    %v13686 = vadd.f32 %v8541, %v13685
    %v13687 = vpop.f32.mrf.mxu0
    %v13688 = vadd.f32 %v8545, %v13687
    %v13689 = vpop.f32.mrf.mxu0
    %v13690 = vpop.f32.mrf.mxu0
    %13691 = vdwg.mxu0
    %13692 = vmatprep.subr.bf16.mxu0 %v12143
    %13693 = vmatpush1.bf16.msra.mxu0 %v12142
    %13694 = vmatprep.subr.bf16.mxu0 %v12114
    %13695 = vmatpush1.bf16.msra.mxu0 %v12113
    %13696 = vmatprep.subr.bf16.mxu0 %v12085
    %13697 = vmatpush1.bf16.msra.mxu0 %v12084
    %13698 = vmatprep.subr.bf16.mxu0 %v12056
    %13699 = vmatpush1.bf16.msra.mxu0 %v12055
    %13700 = vmatprep.subr.bf16.mxu0 %v12027
    %13701 = vmatpush1.bf16.msra.mxu0 %v12026
    %13702 = vmatprep.subr.bf16.mxu0 %v11998
    %13703 = vmatpush1.bf16.msra.mxu0 %v11997
    %13704 = vmatprep.subr.bf16.mxu0 %v11969
    %13705 = vmatpush1.bf16.msra.mxu0 %v11968
    %13706 = vmatprep.subr.bf16.mxu0 %v11940
    %13707 = vmatpush1.bf16.msra.mxu0 %v11939
    %13708 = vmatprep.subr.bf16.mxu0 %v12375
    %13709 = vmatpush2.bf16.msra.mxu0 %v12374
    %13710 = vmatprep.subr.bf16.mxu0 %v12346
    %13711 = vmatpush2.bf16.msra.mxu0 %v12345
    %13712 = vmatprep.subr.bf16.mxu0 %v12317
    %13713 = vmatpush2.bf16.msra.mxu0 %v12316
    %13714 = vmatprep.subr.bf16.mxu0 %v12288
    %13715 = vmatpush2.bf16.msra.mxu0 %v12287
    %13716 = vmatprep.subr.bf16.mxu0 %v12259
    %13717 = vmatpush2.bf16.msra.mxu0 %v12258
    %13718 = vmatprep.subr.bf16.mxu0 %v12230
    %13719 = vmatpush2.bf16.msra.mxu0 %v12229
    %13720 = vmatprep.subr.bf16.mxu0 %v12201
    %13721 = vmatpush2.bf16.msra.mxu0 %v12200
    %13722 = vmatprep.subr.bf16.mxu0 %v12172
    %13723 = vmatpush2.bf16.msra.mxu0 %v12171
    %13724 = vmatprep.mubr.bf16.mxu0 %v7537
    %13725 = vmatmul.mubr.bf16.gmra.mxu0 %v7536
    %v13726 = vpop.f32.mrf.mxu0
    %v13727 = vadd.f32 %v13686, %v13726
    %v13728 = vpop.f32.mrf.mxu0
    %v13729 = vadd.f32 %v13688, %v13728
    %v13730 = vpop.f32.mrf.mxu0
    %v13731 = vpop.f32.mrf.mxu0
    %13732 = vdwg.mxu0
    %13733 = vmatprep.subr.bf16.mxu0 %v11681
    %13734 = vmatpush1.bf16.msra.mxu0 %v11680
    %13735 = vmatprep.subr.bf16.mxu0 %v11652
    %13736 = vmatpush1.bf16.msra.mxu0 %v11651
    %13737 = vmatprep.subr.bf16.mxu0 %v11623
    %13738 = vmatpush1.bf16.msra.mxu0 %v11622
    %13739 = vmatprep.subr.bf16.mxu0 %v11594
    %13740 = vmatpush1.bf16.msra.mxu0 %v11593
    %13741 = vmatprep.subr.bf16.mxu0 %v11565
    %13742 = vmatpush1.bf16.msra.mxu0 %v11564
    %13743 = vmatprep.subr.bf16.mxu0 %v11536
    %13744 = vmatpush1.bf16.msra.mxu0 %v11535
    %13745 = vmatprep.subr.bf16.mxu0 %v11507
    %13746 = vmatpush1.bf16.msra.mxu0 %v11506
    %13747 = vmatprep.subr.bf16.mxu0 %v11478
    %13748 = vmatpush1.bf16.msra.mxu0 %v11477
    %13749 = vmatprep.subr.bf16.mxu0 %v11913
    %13750 = vmatpush2.bf16.msra.mxu0 %v11912
    %13751 = vmatprep.subr.bf16.mxu0 %v11884
    %13752 = vmatpush2.bf16.msra.mxu0 %v11883
    %13753 = vmatprep.subr.bf16.mxu0 %v11855
    %13754 = vmatpush2.bf16.msra.mxu0 %v11854
    %13755 = vmatprep.subr.bf16.mxu0 %v11826
    %13756 = vmatpush2.bf16.msra.mxu0 %v11825
    %13757 = vmatprep.subr.bf16.mxu0 %v11797
    %13758 = vmatpush2.bf16.msra.mxu0 %v11796
    %13759 = vmatprep.subr.bf16.mxu0 %v11768
    %13760 = vmatpush2.bf16.msra.mxu0 %v11767
    %13761 = vmatprep.subr.bf16.mxu0 %v11739
    %13762 = vmatpush2.bf16.msra.mxu0 %v11738
    %13763 = vmatprep.subr.bf16.mxu0 %v11710
    %13764 = vmatpush2.bf16.msra.mxu0 %v11709
    %13765 = vmatprep.mubr.bf16.mxu0 %v7535
    %13766 = vmatmul.mubr.bf16.gmra.mxu0 %v7534
    %v13767 = vpop.f32.mrf.mxu0
    %v13768 = vadd.f32 %v8549, %v13767
    %v13769 = vpop.f32.mrf.mxu0
    %v13770 = vadd.f32 %v8553, %v13769
    %v13771 = vpop.f32.mrf.mxu0
    %v13772 = vpop.f32.mrf.mxu0
    %13773 = vdwg.mxu0
    %13774 = vmatprep.subr.bf16.mxu0 %v12145
    %13775 = vmatpush1.bf16.msra.mxu0 %v12144
    %13776 = vmatprep.subr.bf16.mxu0 %v12116
    %13777 = vmatpush1.bf16.msra.mxu0 %v12115
    %13778 = vmatprep.subr.bf16.mxu0 %v12087
    %13779 = vmatpush1.bf16.msra.mxu0 %v12086
    %13780 = vmatprep.subr.bf16.mxu0 %v12058
    %13781 = vmatpush1.bf16.msra.mxu0 %v12057
    %13782 = vmatprep.subr.bf16.mxu0 %v12029
    %13783 = vmatpush1.bf16.msra.mxu0 %v12028
    %13784 = vmatprep.subr.bf16.mxu0 %v12000
    %13785 = vmatpush1.bf16.msra.mxu0 %v11999
    %13786 = vmatprep.subr.bf16.mxu0 %v11971
    %13787 = vmatpush1.bf16.msra.mxu0 %v11970
    %13788 = vmatprep.subr.bf16.mxu0 %v11942
    %13789 = vmatpush1.bf16.msra.mxu0 %v11941
    %13790 = vmatprep.subr.bf16.mxu0 %v12377
    %13791 = vmatpush2.bf16.msra.mxu0 %v12376
    %13792 = vmatprep.subr.bf16.mxu0 %v12348
    %13793 = vmatpush2.bf16.msra.mxu0 %v12347
    %13794 = vmatprep.subr.bf16.mxu0 %v12319
    %13795 = vmatpush2.bf16.msra.mxu0 %v12318
    %13796 = vmatprep.subr.bf16.mxu0 %v12290
    %13797 = vmatpush2.bf16.msra.mxu0 %v12289
    %13798 = vmatprep.subr.bf16.mxu0 %v12261
    %13799 = vmatpush2.bf16.msra.mxu0 %v12260
    %13800 = vmatprep.subr.bf16.mxu0 %v12232
    %13801 = vmatpush2.bf16.msra.mxu0 %v12231
    %13802 = vmatprep.subr.bf16.mxu0 %v12203
    %13803 = vmatpush2.bf16.msra.mxu0 %v12202
    %13804 = vmatprep.subr.bf16.mxu0 %v12174
    %13805 = vmatpush2.bf16.msra.mxu0 %v12173
    %13806 = vmatprep.mubr.bf16.mxu0 %v7537
    %13807 = vmatmul.mubr.bf16.gmra.mxu0 %v7536
    %v13808 = vpop.f32.mrf.mxu0
    %v13809 = vadd.f32 %v13768, %v13808
    %v13810 = vpop.f32.mrf.mxu0
    %v13811 = vadd.f32 %v13770, %v13810
    %v13812 = vpop.f32.mrf.mxu0
    %v13813 = vpop.f32.mrf.mxu0
    %13814 = vdwg.mxu0
    %13815 = vmatprep.subr.bf16.mxu0 %v11683
    %13816 = vmatpush1.bf16.msra.mxu0 %v11682
    %13817 = vmatprep.subr.bf16.mxu0 %v11654
    %13818 = vmatpush1.bf16.msra.mxu0 %v11653
    %13819 = vmatprep.subr.bf16.mxu0 %v11625
    %13820 = vmatpush1.bf16.msra.mxu0 %v11624
    %13821 = vmatprep.subr.bf16.mxu0 %v11596
    %13822 = vmatpush1.bf16.msra.mxu0 %v11595
    %13823 = vmatprep.subr.bf16.mxu0 %v11567
    %13824 = vmatpush1.bf16.msra.mxu0 %v11566
    %13825 = vmatprep.subr.bf16.mxu0 %v11538
    %13826 = vmatpush1.bf16.msra.mxu0 %v11537
    %13827 = vmatprep.subr.bf16.mxu0 %v11509
    %13828 = vmatpush1.bf16.msra.mxu0 %v11508
    %13829 = vmatprep.subr.bf16.mxu0 %v11480
    %13830 = vmatpush1.bf16.msra.mxu0 %v11479
    %13831 = vmatprep.subr.bf16.mxu0 %v11915
    %13832 = vmatpush2.bf16.msra.mxu0 %v11914
    %13833 = vmatprep.subr.bf16.mxu0 %v11886
    %13834 = vmatpush2.bf16.msra.mxu0 %v11885
    %13835 = vmatprep.subr.bf16.mxu0 %v11857
    %13836 = vmatpush2.bf16.msra.mxu0 %v11856
    %13837 = vmatprep.subr.bf16.mxu0 %v11828
    %13838 = vmatpush2.bf16.msra.mxu0 %v11827
    %13839 = vmatprep.subr.bf16.mxu0 %v11799
    %13840 = vmatpush2.bf16.msra.mxu0 %v11798
    %13841 = vmatprep.subr.bf16.mxu0 %v11770
    %13842 = vmatpush2.bf16.msra.mxu0 %v11769
    %13843 = vmatprep.subr.bf16.mxu0 %v11741
    %13844 = vmatpush2.bf16.msra.mxu0 %v11740
    %13845 = vmatprep.subr.bf16.mxu0 %v11712
    %13846 = vmatpush2.bf16.msra.mxu0 %v11711
    %13847 = vmatprep.mubr.bf16.mxu0 %v7535
    %13848 = vmatmul.mubr.bf16.gmra.mxu0 %v7534
    %v13849 = vpop.f32.mrf.mxu0
    %v13850 = vadd.f32 %v8557, %v13849
    %v13851 = vpop.f32.mrf.mxu0
    %v13852 = vadd.f32 %v8561, %v13851
    %v13853 = vpop.f32.mrf.mxu0
    %v13854 = vpop.f32.mrf.mxu0
    %13855 = vdwg.mxu0
    %13856 = vmatprep.subr.bf16.mxu0 %v12147
    %13857 = vmatpush1.bf16.msra.mxu0 %v12146
    %13858 = vmatprep.subr.bf16.mxu0 %v12118
    %13859 = vmatpush1.bf16.msra.mxu0 %v12117
    %13860 = vmatprep.subr.bf16.mxu0 %v12089
    %13861 = vmatpush1.bf16.msra.mxu0 %v12088
    %13862 = vmatprep.subr.bf16.mxu0 %v12060
    %13863 = vmatpush1.bf16.msra.mxu0 %v12059
    %13864 = vmatprep.subr.bf16.mxu0 %v12031
    %13865 = vmatpush1.bf16.msra.mxu0 %v12030
    %13866 = vmatprep.subr.bf16.mxu0 %v12002
    %13867 = vmatpush1.bf16.msra.mxu0 %v12001
    %13868 = vmatprep.subr.bf16.mxu0 %v11973
    %13869 = vmatpush1.bf16.msra.mxu0 %v11972
    %13870 = vmatprep.subr.bf16.mxu0 %v11944
    %13871 = vmatpush1.bf16.msra.mxu0 %v11943
    %13872 = vmatprep.subr.bf16.mxu0 %v12379
    %13873 = vmatpush2.bf16.msra.mxu0 %v12378
    %13874 = vmatprep.subr.bf16.mxu0 %v12350
    %13875 = vmatpush2.bf16.msra.mxu0 %v12349
    %13876 = vmatprep.subr.bf16.mxu0 %v12321
    %13877 = vmatpush2.bf16.msra.mxu0 %v12320
    %13878 = vmatprep.subr.bf16.mxu0 %v12292
    %13879 = vmatpush2.bf16.msra.mxu0 %v12291
    %13880 = vmatprep.subr.bf16.mxu0 %v12263
    %13881 = vmatpush2.bf16.msra.mxu0 %v12262
    %13882 = vmatprep.subr.bf16.mxu0 %v12234
    %13883 = vmatpush2.bf16.msra.mxu0 %v12233
    %13884 = vmatprep.subr.bf16.mxu0 %v12205
    %13885 = vmatpush2.bf16.msra.mxu0 %v12204
    %13886 = vmatprep.subr.bf16.mxu0 %v12176
    %13887 = vmatpush2.bf16.msra.mxu0 %v12175
    %13888 = vmatprep.mubr.bf16.mxu0 %v7537
    %13889 = vmatmul.mubr.bf16.gmra.mxu0 %v7536
    %v13890 = vpop.f32.mrf.mxu0
    %v13891 = vadd.f32 %v13850, %v13890
    %v13892 = vpop.f32.mrf.mxu0
    %v13893 = vadd.f32 %v13852, %v13892
    %v13894 = vpop.f32.mrf.mxu0
    %v13895 = vpop.f32.mrf.mxu0
    %13896 = vdwg.mxu0
    %13897 = vmatprep.subr.bf16.mxu0 %v11685
    %13898 = vmatpush1.bf16.msra.mxu0 %v11684
    %13899 = vmatprep.subr.bf16.mxu0 %v11656
    %13900 = vmatpush1.bf16.msra.mxu0 %v11655
    %13901 = vmatprep.subr.bf16.mxu0 %v11627
    %13902 = vmatpush1.bf16.msra.mxu0 %v11626
    %13903 = vmatprep.subr.bf16.mxu0 %v11598
    %13904 = vmatpush1.bf16.msra.mxu0 %v11597
    %13905 = vmatprep.subr.bf16.mxu0 %v11569
    %13906 = vmatpush1.bf16.msra.mxu0 %v11568
    %13907 = vmatprep.subr.bf16.mxu0 %v11540
    %13908 = vmatpush1.bf16.msra.mxu0 %v11539
    %13909 = vmatprep.subr.bf16.mxu0 %v11511
    %13910 = vmatpush1.bf16.msra.mxu0 %v11510
    %13911 = vmatprep.subr.bf16.mxu0 %v11482
    %13912 = vmatpush1.bf16.msra.mxu0 %v11481
    %13913 = vmatprep.subr.bf16.mxu0 %v11917
    %13914 = vmatpush2.bf16.msra.mxu0 %v11916
    %13915 = vmatprep.subr.bf16.mxu0 %v11888
    %13916 = vmatpush2.bf16.msra.mxu0 %v11887
    %13917 = vmatprep.subr.bf16.mxu0 %v11859
    %13918 = vmatpush2.bf16.msra.mxu0 %v11858
    %13919 = vmatprep.subr.bf16.mxu0 %v11830
    %13920 = vmatpush2.bf16.msra.mxu0 %v11829
    %13921 = vmatprep.subr.bf16.mxu0 %v11801
    %13922 = vmatpush2.bf16.msra.mxu0 %v11800
    %13923 = vmatprep.subr.bf16.mxu0 %v11772
    %13924 = vmatpush2.bf16.msra.mxu0 %v11771
    %13925 = vmatprep.subr.bf16.mxu0 %v11743
    %13926 = vmatpush2.bf16.msra.mxu0 %v11742
    %13927 = vmatprep.subr.bf16.mxu0 %v11714
    %13928 = vmatpush2.bf16.msra.mxu0 %v11713
    %13929 = vmatprep.mubr.bf16.mxu0 %v7535
    %13930 = vmatmul.mubr.bf16.gmra.mxu0 %v7534
    %v13931 = vpop.f32.mrf.mxu0
    %v13932 = vadd.f32 %v8565, %v13931
    %v13933 = vpop.f32.mrf.mxu0
    %v13934 = vadd.f32 %v8569, %v13933
    %v13935 = vpop.f32.mrf.mxu0
    %v13936 = vpop.f32.mrf.mxu0
    %13937 = vdwg.mxu0
    %13938 = vmatprep.subr.bf16.mxu0 %v12149
    %13939 = vmatpush1.bf16.msra.mxu0 %v12148
    %13940 = vmatprep.subr.bf16.mxu0 %v12120
    %13941 = vmatpush1.bf16.msra.mxu0 %v12119
    %13942 = vmatprep.subr.bf16.mxu0 %v12091
    %13943 = vmatpush1.bf16.msra.mxu0 %v12090
    %13944 = vmatprep.subr.bf16.mxu0 %v12062
    %13945 = vmatpush1.bf16.msra.mxu0 %v12061
    %13946 = vmatprep.subr.bf16.mxu0 %v12033
    %13947 = vmatpush1.bf16.msra.mxu0 %v12032
    %13948 = vmatprep.subr.bf16.mxu0 %v12004
    %13949 = vmatpush1.bf16.msra.mxu0 %v12003
    %13950 = vmatprep.subr.bf16.mxu0 %v11975
    %13951 = vmatpush1.bf16.msra.mxu0 %v11974
    %13952 = vmatprep.subr.bf16.mxu0 %v11946
    %13953 = vmatpush1.bf16.msra.mxu0 %v11945
    %13954 = vmatprep.subr.bf16.mxu0 %v12381
    %13955 = vmatpush2.bf16.msra.mxu0 %v12380
    %13956 = vmatprep.subr.bf16.mxu0 %v12352
    %13957 = vmatpush2.bf16.msra.mxu0 %v12351
    %13958 = vmatprep.subr.bf16.mxu0 %v12323
    %13959 = vmatpush2.bf16.msra.mxu0 %v12322
    %13960 = vmatprep.subr.bf16.mxu0 %v12294
    %13961 = vmatpush2.bf16.msra.mxu0 %v12293
    %13962 = vmatprep.subr.bf16.mxu0 %v12265
    %13963 = vmatpush2.bf16.msra.mxu0 %v12264
    %13964 = vmatprep.subr.bf16.mxu0 %v12236
    %13965 = vmatpush2.bf16.msra.mxu0 %v12235
    %13966 = vmatprep.subr.bf16.mxu0 %v12207
    %13967 = vmatpush2.bf16.msra.mxu0 %v12206
    %13968 = vmatprep.subr.bf16.mxu0 %v12178
    %13969 = vmatpush2.bf16.msra.mxu0 %v12177
    %13970 = vmatprep.mubr.bf16.mxu0 %v7537
    %13971 = vmatmul.mubr.bf16.gmra.mxu0 %v7536
    %v13972 = vpop.f32.mrf.mxu0
    %v13973 = vadd.f32 %v13932, %v13972
    %v13974 = vpop.f32.mrf.mxu0
    %v13975 = vadd.f32 %v13934, %v13974
    %v13976 = vpop.f32.mrf.mxu0
    %v13977 = vpop.f32.mrf.mxu0
    %13978 = vdwg.mxu0
    %13979 = vmatprep.subr.bf16.mxu0 %v11687
    %13980 = vmatpush1.bf16.msra.mxu0 %v11686
    %13981 = vmatprep.subr.bf16.mxu0 %v11658
    %13982 = vmatpush1.bf16.msra.mxu0 %v11657
    %13983 = vmatprep.subr.bf16.mxu0 %v11629
    %13984 = vmatpush1.bf16.msra.mxu0 %v11628
    %13985 = vmatprep.subr.bf16.mxu0 %v11600
    %13986 = vmatpush1.bf16.msra.mxu0 %v11599
    %13987 = vmatprep.subr.bf16.mxu0 %v11571
    %13988 = vmatpush1.bf16.msra.mxu0 %v11570
    %13989 = vmatprep.subr.bf16.mxu0 %v11542
    %13990 = vmatpush1.bf16.msra.mxu0 %v11541
    %13991 = vmatprep.subr.bf16.mxu0 %v11513
    %13992 = vmatpush1.bf16.msra.mxu0 %v11512
    %13993 = vmatprep.subr.bf16.mxu0 %v11484
    %13994 = vmatpush1.bf16.msra.mxu0 %v11483
    %13995 = vmatprep.subr.bf16.mxu0 %v11919
    %13996 = vmatpush2.bf16.msra.mxu0 %v11918
    %13997 = vmatprep.subr.bf16.mxu0 %v11890
    %13998 = vmatpush2.bf16.msra.mxu0 %v11889
    %13999 = vmatprep.subr.bf16.mxu0 %v11861
    %14000 = vmatpush2.bf16.msra.mxu0 %v11860
    %14001 = vmatprep.subr.bf16.mxu0 %v11832
    %14002 = vmatpush2.bf16.msra.mxu0 %v11831
    %14003 = vmatprep.subr.bf16.mxu0 %v11803
    %14004 = vmatpush2.bf16.msra.mxu0 %v11802
    %14005 = vmatprep.subr.bf16.mxu0 %v11774
    %14006 = vmatpush2.bf16.msra.mxu0 %v11773
    %14007 = vmatprep.subr.bf16.mxu0 %v11745
    %14008 = vmatpush2.bf16.msra.mxu0 %v11744
    %14009 = vmatprep.subr.bf16.mxu0 %v11716
    %14010 = vmatpush2.bf16.msra.mxu0 %v11715
    %14011 = vmatprep.mubr.bf16.mxu0 %v7535
    %14012 = vmatmul.mubr.bf16.gmra.mxu0 %v7534
    %v14013 = vpop.f32.mrf.mxu0
    %v14014 = vadd.f32 %v8573, %v14013
    %v14015 = vpop.f32.mrf.mxu0
    %v14016 = vadd.f32 %v8577, %v14015
    %v14017 = vpop.f32.mrf.mxu0
    %v14018 = vpop.f32.mrf.mxu0
    %14019 = vdwg.mxu0
    %14020 = vmatprep.subr.bf16.mxu0 %v12151
    %14021 = vmatpush1.bf16.msra.mxu0 %v12150
    %14022 = vmatprep.subr.bf16.mxu0 %v12122
    %14023 = vmatpush1.bf16.msra.mxu0 %v12121
    %14024 = vmatprep.subr.bf16.mxu0 %v12093
    %14025 = vmatpush1.bf16.msra.mxu0 %v12092
    %14026 = vmatprep.subr.bf16.mxu0 %v12064
    %14027 = vmatpush1.bf16.msra.mxu0 %v12063
    %14028 = vmatprep.subr.bf16.mxu0 %v12035
    %14029 = vmatpush1.bf16.msra.mxu0 %v12034
    %14030 = vmatprep.subr.bf16.mxu0 %v12006
    %14031 = vmatpush1.bf16.msra.mxu0 %v12005
    %14032 = vmatprep.subr.bf16.mxu0 %v11977
    %14033 = vmatpush1.bf16.msra.mxu0 %v11976
    %14034 = vmatprep.subr.bf16.mxu0 %v11948
    %14035 = vmatpush1.bf16.msra.mxu0 %v11947
    %14036 = vmatprep.subr.bf16.mxu0 %v12383
    %14037 = vmatpush2.bf16.msra.mxu0 %v12382
    %14038 = vmatprep.subr.bf16.mxu0 %v12354
    %14039 = vmatpush2.bf16.msra.mxu0 %v12353
    %14040 = vmatprep.subr.bf16.mxu0 %v12325
    %14041 = vmatpush2.bf16.msra.mxu0 %v12324
    %14042 = vmatprep.subr.bf16.mxu0 %v12296
    %14043 = vmatpush2.bf16.msra.mxu0 %v12295
    %14044 = vmatprep.subr.bf16.mxu0 %v12267
    %14045 = vmatpush2.bf16.msra.mxu0 %v12266
    %14046 = vmatprep.subr.bf16.mxu0 %v12238
    %14047 = vmatpush2.bf16.msra.mxu0 %v12237
    %14048 = vmatprep.subr.bf16.mxu0 %v12209
    %14049 = vmatpush2.bf16.msra.mxu0 %v12208
    %14050 = vmatprep.subr.bf16.mxu0 %v12180
    %14051 = vmatpush2.bf16.msra.mxu0 %v12179
    %14052 = vmatprep.mubr.bf16.mxu0 %v7537
    %14053 = vmatmul.mubr.bf16.gmra.mxu0 %v7536
    %v14054 = vpop.f32.mrf.mxu0
    %v14055 = vadd.f32 %v14014, %v14054
    %v14056 = vpop.f32.mrf.mxu0
    %v14057 = vadd.f32 %v14016, %v14056
    %v14058 = vpop.f32.mrf.mxu0
    %v14059 = vpop.f32.mrf.mxu0
    %14060 = vdwg.mxu0
    %14061 = vmatprep.subr.bf16.mxu0 %v11689
    %14062 = vmatpush1.bf16.msra.mxu0 %v11688
    %14063 = vmatprep.subr.bf16.mxu0 %v11660
    %14064 = vmatpush1.bf16.msra.mxu0 %v11659
    %14065 = vmatprep.subr.bf16.mxu0 %v11631
    %14066 = vmatpush1.bf16.msra.mxu0 %v11630
    %14067 = vmatprep.subr.bf16.mxu0 %v11602
    %14068 = vmatpush1.bf16.msra.mxu0 %v11601
    %14069 = vmatprep.subr.bf16.mxu0 %v11573
    %14070 = vmatpush1.bf16.msra.mxu0 %v11572
    %14071 = vmatprep.subr.bf16.mxu0 %v11544
    %14072 = vmatpush1.bf16.msra.mxu0 %v11543
    %14073 = vmatprep.subr.bf16.mxu0 %v11515
    %14074 = vmatpush1.bf16.msra.mxu0 %v11514
    %14075 = vmatprep.subr.bf16.mxu0 %v11486
    %14076 = vmatpush1.bf16.msra.mxu0 %v11485
    %14077 = vmatprep.subr.bf16.mxu0 %v11921
    %14078 = vmatpush2.bf16.msra.mxu0 %v11920
    %14079 = vmatprep.subr.bf16.mxu0 %v11892
    %14080 = vmatpush2.bf16.msra.mxu0 %v11891
    %14081 = vmatprep.subr.bf16.mxu0 %v11863
    %14082 = vmatpush2.bf16.msra.mxu0 %v11862
    %14083 = vmatprep.subr.bf16.mxu0 %v11834
    %14084 = vmatpush2.bf16.msra.mxu0 %v11833
    %14085 = vmatprep.subr.bf16.mxu0 %v11805
    %14086 = vmatpush2.bf16.msra.mxu0 %v11804
    %14087 = vmatprep.subr.bf16.mxu0 %v11776
    %14088 = vmatpush2.bf16.msra.mxu0 %v11775
    %14089 = vmatprep.subr.bf16.mxu0 %v11747
    %14090 = vmatpush2.bf16.msra.mxu0 %v11746
    %14091 = vmatprep.subr.bf16.mxu0 %v11718
    %14092 = vmatpush2.bf16.msra.mxu0 %v11717
    %14093 = vmatprep.mubr.bf16.mxu0 %v7535
    %14094 = vmatmul.mubr.bf16.gmra.mxu0 %v7534
    %v14095 = vpop.f32.mrf.mxu0
    %v14096 = vadd.f32 %v8581, %v14095
    %v14097 = vpop.f32.mrf.mxu0
    %v14098 = vadd.f32 %v8585, %v14097
    %v14099 = vpop.f32.mrf.mxu0
    %v14100 = vpop.f32.mrf.mxu0
    %14101 = vdwg.mxu0
    %14102 = vmatprep.subr.bf16.mxu0 %v12153
    %14103 = vmatpush1.bf16.msra.mxu0 %v12152
    %14104 = vmatprep.subr.bf16.mxu0 %v12124
    %14105 = vmatpush1.bf16.msra.mxu0 %v12123
    %14106 = vmatprep.subr.bf16.mxu0 %v12095
    %14107 = vmatpush1.bf16.msra.mxu0 %v12094
    %14108 = vmatprep.subr.bf16.mxu0 %v12066
    %14109 = vmatpush1.bf16.msra.mxu0 %v12065
    %14110 = vmatprep.subr.bf16.mxu0 %v12037
    %14111 = vmatpush1.bf16.msra.mxu0 %v12036
    %14112 = vmatprep.subr.bf16.mxu0 %v12008
    %14113 = vmatpush1.bf16.msra.mxu0 %v12007
    %14114 = vmatprep.subr.bf16.mxu0 %v11979
    %14115 = vmatpush1.bf16.msra.mxu0 %v11978
    %14116 = vmatprep.subr.bf16.mxu0 %v11950
    %14117 = vmatpush1.bf16.msra.mxu0 %v11949
    %14118 = vmatprep.subr.bf16.mxu0 %v12385
    %14119 = vmatpush2.bf16.msra.mxu0 %v12384
    %14120 = vmatprep.subr.bf16.mxu0 %v12356
    %14121 = vmatpush2.bf16.msra.mxu0 %v12355
    %14122 = vmatprep.subr.bf16.mxu0 %v12327
    %14123 = vmatpush2.bf16.msra.mxu0 %v12326
    %14124 = vmatprep.subr.bf16.mxu0 %v12298
    %14125 = vmatpush2.bf16.msra.mxu0 %v12297
    %14126 = vmatprep.subr.bf16.mxu0 %v12269
    %14127 = vmatpush2.bf16.msra.mxu0 %v12268
    %14128 = vmatprep.subr.bf16.mxu0 %v12240
    %14129 = vmatpush2.bf16.msra.mxu0 %v12239
    %14130 = vmatprep.subr.bf16.mxu0 %v12211
    %14131 = vmatpush2.bf16.msra.mxu0 %v12210
    %14132 = vmatprep.subr.bf16.mxu0 %v12182
    %14133 = vmatpush2.bf16.msra.mxu0 %v12181
    %14134 = vmatprep.mubr.bf16.mxu0 %v7537
    %14135 = vmatmul.mubr.bf16.gmra.mxu0 %v7536
    %v14136 = vpop.f32.mrf.mxu0
    %v14137 = vadd.f32 %v14096, %v14136
    %v14138 = vpop.f32.mrf.mxu0
    %v14139 = vadd.f32 %v14098, %v14138
    %v14140 = vpop.f32.mrf.mxu0
    %v14141 = vpop.f32.mrf.mxu0
    %14142 = vdwg.mxu0
    %14143 = vmatprep.subr.bf16.mxu0 %v11691
    %14144 = vmatpush1.bf16.msra.mxu0 %v11690
    %14145 = vmatprep.subr.bf16.mxu0 %v11662
    %14146 = vmatpush1.bf16.msra.mxu0 %v11661
    %14147 = vmatprep.subr.bf16.mxu0 %v11633
    %14148 = vmatpush1.bf16.msra.mxu0 %v11632
    %14149 = vmatprep.subr.bf16.mxu0 %v11604
    %14150 = vmatpush1.bf16.msra.mxu0 %v11603
    %14151 = vmatprep.subr.bf16.mxu0 %v11575
    %14152 = vmatpush1.bf16.msra.mxu0 %v11574
    %14153 = vmatprep.subr.bf16.mxu0 %v11546
    %14154 = vmatpush1.bf16.msra.mxu0 %v11545
    %14155 = vmatprep.subr.bf16.mxu0 %v11517
    %14156 = vmatpush1.bf16.msra.mxu0 %v11516
    %14157 = vmatprep.subr.bf16.mxu0 %v11488
    %14158 = vmatpush1.bf16.msra.mxu0 %v11487
    %14159 = vmatprep.subr.bf16.mxu0 %v11923
    %14160 = vmatpush2.bf16.msra.mxu0 %v11922
    %14161 = vmatprep.subr.bf16.mxu0 %v11894
    %14162 = vmatpush2.bf16.msra.mxu0 %v11893
    %14163 = vmatprep.subr.bf16.mxu0 %v11865
    %14164 = vmatpush2.bf16.msra.mxu0 %v11864
    %14165 = vmatprep.subr.bf16.mxu0 %v11836
    %14166 = vmatpush2.bf16.msra.mxu0 %v11835
    %14167 = vmatprep.subr.bf16.mxu0 %v11807
    %14168 = vmatpush2.bf16.msra.mxu0 %v11806
    %14169 = vmatprep.subr.bf16.mxu0 %v11778
    %14170 = vmatpush2.bf16.msra.mxu0 %v11777
    %14171 = vmatprep.subr.bf16.mxu0 %v11749
    %14172 = vmatpush2.bf16.msra.mxu0 %v11748
    %14173 = vmatprep.subr.bf16.mxu0 %v11720
    %14174 = vmatpush2.bf16.msra.mxu0 %v11719
    %14175 = vmatprep.mubr.bf16.mxu0 %v7535
    %14176 = vmatmul.mubr.bf16.gmra.mxu0 %v7534
    %v14177 = vpop.f32.mrf.mxu0
    %v14178 = vadd.f32 %v8589, %v14177
    %v14179 = vpop.f32.mrf.mxu0
    %v14180 = vadd.f32 %v8593, %v14179
    %v14181 = vpop.f32.mrf.mxu0
    %v14182 = vpop.f32.mrf.mxu0
    %14183 = vdwg.mxu0
    %14184 = vmatprep.subr.bf16.mxu0 %v12155
    %14185 = vmatpush1.bf16.msra.mxu0 %v12154
    %14186 = vmatprep.subr.bf16.mxu0 %v12126
    %14187 = vmatpush1.bf16.msra.mxu0 %v12125
    %14188 = vmatprep.subr.bf16.mxu0 %v12097
    %14189 = vmatpush1.bf16.msra.mxu0 %v12096
    %14190 = vmatprep.subr.bf16.mxu0 %v12068
    %14191 = vmatpush1.bf16.msra.mxu0 %v12067
    %14192 = vmatprep.subr.bf16.mxu0 %v12039
    %14193 = vmatpush1.bf16.msra.mxu0 %v12038
    %14194 = vmatprep.subr.bf16.mxu0 %v12010
    %14195 = vmatpush1.bf16.msra.mxu0 %v12009
    %14196 = vmatprep.subr.bf16.mxu0 %v11981
    %14197 = vmatpush1.bf16.msra.mxu0 %v11980
    %14198 = vmatprep.subr.bf16.mxu0 %v11952
    %14199 = vmatpush1.bf16.msra.mxu0 %v11951
    %14200 = vmatprep.subr.bf16.mxu0 %v12387
    %14201 = vmatpush2.bf16.msra.mxu0 %v12386
    %14202 = vmatprep.subr.bf16.mxu0 %v12358
    %14203 = vmatpush2.bf16.msra.mxu0 %v12357
    %14204 = vmatprep.subr.bf16.mxu0 %v12329
    %14205 = vmatpush2.bf16.msra.mxu0 %v12328
    %14206 = vmatprep.subr.bf16.mxu0 %v12300
    %14207 = vmatpush2.bf16.msra.mxu0 %v12299
    %14208 = vmatprep.subr.bf16.mxu0 %v12271
    %14209 = vmatpush2.bf16.msra.mxu0 %v12270
    %14210 = vmatprep.subr.bf16.mxu0 %v12242
    %14211 = vmatpush2.bf16.msra.mxu0 %v12241
    %14212 = vmatprep.subr.bf16.mxu0 %v12213
    %14213 = vmatpush2.bf16.msra.mxu0 %v12212
    %14214 = vmatprep.subr.bf16.mxu0 %v12184
    %14215 = vmatpush2.bf16.msra.mxu0 %v12183
    %14216 = vmatprep.mubr.bf16.mxu0 %v7537
    %14217 = vmatmul.mubr.bf16.gmra.mxu0 %v7536
    %v14218 = vpop.f32.mrf.mxu0
    %v14219 = vadd.f32 %v14178, %v14218
    %v14220 = vpop.f32.mrf.mxu0
    %v14221 = vadd.f32 %v14180, %v14220
    %v14222 = vpop.f32.mrf.mxu0
    %v14223 = vpop.f32.mrf.mxu0
    %14224 = vdwg.mxu0
    %14225 = vmatprep.subr.bf16.mxu0 %v11693
    %14226 = vmatpush1.bf16.msra.mxu0 %v11692
    %14227 = vmatprep.subr.bf16.mxu0 %v11664
    %14228 = vmatpush1.bf16.msra.mxu0 %v11663
    %14229 = vmatprep.subr.bf16.mxu0 %v11635
    %14230 = vmatpush1.bf16.msra.mxu0 %v11634
    %14231 = vmatprep.subr.bf16.mxu0 %v11606
    %14232 = vmatpush1.bf16.msra.mxu0 %v11605
    %14233 = vmatprep.subr.bf16.mxu0 %v11577
    %14234 = vmatpush1.bf16.msra.mxu0 %v11576
    %14235 = vmatprep.subr.bf16.mxu0 %v11548
    %14236 = vmatpush1.bf16.msra.mxu0 %v11547
    %14237 = vmatprep.subr.bf16.mxu0 %v11519
    %14238 = vmatpush1.bf16.msra.mxu0 %v11518
    %14239 = vmatprep.subr.bf16.mxu0 %v11490
    %14240 = vmatpush1.bf16.msra.mxu0 %v11489
    %14241 = vmatprep.subr.bf16.mxu0 %v11925
    %14242 = vmatpush2.bf16.msra.mxu0 %v11924
    %14243 = vmatprep.subr.bf16.mxu0 %v11896
    %14244 = vmatpush2.bf16.msra.mxu0 %v11895
    %14245 = vmatprep.subr.bf16.mxu0 %v11867
    %14246 = vmatpush2.bf16.msra.mxu0 %v11866
    %14247 = vmatprep.subr.bf16.mxu0 %v11838
    %14248 = vmatpush2.bf16.msra.mxu0 %v11837
    %14249 = vmatprep.subr.bf16.mxu0 %v11809
    %14250 = vmatpush2.bf16.msra.mxu0 %v11808
    %14251 = vmatprep.subr.bf16.mxu0 %v11780
    %14252 = vmatpush2.bf16.msra.mxu0 %v11779
    %14253 = vmatprep.subr.bf16.mxu0 %v11751
    %14254 = vmatpush2.bf16.msra.mxu0 %v11750
    %14255 = vmatprep.subr.bf16.mxu0 %v11722
    %14256 = vmatpush2.bf16.msra.mxu0 %v11721
    %14257 = vmatprep.mubr.bf16.mxu0 %v7535
    %14258 = vmatmul.mubr.bf16.gmra.mxu0 %v7534
    %v14259 = vpop.f32.mrf.mxu0
    %v14260 = vadd.f32 %v8597, %v14259
    %v14261 = vpop.f32.mrf.mxu0
    %v14262 = vadd.f32 %v8601, %v14261
    %v14263 = vpop.f32.mrf.mxu0
    %v14264 = vpop.f32.mrf.mxu0
    %14265 = vdwg.mxu0
    %14266 = vmatprep.subr.bf16.mxu0 %v12157
    %14267 = vmatpush1.bf16.msra.mxu0 %v12156
    %14268 = vmatprep.subr.bf16.mxu0 %v12128
    %14269 = vmatpush1.bf16.msra.mxu0 %v12127
    %14270 = vmatprep.subr.bf16.mxu0 %v12099
    %14271 = vmatpush1.bf16.msra.mxu0 %v12098
    %14272 = vmatprep.subr.bf16.mxu0 %v12070
    %14273 = vmatpush1.bf16.msra.mxu0 %v12069
    %14274 = vmatprep.subr.bf16.mxu0 %v12041
    %14275 = vmatpush1.bf16.msra.mxu0 %v12040
    %14276 = vmatprep.subr.bf16.mxu0 %v12012
    %14277 = vmatpush1.bf16.msra.mxu0 %v12011
    %14278 = vmatprep.subr.bf16.mxu0 %v11983
    %14279 = vmatpush1.bf16.msra.mxu0 %v11982
    %14280 = vmatprep.subr.bf16.mxu0 %v11954
    %14281 = vmatpush1.bf16.msra.mxu0 %v11953
    %14282 = vmatprep.subr.bf16.mxu0 %v12389
    %14283 = vmatpush2.bf16.msra.mxu0 %v12388
    %14284 = vmatprep.subr.bf16.mxu0 %v12360
    %14285 = vmatpush2.bf16.msra.mxu0 %v12359
    %14286 = vmatprep.subr.bf16.mxu0 %v12331
    %14287 = vmatpush2.bf16.msra.mxu0 %v12330
    %14288 = vmatprep.subr.bf16.mxu0 %v12302
    %14289 = vmatpush2.bf16.msra.mxu0 %v12301
    %14290 = vmatprep.subr.bf16.mxu0 %v12273
    %14291 = vmatpush2.bf16.msra.mxu0 %v12272
    %14292 = vmatprep.subr.bf16.mxu0 %v12244
    %14293 = vmatpush2.bf16.msra.mxu0 %v12243
    %14294 = vmatprep.subr.bf16.mxu0 %v12215
    %14295 = vmatpush2.bf16.msra.mxu0 %v12214
    %14296 = vmatprep.subr.bf16.mxu0 %v12186
    %14297 = vmatpush2.bf16.msra.mxu0 %v12185
    %14298 = vmatprep.mubr.bf16.mxu0 %v7537
    %14299 = vmatmul.mubr.bf16.gmra.mxu0 %v7536
    %v14300 = vpop.f32.mrf.mxu0
    %v14301 = vadd.f32 %v14260, %v14300
    %v14302 = vpop.f32.mrf.mxu0
    %v14303 = vadd.f32 %v14262, %v14302
    %v14304 = vpop.f32.mrf.mxu0
    %v14305 = vpop.f32.mrf.mxu0
    %14306 = vdwg.mxu0
    %14307 = vmatprep.subr.bf16.mxu0 %v11695
    %14308 = vmatpush1.bf16.msra.mxu0 %v11694
    %14309 = vmatprep.subr.bf16.mxu0 %v11666
    %14310 = vmatpush1.bf16.msra.mxu0 %v11665
    %14311 = vmatprep.subr.bf16.mxu0 %v11637
    %14312 = vmatpush1.bf16.msra.mxu0 %v11636
    %14313 = vmatprep.subr.bf16.mxu0 %v11608
    %14314 = vmatpush1.bf16.msra.mxu0 %v11607
    %14315 = vmatprep.subr.bf16.mxu0 %v11579
    %14316 = vmatpush1.bf16.msra.mxu0 %v11578
    %14317 = vmatprep.subr.bf16.mxu0 %v11550
    %14318 = vmatpush1.bf16.msra.mxu0 %v11549
    %14319 = vmatprep.subr.bf16.mxu0 %v11521
    %14320 = vmatpush1.bf16.msra.mxu0 %v11520
    %14321 = vmatprep.subr.bf16.mxu0 %v11492
    %14322 = vmatpush1.bf16.msra.mxu0 %v11491
    %14323 = vmatprep.subr.bf16.mxu0 %v11927
    %14324 = vmatpush2.bf16.msra.mxu0 %v11926
    %14325 = vmatprep.subr.bf16.mxu0 %v11898
    %14326 = vmatpush2.bf16.msra.mxu0 %v11897
    %14327 = vmatprep.subr.bf16.mxu0 %v11869
    %14328 = vmatpush2.bf16.msra.mxu0 %v11868
    %14329 = vmatprep.subr.bf16.mxu0 %v11840
    %14330 = vmatpush2.bf16.msra.mxu0 %v11839
    %14331 = vmatprep.subr.bf16.mxu0 %v11811
    %14332 = vmatpush2.bf16.msra.mxu0 %v11810
    %14333 = vmatprep.subr.bf16.mxu0 %v11782
    %14334 = vmatpush2.bf16.msra.mxu0 %v11781
    %14335 = vmatprep.subr.bf16.mxu0 %v11753
    %14336 = vmatpush2.bf16.msra.mxu0 %v11752
    %14337 = vmatprep.subr.bf16.mxu0 %v11724
    %14338 = vmatpush2.bf16.msra.mxu0 %v11723
    %14339 = vmatprep.mubr.bf16.mxu0 %v7535
    %14340 = vmatmul.mubr.bf16.gmra.mxu0 %v7534
    %v14341 = vpop.f32.mrf.mxu0
    %v14342 = vadd.f32 %v8605, %v14341
    %v14343 = vpop.f32.mrf.mxu0
    %v14344 = vadd.f32 %v8609, %v14343
    %v14345 = vpop.f32.mrf.mxu0
    %v14346 = vpop.f32.mrf.mxu0
    %14347 = vdwg.mxu0
    %14348 = vmatprep.subr.bf16.mxu0 %v12159
    %14349 = vmatpush1.bf16.msra.mxu0 %v12158
    %14350 = vmatprep.subr.bf16.mxu0 %v12130
    %14351 = vmatpush1.bf16.msra.mxu0 %v12129
    %14352 = vmatprep.subr.bf16.mxu0 %v12101
    %14353 = vmatpush1.bf16.msra.mxu0 %v12100
    %14354 = vmatprep.subr.bf16.mxu0 %v12072
    %14355 = vmatpush1.bf16.msra.mxu0 %v12071
    %14356 = vmatprep.subr.bf16.mxu0 %v12043
    %14357 = vmatpush1.bf16.msra.mxu0 %v12042
    %14358 = vmatprep.subr.bf16.mxu0 %v12014
    %14359 = vmatpush1.bf16.msra.mxu0 %v12013
    %14360 = vmatprep.subr.bf16.mxu0 %v11985
    %14361 = vmatpush1.bf16.msra.mxu0 %v11984
    %14362 = vmatprep.subr.bf16.mxu0 %v11956
    %14363 = vmatpush1.bf16.msra.mxu0 %v11955
    %14364 = vmatprep.subr.bf16.mxu0 %v12391
    %14365 = vmatpush2.bf16.msra.mxu0 %v12390
    %14366 = vmatprep.subr.bf16.mxu0 %v12362
    %14367 = vmatpush2.bf16.msra.mxu0 %v12361
    %14368 = vmatprep.subr.bf16.mxu0 %v12333
    %14369 = vmatpush2.bf16.msra.mxu0 %v12332
    %14370 = vmatprep.subr.bf16.mxu0 %v12304
    %14371 = vmatpush2.bf16.msra.mxu0 %v12303
    %14372 = vmatprep.subr.bf16.mxu0 %v12275
    %14373 = vmatpush2.bf16.msra.mxu0 %v12274
    %14374 = vmatprep.subr.bf16.mxu0 %v12246
    %14375 = vmatpush2.bf16.msra.mxu0 %v12245
    %14376 = vmatprep.subr.bf16.mxu0 %v12217
    %14377 = vmatpush2.bf16.msra.mxu0 %v12216
    %14378 = vmatprep.subr.bf16.mxu0 %v12188
    %14379 = vmatpush2.bf16.msra.mxu0 %v12187
    %14380 = vmatprep.mubr.bf16.mxu0 %v7537
    %14381 = vmatmul.mubr.bf16.gmra.mxu0 %v7536
    %v14382 = vpop.f32.mrf.mxu0
    %v14383 = vadd.f32 %v14342, %v14382
    %v14384 = vpop.f32.mrf.mxu0
    %v14385 = vadd.f32 %v14344, %v14384
    %v14386 = vpop.f32.mrf.mxu0
    %v14387 = vpop.f32.mrf.mxu0
    %14388 = vdwg.mxu0
    %14389 = vmatprep.subr.bf16.mxu0 %v11697
    %14390 = vmatpush1.bf16.msra.mxu0 %v11696
    %14391 = vmatprep.subr.bf16.mxu0 %v11668
    %14392 = vmatpush1.bf16.msra.mxu0 %v11667
    %14393 = vmatprep.subr.bf16.mxu0 %v11639
    %14394 = vmatpush1.bf16.msra.mxu0 %v11638
    %14395 = vmatprep.subr.bf16.mxu0 %v11610
    %14396 = vmatpush1.bf16.msra.mxu0 %v11609
    %14397 = vmatprep.subr.bf16.mxu0 %v11581
    %14398 = vmatpush1.bf16.msra.mxu0 %v11580
    %14399 = vmatprep.subr.bf16.mxu0 %v11552
    %14400 = vmatpush1.bf16.msra.mxu0 %v11551
    %14401 = vmatprep.subr.bf16.mxu0 %v11523
    %14402 = vmatpush1.bf16.msra.mxu0 %v11522
    %14403 = vmatprep.subr.bf16.mxu0 %v11494
    %14404 = vmatpush1.bf16.msra.mxu0 %v11493
    %14405 = vmatprep.subr.bf16.mxu0 %v11929
    %14406 = vmatpush2.bf16.msra.mxu0 %v11928
    %14407 = vmatprep.subr.bf16.mxu0 %v11900
    %14408 = vmatpush2.bf16.msra.mxu0 %v11899
    %14409 = vmatprep.subr.bf16.mxu0 %v11871
    %14410 = vmatpush2.bf16.msra.mxu0 %v11870
    %14411 = vmatprep.subr.bf16.mxu0 %v11842
    %14412 = vmatpush2.bf16.msra.mxu0 %v11841
    %14413 = vmatprep.subr.bf16.mxu0 %v11813
    %14414 = vmatpush2.bf16.msra.mxu0 %v11812
    %14415 = vmatprep.subr.bf16.mxu0 %v11784
    %14416 = vmatpush2.bf16.msra.mxu0 %v11783
    %14417 = vmatprep.subr.bf16.mxu0 %v11755
    %14418 = vmatpush2.bf16.msra.mxu0 %v11754
    %14419 = vmatprep.subr.bf16.mxu0 %v11726
    %14420 = vmatpush2.bf16.msra.mxu0 %v11725
    %14421 = vmatprep.mubr.bf16.mxu0 %v7535
    %14422 = vmatmul.mubr.bf16.gmra.mxu0 %v7534
    %v14423 = vpop.f32.mrf.mxu0
    %v14424 = vadd.f32 %v8613, %v14423
    %v14425 = vpop.f32.mrf.mxu0
    %v14426 = vadd.f32 %v8617, %v14425
    %v14427 = vpop.f32.mrf.mxu0
    %v14428 = vpop.f32.mrf.mxu0
    %14429 = vdwg.mxu0
    %14430 = vmatprep.subr.bf16.mxu0 %v12161
    %14431 = vmatpush1.bf16.msra.mxu0 %v12160
    %14432 = vmatprep.subr.bf16.mxu0 %v12132
    %14433 = vmatpush1.bf16.msra.mxu0 %v12131
    %14434 = vmatprep.subr.bf16.mxu0 %v12103
    %14435 = vmatpush1.bf16.msra.mxu0 %v12102
    %14436 = vmatprep.subr.bf16.mxu0 %v12074
    %14437 = vmatpush1.bf16.msra.mxu0 %v12073
    %14438 = vmatprep.subr.bf16.mxu0 %v12045
    %14439 = vmatpush1.bf16.msra.mxu0 %v12044
    %14440 = vmatprep.subr.bf16.mxu0 %v12016
    %14441 = vmatpush1.bf16.msra.mxu0 %v12015
    %14442 = vmatprep.subr.bf16.mxu0 %v11987
    %14443 = vmatpush1.bf16.msra.mxu0 %v11986
    %14444 = vmatprep.subr.bf16.mxu0 %v11958
    %14445 = vmatpush1.bf16.msra.mxu0 %v11957
    %14446 = vmatprep.subr.bf16.mxu0 %v12393
    %14447 = vmatpush2.bf16.msra.mxu0 %v12392
    %14448 = vmatprep.subr.bf16.mxu0 %v12364
    %14449 = vmatpush2.bf16.msra.mxu0 %v12363
    %14450 = vmatprep.subr.bf16.mxu0 %v12335
    %14451 = vmatpush2.bf16.msra.mxu0 %v12334
    %14452 = vmatprep.subr.bf16.mxu0 %v12306
    %14453 = vmatpush2.bf16.msra.mxu0 %v12305
    %14454 = vmatprep.subr.bf16.mxu0 %v12277
    %14455 = vmatpush2.bf16.msra.mxu0 %v12276
    %14456 = vmatprep.subr.bf16.mxu0 %v12248
    %14457 = vmatpush2.bf16.msra.mxu0 %v12247
    %14458 = vmatprep.subr.bf16.mxu0 %v12219
    %14459 = vmatpush2.bf16.msra.mxu0 %v12218
    %14460 = vmatprep.subr.bf16.mxu0 %v12190
    %14461 = vmatpush2.bf16.msra.mxu0 %v12189
    %14462 = vmatprep.mubr.bf16.mxu0 %v7537
    %14463 = vmatmul.mubr.bf16.gmra.mxu0 %v7536
    %v14464 = vpop.f32.mrf.mxu0
    %v14465 = vadd.f32 %v14424, %v14464
    %v14466 = vpop.f32.mrf.mxu0
    %v14467 = vadd.f32 %v14426, %v14466
    %v14468 = vpop.f32.mrf.mxu0
    %v14469 = vpop.f32.mrf.mxu0
    %14470 = vdwg.mxu0
    %14471 = vmatprep.subr.bf16.mxu0 0
    %14472 = vmatpush1.bf16.msra.mxu0 %v11698
    %14473 = vmatprep.subr.bf16.mxu0 0
    %14474 = vmatpush1.bf16.msra.mxu0 %v11669
    %14475 = vmatprep.subr.bf16.mxu0 0
    %14476 = vmatpush1.bf16.msra.mxu0 %v11640
    %14477 = vmatprep.subr.bf16.mxu0 0
    %14478 = vmatpush1.bf16.msra.mxu0 %v11611
    %14479 = vmatprep.subr.bf16.mxu0 0
    %14480 = vmatpush1.bf16.msra.mxu0 %v11582
    %14481 = vmatprep.subr.bf16.mxu0 0
    %14482 = vmatpush1.bf16.msra.mxu0 %v11553
    %14483 = vmatprep.subr.bf16.mxu0 0
    %14484 = vmatpush1.bf16.msra.mxu0 %v11524
    %14485 = vmatprep.subr.bf16.mxu0 0
    %14486 = vmatpush1.bf16.msra.mxu0 %v11495
    %14487 = vmatprep.subr.bf16.mxu0 0
    %14488 = vmatpush2.bf16.msra.mxu0 %v11930
    %14489 = vmatprep.subr.bf16.mxu0 0
    %14490 = vmatpush2.bf16.msra.mxu0 %v11901
    %14491 = vmatprep.subr.bf16.mxu0 0
    %14492 = vmatpush2.bf16.msra.mxu0 %v11872
    %14493 = vmatprep.subr.bf16.mxu0 0
    %14494 = vmatpush2.bf16.msra.mxu0 %v11843
    %14495 = vmatprep.subr.bf16.mxu0 0
    %14496 = vmatpush2.bf16.msra.mxu0 %v11814
    %14497 = vmatprep.subr.bf16.mxu0 0
    %14498 = vmatpush2.bf16.msra.mxu0 %v11785
    %14499 = vmatprep.subr.bf16.mxu0 0
    %14500 = vmatpush2.bf16.msra.mxu0 %v11756
    %14501 = vmatprep.subr.bf16.mxu0 0
    %14502 = vmatpush2.bf16.msra.mxu0 %v11727
    %14503 = vmatprep.mubr.bf16.mxu0 %v7535
    %14504 = vmatmul.mubr.bf16.gmra.mxu0 %v7534
    %v14505 = vpop.f32.mrf.mxu0
    %v14506 = vadd.f32 %v8621, %v14505
    %v14507 = vpop.f32.mrf.mxu0
    %v14508 = vpop.f32.mrf.mxu0
    %v14509 = vpop.f32.mrf.mxu0
    %14510 = vdwg.mxu0
    %14511 = vmatprep.subr.bf16.mxu0 0
    %14512 = vmatpush1.bf16.msra.mxu0 %v12162
    %14513 = vmatprep.subr.bf16.mxu0 0
    %14514 = vmatpush1.bf16.msra.mxu0 %v12133
    %14515 = vmatprep.subr.bf16.mxu0 0
    %14516 = vmatpush1.bf16.msra.mxu0 %v12104
    %14517 = vmatprep.subr.bf16.mxu0 0
    %14518 = vmatpush1.bf16.msra.mxu0 %v12075
    %14519 = vmatprep.subr.bf16.mxu0 0
    %14520 = vmatpush1.bf16.msra.mxu0 %v12046
    %14521 = vmatprep.subr.bf16.mxu0 0
    %14522 = vmatpush1.bf16.msra.mxu0 %v12017
    %14523 = vmatprep.subr.bf16.mxu0 0
    %14524 = vmatpush1.bf16.msra.mxu0 %v11988
    %14525 = vmatprep.subr.bf16.mxu0 0
    %14526 = vmatpush1.bf16.msra.mxu0 %v11959
    %14527 = vmatprep.subr.bf16.mxu0 0
    %14528 = vmatpush2.bf16.msra.mxu0 %v12394
    %14529 = vmatprep.subr.bf16.mxu0 0
    %14530 = vmatpush2.bf16.msra.mxu0 %v12365
    %14531 = vmatprep.subr.bf16.mxu0 0
    %14532 = vmatpush2.bf16.msra.mxu0 %v12336
    %14533 = vmatprep.subr.bf16.mxu0 0
    %14534 = vmatpush2.bf16.msra.mxu0 %v12307
    %14535 = vmatprep.subr.bf16.mxu0 0
    %14536 = vmatpush2.bf16.msra.mxu0 %v12278
    %14537 = vmatprep.subr.bf16.mxu0 0
    %14538 = vmatpush2.bf16.msra.mxu0 %v12249
    %14539 = vmatprep.subr.bf16.mxu0 0
    %14540 = vmatpush2.bf16.msra.mxu0 %v12220
    %14541 = vmatprep.subr.bf16.mxu0 0
    %14542 = vmatpush2.bf16.msra.mxu0 %v12191
    %14543 = vmatprep.mubr.bf16.mxu0 %v7537
    %14544 = vmatmul.mubr.bf16.gmra.mxu0 %v7536
    %v14545 = vpop.f32.mrf.mxu0
    %v14546 = vadd.f32 %v14506, %v14545
    %v14547 = vpop.f32.mrf.mxu0
    %v14548 = vpop.f32.mrf.mxu0
    %v14549 = vpop.f32.mrf.mxu0
    %14550 = vdwg.mxu0
    %14551 = vst [vmem:[%s9] sm:$0xff] %v13399
    %14552 = vst [vmem:[%s9 + $0x8] sm:$0xff] %v13401
    %14553 = vst [vmem:[%s9 + $0x10] sm:$0xff] %v13481
    %14554 = vst [vmem:[%s9 + $0x18] sm:$0xff] %v13483
    %14555 = vst [vmem:[%s9 + $0x20] sm:$0xff] %v13563
    %14556 = vst [vmem:[%s9 + $0x28] sm:$0xff] %v13565
    %14557 = vst [vmem:[%s9 + $0x30] sm:$0xff] %v13645
    %14558 = vst [vmem:[%s9 + $0x38] sm:$0xff] %v13647
    %14559 = vst [vmem:[%s9 + $0x40] sm:$0xff] %v13727
    %14560 = vst [vmem:[%s9 + $0x48] sm:$0xff] %v13729
    %14561 = vst [vmem:[%s9 + $0x50] sm:$0xff] %v13809
    %14562 = vst [vmem:[%s9 + $0x58] sm:$0xff] %v13811
    %14563 = vst [vmem:[%s9 + $0x60] sm:$0xff] %v13891
    %14564 = vst [vmem:[%s9 + $0x68] sm:$0xff] %v13893
    %14565 = vst [vmem:[%s9 + $0x70] sm:$0xff] %v13973
    %14566 = vst [vmem:[%s9 + $0x78] sm:$0xff] %v13975
    %14567 = vst [vmem:[%s9 + $0x80] sm:$0xff] %v14055
    %14568 = vst [vmem:[%s9 + $0x88] sm:$0xff] %v14057
    %14569 = vst [vmem:[%s9 + $0x90] sm:$0xff] %v14137
    %14570 = vst [vmem:[%s9 + $0x98] sm:$0xff] %v14139
    %14571 = vst [vmem:[%s9 + $0xa0] sm:$0xff] %v14219
    %14572 = vst [vmem:[%s9 + $0xa8] sm:$0xff] %v14221
    %14573 = vst [vmem:[%s9 + $0xb0] sm:$0xff] %v14301
    %14574 = vst [vmem:[%s9 + $0xb8] sm:$0xff] %v14303
    %14575 = vst [vmem:[%s9 + $0xc0] sm:$0xff] %v14383
    %14576 = vst [vmem:[%s9 + $0xc8] sm:$0xff] %v14385
    %14577 = vst [vmem:[%s9 + $0xd0] sm:$0xff] %v14465
    %14578 = vst [vmem:[%s9 + $0xd8] sm:$0xff] %v14467
    %14579 = vst [vmem:[%s9 + $0xe0] sm:$0xff] %v14546
    // Predicated region
    $region70: #{vae_forward.1} parent=1 // pred_check
      _
    $region71: #{vae_forward.1} parent=1 // pred_check_branch
      %14581 = sbr.rel (0) target = $region73
    $region72: #{vae_forward.1} parent=1 // pred_region
      _
    $region73: #{vae_forward.1} parent=1 // pred_fallthru
      _
    // Predicated region
    $region74: #{vae_forward.1} parent=1 // pred_check
      _
    $region75: #{vae_forward.1} parent=1 // pred_check_branch
      %14583 = sbr.rel (0) target = $region77
    $region76: #{vae_forward.1} parent=1 // pred_region
      _
    $region77: #{vae_forward.1} parent=1 // pred_fallthru
      _
    %14584 = vsyncpa [#allocation3], 1
    %14585 = vsyncpa [#allocation5], 1
    %14586 = vsyncpa [#allocation8], 1
    %14587 = vsyncpa [#allocation11], 1
    %14588 = vsyncpa [#allocation14], 1

</llo_original>
